<compile_context>
chip_gen: v7x
topology: tpu7x:2x2x1
jax: 0.10.0
libtpu: 0.0.40
codegen_flags: <defaults>
</compile_context>

<pallas_src>
import functools

import jax
import jax.numpy as jnp
from jax.experimental import pallas as pl
from jax.experimental.pallas import tpu as pltpu

NUM_CLASSES = 3          # CONFIG['num_classes']
CIN = 3                  # RGB
CIN_PAD = 8              # pad stem input channels to a sublane multiple
C_STEM = 32
C_MID = 16


# ----------------------------------------------------------------------------
# Fused forward kernel (one grid step == one batch element)
# ----------------------------------------------------------------------------
def _fused_forward_kernel(
    x_ref,
    w_stem_ref, s_stem_ref, t_stem_ref,
    w_b1_ref, s_b1_ref, t_b1_ref,
    w_b2_ref, s_b2_ref, t_b2_ref,
    w_b3_ref, s_b3_ref, t_b3_ref,
    w_fc_ref, b_fc_ref,
    out_ref,
    pad_stem_scr, pad_b2_scr,
    *, H, W,
):
    HW = H * W
    HALO = ((W + 1 + 7) // 8) * 8          # >= W+1, sublane-aligned write offset
    f32 = jnp.float32
    bf16 = jnp.bfloat16

    # Column-validity masks (function of j = p mod W only). Row (dh) boundary
    # violations are handled automatically by the zero halo rows of the scratch.
    j = jax.lax.broadcasted_iota(jnp.int32, (HW, 1), 0) % W
    col_valid = {-1: j >= 1, 0: None, 1: j <= (W - 2)}

    def conv3x3_bn(src, scr, w_taps_ref, scale_ref, shift_ref, cout):
        """3x3 'same' conv as 9 accumulated bf16 dots over shifted VMEM views + BN."""
        scr[...] = jnp.zeros_like(scr)                    # zero halo + body
        scr[pl.ds(HALO, HW), :] = src                     # place activation
        acc = jnp.zeros((HW, cout), f32)
        t = 0
        for dh in (-1, 0, 1):
            for dw in (-1, 0, 1):
                s = dh * W + dw
                tap = scr[pl.ds(HALO + s, HW), :]         # shifted view (static offset)
                if col_valid[dw] is not None:
                    tap = jnp.where(col_valid[dw], tap, 0.0)
                acc = acc + jnp.dot(tap.astype(bf16),
                                    w_taps_ref[t].astype(bf16),
                                    preferred_element_type=f32)
                t += 1
        return acc * scale_ref[...] + shift_ref[...]

    x2d = x_ref[0].astype(f32)                                            # (HW, CIN_PAD)

    # ---- stem: 3x3 conv + BN + ReLU ----------------------------------------------
    h = jnp.maximum(conv3x3_bn(x2d, pad_stem_scr, w_stem_ref,
                               s_stem_ref, t_stem_ref, C_STEM), 0.0)      # (HW, 32)

    # ---- bottleneck: 1x1 -> 3x3 -> 1x1 (BN folded), residual fused at the end -----
    b = jnp.dot(h.astype(bf16), w_b1_ref[...].astype(bf16),
                preferred_element_type=f32)
    b = jnp.maximum(b * s_b1_ref[...] + t_b1_ref[...], 0.0)               # (HW, 16)

    b = jnp.maximum(conv3x3_bn(b, pad_b2_scr, w_b2_ref,
                               s_b2_ref, t_b2_ref, C_MID), 0.0)           # (HW, 16)

    b = jnp.dot(b.astype(bf16), w_b3_ref[...].astype(bf16),
                preferred_element_type=f32)
    h = jnp.maximum(b * s_b3_ref[...] + t_b3_ref[...] + h, 0.0)           # (HW, 32)

    # ---- GAP + classifier (linear and mean commute: mean(h) @ W == mean(h @ W)) ---
    y = jnp.dot(h, w_fc_ref[...], preferred_element_type=f32)             # (HW, 3)
    logits = jnp.sum(y, axis=0, keepdims=True) * (1.0 / HW) + b_fc_ref[...]
    out_ref[0] = logits.astype(out_ref.dtype)                             # (1, 3)


# ----------------------------------------------------------------------------
# Wrapper: one fused pallas_call over the batch
# ----------------------------------------------------------------------------
def custom_net_forward(params, x_nchw):
    B, Cin, H, W = x_nchw.shape
    HW = H * W
    # Layout plumbing only (one-time, tiny): NCHW -> NHWC, pad channels, flatten HW.
    x = jnp.transpose(x_nchw, (0, 2, 3, 1)).astype(jnp.float32)
    x = jnp.pad(x, ((0, 0), (0, 0), (0, 0), (0, CIN_PAD - Cin)))
    x = x.reshape(B, HW, CIN_PAD)

    const2 = lambda b: (0, 0)      # weights resident in VMEM across grid steps
    const3 = lambda b: (0, 0, 0)
    halo = ((W + 1 + 7) // 8) * 8

    out = pl.pallas_call(
        functools.partial(_fused_forward_kernel, H=H, W=W),
        out_shape=jax.ShapeDtypeStruct((B, 1, NUM_CLASSES), jnp.float32),
        grid_spec=pltpu.PrefetchScalarGridSpec(
            num_scalar_prefetch=0,
            grid=(B,),
            in_specs=[
                pl.BlockSpec((1, HW, CIN_PAD), lambda b: (b, 0, 0)),
                pl.BlockSpec((9, CIN_PAD, C_STEM), const3),
                pl.BlockSpec((1, C_STEM), const2),
                pl.BlockSpec((1, C_STEM), const2),
                pl.BlockSpec((C_STEM, C_MID), const2),
                pl.BlockSpec((1, C_MID), const2),
                pl.BlockSpec((1, C_MID), const2),
                pl.BlockSpec((9, C_MID, C_MID), const3),
                pl.BlockSpec((1, C_MID), const2),
                pl.BlockSpec((1, C_MID), const2),
                pl.BlockSpec((C_MID, C_STEM), const2),
                pl.BlockSpec((1, C_STEM), const2),
                pl.BlockSpec((1, C_STEM), const2),
                pl.BlockSpec((C_STEM, NUM_CLASSES), const2),
                pl.BlockSpec((1, NUM_CLASSES), const2),
            ],
            out_specs=pl.BlockSpec((1, 1, NUM_CLASSES), lambda b: (b, 0, 0)),
            scratch_shapes=[
                pltpu.VMEM((HW + 2 * halo, CIN_PAD), jnp.float32),   # stem halo buffer
                pltpu.VMEM((HW + 2 * halo, C_MID), jnp.float32),     # b2 halo buffer
            ],
        ),
        compiler_params=pltpu.CompilerParams(
            dimension_semantics=("parallel",),   # batch sharded across TCs on v7x
        ),
    )(
        x,
        params["w_stem"], params["bn_stem_scale"], params["bn_stem_shift"],
        params["w_b1"], params["bn_b1_scale"], params["bn_b1_shift"],
        params["w_b2"], params["bn_b2_scale"], params["bn_b2_shift"],
        params["w_b3"], params["bn_b3_scale"], params["bn_b3_shift"],
        params["w_fc"], params["b_fc"],
    )
    return out.reshape(B, NUM_CLASSES)


# ----------------------------------------------------------------------------
# Parameters (deterministic init, no checkpoint)
# ----------------------------------------------------------------------------
def init_params(key):
    def he(k, shape, fan_in):
        return jax.random.normal(k, shape, jnp.float32) * jnp.sqrt(2.0 / fan_in)

    ks = jax.random.split(key, 5)
    # 3x3 conv weights stored as (9 taps, Cin, Cout); tap index t = (dh+1)*3 + (dw+1).
    w_stem = he(ks[0], (9, CIN, C_STEM), 9 * CIN)
    w_stem = jnp.pad(w_stem, ((0, 0), (0, CIN_PAD - CIN), (0, 0)))   # inert padded rows
    return {
        "w_stem": w_stem,
        "bn_stem_scale": jnp.ones((1, C_STEM), jnp.float32),
        "bn_stem_shift": jnp.zeros((1, C_STEM), jnp.float32),
        "w_b1": he(ks[1], (C_STEM, C_MID), C_STEM),
        "bn_b1_scale": jnp.ones((1, C_MID), jnp.float32),
        "bn_b1_shift": jnp.zeros((1, C_MID), jnp.float32),
        "w_b2": he(ks[2], (9, C_MID, C_MID), 9 * C_MID),
        "bn_b2_scale": jnp.ones((1, C_MID), jnp.float32),
        "bn_b2_shift": jnp.zeros((1, C_MID), jnp.float32),
        "w_b3": he(ks[3], (C_MID, C_STEM), C_MID),
        "bn_b3_scale": jnp.ones((1, C_STEM), jnp.float32),
        "bn_b3_shift": jnp.zeros((1, C_STEM), jnp.float32),
        "w_fc": he(ks[4], (C_STEM, NUM_CLASSES), C_STEM),
        "b_fc": jnp.zeros((1, NUM_CLASSES), jnp.float32),
    }


if __name__ == "__main__":
    key = jax.random.PRNGKey(0)
    k_x, _ = jax.random.split(key)

    # Small input consistent with the module: RGB image batch, NCHW.
    x = jax.random.normal(k_x, (2, 3, 16, 16), jnp.float32)
    params = init_params(jax.random.PRNGKey(42))

    logits = jax.jit(custom_net_forward)(params, x)
    jax.block_until_ready(logits)

    assert logits.shape == (2, NUM_CLASSES)
    assert logits.dtype == jnp.float32
    print("KERNEL_OK")
</pallas_src>

<mosaic_0001>
module attributes {stable_mosaic.version = 11 : i64} {
  func.func @_fused_forward_kernel(%arg0: i32, %arg1: memref<1x256x8xf32, #tpu.memory_space<vmem>>, %arg2: memref<9x8x32xf32, #tpu.memory_space<vmem>>, %arg3: memref<1x32xf32, #tpu.memory_space<vmem>>, %arg4: memref<1x32xf32, #tpu.memory_space<vmem>>, %arg5: memref<32x16xf32, #tpu.memory_space<vmem>>, %arg6: memref<1x16xf32, #tpu.memory_space<vmem>>, %arg7: memref<1x16xf32, #tpu.memory_space<vmem>>, %arg8: memref<9x16x16xf32, #tpu.memory_space<vmem>>, %arg9: memref<1x16xf32, #tpu.memory_space<vmem>>, %arg10: memref<1x16xf32, #tpu.memory_space<vmem>>, %arg11: memref<16x32xf32, #tpu.memory_space<vmem>>, %arg12: memref<1x32xf32, #tpu.memory_space<vmem>>, %arg13: memref<1x32xf32, #tpu.memory_space<vmem>>, %arg14: memref<32x3xf32, #tpu.memory_space<vmem>>, %arg15: memref<1x3xf32, #tpu.memory_space<vmem>>, %arg16: memref<1x1x3xf32, #tpu.memory_space<vmem>>, %arg17: memref<304x8xf32, #tpu.memory_space<vmem>>, %arg18: memref<304x16xf32, #tpu.memory_space<vmem>>) attributes {dimension_semantics = [#tpu.dimension_semantics<parallel>], iteration_bounds = array<i64: 2>, scalar_prefetch = 0 : i64, scratch_operands = 2 : i64, tpu.core_type = #tpu.core_type<tc>, window_params = [{transform_indices = @transform_0, window_bounds = array<i64: 1, 256, 8>}, {pipeline_mode = #tpu.pipeline_mode<synchronous>, transform_indices = @transform_1, window_bounds = array<i64: 9, 8, 32>}, {pipeline_mode = #tpu.pipeline_mode<synchronous>, transform_indices = @transform_2, window_bounds = array<i64: 1, 32>}, {pipeline_mode = #tpu.pipeline_mode<synchronous>, transform_indices = @transform_3, window_bounds = array<i64: 1, 32>}, {pipeline_mode = #tpu.pipeline_mode<synchronous>, transform_indices = @transform_4, window_bounds = array<i64: 32, 16>}, {pipeline_mode = #tpu.pipeline_mode<synchronous>, transform_indices = @transform_5, window_bounds = array<i64: 1, 16>}, {pipeline_mode = #tpu.pipeline_mode<synchronous>, transform_indices = @transform_6, window_bounds = array<i64: 1, 16>}, {pipeline_mode = #tpu.pipeline_mode<synchronous>, transform_indices = @transform_7, window_bounds = array<i64: 9, 16, 16>}, {pipeline_mode = #tpu.pipeline_mode<synchronous>, transform_indices = @transform_8, window_bounds = array<i64: 1, 16>}, {pipeline_mode = #tpu.pipeline_mode<synchronous>, transform_indices = @transform_9, window_bounds = array<i64: 1, 16>}, {pipeline_mode = #tpu.pipeline_mode<synchronous>, transform_indices = @transform_10, window_bounds = array<i64: 16, 32>}, {pipeline_mode = #tpu.pipeline_mode<synchronous>, transform_indices = @transform_11, window_bounds = array<i64: 1, 32>}, {pipeline_mode = #tpu.pipeline_mode<synchronous>, transform_indices = @transform_12, window_bounds = array<i64: 1, 32>}, {pipeline_mode = #tpu.pipeline_mode<synchronous>, transform_indices = @transform_13, window_bounds = array<i64: 32, 3>}, {pipeline_mode = #tpu.pipeline_mode<synchronous>, transform_indices = @transform_14, window_bounds = array<i64: 1, 3>}, {transform_indices = @transform_15, window_bounds = array<i64: 1, 1, 3>}]} {
    %0 = tpu.iota {dimensions = array<i32: 0>} : vector<256x1xi32>
    %c16_i32 = arith.constant 16 : i32
    %c0_i32 = arith.constant 0 : i32
    %1 = arith.cmpi eq, %c16_i32, %c0_i32 : i32
    %c1_i32 = arith.constant 1 : i32
    %2 = arith.select %1, %c1_i32, %c16_i32 : i32
    %3 = vector.broadcast %2 : i32 to vector<256x1xi32>
    %4 = arith.remsi %0, %3 : vector<256x1xi32>
    %c0_i32_0 = arith.constant 0 : i32
    %5 = vector.broadcast %c0_i32_0 : i32 to vector<256x1xi32>
    %6 = arith.cmpi ne, %4, %5 : vector<256x1xi32>
    %c0_i32_1 = arith.constant 0 : i32
    %7 = vector.broadcast %c0_i32_1 : i32 to vector<256x1xi32>
    %8 = arith.cmpi slt, %4, %7 : vector<256x1xi32>
    %c0_i32_2 = arith.constant 0 : i32
    %9 = arith.cmpi slt, %2, %c0_i32_2 : i32
    %10 = vector.broadcast %9 : i1 to vector<256x1xi1>
    %11 = vector.broadcast %10 : vector<256x1xi1> to vector<256x1xi1>
    %12 = arith.xori %8, %11 : vector<256x1xi1>
    %13 = arith.andi %12, %6 : vector<256x1xi1>
    %14 = vector.broadcast %2 : i32 to vector<256x1xi32>
    %15 = arith.addi %4, %14 : vector<256x1xi32>
    %16 = arith.select %13, %15, %4 : vector<256x1xi1>, vector<256x1xi32>
    %c1_i32_3 = arith.constant 1 : i32
    %17 = vector.broadcast %c1_i32_3 : i32 to vector<256x1xi32>
    %18 = arith.cmpi sge, %16, %17 : vector<256x1xi32>
    %c14_i32 = arith.constant 14 : i32
    %19 = vector.broadcast %c14_i32 : i32 to vector<256x1xi32>
    %20 = arith.cmpi sle, %16, %19 : vector<256x1xi32>
    %c0 = arith.constant 0 : index
    %c0_4 = arith.constant 0 : index
    %c0_5 = arith.constant 0 : index
    %21 = vector.load %arg1[%c0, %c0_4, %c0_5] : memref<1x256x8xf32, #tpu.memory_space<vmem>>, vector<1x256x8xf32>
    %22 = vector.shape_cast %21 : vector<1x256x8xf32> to vector<256x8xf32>
    %cst = arith.constant 0.000000e+00 : f32
    %23 = vector.broadcast %cst : f32 to vector<304x8xf32>
    %c0_6 = arith.constant 0 : index
    %c0_7 = arith.constant 0 : index
    %24 = vector.load %arg17[%c0_6, %c0_7] : memref<304x8xf32, #tpu.memory_space<vmem>>, vector<304x8xf32>
    tpu.vector_store %arg17[%c0_6, %c0_7], %23 {strides = array<i32>} : memref<304x8xf32, #tpu.memory_space<vmem>>, vector<304x8xf32>,
    %c24 = arith.constant 24 : index
    %c0_8 = arith.constant 0 : index
    %25 = vector.load %arg17[%c24, %c0_8] : memref<304x8xf32, #tpu.memory_space<vmem>>, vector<256x8xf32>
    tpu.vector_store %arg17[%c24, %c0_8], %22 {strides = array<i32>} : memref<304x8xf32, #tpu.memory_space<vmem>>, vector<256x8xf32>,
    %cst_9 = arith.constant 0.000000e+00 : f32
    %26 = vector.broadcast %cst_9 : f32 to vector<256x32xf32>
    %c7 = arith.constant 7 : index
    %c0_10 = arith.constant 0 : index
    %27 = vector.load %arg17[%c7, %c0_10] : memref<304x8xf32, #tpu.memory_space<vmem>>, vector<256x8xf32>
    %cst_11 = arith.constant 0.000000e+00 : f32
    %28 = vector.shape_cast %18 : vector<256x1xi1> to vector<256x1xi1>
    %29 = vector.broadcast %28 : vector<256x1xi1> to vector<256x8xi1>
    %30 = vector.broadcast %cst_11 : f32 to vector<256x8xf32>
    %31 = arith.select %29, %27, %30 : vector<256x8xi1>, vector<256x8xf32>
    %32 = arith.truncf %31 : vector<256x8xf32> to vector<256x8xbf16>
    %c0_12 = arith.constant 0 : index
    %c0_13 = arith.constant 0 : index
    %c0_14 = arith.constant 0 : index
    %33 = vector.load %arg2[%c0_12, %c0_13, %c0_14] : memref<9x8x32xf32, #tpu.memory_space<vmem>>, vector<1x8x32xf32>
    %34 = vector.shape_cast %33 : vector<1x8x32xf32> to vector<8x32xf32>
    %35 = arith.truncf %34 : vector<8x32xf32> to vector<8x32xbf16>
    %cst_15 = arith.constant dense<0.000000e+00> : vector<256x32xf32>
    %36 = tpu.matmul %32, %35, %cst_15 {dimension_numbers = #tpu.dot_dimension_numbers<[1], [0], [0], [1], [0, 0, 1, 1], [], []>} : vector<256x8xbf16>, vector<8x32xbf16>, vector<256x32xf32> -> vector<256x32xf32>
    %37 = arith.addf %26, %36 : vector<256x32xf32>
    %c8 = arith.constant 8 : index
    %c0_16 = arith.constant 0 : index
    %38 = vector.load %arg17[%c8, %c0_16] : memref<304x8xf32, #tpu.memory_space<vmem>>, vector<256x8xf32>
    %39 = arith.truncf %38 : vector<256x8xf32> to vector<256x8xbf16>
    %c1 = arith.constant 1 : index
    %c0_17 = arith.constant 0 : index
    %c0_18 = arith.constant 0 : index
    %40 = vector.load %arg2[%c1, %c0_17, %c0_18] : memref<9x8x32xf32, #tpu.memory_space<vmem>>, vector<1x8x32xf32>
    %41 = vector.shape_cast %40 : vector<1x8x32xf32> to vector<8x32xf32>
    %42 = arith.truncf %41 : vector<8x32xf32> to vector<8x32xbf16>
    %cst_19 = arith.constant dense<0.000000e+00> : vector<256x32xf32>
    %43 = tpu.matmul %39, %42, %cst_19 {dimension_numbers = #tpu.dot_dimension_numbers<[1], [0], [0], [1], [0, 0, 1, 1], [], []>} : vector<256x8xbf16>, vector<8x32xbf16>, vector<256x32xf32> -> vector<256x32xf32>
    %44 = arith.addf %37, %43 : vector<256x32xf32>
    %c9 = arith.constant 9 : index
    %c0_20 = arith.constant 0 : index
    %45 = vector.load %arg17[%c9, %c0_20] : memref<304x8xf32, #tpu.memory_space<vmem>>, vector<256x8xf32>
    %cst_21 = arith.constant 0.000000e+00 : f32
    %46 = vector.shape_cast %20 : vector<256x1xi1> to vector<256x1xi1>
    %47 = vector.broadcast %46 : vector<256x1xi1> to vector<256x8xi1>
    %48 = vector.broadcast %cst_21 : f32 to vector<256x8xf32>
    %49 = arith.select %47, %45, %48 : vector<256x8xi1>, vector<256x8xf32>
    %50 = arith.truncf %49 : vector<256x8xf32> to vector<256x8xbf16>
    %c2 = arith.constant 2 : index
    %c0_22 = arith.constant 0 : index
    %c0_23 = arith.constant 0 : index
    %51 = vector.load %arg2[%c2, %c0_22, %c0_23] : memref<9x8x32xf32, #tpu.memory_space<vmem>>, vector<1x8x32xf32>
    %52 = vector.shape_cast %51 : vector<1x8x32xf32> to vector<8x32xf32>
    %53 = arith.truncf %52 : vector<8x32xf32> to vector<8x32xbf16>
    %cst_24 = arith.constant dense<0.000000e+00> : vector<256x32xf32>
    %54 = tpu.matmul %50, %53, %cst_24 {dimension_numbers = #tpu.dot_dimension_numbers<[1], [0], [0], [1], [0, 0, 1, 1], [], []>} : vector<256x8xbf16>, vector<8x32xbf16>, vector<256x32xf32> -> vector<256x32xf32>
    %55 = arith.addf %44, %54 : vector<256x32xf32>
    %c23 = arith.constant 23 : index
    %c0_25 = arith.constant 0 : index
    %56 = vector.load %arg17[%c23, %c0_25] : memref<304x8xf32, #tpu.memory_space<vmem>>, vector<256x8xf32>
    %cst_26 = arith.constant 0.000000e+00 : f32
    %57 = vector.shape_cast %18 : vector<256x1xi1> to vector<256x1xi1>
    %58 = vector.broadcast %57 : vector<256x1xi1> to vector<256x8xi1>
    %59 = vector.broadcast %cst_26 : f32 to vector<256x8xf32>
    %60 = arith.select %58, %56, %59 : vector<256x8xi1>, vector<256x8xf32>
    %61 = arith.truncf %60 : vector<256x8xf32> to vector<256x8xbf16>
    %c3 = arith.constant 3 : index
    %c0_27 = arith.constant 0 : index
    %c0_28 = arith.constant 0 : index
    %62 = vector.load %arg2[%c3, %c0_27, %c0_28] : memref<9x8x32xf32, #tpu.memory_space<vmem>>, vector<1x8x32xf32>
    %63 = vector.shape_cast %62 : vector<1x8x32xf32> to vector<8x32xf32>
    %64 = arith.truncf %63 : vector<8x32xf32> to vector<8x32xbf16>
    %cst_29 = arith.constant dense<0.000000e+00> : vector<256x32xf32>
    %65 = tpu.matmul %61, %64, %cst_29 {dimension_numbers = #tpu.dot_dimension_numbers<[1], [0], [0], [1], [0, 0, 1, 1], [], []>} : vector<256x8xbf16>, vector<8x32xbf16>, vector<256x32xf32> -> vector<256x32xf32>
    %66 = arith.addf %55, %65 : vector<256x32xf32>
    %c24_30 = arith.constant 24 : index
    %c0_31 = arith.constant 0 : index
    %67 = vector.load %arg17[%c24_30, %c0_31] : memref<304x8xf32, #tpu.memory_space<vmem>>, vector<256x8xf32>
    %68 = arith.truncf %67 : vector<256x8xf32> to vector<256x8xbf16>
    %c4 = arith.constant 4 : index
    %c0_32 = arith.constant 0 : index
    %c0_33 = arith.constant 0 : index
    %69 = vector.load %arg2[%c4, %c0_32, %c0_33] : memref<9x8x32xf32, #tpu.memory_space<vmem>>, vector<1x8x32xf32>
    %70 = vector.shape_cast %69 : vector<1x8x32xf32> to vector<8x32xf32>
    %71 = arith.truncf %70 : vector<8x32xf32> to vector<8x32xbf16>
    %cst_34 = arith.constant dense<0.000000e+00> : vector<256x32xf32>
    %72 = tpu.matmul %68, %71, %cst_34 {dimension_numbers = #tpu.dot_dimension_numbers<[1], [0], [0], [1], [0, 0, 1, 1], [], []>} : vector<256x8xbf16>, vector<8x32xbf16>, vector<256x32xf32> -> vector<256x32xf32>
    %73 = arith.addf %66, %72 : vector<256x32xf32>
    %c25 = arith.constant 25 : index
    %c0_35 = arith.constant 0 : index
    %74 = vector.load %arg17[%c25, %c0_35] : memref<304x8xf32, #tpu.memory_space<vmem>>, vector<256x8xf32>
    %cst_36 = arith.constant 0.000000e+00 : f32
    %75 = vector.shape_cast %20 : vector<256x1xi1> to vector<256x1xi1>
    %76 = vector.broadcast %75 : vector<256x1xi1> to vector<256x8xi1>
    %77 = vector.broadcast %cst_36 : f32 to vector<256x8xf32>
    %78 = arith.select %76, %74, %77 : vector<256x8xi1>, vector<256x8xf32>
    %79 = arith.truncf %78 : vector<256x8xf32> to vector<256x8xbf16>
    %c5 = arith.constant 5 : index
    %c0_37 = arith.constant 0 : index
    %c0_38 = arith.constant 0 : index
    %80 = vector.load %arg2[%c5, %c0_37, %c0_38] : memref<9x8x32xf32, #tpu.memory_space<vmem>>, vector<1x8x32xf32>
    %81 = vector.shape_cast %80 : vector<1x8x32xf32> to vector<8x32xf32>
    %82 = arith.truncf %81 : vector<8x32xf32> to vector<8x32xbf16>
    %cst_39 = arith.constant dense<0.000000e+00> : vector<256x32xf32>
    %83 = tpu.matmul %79, %82, %cst_39 {dimension_numbers = #tpu.dot_dimension_numbers<[1], [0], [0], [1], [0, 0, 1, 1], [], []>} : vector<256x8xbf16>, vector<8x32xbf16>, vector<256x32xf32> -> vector<256x32xf32>
    %84 = arith.addf %73, %83 : vector<256x32xf32>
    %c39 = arith.constant 39 : index
    %c0_40 = arith.constant 0 : index
    %85 = vector.load %arg17[%c39, %c0_40] : memref<304x8xf32, #tpu.memory_space<vmem>>, vector<256x8xf32>
    %cst_41 = arith.constant 0.000000e+00 : f32
    %86 = vector.shape_cast %18 : vector<256x1xi1> to vector<256x1xi1>
    %87 = vector.broadcast %86 : vector<256x1xi1> to vector<256x8xi1>
    %88 = vector.broadcast %cst_41 : f32 to vector<256x8xf32>
    %89 = arith.select %87, %85, %88 : vector<256x8xi1>, vector<256x8xf32>
    %90 = arith.truncf %89 : vector<256x8xf32> to vector<256x8xbf16>
    %c6 = arith.constant 6 : index
    %c0_42 = arith.constant 0 : index
    %c0_43 = arith.constant 0 : index
    %91 = vector.load %arg2[%c6, %c0_42, %c0_43] : memref<9x8x32xf32, #tpu.memory_space<vmem>>, vector<1x8x32xf32>
    %92 = vector.shape_cast %91 : vector<1x8x32xf32> to vector<8x32xf32>
    %93 = arith.truncf %92 : vector<8x32xf32> to vector<8x32xbf16>
    %cst_44 = arith.constant dense<0.000000e+00> : vector<256x32xf32>
    %94 = tpu.matmul %90, %93, %cst_44 {dimension_numbers = #tpu.dot_dimension_numbers<[1], [0], [0], [1], [0, 0, 1, 1], [], []>} : vector<256x8xbf16>, vector<8x32xbf16>, vector<256x32xf32> -> vector<256x32xf32>
    %95 = arith.addf %84, %94 : vector<256x32xf32>
    %c40 = arith.constant 40 : index
    %c0_45 = arith.constant 0 : index
    %96 = vector.load %arg17[%c40, %c0_45] : memref<304x8xf32, #tpu.memory_space<vmem>>, vector<256x8xf32>
    %97 = arith.truncf %96 : vector<256x8xf32> to vector<256x8xbf16>
    %c7_46 = arith.constant 7 : index
    %c0_47 = arith.constant 0 : index
    %c0_48 = arith.constant 0 : index
    %98 = vector.load %arg2[%c7_46, %c0_47, %c0_48] : memref<9x8x32xf32, #tpu.memory_space<vmem>>, vector<1x8x32xf32>
    %99 = vector.shape_cast %98 : vector<1x8x32xf32> to vector<8x32xf32>
    %100 = arith.truncf %99 : vector<8x32xf32> to vector<8x32xbf16>
    %cst_49 = arith.constant dense<0.000000e+00> : vector<256x32xf32>
    %101 = tpu.matmul %97, %100, %cst_49 {dimension_numbers = #tpu.dot_dimension_numbers<[1], [0], [0], [1], [0, 0, 1, 1], [], []>} : vector<256x8xbf16>, vector<8x32xbf16>, vector<256x32xf32> -> vector<256x32xf32>
    %102 = arith.addf %95, %101 : vector<256x32xf32>
    %c41 = arith.constant 41 : index
    %c0_50 = arith.constant 0 : index
    %103 = vector.load %arg17[%c41, %c0_50] : memref<304x8xf32, #tpu.memory_space<vmem>>, vector<256x8xf32>
    %cst_51 = arith.constant 0.000000e+00 : f32
    %104 = vector.shape_cast %20 : vector<256x1xi1> to vector<256x1xi1>
    %105 = vector.broadcast %104 : vector<256x1xi1> to vector<256x8xi1>
    %106 = vector.broadcast %cst_51 : f32 to vector<256x8xf32>
    %107 = arith.select %105, %103, %106 : vector<256x8xi1>, vector<256x8xf32>
    %108 = arith.truncf %107 : vector<256x8xf32> to vector<256x8xbf16>
    %c8_52 = arith.constant 8 : index
    %c0_53 = arith.constant 0 : index
    %c0_54 = arith.constant 0 : index
    %109 = vector.load %arg2[%c8_52, %c0_53, %c0_54] : memref<9x8x32xf32, #tpu.memory_space<vmem>>, vector<1x8x32xf32>
    %110 = vector.shape_cast %109 : vector<1x8x32xf32> to vector<8x32xf32>
    %111 = arith.truncf %110 : vector<8x32xf32> to vector<8x32xbf16>
    %cst_55 = arith.constant dense<0.000000e+00> : vector<256x32xf32>
    %112 = tpu.matmul %108, %111, %cst_55 {dimension_numbers = #tpu.dot_dimension_numbers<[1], [0], [0], [1], [0, 0, 1, 1], [], []>} : vector<256x8xbf16>, vector<8x32xbf16>, vector<256x32xf32> -> vector<256x32xf32>
    %113 = arith.addf %102, %112 : vector<256x32xf32>
    %c0_56 = arith.constant 0 : index
    %c0_57 = arith.constant 0 : index
    %114 = vector.load %arg3[%c0_56, %c0_57] : memref<1x32xf32, #tpu.memory_space<vmem>>, vector<1x32xf32>
    %115 = vector.broadcast %114 : vector<1x32xf32> to vector<256x32xf32>
    %116 = arith.mulf %113, %115 : vector<256x32xf32>
    %c0_58 = arith.constant 0 : index
    %c0_59 = arith.constant 0 : index
    %117 = vector.load %arg4[%c0_58, %c0_59] : memref<1x32xf32, #tpu.memory_space<vmem>>, vector<1x32xf32>
    %118 = vector.broadcast %117 : vector<1x32xf32> to vector<256x32xf32>
    %119 = arith.addf %116, %118 : vector<256x32xf32>
    %cst_60 = arith.constant 0.000000e+00 : f32
    %120 = vector.broadcast %cst_60 : f32 to vector<256x32xf32>
    %121 = arith.maximumf %119, %120 : vector<256x32xf32>
    %122 = arith.truncf %121 : vector<256x32xf32> to vector<256x32xbf16>
    %c0_61 = arith.constant 0 : index
    %c0_62 = arith.constant 0 : index
    %123 = vector.load %arg5[%c0_61, %c0_62] : memref<32x16xf32, #tpu.memory_space<vmem>>, vector<32x16xf32>
    %124 = arith.truncf %123 : vector<32x16xf32> to vector<32x16xbf16>
    %cst_63 = arith.constant dense<0.000000e+00> : vector<256x16xf32>
    %125 = tpu.matmul %122, %124, %cst_63 {dimension_numbers = #tpu.dot_dimension_numbers<[1], [0], [0], [1], [0, 0, 1, 1], [], []>} : vector<256x32xbf16>, vector<32x16xbf16>, vector<256x16xf32> -> vector<256x16xf32>
    %c0_64 = arith.constant 0 : index
    %c0_65 = arith.constant 0 : index
    %126 = vector.load %arg6[%c0_64, %c0_65] : memref<1x16xf32, #tpu.memory_space<vmem>>, vector<1x16xf32>
    %127 = vector.broadcast %126 : vector<1x16xf32> to vector<256x16xf32>
    %128 = arith.mulf %125, %127 : vector<256x16xf32>
    %c0_66 = arith.constant 0 : index
    %c0_67 = arith.constant 0 : index
    %129 = vector.load %arg7[%c0_66, %c0_67] : memref<1x16xf32, #tpu.memory_space<vmem>>, vector<1x16xf32>
    %130 = vector.broadcast %129 : vector<1x16xf32> to vector<256x16xf32>
    %131 = arith.addf %128, %130 : vector<256x16xf32>
    %cst_68 = arith.constant 0.000000e+00 : f32
    %132 = vector.broadcast %cst_68 : f32 to vector<256x16xf32>
    %133 = arith.maximumf %131, %132 : vector<256x16xf32>
    %cst_69 = arith.constant 0.000000e+00 : f32
    %134 = vector.broadcast %cst_69 : f32 to vector<304x16xf32>
    %c0_70 = arith.constant 0 : index
    %c0_71 = arith.constant 0 : index
    %135 = vector.load %arg18[%c0_70, %c0_71] : memref<304x16xf32, #tpu.memory_space<vmem>>, vector<304x16xf32>
    tpu.vector_store %arg18[%c0_70, %c0_71], %134 {strides = array<i32>} : memref<304x16xf32, #tpu.memory_space<vmem>>, vector<304x16xf32>,
    %c24_72 = arith.constant 24 : index
    %c0_73 = arith.constant 0 : index
    %136 = vector.load %arg18[%c24_72, %c0_73] : memref<304x16xf32, #tpu.memory_space<vmem>>, vector<256x16xf32>
    tpu.vector_store %arg18[%c24_72, %c0_73], %133 {strides = array<i32>} : memref<304x16xf32, #tpu.memory_space<vmem>>, vector<256x16xf32>,
    %cst_74 = arith.constant 0.000000e+00 : f32
    %137 = vector.broadcast %cst_74 : f32 to vector<256x16xf32>
    %c7_75 = arith.constant 7 : index
    %c0_76 = arith.constant 0 : index
    %138 = vector.load %arg18[%c7_75, %c0_76] : memref<304x16xf32, #tpu.memory_space<vmem>>, vector<256x16xf32>
    %cst_77 = arith.constant 0.000000e+00 : f32
    %139 = vector.shape_cast %18 : vector<256x1xi1> to vector<256x1xi1>
    %140 = vector.broadcast %139 : vector<256x1xi1> to vector<256x16xi1>
    %141 = vector.broadcast %cst_77 : f32 to vector<256x16xf32>
    %142 = arith.select %140, %138, %141 : vector<256x16xi1>, vector<256x16xf32>
    %143 = arith.truncf %142 : vector<256x16xf32> to vector<256x16xbf16>
    %c0_78 = arith.constant 0 : index
    %c0_79 = arith.constant 0 : index
    %c0_80 = arith.constant 0 : index
    %144 = vector.load %arg8[%c0_78, %c0_79, %c0_80] : memref<9x16x16xf32, #tpu.memory_space<vmem>>, vector<1x16x16xf32>
    %145 = vector.shape_cast %144 : vector<1x16x16xf32> to vector<16x16xf32>
    %146 = arith.truncf %145 : vector<16x16xf32> to vector<16x16xbf16>
    %cst_81 = arith.constant dense<0.000000e+00> : vector<256x16xf32>
    %147 = tpu.matmul %143, %146, %cst_81 {dimension_numbers = #tpu.dot_dimension_numbers<[1], [0], [0], [1], [0, 0, 1, 1], [], []>} : vector<256x16xbf16>, vector<16x16xbf16>, vector<256x16xf32> -> vector<256x16xf32>
    %148 = arith.addf %137, %147 : vector<256x16xf32>
    %c8_82 = arith.constant 8 : index
    %c0_83 = arith.constant 0 : index
    %149 = vector.load %arg18[%c8_82, %c0_83] : memref<304x16xf32, #tpu.memory_space<vmem>>, vector<256x16xf32>
    %150 = arith.truncf %149 : vector<256x16xf32> to vector<256x16xbf16>
    %c1_84 = arith.constant 1 : index
    %c0_85 = arith.constant 0 : index
    %c0_86 = arith.constant 0 : index
    %151 = vector.load %arg8[%c1_84, %c0_85, %c0_86] : memref<9x16x16xf32, #tpu.memory_space<vmem>>, vector<1x16x16xf32>
    %152 = vector.shape_cast %151 : vector<1x16x16xf32> to vector<16x16xf32>
    %153 = arith.truncf %152 : vector<16x16xf32> to vector<16x16xbf16>
    %cst_87 = arith.constant dense<0.000000e+00> : vector<256x16xf32>
    %154 = tpu.matmul %150, %153, %cst_87 {dimension_numbers = #tpu.dot_dimension_numbers<[1], [0], [0], [1], [0, 0, 1, 1], [], []>} : vector<256x16xbf16>, vector<16x16xbf16>, vector<256x16xf32> -> vector<256x16xf32>
    %155 = arith.addf %148, %154 : vector<256x16xf32>
    %c9_88 = arith.constant 9 : index
    %c0_89 = arith.constant 0 : index
    %156 = vector.load %arg18[%c9_88, %c0_89] : memref<304x16xf32, #tpu.memory_space<vmem>>, vector<256x16xf32>
    %cst_90 = arith.constant 0.000000e+00 : f32
    %157 = vector.shape_cast %20 : vector<256x1xi1> to vector<256x1xi1>
    %158 = vector.broadcast %157 : vector<256x1xi1> to vector<256x16xi1>
    %159 = vector.broadcast %cst_90 : f32 to vector<256x16xf32>
    %160 = arith.select %158, %156, %159 : vector<256x16xi1>, vector<256x16xf32>
    %161 = arith.truncf %160 : vector<256x16xf32> to vector<256x16xbf16>
    %c2_91 = arith.constant 2 : index
    %c0_92 = arith.constant 0 : index
    %c0_93 = arith.constant 0 : index
    %162 = vector.load %arg8[%c2_91, %c0_92, %c0_93] : memref<9x16x16xf32, #tpu.memory_space<vmem>>, vector<1x16x16xf32>
    %163 = vector.shape_cast %162 : vector<1x16x16xf32> to vector<16x16xf32>
    %164 = arith.truncf %163 : vector<16x16xf32> to vector<16x16xbf16>
    %cst_94 = arith.constant dense<0.000000e+00> : vector<256x16xf32>
    %165 = tpu.matmul %161, %164, %cst_94 {dimension_numbers = #tpu.dot_dimension_numbers<[1], [0], [0], [1], [0, 0, 1, 1], [], []>} : vector<256x16xbf16>, vector<16x16xbf16>, vector<256x16xf32> -> vector<256x16xf32>
    %166 = arith.addf %155, %165 : vector<256x16xf32>
    %c23_95 = arith.constant 23 : index
    %c0_96 = arith.constant 0 : index
    %167 = vector.load %arg18[%c23_95, %c0_96] : memref<304x16xf32, #tpu.memory_space<vmem>>, vector<256x16xf32>
    %cst_97 = arith.constant 0.000000e+00 : f32
    %168 = vector.shape_cast %18 : vector<256x1xi1> to vector<256x1xi1>
    %169 = vector.broadcast %168 : vector<256x1xi1> to vector<256x16xi1>
    %170 = vector.broadcast %cst_97 : f32 to vector<256x16xf32>
    %171 = arith.select %169, %167, %170 : vector<256x16xi1>, vector<256x16xf32>
    %172 = arith.truncf %171 : vector<256x16xf32> to vector<256x16xbf16>
    %c3_98 = arith.constant 3 : index
    %c0_99 = arith.constant 0 : index
    %c0_100 = arith.constant 0 : index
    %173 = vector.load %arg8[%c3_98, %c0_99, %c0_100] : memref<9x16x16xf32, #tpu.memory_space<vmem>>, vector<1x16x16xf32>
    %174 = vector.shape_cast %173 : vector<1x16x16xf32> to vector<16x16xf32>
    %175 = arith.truncf %174 : vector<16x16xf32> to vector<16x16xbf16>
    %cst_101 = arith.constant dense<0.000000e+00> : vector<256x16xf32>
    %176 = tpu.matmul %172, %175, %cst_101 {dimension_numbers = #tpu.dot_dimension_numbers<[1], [0], [0], [1], [0, 0, 1, 1], [], []>} : vector<256x16xbf16>, vector<16x16xbf16>, vector<256x16xf32> -> vector<256x16xf32>
    %177 = arith.addf %166, %176 : vector<256x16xf32>
    %c24_102 = arith.constant 24 : index
    %c0_103 = arith.constant 0 : index
    %178 = vector.load %arg18[%c24_102, %c0_103] : memref<304x16xf32, #tpu.memory_space<vmem>>, vector<256x16xf32>
    %179 = arith.truncf %178 : vector<256x16xf32> to vector<256x16xbf16>
    %c4_104 = arith.constant 4 : index
    %c0_105 = arith.constant 0 : index
    %c0_106 = arith.constant 0 : index
    %180 = vector.load %arg8[%c4_104, %c0_105, %c0_106] : memref<9x16x16xf32, #tpu.memory_space<vmem>>, vector<1x16x16xf32>
    %181 = vector.shape_cast %180 : vector<1x16x16xf32> to vector<16x16xf32>
    %182 = arith.truncf %181 : vector<16x16xf32> to vector<16x16xbf16>
    %cst_107 = arith.constant dense<0.000000e+00> : vector<256x16xf32>
    %183 = tpu.matmul %179, %182, %cst_107 {dimension_numbers = #tpu.dot_dimension_numbers<[1], [0], [0], [1], [0, 0, 1, 1], [], []>} : vector<256x16xbf16>, vector<16x16xbf16>, vector<256x16xf32> -> vector<256x16xf32>
    %184 = arith.addf %177, %183 : vector<256x16xf32>
    %c25_108 = arith.constant 25 : index
    %c0_109 = arith.constant 0 : index
    %185 = vector.load %arg18[%c25_108, %c0_109] : memref<304x16xf32, #tpu.memory_space<vmem>>, vector<256x16xf32>
    %cst_110 = arith.constant 0.000000e+00 : f32
    %186 = vector.shape_cast %20 : vector<256x1xi1> to vector<256x1xi1>
    %187 = vector.broadcast %186 : vector<256x1xi1> to vector<256x16xi1>
    %188 = vector.broadcast %cst_110 : f32 to vector<256x16xf32>
    %189 = arith.select %187, %185, %188 : vector<256x16xi1>, vector<256x16xf32>
    %190 = arith.truncf %189 : vector<256x16xf32> to vector<256x16xbf16>
    %c5_111 = arith.constant 5 : index
    %c0_112 = arith.constant 0 : index
    %c0_113 = arith.constant 0 : index
    %191 = vector.load %arg8[%c5_111, %c0_112, %c0_113] : memref<9x16x16xf32, #tpu.memory_space<vmem>>, vector<1x16x16xf32>
    %192 = vector.shape_cast %191 : vector<1x16x16xf32> to vector<16x16xf32>
    %193 = arith.truncf %192 : vector<16x16xf32> to vector<16x16xbf16>
    %cst_114 = arith.constant dense<0.000000e+00> : vector<256x16xf32>
    %194 = tpu.matmul %190, %193, %cst_114 {dimension_numbers = #tpu.dot_dimension_numbers<[1], [0], [0], [1], [0, 0, 1, 1], [], []>} : vector<256x16xbf16>, vector<16x16xbf16>, vector<256x16xf32> -> vector<256x16xf32>
    %195 = arith.addf %184, %194 : vector<256x16xf32>
    %c39_115 = arith.constant 39 : index
    %c0_116 = arith.constant 0 : index
    %196 = vector.load %arg18[%c39_115, %c0_116] : memref<304x16xf32, #tpu.memory_space<vmem>>, vector<256x16xf32>
    %cst_117 = arith.constant 0.000000e+00 : f32
    %197 = vector.shape_cast %18 : vector<256x1xi1> to vector<256x1xi1>
    %198 = vector.broadcast %197 : vector<256x1xi1> to vector<256x16xi1>
    %199 = vector.broadcast %cst_117 : f32 to vector<256x16xf32>
    %200 = arith.select %198, %196, %199 : vector<256x16xi1>, vector<256x16xf32>
    %201 = arith.truncf %200 : vector<256x16xf32> to vector<256x16xbf16>
    %c6_118 = arith.constant 6 : index
    %c0_119 = arith.constant 0 : index
    %c0_120 = arith.constant 0 : index
    %202 = vector.load %arg8[%c6_118, %c0_119, %c0_120] : memref<9x16x16xf32, #tpu.memory_space<vmem>>, vector<1x16x16xf32>
    %203 = vector.shape_cast %202 : vector<1x16x16xf32> to vector<16x16xf32>
    %204 = arith.truncf %203 : vector<16x16xf32> to vector<16x16xbf16>
    %cst_121 = arith.constant dense<0.000000e+00> : vector<256x16xf32>
    %205 = tpu.matmul %201, %204, %cst_121 {dimension_numbers = #tpu.dot_dimension_numbers<[1], [0], [0], [1], [0, 0, 1, 1], [], []>} : vector<256x16xbf16>, vector<16x16xbf16>, vector<256x16xf32> -> vector<256x16xf32>
    %206 = arith.addf %195, %205 : vector<256x16xf32>
    %c40_122 = arith.constant 40 : index
    %c0_123 = arith.constant 0 : index
    %207 = vector.load %arg18[%c40_122, %c0_123] : memref<304x16xf32, #tpu.memory_space<vmem>>, vector<256x16xf32>
    %208 = arith.truncf %207 : vector<256x16xf32> to vector<256x16xbf16>
    %c7_124 = arith.constant 7 : index
    %c0_125 = arith.constant 0 : index
    %c0_126 = arith.constant 0 : index
    %209 = vector.load %arg8[%c7_124, %c0_125, %c0_126] : memref<9x16x16xf32, #tpu.memory_space<vmem>>, vector<1x16x16xf32>
    %210 = vector.shape_cast %209 : vector<1x16x16xf32> to vector<16x16xf32>
    %211 = arith.truncf %210 : vector<16x16xf32> to vector<16x16xbf16>
    %cst_127 = arith.constant dense<0.000000e+00> : vector<256x16xf32>
    %212 = tpu.matmul %208, %211, %cst_127 {dimension_numbers = #tpu.dot_dimension_numbers<[1], [0], [0], [1], [0, 0, 1, 1], [], []>} : vector<256x16xbf16>, vector<16x16xbf16>, vector<256x16xf32> -> vector<256x16xf32>
    %213 = arith.addf %206, %212 : vector<256x16xf32>
    %c41_128 = arith.constant 41 : index
    %c0_129 = arith.constant 0 : index
    %214 = vector.load %arg18[%c41_128, %c0_129] : memref<304x16xf32, #tpu.memory_space<vmem>>, vector<256x16xf32>
    %cst_130 = arith.constant 0.000000e+00 : f32
    %215 = vector.shape_cast %20 : vector<256x1xi1> to vector<256x1xi1>
    %216 = vector.broadcast %215 : vector<256x1xi1> to vector<256x16xi1>
    %217 = vector.broadcast %cst_130 : f32 to vector<256x16xf32>
    %218 = arith.select %216, %214, %217 : vector<256x16xi1>, vector<256x16xf32>
    %219 = arith.truncf %218 : vector<256x16xf32> to vector<256x16xbf16>
    %c8_131 = arith.constant 8 : index
    %c0_132 = arith.constant 0 : index
    %c0_133 = arith.constant 0 : index
    %220 = vector.load %arg8[%c8_131, %c0_132, %c0_133] : memref<9x16x16xf32, #tpu.memory_space<vmem>>, vector<1x16x16xf32>
    %221 = vector.shape_cast %220 : vector<1x16x16xf32> to vector<16x16xf32>
    %222 = arith.truncf %221 : vector<16x16xf32> to vector<16x16xbf16>
    %cst_134 = arith.constant dense<0.000000e+00> : vector<256x16xf32>
    %223 = tpu.matmul %219, %222, %cst_134 {dimension_numbers = #tpu.dot_dimension_numbers<[1], [0], [0], [1], [0, 0, 1, 1], [], []>} : vector<256x16xbf16>, vector<16x16xbf16>, vector<256x16xf32> -> vector<256x16xf32>
    %224 = arith.addf %213, %223 : vector<256x16xf32>
    %c0_135 = arith.constant 0 : index
    %c0_136 = arith.constant 0 : index
    %225 = vector.load %arg9[%c0_135, %c0_136] : memref<1x16xf32, #tpu.memory_space<vmem>>, vector<1x16xf32>
    %226 = vector.broadcast %225 : vector<1x16xf32> to vector<256x16xf32>
    %227 = arith.mulf %224, %226 : vector<256x16xf32>
    %c0_137 = arith.constant 0 : index
    %c0_138 = arith.constant 0 : index
    %228 = vector.load %arg10[%c0_137, %c0_138] : memref<1x16xf32, #tpu.memory_space<vmem>>, vector<1x16xf32>
    %229 = vector.broadcast %228 : vector<1x16xf32> to vector<256x16xf32>
    %230 = arith.addf %227, %229 : vector<256x16xf32>
    %cst_139 = arith.constant 0.000000e+00 : f32
    %231 = vector.broadcast %cst_139 : f32 to vector<256x16xf32>
    %232 = arith.maximumf %230, %231 : vector<256x16xf32>
    %233 = arith.truncf %232 : vector<256x16xf32> to vector<256x16xbf16>
    %c0_140 = arith.constant 0 : index
    %c0_141 = arith.constant 0 : index
    %234 = vector.load %arg11[%c0_140, %c0_141] : memref<16x32xf32, #tpu.memory_space<vmem>>, vector<16x32xf32>
    %235 = arith.truncf %234 : vector<16x32xf32> to vector<16x32xbf16>
    %cst_142 = arith.constant dense<0.000000e+00> : vector<256x32xf32>
    %236 = tpu.matmul %233, %235, %cst_142 {dimension_numbers = #tpu.dot_dimension_numbers<[1], [0], [0], [1], [0, 0, 1, 1], [], []>} : vector<256x16xbf16>, vector<16x32xbf16>, vector<256x32xf32> -> vector<256x32xf32>
    %c0_143 = arith.constant 0 : index
    %c0_144 = arith.constant 0 : index
    %237 = vector.load %arg12[%c0_143, %c0_144] : memref<1x32xf32, #tpu.memory_space<vmem>>, vector<1x32xf32>
    %238 = vector.broadcast %237 : vector<1x32xf32> to vector<256x32xf32>
    %239 = arith.mulf %236, %238 : vector<256x32xf32>
    %c0_145 = arith.constant 0 : index
    %c0_146 = arith.constant 0 : index
    %240 = vector.load %arg13[%c0_145, %c0_146] : memref<1x32xf32, #tpu.memory_space<vmem>>, vector<1x32xf32>
    %241 = vector.broadcast %240 : vector<1x32xf32> to vector<256x32xf32>
    %242 = arith.addf %239, %241 : vector<256x32xf32>
    %243 = arith.addf %242, %121 : vector<256x32xf32>
    %cst_147 = arith.constant 0.000000e+00 : f32
    %244 = vector.broadcast %cst_147 : f32 to vector<256x32xf32>
    %245 = arith.maximumf %243, %244 : vector<256x32xf32>
    %c0_148 = arith.constant 0 : index
    %c0_149 = arith.constant 0 : index
    %246 = vector.load %arg14[%c0_148, %c0_149] : memref<32x3xf32, #tpu.memory_space<vmem>>, vector<32x3xf32>
    %cst_150 = arith.constant dense<0.000000e+00> : vector<256x3xf32>
    %247 = tpu.matmul %245, %246, %cst_150 {dimension_numbers = #tpu.dot_dimension_numbers<[1], [0], [0], [1], [0, 0, 1, 1], [], []>} : vector<256x32xf32>, vector<32x3xf32>, vector<256x3xf32> -> vector<256x3xf32>
    %cst_151 = arith.constant dense<0.000000e+00> : vector<3xf32>
    %248 = vector.multi_reduction <add>, %247, %cst_151 [0] : vector<256x3xf32> to vector<3xf32>
    %249 = vector.shape_cast %248 : vector<3xf32> to vector<1x3xf32>
    %cst_152 = arith.constant 3.906250e-03 : f32
    %250 = vector.broadcast %cst_152 : f32 to vector<1x3xf32>
    %251 = arith.mulf %249, %250 : vector<1x3xf32>
    %c0_153 = arith.constant 0 : index
    %c0_154 = arith.constant 0 : index
    %252 = vector.load %arg15[%c0_153, %c0_154] : memref<1x3xf32, #tpu.memory_space<vmem>>, vector<1x3xf32>
    %253 = arith.addf %251, %252 : vector<1x3xf32>
    %c0_155 = arith.constant 0 : index
    %c0_156 = arith.constant 0 : index
    %c0_157 = arith.constant 0 : index
    %254 = vector.load %arg16[%c0_155, %c0_156, %c0_157] : memref<1x1x3xf32, #tpu.memory_space<vmem>>, vector<1x1x3xf32>
    %255 = vector.shape_cast %254 : vector<1x1x3xf32> to vector<1x3xf32>
    %256 = vector.shape_cast %253 : vector<1x3xf32> to vector<1x1x3xf32>
    tpu.vector_store %arg16[%c0_155, %c0_156, %c0_157], %256 {strides = array<i32>} : memref<1x1x3xf32, #tpu.memory_space<vmem>>, vector<1x1x3xf32>,
    return
  }
  func.func @transform_0(%arg0: i32) -> (i32, i32, i32) {
    %c0_i32 = arith.constant 0 : i32
    %c0_i32_0 = arith.constant 0 : i32
    %c0_i32_1 = arith.constant 0 : i32
    return %arg0, %c0_i32, %c0_i32_0 : i32, i32, i32
  }
  func.func @transform_1(%arg0: i32) -> (i32, i32, i32) {
    %c0_i32 = arith.constant 0 : i32
    %c0_i32_0 = arith.constant 0 : i32
    %c0_i32_1 = arith.constant 0 : i32
    %c0_i32_2 = arith.constant 0 : i32
    return %c0_i32, %c0_i32_0, %c0_i32_1 : i32, i32, i32
  }
  func.func @transform_2(%arg0: i32) -> (i32, i32) {
    %c0_i32 = arith.constant 0 : i32
    %c0_i32_0 = arith.constant 0 : i32
    %c0_i32_1 = arith.constant 0 : i32
    return %c0_i32, %c0_i32_0 : i32, i32
  }
  func.func @transform_3(%arg0: i32) -> (i32, i32) {
    %c0_i32 = arith.constant 0 : i32
    %c0_i32_0 = arith.constant 0 : i32
    %c0_i32_1 = arith.constant 0 : i32
    return %c0_i32, %c0_i32_0 : i32, i32
  }
  func.func @transform_4(%arg0: i32) -> (i32, i32) {
    %c0_i32 = arith.constant 0 : i32
    %c0_i32_0 = arith.constant 0 : i32
    %c0_i32_1 = arith.constant 0 : i32
    return %c0_i32, %c0_i32_0 : i32, i32
  }
  func.func @transform_5(%arg0: i32) -> (i32, i32) {
    %c0_i32 = arith.constant 0 : i32
    %c0_i32_0 = arith.constant 0 : i32
    %c0_i32_1 = arith.constant 0 : i32
    return %c0_i32, %c0_i32_0 : i32, i32
  }
  func.func @transform_6(%arg0: i32) -> (i32, i32) {
    %c0_i32 = arith.constant 0 : i32
    %c0_i32_0 = arith.constant 0 : i32
    %c0_i32_1 = arith.constant 0 : i32
    return %c0_i32, %c0_i32_0 : i32, i32
  }
  func.func @transform_7(%arg0: i32) -> (i32, i32, i32) {
    %c0_i32 = arith.constant 0 : i32
    %c0_i32_0 = arith.constant 0 : i32
    %c0_i32_1 = arith.constant 0 : i32
    %c0_i32_2 = arith.constant 0 : i32
    return %c0_i32, %c0_i32_0, %c0_i32_1 : i32, i32, i32
  }
  func.func @transform_8(%arg0: i32) -> (i32, i32) {
    %c0_i32 = arith.constant 0 : i32
    %c0_i32_0 = arith.constant 0 : i32
    %c0_i32_1 = arith.constant 0 : i32
    return %c0_i32, %c0_i32_0 : i32, i32
  }
  func.func @transform_9(%arg0: i32) -> (i32, i32) {
    %c0_i32 = arith.constant 0 : i32
    %c0_i32_0 = arith.constant 0 : i32
    %c0_i32_1 = arith.constant 0 : i32
    return %c0_i32, %c0_i32_0 : i32, i32
  }
  func.func @transform_10(%arg0: i32) -> (i32, i32) {
    %c0_i32 = arith.constant 0 : i32
    %c0_i32_0 = arith.constant 0 : i32
    %c0_i32_1 = arith.constant 0 : i32
    return %c0_i32, %c0_i32_0 : i32, i32
  }
  func.func @transform_11(%arg0: i32) -> (i32, i32) {
    %c0_i32 = arith.constant 0 : i32
    %c0_i32_0 = arith.constant 0 : i32
    %c0_i32_1 = arith.constant 0 : i32
    return %c0_i32, %c0_i32_0 : i32, i32
  }
  func.func @transform_12(%arg0: i32) -> (i32, i32) {
    %c0_i32 = arith.constant 0 : i32
    %c0_i32_0 = arith.constant 0 : i32
    %c0_i32_1 = arith.constant 0 : i32
    return %c0_i32, %c0_i32_0 : i32, i32
  }
  func.func @transform_13(%arg0: i32) -> (i32, i32) {
    %c0_i32 = arith.constant 0 : i32
    %c0_i32_0 = arith.constant 0 : i32
    %c0_i32_1 = arith.constant 0 : i32
    return %c0_i32, %c0_i32_0 : i32, i32
  }
  func.func @transform_14(%arg0: i32) -> (i32, i32) {
    %c0_i32 = arith.constant 0 : i32
    %c0_i32_0 = arith.constant 0 : i32
    %c0_i32_1 = arith.constant 0 : i32
    return %c0_i32, %c0_i32_0 : i32, i32
  }
  func.func @transform_15(%arg0: i32) -> (i32, i32, i32) {
    %c0_i32 = arith.constant 0 : i32
    %c0_i32_0 = arith.constant 0 : i32
    %c0_i32_1 = arith.constant 0 : i32
    return %arg0, %c0_i32, %c0_i32_0 : i32, i32, i32
  }
}

</mosaic_0001>

<llo_original>
// kernel: custom_net_forward.1
$region0: #{custom_net_forward.1}
  #allocation0 [shape = 'u32[]', space=smem, size = 0x4, offset = 0x4, fixed_abs, tag = 'smem constant byte address 0x4 - core index']
  #allocation1 [shape = 'u32[144,128]{1,0:T(1,128)}', space=vmem, size = 0x12000, scoped, tag = 'internal scratch']
  #allocation2 [shape = 'f32[304,8]{1,0:T(8,128)}', space=vmem, size = 0x26000, scoped, tag = 'scratch operand']
  #allocation3 [shape = 'f32[304,16]{1,0:T(8,128)}', space=vmem, size = 0x26000, scoped, tag = 'scratch operand']
  %s0 = inlined_call_operand.vmem [shape: f32[2,256,8], index: 0, kind: input, shape index: {}]
  %s1 = inlined_call_operand.vmem [shape: f32[9,8,32], index: 1, kind: input, shape index: {}]
  %s2 = inlined_call_operand.vmem [shape: f32[1,32], index: 2, kind: input, shape index: {}]
  %s3 = inlined_call_operand.vmem [shape: f32[1,32], index: 3, kind: input, shape index: {}]
  %s4 = inlined_call_operand.vmem [shape: f32[32,16], index: 4, kind: input, shape index: {}]
  %s5 = inlined_call_operand.vmem [shape: f32[1,16], index: 5, kind: input, shape index: {}]
  %s6 = inlined_call_operand.vmem [shape: f32[1,16], index: 6, kind: input, shape index: {}]
  %s7 = inlined_call_operand.vmem [shape: f32[9,16,16], index: 7, kind: input, shape index: {}]
  %s8 = inlined_call_operand.vmem [shape: f32[1,16], index: 8, kind: input, shape index: {}]
  %s9 = inlined_call_operand.vmem [shape: f32[1,16], index: 9, kind: input, shape index: {}]
  %s10 = inlined_call_operand.vmem [shape: f32[16,32], index: 10, kind: input, shape index: {}]
  %s11 = inlined_call_operand.vmem [shape: f32[1,32], index: 11, kind: input, shape index: {}]
  %s12 = inlined_call_operand.vmem [shape: f32[1,32], index: 12, kind: input, shape index: {}]
  %s13 = inlined_call_operand.vmem [shape: f32[32,3], index: 13, kind: input, shape index: {}]
  %s14 = inlined_call_operand.vmem [shape: f32[1,3], index: 14, kind: input, shape index: {}]
  %s15 = inlined_call_operand.hbm [shape: f32[2,1,3], index: 15, kind: output, shape index: {}]
  %s16 = sld [smem:[#allocation0]]
  $region93: #{custom_net_forward.1} parent=0
    _
  %s18 = ssub.s32 1, %s16
  %s19 = scalar_select 0, %s18, %s16
  $region1: #{custom_net_forward.1} parent=0
    #allocation4 [shape = 'u8[1024]{0}', space=vmem, size = 0x400, scoped, tag = 'output window, operand 0']
    #allocation5 [shape = 's32[2]{0}', space=sflag, size = 0x8, scoped, tag = 'scoped memory for custom_net_forward.1']
    %20 = vsyncpa [#allocation5], 0
    %s21 = scalar_lea.sflag [#allocation5], 1
    %22 = vsyncpa %s21, 0
    loop: start=0, step=1, limit=4
    $region2: #{custom_net_forward.1} parent=1 // loop_pre_header
      _
    $region3: #{custom_net_forward.1} parent=1 // loop_header
      %s24 = sphi 0, %s28
      %p25 = scmp.ge.s32.totalorder %s24, 4
      %s34 = sphi 0, %s36
      %s37 = sphi 0, %s34
      %s38 = sphi 0, %s37
      %s54 = sphi 0, %s38
      %s58 = sphi 0, %s58
      %s60 = sphi 0, %s58
      %s61 = sphi 0, %s60
      %s75 = sphi 0, %s61
      %s79 = sphi 0, %s79
      %s81 = sphi 0, %s79
      %s82 = sphi 0, %s81
      %s96 = sphi 0, %s82
      %s100 = sphi 0, %s100
      %s102 = sphi 0, %s100
      %s103 = sphi 0, %s102
      %s117 = sphi 0, %s103
      %s121 = sphi 0, %s121
      %s123 = sphi 0, %s121
      %s124 = sphi 0, %s123
      %s138 = sphi 0, %s124
      %s142 = sphi 0, %s142
      %s144 = sphi 0, %s142
      %s145 = sphi 0, %s144
      %s159 = sphi 0, %s145
      %s163 = sphi 0, %s163
      %s165 = sphi 0, %s163
      %s166 = sphi 0, %s165
      %s180 = sphi 0, %s166
      %s184 = sphi 0, %s184
      %s186 = sphi 0, %s184
      %s187 = sphi 0, %s186
      %s201 = sphi 0, %s187
      %s205 = sphi 0, %s205
      %s207 = sphi 0, %s205
      %s208 = sphi 0, %s207
      %s222 = sphi 0, %s208
      %s226 = sphi 0, %s226
      %s228 = sphi 0, %s226
      %s229 = sphi 0, %s228
      %s243 = sphi 0, %s229
      %s247 = sphi 0, %s247
      %s249 = sphi 0, %s247
      %s250 = sphi 0, %s249
      %s264 = sphi 0, %s250
      %s268 = sphi 0, %s268
      %s270 = sphi 0, %s268
      %s271 = sphi 0, %s270
      %s285 = sphi 0, %s271
      %s289 = sphi 0, %s289
      %s291 = sphi 0, %s289
      %s292 = sphi 0, %s291
      %s306 = sphi 0, %s292
      %s310 = sphi 0, %s310
      %s312 = sphi 0, %s310
      %s313 = sphi 0, %s312
      %s327 = sphi 0, %s313
      %s331 = sphi 0, %s331
      %s333 = sphi 0, %s331
      %s334 = sphi 0, %s333
      %s348 = sphi 0, %s334
      %s354 = sphi 0, %s356
      %s357 = sphi 0, %s354
      %s358 = sphi 0, %s357
      %s374 = sphi 0, %s358
    $region4: #{custom_net_forward.1} parent=1 // loop_header_branch
      %27 = sbr.rel (%p25) target = $region8
    $region5: #{custom_net_forward.1} parent=1 // loop_body
      %s29 = ssub.s32 %s24, 1
      %s30 = ssub.s32 %s24, 2
      %s31 = sadd.s32 %s24, 1
      %s32 = ssub.s32 %s24, %s31
      %p33 = scmp.eq.s32.totalorder %s32, 0
      %s35 = sadd.s32 %s34, 1
      %s36 = scalar_select %p33, %s34, %s35
      %p39 = pneg %p33
      %p40 = scmp.eq.s32.totalorder %s24, 1
      %p41 = por %p39, %p40
      %p42 = scmp.ne.s32.totalorder %s34, %s37
      %p43 = scmp.eq.s32.totalorder %s24, 0
      %p44 = por %p42, %p43
      %p45 = scmp.ne.s32.totalorder %s34, %s37
      %p46 = scmp.eq.s32.totalorder %s29, 1
      %p47 = por %p45, %p46
      %p48 = scmp.ne.s32.totalorder %s37, %s38
      %p49 = scmp.eq.s32.totalorder %s29, 0
      %p50 = por %p48, %p49
      %p51 = scmp.ne.s32.totalorder %s37, %s38
      %p52 = scmp.eq.s32.totalorder %s30, 1
      %p53 = por %p51, %p52
      %p55 = scmp.ne.s32.totalorder %s38, %s54
      %p56 = scmp.eq.s32.totalorder %s30, 0
      %p57 = por %p55, %p56
      %s59 = sadd.s32 %s58, 1
      %p62 = scmp.eq.s32.totalorder %s24, 1
      %p63 = scmp.ne.s32.totalorder %s58, %s60
      %p64 = scmp.eq.s32.totalorder %s24, 0
      %p65 = por %p63, %p64
      %p66 = scmp.ne.s32.totalorder %s58, %s60
      %p67 = scmp.eq.s32.totalorder %s29, 1
      %p68 = por %p66, %p67
      %p69 = scmp.ne.s32.totalorder %s60, %s61
      %p70 = scmp.eq.s32.totalorder %s29, 0
      %p71 = por %p69, %p70
      %p72 = scmp.ne.s32.totalorder %s60, %s61
      %p73 = scmp.eq.s32.totalorder %s30, 1
      %p74 = por %p72, %p73
      %p76 = scmp.ne.s32.totalorder %s61, %s75
      %p77 = scmp.eq.s32.totalorder %s30, 0
      %p78 = por %p76, %p77
      %s80 = sadd.s32 %s79, 1
      %p83 = scmp.eq.s32.totalorder %s24, 1
      %p84 = scmp.ne.s32.totalorder %s79, %s81
      %p85 = scmp.eq.s32.totalorder %s24, 0
      %p86 = por %p84, %p85
      %p87 = scmp.ne.s32.totalorder %s79, %s81
      %p88 = scmp.eq.s32.totalorder %s29, 1
      %p89 = por %p87, %p88
      %p90 = scmp.ne.s32.totalorder %s81, %s82
      %p91 = scmp.eq.s32.totalorder %s29, 0
      %p92 = por %p90, %p91
      %p93 = scmp.ne.s32.totalorder %s81, %s82
      %p94 = scmp.eq.s32.totalorder %s30, 1
      %p95 = por %p93, %p94
      %p97 = scmp.ne.s32.totalorder %s82, %s96
      %p98 = scmp.eq.s32.totalorder %s30, 0
      %p99 = por %p97, %p98
      %s101 = sadd.s32 %s100, 1
      %p104 = scmp.eq.s32.totalorder %s24, 1
      %p105 = scmp.ne.s32.totalorder %s100, %s102
      %p106 = scmp.eq.s32.totalorder %s24, 0
      %p107 = por %p105, %p106
      %p108 = scmp.ne.s32.totalorder %s100, %s102
      %p109 = scmp.eq.s32.totalorder %s29, 1
      %p110 = por %p108, %p109
      %p111 = scmp.ne.s32.totalorder %s102, %s103
      %p112 = scmp.eq.s32.totalorder %s29, 0
      %p113 = por %p111, %p112
      %p114 = scmp.ne.s32.totalorder %s102, %s103
      %p115 = scmp.eq.s32.totalorder %s30, 1
      %p116 = por %p114, %p115
      %p118 = scmp.ne.s32.totalorder %s103, %s117
      %p119 = scmp.eq.s32.totalorder %s30, 0
      %p120 = por %p118, %p119
      %s122 = sadd.s32 %s121, 1
      %p125 = scmp.eq.s32.totalorder %s24, 1
      %p126 = scmp.ne.s32.totalorder %s121, %s123
      %p127 = scmp.eq.s32.totalorder %s24, 0
      %p128 = por %p126, %p127
      %p129 = scmp.ne.s32.totalorder %s121, %s123
      %p130 = scmp.eq.s32.totalorder %s29, 1
      %p131 = por %p129, %p130
      %p132 = scmp.ne.s32.totalorder %s123, %s124
      %p133 = scmp.eq.s32.totalorder %s29, 0
      %p134 = por %p132, %p133
      %p135 = scmp.ne.s32.totalorder %s123, %s124
      %p136 = scmp.eq.s32.totalorder %s30, 1
      %p137 = por %p135, %p136
      %p139 = scmp.ne.s32.totalorder %s124, %s138
      %p140 = scmp.eq.s32.totalorder %s30, 0
      %p141 = por %p139, %p140
      %s143 = sadd.s32 %s142, 1
      %p146 = scmp.eq.s32.totalorder %s24, 1
      %p147 = scmp.ne.s32.totalorder %s142, %s144
      %p148 = scmp.eq.s32.totalorder %s24, 0
      %p149 = por %p147, %p148
      %p150 = scmp.ne.s32.totalorder %s142, %s144
      %p151 = scmp.eq.s32.totalorder %s29, 1
      %p152 = por %p150, %p151
      %p153 = scmp.ne.s32.totalorder %s144, %s145
      %p154 = scmp.eq.s32.totalorder %s29, 0
      %p155 = por %p153, %p154
      %p156 = scmp.ne.s32.totalorder %s144, %s145
      %p157 = scmp.eq.s32.totalorder %s30, 1
      %p158 = por %p156, %p157
      %p160 = scmp.ne.s32.totalorder %s145, %s159
      %p161 = scmp.eq.s32.totalorder %s30, 0
      %p162 = por %p160, %p161
      %s164 = sadd.s32 %s163, 1
      %p167 = scmp.eq.s32.totalorder %s24, 1
      %p168 = scmp.ne.s32.totalorder %s163, %s165
      %p169 = scmp.eq.s32.totalorder %s24, 0
      %p170 = por %p168, %p169
      %p171 = scmp.ne.s32.totalorder %s163, %s165
      %p172 = scmp.eq.s32.totalorder %s29, 1
      %p173 = por %p171, %p172
      %p174 = scmp.ne.s32.totalorder %s165, %s166
      %p175 = scmp.eq.s32.totalorder %s29, 0
      %p176 = por %p174, %p175
      %p177 = scmp.ne.s32.totalorder %s165, %s166
      %p178 = scmp.eq.s32.totalorder %s30, 1
      %p179 = por %p177, %p178
      %p181 = scmp.ne.s32.totalorder %s166, %s180
      %p182 = scmp.eq.s32.totalorder %s30, 0
      %p183 = por %p181, %p182
      %s185 = sadd.s32 %s184, 1
      %p188 = scmp.eq.s32.totalorder %s24, 1
      %p189 = scmp.ne.s32.totalorder %s184, %s186
      %p190 = scmp.eq.s32.totalorder %s24, 0
      %p191 = por %p189, %p190
      %p192 = scmp.ne.s32.totalorder %s184, %s186
      %p193 = scmp.eq.s32.totalorder %s29, 1
      %p194 = por %p192, %p193
      %p195 = scmp.ne.s32.totalorder %s186, %s187
      %p196 = scmp.eq.s32.totalorder %s29, 0
      %p197 = por %p195, %p196
      %p198 = scmp.ne.s32.totalorder %s186, %s187
      %p199 = scmp.eq.s32.totalorder %s30, 1
      %p200 = por %p198, %p199
      %p202 = scmp.ne.s32.totalorder %s187, %s201
      %p203 = scmp.eq.s32.totalorder %s30, 0
      %p204 = por %p202, %p203
      %s206 = sadd.s32 %s205, 1
      %p209 = scmp.eq.s32.totalorder %s24, 1
      %p210 = scmp.ne.s32.totalorder %s205, %s207
      %p211 = scmp.eq.s32.totalorder %s24, 0
      %p212 = por %p210, %p211
      %p213 = scmp.ne.s32.totalorder %s205, %s207
      %p214 = scmp.eq.s32.totalorder %s29, 1
      %p215 = por %p213, %p214
      %p216 = scmp.ne.s32.totalorder %s207, %s208
      %p217 = scmp.eq.s32.totalorder %s29, 0
      %p218 = por %p216, %p217
      %p219 = scmp.ne.s32.totalorder %s207, %s208
      %p220 = scmp.eq.s32.totalorder %s30, 1
      %p221 = por %p219, %p220
      %p223 = scmp.ne.s32.totalorder %s208, %s222
      %p224 = scmp.eq.s32.totalorder %s30, 0
      %p225 = por %p223, %p224
      %s227 = sadd.s32 %s226, 1
      %p230 = scmp.eq.s32.totalorder %s24, 1
      %p231 = scmp.ne.s32.totalorder %s226, %s228
      %p232 = scmp.eq.s32.totalorder %s24, 0
      %p233 = por %p231, %p232
      %p234 = scmp.ne.s32.totalorder %s226, %s228
      %p235 = scmp.eq.s32.totalorder %s29, 1
      %p236 = por %p234, %p235
      %p237 = scmp.ne.s32.totalorder %s228, %s229
      %p238 = scmp.eq.s32.totalorder %s29, 0
      %p239 = por %p237, %p238
      %p240 = scmp.ne.s32.totalorder %s228, %s229
      %p241 = scmp.eq.s32.totalorder %s30, 1
      %p242 = por %p240, %p241
      %p244 = scmp.ne.s32.totalorder %s229, %s243
      %p245 = scmp.eq.s32.totalorder %s30, 0
      %p246 = por %p244, %p245
      %s248 = sadd.s32 %s247, 1
      %p251 = scmp.eq.s32.totalorder %s24, 1
      %p252 = scmp.ne.s32.totalorder %s247, %s249
      %p253 = scmp.eq.s32.totalorder %s24, 0
      %p254 = por %p252, %p253
      %p255 = scmp.ne.s32.totalorder %s247, %s249
      %p256 = scmp.eq.s32.totalorder %s29, 1
      %p257 = por %p255, %p256
      %p258 = scmp.ne.s32.totalorder %s249, %s250
      %p259 = scmp.eq.s32.totalorder %s29, 0
      %p260 = por %p258, %p259
      %p261 = scmp.ne.s32.totalorder %s249, %s250
      %p262 = scmp.eq.s32.totalorder %s30, 1
      %p263 = por %p261, %p262
      %p265 = scmp.ne.s32.totalorder %s250, %s264
      %p266 = scmp.eq.s32.totalorder %s30, 0
      %p267 = por %p265, %p266
      %s269 = sadd.s32 %s268, 1
      %p272 = scmp.eq.s32.totalorder %s24, 1
      %p273 = scmp.ne.s32.totalorder %s268, %s270
      %p274 = scmp.eq.s32.totalorder %s24, 0
      %p275 = por %p273, %p274
      %p276 = scmp.ne.s32.totalorder %s268, %s270
      %p277 = scmp.eq.s32.totalorder %s29, 1
      %p278 = por %p276, %p277
      %p279 = scmp.ne.s32.totalorder %s270, %s271
      %p280 = scmp.eq.s32.totalorder %s29, 0
      %p281 = por %p279, %p280
      %p282 = scmp.ne.s32.totalorder %s270, %s271
      %p283 = scmp.eq.s32.totalorder %s30, 1
      %p284 = por %p282, %p283
      %p286 = scmp.ne.s32.totalorder %s271, %s285
      %p287 = scmp.eq.s32.totalorder %s30, 0
      %p288 = por %p286, %p287
      %s290 = sadd.s32 %s289, 1
      %p293 = scmp.eq.s32.totalorder %s24, 1
      %p294 = scmp.ne.s32.totalorder %s289, %s291
      %p295 = scmp.eq.s32.totalorder %s24, 0
      %p296 = por %p294, %p295
      %p297 = scmp.ne.s32.totalorder %s289, %s291
      %p298 = scmp.eq.s32.totalorder %s29, 1
      %p299 = por %p297, %p298
      %p300 = scmp.ne.s32.totalorder %s291, %s292
      %p301 = scmp.eq.s32.totalorder %s29, 0
      %p302 = por %p300, %p301
      %p303 = scmp.ne.s32.totalorder %s291, %s292
      %p304 = scmp.eq.s32.totalorder %s30, 1
      %p305 = por %p303, %p304
      %p307 = scmp.ne.s32.totalorder %s292, %s306
      %p308 = scmp.eq.s32.totalorder %s30, 0
      %p309 = por %p307, %p308
      %s311 = sadd.s32 %s310, 1
      %p314 = scmp.eq.s32.totalorder %s24, 1
      %p315 = scmp.ne.s32.totalorder %s310, %s312
      %p316 = scmp.eq.s32.totalorder %s24, 0
      %p317 = por %p315, %p316
      %p318 = scmp.ne.s32.totalorder %s310, %s312
      %p319 = scmp.eq.s32.totalorder %s29, 1
      %p320 = por %p318, %p319
      %p321 = scmp.ne.s32.totalorder %s312, %s313
      %p322 = scmp.eq.s32.totalorder %s29, 0
      %p323 = por %p321, %p322
      %p324 = scmp.ne.s32.totalorder %s312, %s313
      %p325 = scmp.eq.s32.totalorder %s30, 1
      %p326 = por %p324, %p325
      %p328 = scmp.ne.s32.totalorder %s313, %s327
      %p329 = scmp.eq.s32.totalorder %s30, 0
      %p330 = por %p328, %p329
      %s332 = sadd.s32 %s331, 1
      %p335 = scmp.eq.s32.totalorder %s24, 1
      %p336 = scmp.ne.s32.totalorder %s331, %s333
      %p337 = scmp.eq.s32.totalorder %s24, 0
      %p338 = por %p336, %p337
      %p339 = scmp.ne.s32.totalorder %s331, %s333
      %p340 = scmp.eq.s32.totalorder %s29, 1
      %p341 = por %p339, %p340
      %p342 = scmp.ne.s32.totalorder %s333, %s334
      %p343 = scmp.eq.s32.totalorder %s29, 0
      %p344 = por %p342, %p343
      %p345 = scmp.ne.s32.totalorder %s333, %s334
      %p346 = scmp.eq.s32.totalorder %s30, 1
      %p347 = por %p345, %p346
      %p349 = scmp.ne.s32.totalorder %s334, %s348
      %p350 = scmp.eq.s32.totalorder %s30, 0
      %p351 = por %p349, %p350
      %s352 = ssub.s32 %s24, %s31
      %p353 = scmp.eq.s32.totalorder %s352, 0
      %s355 = sadd.s32 %s354, 1
      %s356 = scalar_select %p353, %s354, %s355
      %p359 = pneg %p353
      %p360 = scmp.eq.s32.totalorder %s24, 1
      %p361 = por %p359, %p360
      %p362 = scmp.ne.s32.totalorder %s354, %s357
      %p363 = scmp.eq.s32.totalorder %s24, 0
      %p364 = por %p362, %p363
      %p365 = scmp.ne.s32.totalorder %s354, %s357
      %p366 = scmp.eq.s32.totalorder %s29, 1
      %p367 = por %p365, %p366
      %p368 = scmp.ne.s32.totalorder %s357, %s358
      %p369 = scmp.eq.s32.totalorder %s29, 0
      %p370 = por %p368, %p369
      %p371 = scmp.ne.s32.totalorder %s357, %s358
      %p372 = scmp.eq.s32.totalorder %s30, 1
      %p373 = por %p371, %p372
      %p375 = scmp.ne.s32.totalorder %s358, %s374
      %p376 = scmp.eq.s32.totalorder %s30, 0
      %p377 = por %p375, %p376
      %p378 = scmp.le.s32.totalorder 1, %s24
      %p379 = scmp.lt.s32.totalorder %s24, 3
      %p380 = pnand %p378, %p379
      %p381 = pneg %p380
      // Predicated region
      $region9: #{custom_net_forward.1} parent=5 // pred_check
        _
      $region10: #{custom_net_forward.1} parent=5 // pred_check_branch
        %383 = sbr.rel (%p380) target = $region12
      $region11: #{custom_net_forward.1} parent=5 // pred_region
        %s384 = ssub.s32 %s24, 1
        // Predicated region
        $region13: #{custom_net_forward.1} parent=11 // pred_check
          %p385 = pneg %p71
        $region14: #{custom_net_forward.1} parent=11 // pred_check_branch
          %387 = sbr.rel (%p385) target = $region16
        $region15: #{custom_net_forward.1} parent=11 // pred_region
          _
        $region16: #{custom_net_forward.1} parent=11 // pred_fallthru
          _
        // Predicated region
        $region17: #{custom_net_forward.1} parent=11 // pred_check
          %p388 = pneg %p92
        $region18: #{custom_net_forward.1} parent=11 // pred_check_branch
          %390 = sbr.rel (%p388) target = $region20
        $region19: #{custom_net_forward.1} parent=11 // pred_region
          _
        $region20: #{custom_net_forward.1} parent=11 // pred_fallthru
          _
        // Predicated region
        $region21: #{custom_net_forward.1} parent=11 // pred_check
          %p391 = pneg %p113
        $region22: #{custom_net_forward.1} parent=11 // pred_check_branch
          %393 = sbr.rel (%p391) target = $region24
        $region23: #{custom_net_forward.1} parent=11 // pred_region
          _
        $region24: #{custom_net_forward.1} parent=11 // pred_fallthru
          _
        // Predicated region
        $region25: #{custom_net_forward.1} parent=11 // pred_check
          %p394 = pneg %p134
        $region26: #{custom_net_forward.1} parent=11 // pred_check_branch
          %396 = sbr.rel (%p394) target = $region28
        $region27: #{custom_net_forward.1} parent=11 // pred_region
          _
        $region28: #{custom_net_forward.1} parent=11 // pred_fallthru
          _
        // Predicated region
        $region29: #{custom_net_forward.1} parent=11 // pred_check
          %p397 = pneg %p155
        $region30: #{custom_net_forward.1} parent=11 // pred_check_branch
          %399 = sbr.rel (%p397) target = $region32
        $region31: #{custom_net_forward.1} parent=11 // pred_region
          _
        $region32: #{custom_net_forward.1} parent=11 // pred_fallthru
          _
        // Predicated region
        $region33: #{custom_net_forward.1} parent=11 // pred_check
          %p400 = pneg %p176
        $region34: #{custom_net_forward.1} parent=11 // pred_check_branch
          %402 = sbr.rel (%p400) target = $region36
        $region35: #{custom_net_forward.1} parent=11 // pred_region
          _
        $region36: #{custom_net_forward.1} parent=11 // pred_fallthru
          _
        // Predicated region
        $region37: #{custom_net_forward.1} parent=11 // pred_check
          %p403 = pneg %p197
        $region38: #{custom_net_forward.1} parent=11 // pred_check_branch
          %405 = sbr.rel (%p403) target = $region40
        $region39: #{custom_net_forward.1} parent=11 // pred_region
          _
        $region40: #{custom_net_forward.1} parent=11 // pred_fallthru
          _
        // Predicated region
        $region41: #{custom_net_forward.1} parent=11 // pred_check
          %p406 = pneg %p218
        $region42: #{custom_net_forward.1} parent=11 // pred_check_branch
          %408 = sbr.rel (%p406) target = $region44
        $region43: #{custom_net_forward.1} parent=11 // pred_region
          _
        $region44: #{custom_net_forward.1} parent=11 // pred_fallthru
          _
        // Predicated region
        $region45: #{custom_net_forward.1} parent=11 // pred_check
          %p409 = pneg %p239
        $region46: #{custom_net_forward.1} parent=11 // pred_check_branch
          %411 = sbr.rel (%p409) target = $region48
        $region47: #{custom_net_forward.1} parent=11 // pred_region
          _
        $region48: #{custom_net_forward.1} parent=11 // pred_fallthru
          _
        // Predicated region
        $region49: #{custom_net_forward.1} parent=11 // pred_check
          %p412 = pneg %p260
        $region50: #{custom_net_forward.1} parent=11 // pred_check_branch
          %414 = sbr.rel (%p412) target = $region52
        $region51: #{custom_net_forward.1} parent=11 // pred_region
          _
        $region52: #{custom_net_forward.1} parent=11 // pred_fallthru
          _
        // Predicated region
        $region53: #{custom_net_forward.1} parent=11 // pred_check
          %p415 = pneg %p281
        $region54: #{custom_net_forward.1} parent=11 // pred_check_branch
          %417 = sbr.rel (%p415) target = $region56
        $region55: #{custom_net_forward.1} parent=11 // pred_region
          _
        $region56: #{custom_net_forward.1} parent=11 // pred_fallthru
          _
        // Predicated region
        $region57: #{custom_net_forward.1} parent=11 // pred_check
          %p418 = pneg %p302
        $region58: #{custom_net_forward.1} parent=11 // pred_check_branch
          %420 = sbr.rel (%p418) target = $region60
        $region59: #{custom_net_forward.1} parent=11 // pred_region
          _
        $region60: #{custom_net_forward.1} parent=11 // pred_fallthru
          _
        // Predicated region
        $region61: #{custom_net_forward.1} parent=11 // pred_check
          %p421 = pneg %p323
        $region62: #{custom_net_forward.1} parent=11 // pred_check_branch
          %423 = sbr.rel (%p421) target = $region64
        $region63: #{custom_net_forward.1} parent=11 // pred_region
          _
        $region64: #{custom_net_forward.1} parent=11 // pred_fallthru
          _
        // Predicated region
        $region65: #{custom_net_forward.1} parent=11 // pred_check
          %p424 = pneg %p344
        $region66: #{custom_net_forward.1} parent=11 // pred_check_branch
          %426 = sbr.rel (%p424) target = $region68
        $region67: #{custom_net_forward.1} parent=11 // pred_region
          _
        $region68: #{custom_net_forward.1} parent=11 // pred_fallthru
          _
      $region12: #{custom_net_forward.1} parent=5 // pred_fallthru
        _
      %p427 = scmp.lt.s32.totalorder %s24, 2
      // Predicated region
      $region69: #{custom_net_forward.1} parent=5 // pred_check
        %p428 = pneg %p427
      $region70: #{custom_net_forward.1} parent=5 // pred_check_branch
        %430 = sbr.rel (%p428) target = $region72
      $region71: #{custom_net_forward.1} parent=5 // pred_region
        // Predicated region
        $region73: #{custom_net_forward.1} parent=71 // pred_check
          %p431 = pneg %p44
        $region74: #{custom_net_forward.1} parent=71 // pred_check_branch
          %433 = sbr.rel (%p431) target = $region76
        $region75: #{custom_net_forward.1} parent=71 // pred_region
          %p434 = scmp.lt.s32.totalorder %s24, 1
          %s435 = scalar_select %p434, %s24, 1
          %s436 = smul.addr %s435, 32
          %s437 = smul.addr %s436, 8
          %s438 = scalar_lea.vmem %s0, %s437
        $region76: #{custom_net_forward.1} parent=71 // pred_fallthru
          _
      $region72: #{custom_net_forward.1} parent=5 // pred_fallthru
        _
      %p439 = scmp.le.s32.totalorder 1, %s24
      %p440 = scmp.lt.s32.totalorder %s24, 3
      %p441 = pnand %p439, %p440
      %p442 = pneg %p441
      // Predicated region
      $region77: #{custom_net_forward.1} parent=5 // pred_check
        _
      $region78: #{custom_net_forward.1} parent=5 // pred_check_branch
        %444 = sbr.rel (%p441) target = $region80
      $region79: #{custom_net_forward.1} parent=5 // pred_region
        %s445 = ssub.s32 %s24, 1
        %p446 = scmp.lt.s32.totalorder %s29, 1
        %s447 = scalar_select %p446, %s29, 1
        %s448 = smul.addr %s447, 32
        %s449 = smul.addr %s448, 8
        %s450 = scalar_lea.vmem %s0, %s449
        %p451 = pneg %p50
        %p452 = pneg %p47
        %p453 = pneg %p71
        %p454 = pneg %p68
        %p455 = pneg %p92
        %p456 = pneg %p89
        %p457 = pneg %p113
        %p458 = pneg %p110
        %p459 = pneg %p134
        %p460 = pneg %p131
        %p461 = pneg %p155
        %p462 = pneg %p152
        %p463 = pneg %p176
        %p464 = pneg %p173
        %p465 = pneg %p197
        %p466 = pneg %p194
        %p467 = pneg %p218
        %p468 = pneg %p215
        %p469 = pneg %p239
        %p470 = pneg %p236
        %p471 = pneg %p260
        %p472 = pneg %p257
        %p473 = pneg %p281
        %p474 = pneg %p278
        %p475 = pneg %p302
        %p476 = pneg %p299
        %p477 = pneg %p323
        %p478 = pneg %p320
        %p479 = pneg %p344
        %p480 = pneg %p341
        %p481 = pneg %p370
        %p482 = pneg %p367
        %s483 = sand.u32 %s357, 1
        %s484 = scalar_lea.sflag [#allocation5], %s483
        %s485 = sand.u32 %s357, 1
        %s486 = scalar_lea.vmem [#allocation4], %s485
        %p487 = scmp.lt.s32.totalorder %s29, 1
        %s488 = scalar_select %p487, %s29, 1
        %s489 = smul.addr %s488, 32
        %s490 = smul.addr %s489, 8
        %s491 = scalar_lea.vmem %s0, %s490
        %v493 = vlaneseq
        %v494 = vshrl.u32 %v493, 7
        %v495 = vadd.s32 %v494, 8
        %v496 = vadd.s32 %v494, 16
        %v497 = vadd.s32 %v494, 24
        %v498 = vadd.s32 %v494, 32
        %v499 = vadd.s32 %v494, 40
        %v500 = vadd.s32 %v494, 48
        %v501 = vadd.s32 %v494, 56
        %v502 = vadd.s32 %v494, 64
        %v503 = vadd.s32 %v494, 72
        %v504 = vadd.s32 %v494, 80
        %v505 = vadd.s32 %v494, 88
        %v506 = vadd.s32 %v494, 96
        %v507 = vadd.s32 %v494, 104
        %v508 = vadd.s32 %v494, 112
        %v509 = vadd.s32 %v494, 120
        %v510 = vadd.s32 %v494, 128
        %v511 = vadd.s32 %v494, 136
        %v512 = vadd.s32 %v494, 144
        %v513 = vadd.s32 %v494, 152
        %v514 = vadd.s32 %v494, 160
        %v515 = vadd.s32 %v494, 168
        %v516 = vadd.s32 %v494, 176
        %v517 = vadd.s32 %v494, 184
        %v518 = vadd.s32 %v494, 192
        %v519 = vadd.s32 %v494, 200
        %v520 = vadd.s32 %v494, 208
        %v521 = vadd.s32 %v494, 216
        %v522 = vadd.s32 %v494, 224
        %v523 = vadd.s32 %v494, 232
        %v524 = vadd.s32 %v494, 240
        %v525 = vadd.s32 %v494, 248
        %vm526 = vcmp.lt.s32.totalorder %v494, 0
        %v527 = vsub.s32 0, %v494
        %v528 = vsel %vm526, %v527, %v494
        %v529 = vshrl.u32 %v528, 4
        %v530 = vand.u32 %v528, 15
        %v531 = vsub.s32 0, %v530
        %v532 = vsel %vm526, %v531, %v530
        %vm533 = vcmp.lt.s32.totalorder %v495, 0
        %v534 = vsub.s32 0, %v495
        %v535 = vsel %vm533, %v534, %v495
        %v536 = vshrl.u32 %v535, 4
        %v537 = vand.u32 %v535, 15
        %v538 = vsub.s32 0, %v537
        %v539 = vsel %vm533, %v538, %v537
        %vm540 = vcmp.lt.s32.totalorder %v496, 0
        %v541 = vsub.s32 0, %v496
        %v542 = vsel %vm540, %v541, %v496
        %v543 = vshrl.u32 %v542, 4
        %v544 = vand.u32 %v542, 15
        %v545 = vsub.s32 0, %v544
        %v546 = vsel %vm540, %v545, %v544
        %vm547 = vcmp.lt.s32.totalorder %v497, 0
        %v548 = vsub.s32 0, %v497
        %v549 = vsel %vm547, %v548, %v497
        %v550 = vshrl.u32 %v549, 4
        %v551 = vand.u32 %v549, 15
        %v552 = vsub.s32 0, %v551
        %v553 = vsel %vm547, %v552, %v551
        %vm554 = vcmp.lt.s32.totalorder %v498, 0
        %v555 = vsub.s32 0, %v498
        %v556 = vsel %vm554, %v555, %v498
        %v557 = vshrl.u32 %v556, 4
        %v558 = vand.u32 %v556, 15
        %v559 = vsub.s32 0, %v558
        %v560 = vsel %vm554, %v559, %v558
        %vm561 = vcmp.lt.s32.totalorder %v499, 0
        %v562 = vsub.s32 0, %v499
        %v563 = vsel %vm561, %v562, %v499
        %v564 = vshrl.u32 %v563, 4
        %v565 = vand.u32 %v563, 15
        %v566 = vsub.s32 0, %v565
        %v567 = vsel %vm561, %v566, %v565
        %vm568 = vcmp.lt.s32.totalorder %v500, 0
        %v569 = vsub.s32 0, %v500
        %v570 = vsel %vm568, %v569, %v500
        %v571 = vshrl.u32 %v570, 4
        %v572 = vand.u32 %v570, 15
        %v573 = vsub.s32 0, %v572
        %v574 = vsel %vm568, %v573, %v572
        %vm575 = vcmp.lt.s32.totalorder %v501, 0
        %v576 = vsub.s32 0, %v501
        %v577 = vsel %vm575, %v576, %v501
        %v578 = vshrl.u32 %v577, 4
        %v579 = vand.u32 %v577, 15
        %v580 = vsub.s32 0, %v579
        %v581 = vsel %vm575, %v580, %v579
        %vm582 = vcmp.lt.s32.totalorder %v502, 0
        %v583 = vsub.s32 0, %v502
        %v584 = vsel %vm582, %v583, %v502
        %v585 = vshrl.u32 %v584, 4
        %v586 = vand.u32 %v584, 15
        %v587 = vsub.s32 0, %v586
        %v588 = vsel %vm582, %v587, %v586
        %vm589 = vcmp.lt.s32.totalorder %v503, 0
        %v590 = vsub.s32 0, %v503
        %v591 = vsel %vm589, %v590, %v503
        %v592 = vshrl.u32 %v591, 4
        %v593 = vand.u32 %v591, 15
        %v594 = vsub.s32 0, %v593
        %v595 = vsel %vm589, %v594, %v593
        %vm596 = vcmp.lt.s32.totalorder %v504, 0
        %v597 = vsub.s32 0, %v504
        %v598 = vsel %vm596, %v597, %v504
        %v599 = vshrl.u32 %v598, 4
        %v600 = vand.u32 %v598, 15
        %v601 = vsub.s32 0, %v600
        %v602 = vsel %vm596, %v601, %v600
        %vm603 = vcmp.lt.s32.totalorder %v505, 0
        %v604 = vsub.s32 0, %v505
        %v605 = vsel %vm603, %v604, %v505
        %v606 = vshrl.u32 %v605, 4
        %v607 = vand.u32 %v605, 15
        %v608 = vsub.s32 0, %v607
        %v609 = vsel %vm603, %v608, %v607
        %vm610 = vcmp.lt.s32.totalorder %v506, 0
        %v611 = vsub.s32 0, %v506
        %v612 = vsel %vm610, %v611, %v506
        %v613 = vshrl.u32 %v612, 4
        %v614 = vand.u32 %v612, 15
        %v615 = vsub.s32 0, %v614
        %v616 = vsel %vm610, %v615, %v614
        %vm617 = vcmp.lt.s32.totalorder %v507, 0
        %v618 = vsub.s32 0, %v507
        %v619 = vsel %vm617, %v618, %v507
        %v620 = vshrl.u32 %v619, 4
        %v621 = vand.u32 %v619, 15
        %v622 = vsub.s32 0, %v621
        %v623 = vsel %vm617, %v622, %v621
        %vm624 = vcmp.lt.s32.totalorder %v508, 0
        %v625 = vsub.s32 0, %v508
        %v626 = vsel %vm624, %v625, %v508
        %v627 = vshrl.u32 %v626, 4
        %v628 = vand.u32 %v626, 15
        %v629 = vsub.s32 0, %v628
        %v630 = vsel %vm624, %v629, %v628
        %vm631 = vcmp.lt.s32.totalorder %v509, 0
        %v632 = vsub.s32 0, %v509
        %v633 = vsel %vm631, %v632, %v509
        %v634 = vshrl.u32 %v633, 4
        %v635 = vand.u32 %v633, 15
        %v636 = vsub.s32 0, %v635
        %v637 = vsel %vm631, %v636, %v635
        %vm638 = vcmp.lt.s32.totalorder %v510, 0
        %v639 = vsub.s32 0, %v510
        %v640 = vsel %vm638, %v639, %v510
        %v641 = vshrl.u32 %v640, 4
        %v642 = vand.u32 %v640, 15
        %v643 = vsub.s32 0, %v642
        %v644 = vsel %vm638, %v643, %v642
        %vm645 = vcmp.lt.s32.totalorder %v511, 0
        %v646 = vsub.s32 0, %v511
        %v647 = vsel %vm645, %v646, %v511
        %v648 = vshrl.u32 %v647, 4
        %v649 = vand.u32 %v647, 15
        %v650 = vsub.s32 0, %v649
        %v651 = vsel %vm645, %v650, %v649
        %vm652 = vcmp.lt.s32.totalorder %v512, 0
        %v653 = vsub.s32 0, %v512
        %v654 = vsel %vm652, %v653, %v512
        %v655 = vshrl.u32 %v654, 4
        %v656 = vand.u32 %v654, 15
        %v657 = vsub.s32 0, %v656
        %v658 = vsel %vm652, %v657, %v656
        %vm659 = vcmp.lt.s32.totalorder %v513, 0
        %v660 = vsub.s32 0, %v513
        %v661 = vsel %vm659, %v660, %v513
        %v662 = vshrl.u32 %v661, 4
        %v663 = vand.u32 %v661, 15
        %v664 = vsub.s32 0, %v663
        %v665 = vsel %vm659, %v664, %v663
        %vm666 = vcmp.lt.s32.totalorder %v514, 0
        %v667 = vsub.s32 0, %v514
        %v668 = vsel %vm666, %v667, %v514
        %v669 = vshrl.u32 %v668, 4
        %v670 = vand.u32 %v668, 15
        %v671 = vsub.s32 0, %v670
        %v672 = vsel %vm666, %v671, %v670
        %vm673 = vcmp.lt.s32.totalorder %v515, 0
        %v674 = vsub.s32 0, %v515
        %v675 = vsel %vm673, %v674, %v515
        %v676 = vshrl.u32 %v675, 4
        %v677 = vand.u32 %v675, 15
        %v678 = vsub.s32 0, %v677
        %v679 = vsel %vm673, %v678, %v677
        %vm680 = vcmp.lt.s32.totalorder %v516, 0
        %v681 = vsub.s32 0, %v516
        %v682 = vsel %vm680, %v681, %v516
        %v683 = vshrl.u32 %v682, 4
        %v684 = vand.u32 %v682, 15
        %v685 = vsub.s32 0, %v684
        %v686 = vsel %vm680, %v685, %v684
        %vm687 = vcmp.lt.s32.totalorder %v517, 0
        %v688 = vsub.s32 0, %v517
        %v689 = vsel %vm687, %v688, %v517
        %v690 = vshrl.u32 %v689, 4
        %v691 = vand.u32 %v689, 15
        %v692 = vsub.s32 0, %v691
        %v693 = vsel %vm687, %v692, %v691
        %vm694 = vcmp.lt.s32.totalorder %v518, 0
        %v695 = vsub.s32 0, %v518
        %v696 = vsel %vm694, %v695, %v518
        %v697 = vshrl.u32 %v696, 4
        %v698 = vand.u32 %v696, 15
        %v699 = vsub.s32 0, %v698
        %v700 = vsel %vm694, %v699, %v698
        %vm701 = vcmp.lt.s32.totalorder %v519, 0
        %v702 = vsub.s32 0, %v519
        %v703 = vsel %vm701, %v702, %v519
        %v704 = vshrl.u32 %v703, 4
        %v705 = vand.u32 %v703, 15
        %v706 = vsub.s32 0, %v705
        %v707 = vsel %vm701, %v706, %v705
        %vm708 = vcmp.lt.s32.totalorder %v520, 0
        %v709 = vsub.s32 0, %v520
        %v710 = vsel %vm708, %v709, %v520
        %v711 = vshrl.u32 %v710, 4
        %v712 = vand.u32 %v710, 15
        %v713 = vsub.s32 0, %v712
        %v714 = vsel %vm708, %v713, %v712
        %vm715 = vcmp.lt.s32.totalorder %v521, 0
        %v716 = vsub.s32 0, %v521
        %v717 = vsel %vm715, %v716, %v521
        %v718 = vshrl.u32 %v717, 4
        %v719 = vand.u32 %v717, 15
        %v720 = vsub.s32 0, %v719
        %v721 = vsel %vm715, %v720, %v719
        %vm722 = vcmp.lt.s32.totalorder %v522, 0
        %v723 = vsub.s32 0, %v522
        %v724 = vsel %vm722, %v723, %v522
        %v725 = vshrl.u32 %v724, 4
        %v726 = vand.u32 %v724, 15
        %v727 = vsub.s32 0, %v726
        %v728 = vsel %vm722, %v727, %v726
        %vm729 = vcmp.lt.s32.totalorder %v523, 0
        %v730 = vsub.s32 0, %v523
        %v731 = vsel %vm729, %v730, %v523
        %v732 = vshrl.u32 %v731, 4
        %v733 = vand.u32 %v731, 15
        %v734 = vsub.s32 0, %v733
        %v735 = vsel %vm729, %v734, %v733
        %vm736 = vcmp.lt.s32.totalorder %v524, 0
        %v737 = vsub.s32 0, %v524
        %v738 = vsel %vm736, %v737, %v524
        %v739 = vshrl.u32 %v738, 4
        %v740 = vand.u32 %v738, 15
        %v741 = vsub.s32 0, %v740
        %v742 = vsel %vm736, %v741, %v740
        %vm743 = vcmp.lt.s32.totalorder %v525, 0
        %v744 = vsub.s32 0, %v525
        %v745 = vsel %vm743, %v744, %v525
        %v746 = vshrl.u32 %v745, 4
        %v747 = vand.u32 %v745, 15
        %v748 = vsub.s32 0, %v747
        %v749 = vsel %vm743, %v748, %v747
        %vm750 = vcmp.ne.s32.totalorder %v532, 0
        %vm751 = vcmp.ne.s32.totalorder %v539, 0
        %vm752 = vcmp.ne.s32.totalorder %v546, 0
        %vm753 = vcmp.ne.s32.totalorder %v553, 0
        %vm754 = vcmp.ne.s32.totalorder %v560, 0
        %vm755 = vcmp.ne.s32.totalorder %v567, 0
        %vm756 = vcmp.ne.s32.totalorder %v574, 0
        %vm757 = vcmp.ne.s32.totalorder %v581, 0
        %vm758 = vcmp.ne.s32.totalorder %v588, 0
        %vm759 = vcmp.ne.s32.totalorder %v595, 0
        %vm760 = vcmp.ne.s32.totalorder %v602, 0
        %vm761 = vcmp.ne.s32.totalorder %v609, 0
        %vm762 = vcmp.ne.s32.totalorder %v616, 0
        %vm763 = vcmp.ne.s32.totalorder %v623, 0
        %vm764 = vcmp.ne.s32.totalorder %v630, 0
        %vm765 = vcmp.ne.s32.totalorder %v637, 0
        %vm766 = vcmp.ne.s32.totalorder %v644, 0
        %vm767 = vcmp.ne.s32.totalorder %v651, 0
        %vm768 = vcmp.ne.s32.totalorder %v658, 0
        %vm769 = vcmp.ne.s32.totalorder %v665, 0
        %vm770 = vcmp.ne.s32.totalorder %v672, 0
        %vm771 = vcmp.ne.s32.totalorder %v679, 0
        %vm772 = vcmp.ne.s32.totalorder %v686, 0
        %vm773 = vcmp.ne.s32.totalorder %v693, 0
        %vm774 = vcmp.ne.s32.totalorder %v700, 0
        %vm775 = vcmp.ne.s32.totalorder %v707, 0
        %vm776 = vcmp.ne.s32.totalorder %v714, 0
        %vm777 = vcmp.ne.s32.totalorder %v721, 0
        %vm778 = vcmp.ne.s32.totalorder %v728, 0
        %vm779 = vcmp.ne.s32.totalorder %v735, 0
        %vm780 = vcmp.ne.s32.totalorder %v742, 0
        %vm781 = vcmp.ne.s32.totalorder %v749, 0
        %vm782 = vcmp.lt.s32.totalorder %v532, 0
        %vm783 = vcmp.lt.s32.totalorder %v539, 0
        %vm784 = vcmp.lt.s32.totalorder %v546, 0
        %vm785 = vcmp.lt.s32.totalorder %v553, 0
        %vm786 = vcmp.lt.s32.totalorder %v560, 0
        %vm787 = vcmp.lt.s32.totalorder %v567, 0
        %vm788 = vcmp.lt.s32.totalorder %v574, 0
        %vm789 = vcmp.lt.s32.totalorder %v581, 0
        %vm790 = vcmp.lt.s32.totalorder %v588, 0
        %vm791 = vcmp.lt.s32.totalorder %v595, 0
        %vm792 = vcmp.lt.s32.totalorder %v602, 0
        %vm793 = vcmp.lt.s32.totalorder %v609, 0
        %vm794 = vcmp.lt.s32.totalorder %v616, 0
        %vm795 = vcmp.lt.s32.totalorder %v623, 0
        %vm796 = vcmp.lt.s32.totalorder %v630, 0
        %vm797 = vcmp.lt.s32.totalorder %v637, 0
        %vm798 = vcmp.lt.s32.totalorder %v644, 0
        %vm799 = vcmp.lt.s32.totalorder %v651, 0
        %vm800 = vcmp.lt.s32.totalorder %v658, 0
        %vm801 = vcmp.lt.s32.totalorder %v665, 0
        %vm802 = vcmp.lt.s32.totalorder %v672, 0
        %vm803 = vcmp.lt.s32.totalorder %v679, 0
        %vm804 = vcmp.lt.s32.totalorder %v686, 0
        %vm805 = vcmp.lt.s32.totalorder %v693, 0
        %vm806 = vcmp.lt.s32.totalorder %v700, 0
        %vm807 = vcmp.lt.s32.totalorder %v707, 0
        %vm808 = vcmp.lt.s32.totalorder %v714, 0
        %vm809 = vcmp.lt.s32.totalorder %v721, 0
        %vm810 = vcmp.lt.s32.totalorder %v728, 0
        %vm811 = vcmp.lt.s32.totalorder %v735, 0
        %vm812 = vcmp.lt.s32.totalorder %v742, 0
        %vm813 = vcmp.lt.s32.totalorder %v749, 0
        %vm814 = vmand %vm782, %vm750
        %vm815 = vmand %vm783, %vm751
        %vm816 = vmand %vm784, %vm752
        %vm817 = vmand %vm785, %vm753
        %vm818 = vmand %vm786, %vm754
        %vm819 = vmand %vm787, %vm755
        %vm820 = vmand %vm788, %vm756
        %vm821 = vmand %vm789, %vm757
        %vm822 = vmand %vm790, %vm758
        %vm823 = vmand %vm791, %vm759
        %vm824 = vmand %vm792, %vm760
        %vm825 = vmand %vm793, %vm761
        %vm826 = vmand %vm794, %vm762
        %vm827 = vmand %vm795, %vm763
        %vm828 = vmand %vm796, %vm764
        %vm829 = vmand %vm797, %vm765
        %vm830 = vmand %vm798, %vm766
        %vm831 = vmand %vm799, %vm767
        %vm832 = vmand %vm800, %vm768
        %vm833 = vmand %vm801, %vm769
        %vm834 = vmand %vm802, %vm770
        %vm835 = vmand %vm803, %vm771
        %vm836 = vmand %vm804, %vm772
        %vm837 = vmand %vm805, %vm773
        %vm838 = vmand %vm806, %vm774
        %vm839 = vmand %vm807, %vm775
        %vm840 = vmand %vm808, %vm776
        %vm841 = vmand %vm809, %vm777
        %vm842 = vmand %vm810, %vm778
        %vm843 = vmand %vm811, %vm779
        %vm844 = vmand %vm812, %vm780
        %vm845 = vmand %vm813, %vm781
        %v846 = vadd.s32 %v532, 16
        %v847 = vadd.s32 %v539, 16
        %v848 = vadd.s32 %v546, 16
        %v849 = vadd.s32 %v553, 16
        %v850 = vadd.s32 %v560, 16
        %v851 = vadd.s32 %v567, 16
        %v852 = vadd.s32 %v574, 16
        %v853 = vadd.s32 %v581, 16
        %v854 = vadd.s32 %v588, 16
        %v855 = vadd.s32 %v595, 16
        %v856 = vadd.s32 %v602, 16
        %v857 = vadd.s32 %v609, 16
        %v858 = vadd.s32 %v616, 16
        %v859 = vadd.s32 %v623, 16
        %v860 = vadd.s32 %v630, 16
        %v861 = vadd.s32 %v637, 16
        %v862 = vadd.s32 %v644, 16
        %v863 = vadd.s32 %v651, 16
        %v864 = vadd.s32 %v658, 16
        %v865 = vadd.s32 %v665, 16
        %v866 = vadd.s32 %v672, 16
        %v867 = vadd.s32 %v679, 16
        %v868 = vadd.s32 %v686, 16
        %v869 = vadd.s32 %v693, 16
        %v870 = vadd.s32 %v700, 16
        %v871 = vadd.s32 %v707, 16
        %v872 = vadd.s32 %v714, 16
        %v873 = vadd.s32 %v721, 16
        %v874 = vadd.s32 %v728, 16
        %v875 = vadd.s32 %v735, 16
        %v876 = vadd.s32 %v742, 16
        %v877 = vadd.s32 %v749, 16
        %v878 = vsel %vm814, %v846, %v532
        %v879 = vsel %vm815, %v847, %v539
        %v880 = vsel %vm816, %v848, %v546
        %v881 = vsel %vm817, %v849, %v553
        %v882 = vsel %vm818, %v850, %v560
        %v883 = vsel %vm819, %v851, %v567
        %v884 = vsel %vm820, %v852, %v574
        %v885 = vsel %vm821, %v853, %v581
        %v886 = vsel %vm822, %v854, %v588
        %v887 = vsel %vm823, %v855, %v595
        %v888 = vsel %vm824, %v856, %v602
        %v889 = vsel %vm825, %v857, %v609
        %v890 = vsel %vm826, %v858, %v616
        %v891 = vsel %vm827, %v859, %v623
        %v892 = vsel %vm828, %v860, %v630
        %v893 = vsel %vm829, %v861, %v637
        %v894 = vsel %vm830, %v862, %v644
        %v895 = vsel %vm831, %v863, %v651
        %v896 = vsel %vm832, %v864, %v658
        %v897 = vsel %vm833, %v865, %v665
        %v898 = vsel %vm834, %v866, %v672
        %v899 = vsel %vm835, %v867, %v679
        %v900 = vsel %vm836, %v868, %v686
        %v901 = vsel %vm837, %v869, %v693
        %v902 = vsel %vm838, %v870, %v700
        %v903 = vsel %vm839, %v871, %v707
        %v904 = vsel %vm840, %v872, %v714
        %v905 = vsel %vm841, %v873, %v721
        %v906 = vsel %vm842, %v874, %v728
        %v907 = vsel %vm843, %v875, %v735
        %v908 = vsel %vm844, %v876, %v742
        %v909 = vsel %vm845, %v877, %v749
        %vm910 = vcmp.ge.s32.totalorder %v878, 1
        %vm911 = vcmp.ge.s32.totalorder %v879, 1
        %vm912 = vcmp.ge.s32.totalorder %v880, 1
        %vm913 = vcmp.ge.s32.totalorder %v881, 1
        %vm914 = vcmp.ge.s32.totalorder %v882, 1
        %vm915 = vcmp.ge.s32.totalorder %v883, 1
        %vm916 = vcmp.ge.s32.totalorder %v884, 1
        %vm917 = vcmp.ge.s32.totalorder %v885, 1
        %vm918 = vcmp.ge.s32.totalorder %v886, 1
        %vm919 = vcmp.ge.s32.totalorder %v887, 1
        %vm920 = vcmp.ge.s32.totalorder %v888, 1
        %vm921 = vcmp.ge.s32.totalorder %v889, 1
        %vm922 = vcmp.ge.s32.totalorder %v890, 1
        %vm923 = vcmp.ge.s32.totalorder %v891, 1
        %vm924 = vcmp.ge.s32.totalorder %v892, 1
        %vm925 = vcmp.ge.s32.totalorder %v893, 1
        %vm926 = vcmp.ge.s32.totalorder %v894, 1
        %vm927 = vcmp.ge.s32.totalorder %v895, 1
        %vm928 = vcmp.ge.s32.totalorder %v896, 1
        %vm929 = vcmp.ge.s32.totalorder %v897, 1
        %vm930 = vcmp.ge.s32.totalorder %v898, 1
        %vm931 = vcmp.ge.s32.totalorder %v899, 1
        %vm932 = vcmp.ge.s32.totalorder %v900, 1
        %vm933 = vcmp.ge.s32.totalorder %v901, 1
        %vm934 = vcmp.ge.s32.totalorder %v902, 1
        %vm935 = vcmp.ge.s32.totalorder %v903, 1
        %vm936 = vcmp.ge.s32.totalorder %v904, 1
        %vm937 = vcmp.ge.s32.totalorder %v905, 1
        %vm938 = vcmp.ge.s32.totalorder %v906, 1
        %vm939 = vcmp.ge.s32.totalorder %v907, 1
        %vm940 = vcmp.ge.s32.totalorder %v908, 1
        %vm941 = vcmp.ge.s32.totalorder %v909, 1
        %vm942 = vcmp.le.s32.totalorder %v878, 14
        %vm943 = vcmp.le.s32.totalorder %v879, 14
        %vm944 = vcmp.le.s32.totalorder %v880, 14
        %vm945 = vcmp.le.s32.totalorder %v881, 14
        %vm946 = vcmp.le.s32.totalorder %v882, 14
        %vm947 = vcmp.le.s32.totalorder %v883, 14
        %vm948 = vcmp.le.s32.totalorder %v884, 14
        %vm949 = vcmp.le.s32.totalorder %v885, 14
        %vm950 = vcmp.le.s32.totalorder %v886, 14
        %vm951 = vcmp.le.s32.totalorder %v887, 14
        %vm952 = vcmp.le.s32.totalorder %v888, 14
        %vm953 = vcmp.le.s32.totalorder %v889, 14
        %vm954 = vcmp.le.s32.totalorder %v890, 14
        %vm955 = vcmp.le.s32.totalorder %v891, 14
        %vm956 = vcmp.le.s32.totalorder %v892, 14
        %vm957 = vcmp.le.s32.totalorder %v893, 14
        %vm958 = vcmp.le.s32.totalorder %v894, 14
        %vm959 = vcmp.le.s32.totalorder %v895, 14
        %vm960 = vcmp.le.s32.totalorder %v896, 14
        %vm961 = vcmp.le.s32.totalorder %v897, 14
        %vm962 = vcmp.le.s32.totalorder %v898, 14
        %vm963 = vcmp.le.s32.totalorder %v899, 14
        %vm964 = vcmp.le.s32.totalorder %v900, 14
        %vm965 = vcmp.le.s32.totalorder %v901, 14
        %vm966 = vcmp.le.s32.totalorder %v902, 14
        %vm967 = vcmp.le.s32.totalorder %v903, 14
        %vm968 = vcmp.le.s32.totalorder %v904, 14
        %vm969 = vcmp.le.s32.totalorder %v905, 14
        %vm970 = vcmp.le.s32.totalorder %v906, 14
        %vm971 = vcmp.le.s32.totalorder %v907, 14
        %vm972 = vcmp.le.s32.totalorder %v908, 14
        %vm973 = vcmp.le.s32.totalorder %v909, 14
        %v974 = vld [vmem:[%s491] sm:$0xff]
        %v975 = vld [vmem:[%s491 + $0x8] sm:$0xff]
        %v976 = vld [vmem:[%s491 + $0x10] sm:$0xff]
        %v977 = vld [vmem:[%s491 + $0x18] sm:$0xff]
        %v978 = vld [vmem:[%s491 + $0x20] sm:$0xff]
        %v979 = vld [vmem:[%s491 + $0x28] sm:$0xff]
        %v980 = vld [vmem:[%s491 + $0x30] sm:$0xff]
        %v981 = vld [vmem:[%s491 + $0x38] sm:$0xff]
        %v982 = vld [vmem:[%s491 + $0x40] sm:$0xff]
        %v983 = vld [vmem:[%s491 + $0x48] sm:$0xff]
        %v984 = vld [vmem:[%s491 + $0x50] sm:$0xff]
        %v985 = vld [vmem:[%s491 + $0x58] sm:$0xff]
        %v986 = vld [vmem:[%s491 + $0x60] sm:$0xff]
        %v987 = vld [vmem:[%s491 + $0x68] sm:$0xff]
        %v988 = vld [vmem:[%s491 + $0x70] sm:$0xff]
        %v989 = vld [vmem:[%s491 + $0x78] sm:$0xff]
        %v990 = vld [vmem:[%s491 + $0x80] sm:$0xff]
        %v991 = vld [vmem:[%s491 + $0x88] sm:$0xff]
        %v992 = vld [vmem:[%s491 + $0x90] sm:$0xff]
        %v993 = vld [vmem:[%s491 + $0x98] sm:$0xff]
        %v994 = vld [vmem:[%s491 + $0xa0] sm:$0xff]
        %v995 = vld [vmem:[%s491 + $0xa8] sm:$0xff]
        %v996 = vld [vmem:[%s491 + $0xb0] sm:$0xff]
        %v997 = vld [vmem:[%s491 + $0xb8] sm:$0xff]
        %v998 = vld [vmem:[%s491 + $0xc0] sm:$0xff]
        %v999 = vld [vmem:[%s491 + $0xc8] sm:$0xff]
        %v1000 = vld [vmem:[%s491 + $0xd0] sm:$0xff]
        %v1001 = vld [vmem:[%s491 + $0xd8] sm:$0xff]
        %v1002 = vld [vmem:[%s491 + $0xe0] sm:$0xff]
        %v1003 = vld [vmem:[%s491 + $0xe8] sm:$0xff]
        %v1004 = vld [vmem:[%s491 + $0xf0] sm:$0xff]
        %v1005 = vld [vmem:[%s491 + $0xf8] sm:$0xff]
        %vm1006 = vcmask 64512
        %1007 = vst.msk [vmem:[#allocation2] sm:$0xff] %vm1006, 0.0
        %1008 = vst.msk [vmem:[#allocation2 + $0x8] sm:$0xff] %vm1006, 0.0
        %1009 = vst.msk [vmem:[#allocation2 + $0x10] sm:$0xff] %vm1006, 0.0
        %1010 = vst.msk [vmem:[#allocation2 + $0x18] sm:$0xff] %vm1006, 0.0
        %1011 = vst.msk [vmem:[#allocation2 + $0x20] sm:$0xff] %vm1006, 0.0
        %1012 = vst.msk [vmem:[#allocation2 + $0x28] sm:$0xff] %vm1006, 0.0
        %1013 = vst.msk [vmem:[#allocation2 + $0x30] sm:$0xff] %vm1006, 0.0
        %1014 = vst.msk [vmem:[#allocation2 + $0x38] sm:$0xff] %vm1006, 0.0
        %1015 = vst.msk [vmem:[#allocation2 + $0x40] sm:$0xff] %vm1006, 0.0
        %1016 = vst.msk [vmem:[#allocation2 + $0x48] sm:$0xff] %vm1006, 0.0
        %1017 = vst.msk [vmem:[#allocation2 + $0x50] sm:$0xff] %vm1006, 0.0
        %1018 = vst.msk [vmem:[#allocation2 + $0x58] sm:$0xff] %vm1006, 0.0
        %1019 = vst.msk [vmem:[#allocation2 + $0x60] sm:$0xff] %vm1006, 0.0
        %1020 = vst.msk [vmem:[#allocation2 + $0x68] sm:$0xff] %vm1006, 0.0
        %1021 = vst.msk [vmem:[#allocation2 + $0x70] sm:$0xff] %vm1006, 0.0
        %1022 = vst.msk [vmem:[#allocation2 + $0x78] sm:$0xff] %vm1006, 0.0
        %1023 = vst.msk [vmem:[#allocation2 + $0x80] sm:$0xff] %vm1006, 0.0
        %1024 = vst.msk [vmem:[#allocation2 + $0x88] sm:$0xff] %vm1006, 0.0
        %1025 = vst.msk [vmem:[#allocation2 + $0x90] sm:$0xff] %vm1006, 0.0
        %1026 = vst.msk [vmem:[#allocation2 + $0x98] sm:$0xff] %vm1006, 0.0
        %1027 = vst.msk [vmem:[#allocation2 + $0xa0] sm:$0xff] %vm1006, 0.0
        %1028 = vst.msk [vmem:[#allocation2 + $0xa8] sm:$0xff] %vm1006, 0.0
        %1029 = vst.msk [vmem:[#allocation2 + $0xb0] sm:$0xff] %vm1006, 0.0
        %1030 = vst.msk [vmem:[#allocation2 + $0xb8] sm:$0xff] %vm1006, 0.0
        %1031 = vst.msk [vmem:[#allocation2 + $0xc0] sm:$0xff] %vm1006, 0.0
        %1032 = vst.msk [vmem:[#allocation2 + $0xc8] sm:$0xff] %vm1006, 0.0
        %1033 = vst.msk [vmem:[#allocation2 + $0xd0] sm:$0xff] %vm1006, 0.0
        %1034 = vst.msk [vmem:[#allocation2 + $0xd8] sm:$0xff] %vm1006, 0.0
        %1035 = vst.msk [vmem:[#allocation2 + $0xe0] sm:$0xff] %vm1006, 0.0
        %1036 = vst.msk [vmem:[#allocation2 + $0xe8] sm:$0xff] %vm1006, 0.0
        %1037 = vst.msk [vmem:[#allocation2 + $0xf0] sm:$0xff] %vm1006, 0.0
        %1038 = vst.msk [vmem:[#allocation2 + $0xf8] sm:$0xff] %vm1006, 0.0
        %1039 = vst.msk [vmem:[#allocation2 + $0x100] sm:$0xff] %vm1006, 0.0
        %1040 = vst.msk [vmem:[#allocation2 + $0x108] sm:$0xff] %vm1006, 0.0
        %1041 = vst.msk [vmem:[#allocation2 + $0x110] sm:$0xff] %vm1006, 0.0
        %1042 = vst.msk [vmem:[#allocation2 + $0x118] sm:$0xff] %vm1006, 0.0
        %1043 = vst.msk [vmem:[#allocation2 + $0x120] sm:$0xff] %vm1006, 0.0
        %1044 = vst.msk [vmem:[#allocation2 + $0x128] sm:$0xff] %vm1006, 0.0
        %1045 = vst.msk [vmem:[#allocation2 + $0x18] sm:$0xff] %vm1006, %v974
        %1046 = vst.msk [vmem:[#allocation2 + $0x20] sm:$0xff] %vm1006, %v975
        %1047 = vst.msk [vmem:[#allocation2 + $0x28] sm:$0xff] %vm1006, %v976
        %1048 = vst.msk [vmem:[#allocation2 + $0x30] sm:$0xff] %vm1006, %v977
        %1049 = vst.msk [vmem:[#allocation2 + $0x38] sm:$0xff] %vm1006, %v978
        %1050 = vst.msk [vmem:[#allocation2 + $0x40] sm:$0xff] %vm1006, %v979
        %1051 = vst.msk [vmem:[#allocation2 + $0x48] sm:$0xff] %vm1006, %v980
        %1052 = vst.msk [vmem:[#allocation2 + $0x50] sm:$0xff] %vm1006, %v981
        %1053 = vst.msk [vmem:[#allocation2 + $0x58] sm:$0xff] %vm1006, %v982
        %1054 = vst.msk [vmem:[#allocation2 + $0x60] sm:$0xff] %vm1006, %v983
        %1055 = vst.msk [vmem:[#allocation2 + $0x68] sm:$0xff] %vm1006, %v984
        %1056 = vst.msk [vmem:[#allocation2 + $0x70] sm:$0xff] %vm1006, %v985
        %1057 = vst.msk [vmem:[#allocation2 + $0x78] sm:$0xff] %vm1006, %v986
        %1058 = vst.msk [vmem:[#allocation2 + $0x80] sm:$0xff] %vm1006, %v987
        %1059 = vst.msk [vmem:[#allocation2 + $0x88] sm:$0xff] %vm1006, %v988
        %1060 = vst.msk [vmem:[#allocation2 + $0x90] sm:$0xff] %vm1006, %v989
        %1061 = vst.msk [vmem:[#allocation2 + $0x98] sm:$0xff] %vm1006, %v990
        %1062 = vst.msk [vmem:[#allocation2 + $0xa0] sm:$0xff] %vm1006, %v991
        %1063 = vst.msk [vmem:[#allocation2 + $0xa8] sm:$0xff] %vm1006, %v992
        %1064 = vst.msk [vmem:[#allocation2 + $0xb0] sm:$0xff] %vm1006, %v993
        %1065 = vst.msk [vmem:[#allocation2 + $0xb8] sm:$0xff] %vm1006, %v994
        %1066 = vst.msk [vmem:[#allocation2 + $0xc0] sm:$0xff] %vm1006, %v995
        %1067 = vst.msk [vmem:[#allocation2 + $0xc8] sm:$0xff] %vm1006, %v996
        %1068 = vst.msk [vmem:[#allocation2 + $0xd0] sm:$0xff] %vm1006, %v997
        %1069 = vst.msk [vmem:[#allocation2 + $0xd8] sm:$0xff] %vm1006, %v998
        %1070 = vst.msk [vmem:[#allocation2 + $0xe0] sm:$0xff] %vm1006, %v999
        %1071 = vst.msk [vmem:[#allocation2 + $0xe8] sm:$0xff] %vm1006, %v1000
        %1072 = vst.msk [vmem:[#allocation2 + $0xf0] sm:$0xff] %vm1006, %v1001
        %1073 = vst.msk [vmem:[#allocation2 + $0xf8] sm:$0xff] %vm1006, %v1002
        %1074 = vst.msk [vmem:[#allocation2 + $0x100] sm:$0xff] %vm1006, %v1003
        %1075 = vst.msk [vmem:[#allocation2 + $0x108] sm:$0xff] %vm1006, %v1004
        %1076 = vst.msk [vmem:[#allocation2 + $0x110] sm:$0xff] %vm1006, %v1005
        %v1077 = vld [vmem:[#allocation2 + $0x7] sm:$0xff]
        %v1078 = vld [vmem:[#allocation2 + $0xf] sm:$0xff]
        %v1079 = vld [vmem:[#allocation2 + $0x17] sm:$0xff]
        %v1080 = vld [vmem:[#allocation2 + $0x1f] sm:$0xff]
        %v1081 = vld [vmem:[#allocation2 + $0x27] sm:$0xff]
        %v1082 = vld [vmem:[#allocation2 + $0x2f] sm:$0xff]
        %v1083 = vld [vmem:[#allocation2 + $0x37] sm:$0xff]
        %v1084 = vld [vmem:[#allocation2 + $0x3f] sm:$0xff]
        %v1085 = vld [vmem:[#allocation2 + $0x47] sm:$0xff]
        %v1086 = vld [vmem:[#allocation2 + $0x4f] sm:$0xff]
        %v1087 = vld [vmem:[#allocation2 + $0x57] sm:$0xff]
        %v1088 = vld [vmem:[#allocation2 + $0x5f] sm:$0xff]
        %v1089 = vld [vmem:[#allocation2 + $0x67] sm:$0xff]
        %v1090 = vld [vmem:[#allocation2 + $0x6f] sm:$0xff]
        %v1091 = vld [vmem:[#allocation2 + $0x77] sm:$0xff]
        %v1092 = vld [vmem:[#allocation2 + $0x7f] sm:$0xff]
        %v1093 = vld [vmem:[#allocation2 + $0x87] sm:$0xff]
        %v1094 = vld [vmem:[#allocation2 + $0x8f] sm:$0xff]
        %v1095 = vld [vmem:[#allocation2 + $0x97] sm:$0xff]
        %v1096 = vld [vmem:[#allocation2 + $0x9f] sm:$0xff]
        %v1097 = vld [vmem:[#allocation2 + $0xa7] sm:$0xff]
        %v1098 = vld [vmem:[#allocation2 + $0xaf] sm:$0xff]
        %v1099 = vld [vmem:[#allocation2 + $0xb7] sm:$0xff]
        %v1100 = vld [vmem:[#allocation2 + $0xbf] sm:$0xff]
        %v1101 = vld [vmem:[#allocation2 + $0xc7] sm:$0xff]
        %v1102 = vld [vmem:[#allocation2 + $0xcf] sm:$0xff]
        %v1103 = vld [vmem:[#allocation2 + $0xd7] sm:$0xff]
        %v1104 = vld [vmem:[#allocation2 + $0xdf] sm:$0xff]
        %v1105 = vld [vmem:[#allocation2 + $0xe7] sm:$0xff]
        %v1106 = vld [vmem:[#allocation2 + $0xef] sm:$0xff]
        %v1107 = vld [vmem:[#allocation2 + $0xf7] sm:$0xff]
        %v1108 = vld [vmem:[#allocation2 + $0xff] sm:$0xff]
        %v1109 = vsel %vm910, 1, 0
        %v1110 = vsel %vm911, 1, 0
        %v1111 = vsel %vm912, 1, 0
        %v1112 = vsel %vm913, 1, 0
        %v1113 = vsel %vm914, 1, 0
        %v1114 = vsel %vm915, 1, 0
        %v1115 = vsel %vm916, 1, 0
        %v1116 = vsel %vm917, 1, 0
        %v1117 = vsel %vm918, 1, 0
        %v1118 = vsel %vm919, 1, 0
        %v1119 = vsel %vm920, 1, 0
        %v1120 = vsel %vm921, 1, 0
        %v1121 = vsel %vm922, 1, 0
        %v1122 = vsel %vm923, 1, 0
        %v1123 = vsel %vm924, 1, 0
        %v1124 = vsel %vm925, 1, 0
        %v1125 = vsel %vm926, 1, 0
        %v1126 = vsel %vm927, 1, 0
        %v1127 = vsel %vm928, 1, 0
        %v1128 = vsel %vm929, 1, 0
        %v1129 = vsel %vm930, 1, 0
        %v1130 = vsel %vm931, 1, 0
        %v1131 = vsel %vm932, 1, 0
        %v1132 = vsel %vm933, 1, 0
        %v1133 = vsel %vm934, 1, 0
        %v1134 = vsel %vm935, 1, 0
        %v1135 = vsel %vm936, 1, 0
        %v1136 = vsel %vm937, 1, 0
        %v1137 = vsel %vm938, 1, 0
        %v1138 = vsel %vm939, 1, 0
        %v1139 = vsel %vm940, 1, 0
        %v1140 = vsel %vm941, 1, 0
        %vm1141 = vcmp.eq.s32.totalorder %v1109, 1
        %vm1142 = vcmp.eq.s32.totalorder %v1110, 1
        %vm1143 = vcmp.eq.s32.totalorder %v1111, 1
        %vm1144 = vcmp.eq.s32.totalorder %v1112, 1
        %vm1145 = vcmp.eq.s32.totalorder %v1113, 1
        %vm1146 = vcmp.eq.s32.totalorder %v1114, 1
        %vm1147 = vcmp.eq.s32.totalorder %v1115, 1
        %vm1148 = vcmp.eq.s32.totalorder %v1116, 1
        %vm1149 = vcmp.eq.s32.totalorder %v1117, 1
        %vm1150 = vcmp.eq.s32.totalorder %v1118, 1
        %vm1151 = vcmp.eq.s32.totalorder %v1119, 1
        %vm1152 = vcmp.eq.s32.totalorder %v1120, 1
        %vm1153 = vcmp.eq.s32.totalorder %v1121, 1
        %vm1154 = vcmp.eq.s32.totalorder %v1122, 1
        %vm1155 = vcmp.eq.s32.totalorder %v1123, 1
        %vm1156 = vcmp.eq.s32.totalorder %v1124, 1
        %vm1157 = vcmp.eq.s32.totalorder %v1125, 1
        %vm1158 = vcmp.eq.s32.totalorder %v1126, 1
        %vm1159 = vcmp.eq.s32.totalorder %v1127, 1
        %vm1160 = vcmp.eq.s32.totalorder %v1128, 1
        %vm1161 = vcmp.eq.s32.totalorder %v1129, 1
        %vm1162 = vcmp.eq.s32.totalorder %v1130, 1
        %vm1163 = vcmp.eq.s32.totalorder %v1131, 1
        %vm1164 = vcmp.eq.s32.totalorder %v1132, 1
        %vm1165 = vcmp.eq.s32.totalorder %v1133, 1
        %vm1166 = vcmp.eq.s32.totalorder %v1134, 1
        %vm1167 = vcmp.eq.s32.totalorder %v1135, 1
        %vm1168 = vcmp.eq.s32.totalorder %v1136, 1
        %vm1169 = vcmp.eq.s32.totalorder %v1137, 1
        %vm1170 = vcmp.eq.s32.totalorder %v1138, 1
        %vm1171 = vcmp.eq.s32.totalorder %v1139, 1
        %vm1172 = vcmp.eq.s32.totalorder %v1140, 1
        %v1173 = vsel %vm1141, %v1077, 0.0
        %v1174 = vsel %vm1142, %v1078, 0.0
        %v1175 = vsel %vm1143, %v1079, 0.0
        %v1176 = vsel %vm1144, %v1080, 0.0
        %v1177 = vsel %vm1145, %v1081, 0.0
        %v1178 = vsel %vm1146, %v1082, 0.0
        %v1179 = vsel %vm1147, %v1083, 0.0
        %v1180 = vsel %vm1148, %v1084, 0.0
        %v1181 = vsel %vm1149, %v1085, 0.0
        %v1182 = vsel %vm1150, %v1086, 0.0
        %v1183 = vsel %vm1151, %v1087, 0.0
        %v1184 = vsel %vm1152, %v1088, 0.0
        %v1185 = vsel %vm1153, %v1089, 0.0
        %v1186 = vsel %vm1154, %v1090, 0.0
        %v1187 = vsel %vm1155, %v1091, 0.0
        %v1188 = vsel %vm1156, %v1092, 0.0
        %v1189 = vsel %vm1157, %v1093, 0.0
        %v1190 = vsel %vm1158, %v1094, 0.0
        %v1191 = vsel %vm1159, %v1095, 0.0
        %v1192 = vsel %vm1160, %v1096, 0.0
        %v1193 = vsel %vm1161, %v1097, 0.0
        %v1194 = vsel %vm1162, %v1098, 0.0
        %v1195 = vsel %vm1163, %v1099, 0.0
        %v1196 = vsel %vm1164, %v1100, 0.0
        %v1197 = vsel %vm1165, %v1101, 0.0
        %v1198 = vsel %vm1166, %v1102, 0.0
        %v1199 = vsel %vm1167, %v1103, 0.0
        %v1200 = vsel %vm1168, %v1104, 0.0
        %v1201 = vsel %vm1169, %v1105, 0.0
        %v1202 = vsel %vm1170, %v1106, 0.0
        %v1203 = vsel %vm1171, %v1107, 0.0
        %v1204 = vsel %vm1172, %v1108, 0.0
        %v1205 = vpack.c.bf16 %v1174, %v1173
        %v1206 = vpack.c.bf16 %v1176, %v1175
        %v1207 = vpack.c.bf16 %v1178, %v1177
        %v1208 = vpack.c.bf16 %v1180, %v1179
        %v1209 = vpack.c.bf16 %v1182, %v1181
        %v1210 = vpack.c.bf16 %v1184, %v1183
        %v1211 = vpack.c.bf16 %v1186, %v1185
        %v1212 = vpack.c.bf16 %v1188, %v1187
        %v1213 = vpack.c.bf16 %v1190, %v1189
        %v1214 = vpack.c.bf16 %v1192, %v1191
        %v1215 = vpack.c.bf16 %v1194, %v1193
        %v1216 = vpack.c.bf16 %v1196, %v1195
        %v1217 = vpack.c.bf16 %v1198, %v1197
        %v1218 = vpack.c.bf16 %v1200, %v1199
        %v1219 = vpack.c.bf16 %v1202, %v1201
        %v1220 = vpack.c.bf16 %v1204, %v1203
        %v1221 = vld [vmem:[%s1] sm:$0xff]
        %v1222 = vpack.c.bf16 %v1221, %v1221
        %v1223 = vld [vmem:[#allocation2 + $0x8] sm:$0xff]
        %v1224 = vld [vmem:[#allocation2 + $0x10] sm:$0xff]
        %v1225 = vld [vmem:[#allocation2 + $0x18] sm:$0xff]
        %v1226 = vld [vmem:[#allocation2 + $0x20] sm:$0xff]
        %v1227 = vld [vmem:[#allocation2 + $0x28] sm:$0xff]
        %v1228 = vld [vmem:[#allocation2 + $0x30] sm:$0xff]
        %v1229 = vld [vmem:[#allocation2 + $0x38] sm:$0xff]
        %v1230 = vld [vmem:[#allocation2 + $0x40] sm:$0xff]
        %v1231 = vld [vmem:[#allocation2 + $0x48] sm:$0xff]
        %v1232 = vld [vmem:[#allocation2 + $0x50] sm:$0xff]
        %v1233 = vld [vmem:[#allocation2 + $0x58] sm:$0xff]
        %v1234 = vld [vmem:[#allocation2 + $0x60] sm:$0xff]
        %v1235 = vld [vmem:[#allocation2 + $0x68] sm:$0xff]
        %v1236 = vld [vmem:[#allocation2 + $0x70] sm:$0xff]
        %v1237 = vld [vmem:[#allocation2 + $0x78] sm:$0xff]
        %v1238 = vld [vmem:[#allocation2 + $0x80] sm:$0xff]
        %v1239 = vld [vmem:[#allocation2 + $0x88] sm:$0xff]
        %v1240 = vld [vmem:[#allocation2 + $0x90] sm:$0xff]
        %v1241 = vld [vmem:[#allocation2 + $0x98] sm:$0xff]
        %v1242 = vld [vmem:[#allocation2 + $0xa0] sm:$0xff]
        %v1243 = vld [vmem:[#allocation2 + $0xa8] sm:$0xff]
        %v1244 = vld [vmem:[#allocation2 + $0xb0] sm:$0xff]
        %v1245 = vld [vmem:[#allocation2 + $0xb8] sm:$0xff]
        %v1246 = vld [vmem:[#allocation2 + $0xc0] sm:$0xff]
        %v1247 = vld [vmem:[#allocation2 + $0xc8] sm:$0xff]
        %v1248 = vld [vmem:[#allocation2 + $0xd0] sm:$0xff]
        %v1249 = vld [vmem:[#allocation2 + $0xd8] sm:$0xff]
        %v1250 = vld [vmem:[#allocation2 + $0xe0] sm:$0xff]
        %v1251 = vld [vmem:[#allocation2 + $0xe8] sm:$0xff]
        %v1252 = vld [vmem:[#allocation2 + $0xf0] sm:$0xff]
        %v1253 = vld [vmem:[#allocation2 + $0xf8] sm:$0xff]
        %v1254 = vld [vmem:[#allocation2 + $0x100] sm:$0xff]
        %v1255 = vpack.c.bf16 %v1224, %v1223
        %v1256 = vpack.c.bf16 %v1226, %v1225
        %v1257 = vpack.c.bf16 %v1228, %v1227
        %v1258 = vpack.c.bf16 %v1230, %v1229
        %v1259 = vpack.c.bf16 %v1232, %v1231
        %v1260 = vpack.c.bf16 %v1234, %v1233
        %v1261 = vpack.c.bf16 %v1236, %v1235
        %v1262 = vpack.c.bf16 %v1238, %v1237
        %v1263 = vpack.c.bf16 %v1240, %v1239
        %v1264 = vpack.c.bf16 %v1242, %v1241
        %v1265 = vpack.c.bf16 %v1244, %v1243
        %v1266 = vpack.c.bf16 %v1246, %v1245
        %v1267 = vpack.c.bf16 %v1248, %v1247
        %v1268 = vpack.c.bf16 %v1250, %v1249
        %v1269 = vpack.c.bf16 %v1252, %v1251
        %v1270 = vpack.c.bf16 %v1254, %v1253
        %s1271 = scalar_lea.vmem %s1, 8
        %v1272 = vld [vmem:[%s1271] sm:$0xff]
        %v1273 = vpack.c.bf16 %v1272, %v1272
        %v1275 = vsel %vm1006, %v1255, 0
        %v1278 = vsel %vm1006, %v1256, 0
        %v1281 = vsel %vm1006, %v1257, 0
        %v1284 = vsel %vm1006, %v1258, 0
        %v1287 = vsel %vm1006, %v1259, 0
        %v1290 = vsel %vm1006, %v1260, 0
        %v1293 = vsel %vm1006, %v1261, 0
        %v1296 = vsel %vm1006, %v1262, 0
        %v1299 = vsel %vm1006, %v1263, 0
        %v1302 = vsel %vm1006, %v1264, 0
        %v1305 = vsel %vm1006, %v1265, 0
        %v1308 = vsel %vm1006, %v1266, 0
        %v1311 = vsel %vm1006, %v1267, 0
        %v1314 = vsel %vm1006, %v1268, 0
        %v1317 = vsel %vm1006, %v1269, 0
        %v1320 = vsel %vm1006, %v1270, 0
        %vm1322 = vcmask 1043456
        %v1324 = vsel %vm1322, %v1273, 0
        %1326 = vmatprep.subr.bf16.mxu0 0
        %1327 = vmatpush1.bf16.msra.mxu0 %v1324
        %1328 = vmatprep.subr.bf16.mxu0 0
        %1329 = vmatpush1.bf16.msra.mxu0 0
        %1330 = vmatprep.subr.bf16.mxu0 0
        %1331 = vmatpush1.bf16.msra.mxu0 0
        %1332 = vmatprep.subr.bf16.mxu0 0
        %1333 = vmatpush1.bf16.msra.mxu0 0
        %1334 = vmatprep.subr.bf16.mxu0 0
        %1335 = vmatpush1.bf16.msra.mxu0 0
        %1336 = vmatprep.subr.bf16.mxu0 0
        %1337 = vmatpush1.bf16.msra.mxu0 0
        %1338 = vmatprep.subr.bf16.mxu0 0
        %1339 = vmatpush1.bf16.msra.mxu0 0
        %1340 = vmatprep.subr.bf16.mxu0 0
        %1341 = vmatpush1.bf16.msra.mxu0 0
        %1342 = vmatprep.subr.bf16.mxu0 0
        %1343 = vmatpush1.bf16.msra.mxu0 0
        %1344 = vmatprep.subr.bf16.mxu0 0
        %1345 = vmatpush1.bf16.msra.mxu0 0
        %1346 = vmatprep.subr.bf16.mxu0 0
        %1347 = vmatpush1.bf16.msra.mxu0 0
        %1348 = vmatprep.subr.bf16.mxu0 0
        %1349 = vmatpush1.bf16.msra.mxu0 0
        %1350 = vmatprep.subr.bf16.mxu0 0
        %1351 = vmatpush1.bf16.msra.mxu0 0
        %1352 = vmatprep.subr.bf16.mxu0 0
        %1353 = vmatpush1.bf16.msra.mxu0 0
        %1354 = vmatprep.subr.bf16.mxu0 0
        %1355 = vmatpush1.bf16.msra.mxu0 0
        %1356 = vmatprep.subr.bf16.mxu0 0
        %1357 = vmatpush1.bf16.msra.mxu0 0
        %1358 = vmatprep.mubr.bf16.mxu0 0
        %1359 = vmatmul.mubr.bf16.gmra.mrb[0].mxu0 %v1275
        %v1360 = vpop.f32.mrb[0].mxu0
        %v1361 = vadd.f32 0.0, %v1360
        %v1362 = vpop.f32.mrb[0].mxu0
        %v1363 = vpop.f32.mrb[0].mxu0
        %v1364 = vadd.f32 0.0, %v1363
        %v1365 = vpop.f32.mrb[0].mxu0
        %1366 = vmatprep.mubr.bf16.mxu0 0
        %1367 = vmatmul.mubr.bf16.gmra.mrb[0].mxu0 %v1278
        %v1368 = vpop.f32.mrb[0].mxu0
        %v1369 = vadd.f32 0.0, %v1368
        %v1370 = vpop.f32.mrb[0].mxu0
        %v1371 = vpop.f32.mrb[0].mxu0
        %v1372 = vadd.f32 0.0, %v1371
        %v1373 = vpop.f32.mrb[0].mxu0
        %1374 = vmatprep.mubr.bf16.mxu0 0
        %1375 = vmatmul.mubr.bf16.gmra.mrb[0].mxu0 %v1281
        %v1376 = vpop.f32.mrb[0].mxu0
        %v1377 = vadd.f32 0.0, %v1376
        %v1378 = vpop.f32.mrb[0].mxu0
        %v1379 = vpop.f32.mrb[0].mxu0
        %v1380 = vadd.f32 0.0, %v1379
        %v1381 = vpop.f32.mrb[0].mxu0
        %1382 = vmatprep.mubr.bf16.mxu0 0
        %1383 = vmatmul.mubr.bf16.gmra.mrb[0].mxu0 %v1284
        %v1384 = vpop.f32.mrb[0].mxu0
        %v1385 = vadd.f32 0.0, %v1384
        %v1386 = vpop.f32.mrb[0].mxu0
        %v1387 = vpop.f32.mrb[0].mxu0
        %v1388 = vadd.f32 0.0, %v1387
        %v1389 = vpop.f32.mrb[0].mxu0
        %1390 = vmatprep.mubr.bf16.mxu0 0
        %1391 = vmatmul.mubr.bf16.gmra.mrb[0].mxu0 %v1287
        %v1392 = vpop.f32.mrb[0].mxu0
        %v1393 = vadd.f32 0.0, %v1392
        %v1394 = vpop.f32.mrb[0].mxu0
        %v1395 = vpop.f32.mrb[0].mxu0
        %v1396 = vadd.f32 0.0, %v1395
        %v1397 = vpop.f32.mrb[0].mxu0
        %1398 = vmatprep.mubr.bf16.mxu0 0
        %1399 = vmatmul.mubr.bf16.gmra.mrb[0].mxu0 %v1290
        %v1400 = vpop.f32.mrb[0].mxu0
        %v1401 = vadd.f32 0.0, %v1400
        %v1402 = vpop.f32.mrb[0].mxu0
        %v1403 = vpop.f32.mrb[0].mxu0
        %v1404 = vadd.f32 0.0, %v1403
        %v1405 = vpop.f32.mrb[0].mxu0
        %1406 = vmatprep.mubr.bf16.mxu0 0
        %1407 = vmatmul.mubr.bf16.gmra.mrb[0].mxu0 %v1293
        %v1408 = vpop.f32.mrb[0].mxu0
        %v1409 = vadd.f32 0.0, %v1408
        %v1410 = vpop.f32.mrb[0].mxu0
        %v1411 = vpop.f32.mrb[0].mxu0
        %v1412 = vadd.f32 0.0, %v1411
        %v1413 = vpop.f32.mrb[0].mxu0
        %1414 = vmatprep.mubr.bf16.mxu0 0
        %1415 = vmatmul.mubr.bf16.gmra.mrb[0].mxu0 %v1296
        %v1416 = vpop.f32.mrb[0].mxu0
        %v1417 = vadd.f32 0.0, %v1416
        %v1418 = vpop.f32.mrb[0].mxu0
        %v1419 = vpop.f32.mrb[0].mxu0
        %v1420 = vadd.f32 0.0, %v1419
        %v1421 = vpop.f32.mrb[0].mxu0
        %1422 = vmatprep.mubr.bf16.mxu0 0
        %1423 = vmatmul.mubr.bf16.gmra.mrb[0].mxu0 %v1299
        %v1424 = vpop.f32.mrb[0].mxu0
        %v1425 = vadd.f32 0.0, %v1424
        %v1426 = vpop.f32.mrb[0].mxu0
        %v1427 = vpop.f32.mrb[0].mxu0
        %v1428 = vadd.f32 0.0, %v1427
        %v1429 = vpop.f32.mrb[0].mxu0
        %1430 = vmatprep.mubr.bf16.mxu0 0
        %1431 = vmatmul.mubr.bf16.gmra.mrb[0].mxu0 %v1302
        %v1432 = vpop.f32.mrb[0].mxu0
        %v1433 = vadd.f32 0.0, %v1432
        %v1434 = vpop.f32.mrb[0].mxu0
        %v1435 = vpop.f32.mrb[0].mxu0
        %v1436 = vadd.f32 0.0, %v1435
        %v1437 = vpop.f32.mrb[0].mxu0
        %1438 = vmatprep.mubr.bf16.mxu0 0
        %1439 = vmatmul.mubr.bf16.gmra.mrb[0].mxu0 %v1305
        %v1440 = vpop.f32.mrb[0].mxu0
        %v1441 = vadd.f32 0.0, %v1440
        %v1442 = vpop.f32.mrb[0].mxu0
        %v1443 = vpop.f32.mrb[0].mxu0
        %v1444 = vadd.f32 0.0, %v1443
        %v1445 = vpop.f32.mrb[0].mxu0
        %1446 = vmatprep.mubr.bf16.mxu0 0
        %1447 = vmatmul.mubr.bf16.gmra.mrb[0].mxu0 %v1308
        %v1448 = vpop.f32.mrb[0].mxu0
        %v1449 = vadd.f32 0.0, %v1448
        %v1450 = vpop.f32.mrb[0].mxu0
        %v1451 = vpop.f32.mrb[0].mxu0
        %v1452 = vadd.f32 0.0, %v1451
        %v1453 = vpop.f32.mrb[0].mxu0
        %1454 = vmatprep.mubr.bf16.mxu0 0
        %1455 = vmatmul.mubr.bf16.gmra.mrb[0].mxu0 %v1311
        %v1456 = vpop.f32.mrb[0].mxu0
        %v1457 = vadd.f32 0.0, %v1456
        %v1458 = vpop.f32.mrb[0].mxu0
        %v1459 = vpop.f32.mrb[0].mxu0
        %v1460 = vadd.f32 0.0, %v1459
        %v1461 = vpop.f32.mrb[0].mxu0
        %1462 = vmatprep.mubr.bf16.mxu0 0
        %1463 = vmatmul.mubr.bf16.gmra.mrb[0].mxu0 %v1314
        %v1464 = vpop.f32.mrb[0].mxu0
        %v1465 = vadd.f32 0.0, %v1464
        %v1466 = vpop.f32.mrb[0].mxu0
        %v1467 = vpop.f32.mrb[0].mxu0
        %v1468 = vadd.f32 0.0, %v1467
        %v1469 = vpop.f32.mrb[0].mxu0
        %1470 = vmatprep.mubr.bf16.mxu0 0
        %1471 = vmatmul.mubr.bf16.gmra.mrb[0].mxu0 %v1317
        %v1472 = vpop.f32.mrb[0].mxu0
        %v1473 = vadd.f32 0.0, %v1472
        %v1474 = vpop.f32.mrb[0].mxu0
        %v1475 = vpop.f32.mrb[0].mxu0
        %v1476 = vadd.f32 0.0, %v1475
        %v1477 = vpop.f32.mrb[0].mxu0
        %1478 = vmatprep.mubr.bf16.mxu0 0
        %1479 = vmatmul.mubr.bf16.gmra.mrb[0].mxu0 %v1320
        %v1480 = vpop.f32.mrb[0].mxu0
        %v1481 = vadd.f32 0.0, %v1480
        %v1482 = vpop.f32.mrb[0].mxu0
        %v1483 = vpop.f32.mrb[0].mxu0
        %v1484 = vadd.f32 0.0, %v1483
        %v1485 = vpop.f32.mrb[0].mxu0
        %1486 = vdwg.mxu0
        %v1488 = vsel %vm1006, %v1205, 0
        %v1491 = vsel %vm1006, %v1206, 0
        %v1494 = vsel %vm1006, %v1207, 0
        %v1497 = vsel %vm1006, %v1208, 0
        %v1500 = vsel %vm1006, %v1209, 0
        %v1503 = vsel %vm1006, %v1210, 0
        %v1506 = vsel %vm1006, %v1211, 0
        %v1509 = vsel %vm1006, %v1212, 0
        %v1512 = vsel %vm1006, %v1213, 0
        %v1515 = vsel %vm1006, %v1214, 0
        %v1518 = vsel %vm1006, %v1215, 0
        %v1521 = vsel %vm1006, %v1216, 0
        %v1524 = vsel %vm1006, %v1217, 0
        %v1527 = vsel %vm1006, %v1218, 0
        %v1530 = vsel %vm1006, %v1219, 0
        %v1533 = vsel %vm1006, %v1220, 0
        %v1536 = vsel %vm1322, %v1222, 0
        %1538 = vmatprep.subr.bf16.mxu0 0
        %1539 = vmatpush1.bf16.msra.mxu0 %v1536
        %1540 = vmatprep.subr.bf16.mxu0 0
        %1541 = vmatpush1.bf16.msra.mxu0 0
        %1542 = vmatprep.subr.bf16.mxu0 0
        %1543 = vmatpush1.bf16.msra.mxu0 0
        %1544 = vmatprep.subr.bf16.mxu0 0
        %1545 = vmatpush1.bf16.msra.mxu0 0
        %1546 = vmatprep.subr.bf16.mxu0 0
        %1547 = vmatpush1.bf16.msra.mxu0 0
        %1548 = vmatprep.subr.bf16.mxu0 0
        %1549 = vmatpush1.bf16.msra.mxu0 0
        %1550 = vmatprep.subr.bf16.mxu0 0
        %1551 = vmatpush1.bf16.msra.mxu0 0
        %1552 = vmatprep.subr.bf16.mxu0 0
        %1553 = vmatpush1.bf16.msra.mxu0 0
        %1554 = vmatprep.subr.bf16.mxu0 0
        %1555 = vmatpush1.bf16.msra.mxu0 0
        %1556 = vmatprep.subr.bf16.mxu0 0
        %1557 = vmatpush1.bf16.msra.mxu0 0
        %1558 = vmatprep.subr.bf16.mxu0 0
        %1559 = vmatpush1.bf16.msra.mxu0 0
        %1560 = vmatprep.subr.bf16.mxu0 0
        %1561 = vmatpush1.bf16.msra.mxu0 0
        %1562 = vmatprep.subr.bf16.mxu0 0
        %1563 = vmatpush1.bf16.msra.mxu0 0
        %1564 = vmatprep.subr.bf16.mxu0 0
        %1565 = vmatpush1.bf16.msra.mxu0 0
        %1566 = vmatprep.subr.bf16.mxu0 0
        %1567 = vmatpush1.bf16.msra.mxu0 0
        %1568 = vmatprep.subr.bf16.mxu0 0
        %1569 = vmatpush1.bf16.msra.mxu0 0
        %1570 = vmatprep.mubr.bf16.mxu0 0
        %1571 = vmatmul.mubr.bf16.gmra.mrb[0].mxu0 %v1488
        %v1572 = vpop.f32.mrb[0].mxu0
        %v1573 = vadd.f32 %v1361, %v1572
        %v1574 = vpop.f32.mrb[0].mxu0
        %v1575 = vpop.f32.mrb[0].mxu0
        %v1576 = vadd.f32 %v1364, %v1575
        %v1577 = vpop.f32.mrb[0].mxu0
        %1578 = vmatprep.mubr.bf16.mxu0 0
        %1579 = vmatmul.mubr.bf16.gmra.mrb[0].mxu0 %v1491
        %v1580 = vpop.f32.mrb[0].mxu0
        %v1581 = vadd.f32 %v1369, %v1580
        %v1582 = vpop.f32.mrb[0].mxu0
        %v1583 = vpop.f32.mrb[0].mxu0
        %v1584 = vadd.f32 %v1372, %v1583
        %v1585 = vpop.f32.mrb[0].mxu0
        %1586 = vmatprep.mubr.bf16.mxu0 0
        %1587 = vmatmul.mubr.bf16.gmra.mrb[0].mxu0 %v1494
        %v1588 = vpop.f32.mrb[0].mxu0
        %v1589 = vadd.f32 %v1377, %v1588
        %v1590 = vpop.f32.mrb[0].mxu0
        %v1591 = vpop.f32.mrb[0].mxu0
        %v1592 = vadd.f32 %v1380, %v1591
        %v1593 = vpop.f32.mrb[0].mxu0
        %1594 = vmatprep.mubr.bf16.mxu0 0
        %1595 = vmatmul.mubr.bf16.gmra.mrb[0].mxu0 %v1497
        %v1596 = vpop.f32.mrb[0].mxu0
        %v1597 = vadd.f32 %v1385, %v1596
        %v1598 = vpop.f32.mrb[0].mxu0
        %v1599 = vpop.f32.mrb[0].mxu0
        %v1600 = vadd.f32 %v1388, %v1599
        %v1601 = vpop.f32.mrb[0].mxu0
        %1602 = vmatprep.mubr.bf16.mxu0 0
        %1603 = vmatmul.mubr.bf16.gmra.mrb[0].mxu0 %v1500
        %v1604 = vpop.f32.mrb[0].mxu0
        %v1605 = vadd.f32 %v1393, %v1604
        %v1606 = vpop.f32.mrb[0].mxu0
        %v1607 = vpop.f32.mrb[0].mxu0
        %v1608 = vadd.f32 %v1396, %v1607
        %v1609 = vpop.f32.mrb[0].mxu0
        %1610 = vmatprep.mubr.bf16.mxu0 0
        %1611 = vmatmul.mubr.bf16.gmra.mrb[0].mxu0 %v1503
        %v1612 = vpop.f32.mrb[0].mxu0
        %v1613 = vadd.f32 %v1401, %v1612
        %v1614 = vpop.f32.mrb[0].mxu0
        %v1615 = vpop.f32.mrb[0].mxu0
        %v1616 = vadd.f32 %v1404, %v1615
        %v1617 = vpop.f32.mrb[0].mxu0
        %1618 = vmatprep.mubr.bf16.mxu0 0
        %1619 = vmatmul.mubr.bf16.gmra.mrb[0].mxu0 %v1506
        %v1620 = vpop.f32.mrb[0].mxu0
        %v1621 = vadd.f32 %v1409, %v1620
        %v1622 = vpop.f32.mrb[0].mxu0
        %v1623 = vpop.f32.mrb[0].mxu0
        %v1624 = vadd.f32 %v1412, %v1623
        %v1625 = vpop.f32.mrb[0].mxu0
        %1626 = vmatprep.mubr.bf16.mxu0 0
        %1627 = vmatmul.mubr.bf16.gmra.mrb[0].mxu0 %v1509
        %v1628 = vpop.f32.mrb[0].mxu0
        %v1629 = vadd.f32 %v1417, %v1628
        %v1630 = vpop.f32.mrb[0].mxu0
        %v1631 = vpop.f32.mrb[0].mxu0
        %v1632 = vadd.f32 %v1420, %v1631
        %v1633 = vpop.f32.mrb[0].mxu0
        %1634 = vmatprep.mubr.bf16.mxu0 0
        %1635 = vmatmul.mubr.bf16.gmra.mrb[0].mxu0 %v1512
        %v1636 = vpop.f32.mrb[0].mxu0
        %v1637 = vadd.f32 %v1425, %v1636
        %v1638 = vpop.f32.mrb[0].mxu0
        %v1639 = vpop.f32.mrb[0].mxu0
        %v1640 = vadd.f32 %v1428, %v1639
        %v1641 = vpop.f32.mrb[0].mxu0
        %1642 = vmatprep.mubr.bf16.mxu0 0
        %1643 = vmatmul.mubr.bf16.gmra.mrb[0].mxu0 %v1515
        %v1644 = vpop.f32.mrb[0].mxu0
        %v1645 = vadd.f32 %v1433, %v1644
        %v1646 = vpop.f32.mrb[0].mxu0
        %v1647 = vpop.f32.mrb[0].mxu0
        %v1648 = vadd.f32 %v1436, %v1647
        %v1649 = vpop.f32.mrb[0].mxu0
        %1650 = vmatprep.mubr.bf16.mxu0 0
        %1651 = vmatmul.mubr.bf16.gmra.mrb[0].mxu0 %v1518
        %v1652 = vpop.f32.mrb[0].mxu0
        %v1653 = vadd.f32 %v1441, %v1652
        %v1654 = vpop.f32.mrb[0].mxu0
        %v1655 = vpop.f32.mrb[0].mxu0
        %v1656 = vadd.f32 %v1444, %v1655
        %v1657 = vpop.f32.mrb[0].mxu0
        %1658 = vmatprep.mubr.bf16.mxu0 0
        %1659 = vmatmul.mubr.bf16.gmra.mrb[0].mxu0 %v1521
        %v1660 = vpop.f32.mrb[0].mxu0
        %v1661 = vadd.f32 %v1449, %v1660
        %v1662 = vpop.f32.mrb[0].mxu0
        %v1663 = vpop.f32.mrb[0].mxu0
        %v1664 = vadd.f32 %v1452, %v1663
        %v1665 = vpop.f32.mrb[0].mxu0
        %1666 = vmatprep.mubr.bf16.mxu0 0
        %1667 = vmatmul.mubr.bf16.gmra.mrb[0].mxu0 %v1524
        %v1668 = vpop.f32.mrb[0].mxu0
        %v1669 = vadd.f32 %v1457, %v1668
        %v1670 = vpop.f32.mrb[0].mxu0
        %v1671 = vpop.f32.mrb[0].mxu0
        %v1672 = vadd.f32 %v1460, %v1671
        %v1673 = vpop.f32.mrb[0].mxu0
        %1674 = vmatprep.mubr.bf16.mxu0 0
        %1675 = vmatmul.mubr.bf16.gmra.mrb[0].mxu0 %v1527
        %v1676 = vpop.f32.mrb[0].mxu0
        %v1677 = vadd.f32 %v1465, %v1676
        %v1678 = vpop.f32.mrb[0].mxu0
        %v1679 = vpop.f32.mrb[0].mxu0
        %v1680 = vadd.f32 %v1468, %v1679
        %v1681 = vpop.f32.mrb[0].mxu0
        %1682 = vmatprep.mubr.bf16.mxu0 0
        %1683 = vmatmul.mubr.bf16.gmra.mrb[0].mxu0 %v1530
        %v1684 = vpop.f32.mrb[0].mxu0
        %v1685 = vadd.f32 %v1473, %v1684
        %v1686 = vpop.f32.mrb[0].mxu0
        %v1687 = vpop.f32.mrb[0].mxu0
        %v1688 = vadd.f32 %v1476, %v1687
        %v1689 = vpop.f32.mrb[0].mxu0
        %1690 = vmatprep.mubr.bf16.mxu0 0
        %1691 = vmatmul.mubr.bf16.gmra.mrb[0].mxu0 %v1533
        %v1692 = vpop.f32.mrb[0].mxu0
        %v1693 = vadd.f32 %v1481, %v1692
        %v1694 = vpop.f32.mrb[0].mxu0
        %v1695 = vpop.f32.mrb[0].mxu0
        %v1696 = vadd.f32 %v1484, %v1695
        %v1697 = vpop.f32.mrb[0].mxu0
        %1698 = vdwg.mxu0
        %v1699 = vld [vmem:[#allocation2 + $0x9] sm:$0xff]
        %v1700 = vld [vmem:[#allocation2 + $0x11] sm:$0xff]
        %v1701 = vld [vmem:[#allocation2 + $0x19] sm:$0xff]
        %v1702 = vld [vmem:[#allocation2 + $0x21] sm:$0xff]
        %v1703 = vld [vmem:[#allocation2 + $0x29] sm:$0xff]
        %v1704 = vld [vmem:[#allocation2 + $0x31] sm:$0xff]
        %v1705 = vld [vmem:[#allocation2 + $0x39] sm:$0xff]
        %v1706 = vld [vmem:[#allocation2 + $0x41] sm:$0xff]
        %v1707 = vld [vmem:[#allocation2 + $0x49] sm:$0xff]
        %v1708 = vld [vmem:[#allocation2 + $0x51] sm:$0xff]
        %v1709 = vld [vmem:[#allocation2 + $0x59] sm:$0xff]
        %v1710 = vld [vmem:[#allocation2 + $0x61] sm:$0xff]
        %v1711 = vld [vmem:[#allocation2 + $0x69] sm:$0xff]
        %v1712 = vld [vmem:[#allocation2 + $0x71] sm:$0xff]
        %v1713 = vld [vmem:[#allocation2 + $0x79] sm:$0xff]
        %v1714 = vld [vmem:[#allocation2 + $0x81] sm:$0xff]
        %v1715 = vld [vmem:[#allocation2 + $0x89] sm:$0xff]
        %v1716 = vld [vmem:[#allocation2 + $0x91] sm:$0xff]
        %v1717 = vld [vmem:[#allocation2 + $0x99] sm:$0xff]
        %v1718 = vld [vmem:[#allocation2 + $0xa1] sm:$0xff]
        %v1719 = vld [vmem:[#allocation2 + $0xa9] sm:$0xff]
        %v1720 = vld [vmem:[#allocation2 + $0xb1] sm:$0xff]
        %v1721 = vld [vmem:[#allocation2 + $0xb9] sm:$0xff]
        %v1722 = vld [vmem:[#allocation2 + $0xc1] sm:$0xff]
        %v1723 = vld [vmem:[#allocation2 + $0xc9] sm:$0xff]
        %v1724 = vld [vmem:[#allocation2 + $0xd1] sm:$0xff]
        %v1725 = vld [vmem:[#allocation2 + $0xd9] sm:$0xff]
        %v1726 = vld [vmem:[#allocation2 + $0xe1] sm:$0xff]
        %v1727 = vld [vmem:[#allocation2 + $0xe9] sm:$0xff]
        %v1728 = vld [vmem:[#allocation2 + $0xf1] sm:$0xff]
        %v1729 = vld [vmem:[#allocation2 + $0xf9] sm:$0xff]
        %v1730 = vld [vmem:[#allocation2 + $0x101] sm:$0xff]
        %v1731 = vsel %vm942, 1, 0
        %v1732 = vsel %vm943, 1, 0
        %v1733 = vsel %vm944, 1, 0
        %v1734 = vsel %vm945, 1, 0
        %v1735 = vsel %vm946, 1, 0
        %v1736 = vsel %vm947, 1, 0
        %v1737 = vsel %vm948, 1, 0
        %v1738 = vsel %vm949, 1, 0
        %v1739 = vsel %vm950, 1, 0
        %v1740 = vsel %vm951, 1, 0
        %v1741 = vsel %vm952, 1, 0
        %v1742 = vsel %vm953, 1, 0
        %v1743 = vsel %vm954, 1, 0
        %v1744 = vsel %vm955, 1, 0
        %v1745 = vsel %vm956, 1, 0
        %v1746 = vsel %vm957, 1, 0
        %v1747 = vsel %vm958, 1, 0
        %v1748 = vsel %vm959, 1, 0
        %v1749 = vsel %vm960, 1, 0
        %v1750 = vsel %vm961, 1, 0
        %v1751 = vsel %vm962, 1, 0
        %v1752 = vsel %vm963, 1, 0
        %v1753 = vsel %vm964, 1, 0
        %v1754 = vsel %vm965, 1, 0
        %v1755 = vsel %vm966, 1, 0
        %v1756 = vsel %vm967, 1, 0
        %v1757 = vsel %vm968, 1, 0
        %v1758 = vsel %vm969, 1, 0
        %v1759 = vsel %vm970, 1, 0
        %v1760 = vsel %vm971, 1, 0
        %v1761 = vsel %vm972, 1, 0
        %v1762 = vsel %vm973, 1, 0
        %vm1763 = vcmp.eq.s32.totalorder %v1731, 1
        %vm1764 = vcmp.eq.s32.totalorder %v1732, 1
        %vm1765 = vcmp.eq.s32.totalorder %v1733, 1
        %vm1766 = vcmp.eq.s32.totalorder %v1734, 1
        %vm1767 = vcmp.eq.s32.totalorder %v1735, 1
        %vm1768 = vcmp.eq.s32.totalorder %v1736, 1
        %vm1769 = vcmp.eq.s32.totalorder %v1737, 1
        %vm1770 = vcmp.eq.s32.totalorder %v1738, 1
        %vm1771 = vcmp.eq.s32.totalorder %v1739, 1
        %vm1772 = vcmp.eq.s32.totalorder %v1740, 1
        %vm1773 = vcmp.eq.s32.totalorder %v1741, 1
        %vm1774 = vcmp.eq.s32.totalorder %v1742, 1
        %vm1775 = vcmp.eq.s32.totalorder %v1743, 1
        %vm1776 = vcmp.eq.s32.totalorder %v1744, 1
        %vm1777 = vcmp.eq.s32.totalorder %v1745, 1
        %vm1778 = vcmp.eq.s32.totalorder %v1746, 1
        %vm1779 = vcmp.eq.s32.totalorder %v1747, 1
        %vm1780 = vcmp.eq.s32.totalorder %v1748, 1
        %vm1781 = vcmp.eq.s32.totalorder %v1749, 1
        %vm1782 = vcmp.eq.s32.totalorder %v1750, 1
        %vm1783 = vcmp.eq.s32.totalorder %v1751, 1
        %vm1784 = vcmp.eq.s32.totalorder %v1752, 1
        %vm1785 = vcmp.eq.s32.totalorder %v1753, 1
        %vm1786 = vcmp.eq.s32.totalorder %v1754, 1
        %vm1787 = vcmp.eq.s32.totalorder %v1755, 1
        %vm1788 = vcmp.eq.s32.totalorder %v1756, 1
        %vm1789 = vcmp.eq.s32.totalorder %v1757, 1
        %vm1790 = vcmp.eq.s32.totalorder %v1758, 1
        %vm1791 = vcmp.eq.s32.totalorder %v1759, 1
        %vm1792 = vcmp.eq.s32.totalorder %v1760, 1
        %vm1793 = vcmp.eq.s32.totalorder %v1761, 1
        %vm1794 = vcmp.eq.s32.totalorder %v1762, 1
        %v1795 = vsel %vm1763, %v1699, 0.0
        %v1796 = vsel %vm1764, %v1700, 0.0
        %v1797 = vsel %vm1765, %v1701, 0.0
        %v1798 = vsel %vm1766, %v1702, 0.0
        %v1799 = vsel %vm1767, %v1703, 0.0
        %v1800 = vsel %vm1768, %v1704, 0.0
        %v1801 = vsel %vm1769, %v1705, 0.0
        %v1802 = vsel %vm1770, %v1706, 0.0
        %v1803 = vsel %vm1771, %v1707, 0.0
        %v1804 = vsel %vm1772, %v1708, 0.0
        %v1805 = vsel %vm1773, %v1709, 0.0
        %v1806 = vsel %vm1774, %v1710, 0.0
        %v1807 = vsel %vm1775, %v1711, 0.0
        %v1808 = vsel %vm1776, %v1712, 0.0
        %v1809 = vsel %vm1777, %v1713, 0.0
        %v1810 = vsel %vm1778, %v1714, 0.0
        %v1811 = vsel %vm1779, %v1715, 0.0
        %v1812 = vsel %vm1780, %v1716, 0.0
        %v1813 = vsel %vm1781, %v1717, 0.0
        %v1814 = vsel %vm1782, %v1718, 0.0
        %v1815 = vsel %vm1783, %v1719, 0.0
        %v1816 = vsel %vm1784, %v1720, 0.0
        %v1817 = vsel %vm1785, %v1721, 0.0
        %v1818 = vsel %vm1786, %v1722, 0.0
        %v1819 = vsel %vm1787, %v1723, 0.0
        %v1820 = vsel %vm1788, %v1724, 0.0
        %v1821 = vsel %vm1789, %v1725, 0.0
        %v1822 = vsel %vm1790, %v1726, 0.0
        %v1823 = vsel %vm1791, %v1727, 0.0
        %v1824 = vsel %vm1792, %v1728, 0.0
        %v1825 = vsel %vm1793, %v1729, 0.0
        %v1826 = vsel %vm1794, %v1730, 0.0
        %v1827 = vpack.c.bf16 %v1796, %v1795
        %v1828 = vpack.c.bf16 %v1798, %v1797
        %v1829 = vpack.c.bf16 %v1800, %v1799
        %v1830 = vpack.c.bf16 %v1802, %v1801
        %v1831 = vpack.c.bf16 %v1804, %v1803
        %v1832 = vpack.c.bf16 %v1806, %v1805
        %v1833 = vpack.c.bf16 %v1808, %v1807
        %v1834 = vpack.c.bf16 %v1810, %v1809
        %v1835 = vpack.c.bf16 %v1812, %v1811
        %v1836 = vpack.c.bf16 %v1814, %v1813
        %v1837 = vpack.c.bf16 %v1816, %v1815
        %v1838 = vpack.c.bf16 %v1818, %v1817
        %v1839 = vpack.c.bf16 %v1820, %v1819
        %v1840 = vpack.c.bf16 %v1822, %v1821
        %v1841 = vpack.c.bf16 %v1824, %v1823
        %v1842 = vpack.c.bf16 %v1826, %v1825
        %s1843 = scalar_lea.vmem %s1, 16
        %v1844 = vld [vmem:[%s1843] sm:$0xff]
        %v1845 = vpack.c.bf16 %v1844, %v1844
        %v1847 = vsel %vm1006, %v1827, 0
        %v1850 = vsel %vm1006, %v1828, 0
        %v1853 = vsel %vm1006, %v1829, 0
        %v1856 = vsel %vm1006, %v1830, 0
        %v1859 = vsel %vm1006, %v1831, 0
        %v1862 = vsel %vm1006, %v1832, 0
        %v1865 = vsel %vm1006, %v1833, 0
        %v1868 = vsel %vm1006, %v1834, 0
        %v1871 = vsel %vm1006, %v1835, 0
        %v1874 = vsel %vm1006, %v1836, 0
        %v1877 = vsel %vm1006, %v1837, 0
        %v1880 = vsel %vm1006, %v1838, 0
        %v1883 = vsel %vm1006, %v1839, 0
        %v1886 = vsel %vm1006, %v1840, 0
        %v1889 = vsel %vm1006, %v1841, 0
        %v1892 = vsel %vm1006, %v1842, 0
        %v1895 = vsel %vm1322, %v1845, 0
        %1897 = vmatprep.subr.bf16.mxu0 0
        %1898 = vmatpush1.bf16.msra.mxu0 %v1895
        %1899 = vmatprep.subr.bf16.mxu0 0
        %1900 = vmatpush1.bf16.msra.mxu0 0
        %1901 = vmatprep.subr.bf16.mxu0 0
        %1902 = vmatpush1.bf16.msra.mxu0 0
        %1903 = vmatprep.subr.bf16.mxu0 0
        %1904 = vmatpush1.bf16.msra.mxu0 0
        %1905 = vmatprep.subr.bf16.mxu0 0
        %1906 = vmatpush1.bf16.msra.mxu0 0
        %1907 = vmatprep.subr.bf16.mxu0 0
        %1908 = vmatpush1.bf16.msra.mxu0 0
        %1909 = vmatprep.subr.bf16.mxu0 0
        %1910 = vmatpush1.bf16.msra.mxu0 0
        %1911 = vmatprep.subr.bf16.mxu0 0
        %1912 = vmatpush1.bf16.msra.mxu0 0
        %1913 = vmatprep.subr.bf16.mxu0 0
        %1914 = vmatpush1.bf16.msra.mxu0 0
        %1915 = vmatprep.subr.bf16.mxu0 0
        %1916 = vmatpush1.bf16.msra.mxu0 0
        %1917 = vmatprep.subr.bf16.mxu0 0
        %1918 = vmatpush1.bf16.msra.mxu0 0
        %1919 = vmatprep.subr.bf16.mxu0 0
        %1920 = vmatpush1.bf16.msra.mxu0 0
        %1921 = vmatprep.subr.bf16.mxu0 0
        %1922 = vmatpush1.bf16.msra.mxu0 0
        %1923 = vmatprep.subr.bf16.mxu0 0
        %1924 = vmatpush1.bf16.msra.mxu0 0
        %1925 = vmatprep.subr.bf16.mxu0 0
        %1926 = vmatpush1.bf16.msra.mxu0 0
        %1927 = vmatprep.subr.bf16.mxu0 0
        %1928 = vmatpush1.bf16.msra.mxu0 0
        %1929 = vmatprep.mubr.bf16.mxu0 0
        %1930 = vmatmul.mubr.bf16.gmra.mrb[0].mxu0 %v1847
        %v1931 = vpop.f32.mrb[0].mxu0
        %v1932 = vadd.f32 0.0, %v1931
        %v1933 = vpop.f32.mrb[0].mxu0
        %v1934 = vpop.f32.mrb[0].mxu0
        %v1935 = vadd.f32 0.0, %v1934
        %v1936 = vpop.f32.mrb[0].mxu0
        %1937 = vmatprep.mubr.bf16.mxu0 0
        %1938 = vmatmul.mubr.bf16.gmra.mrb[0].mxu0 %v1850
        %v1939 = vpop.f32.mrb[0].mxu0
        %v1940 = vadd.f32 0.0, %v1939
        %v1941 = vpop.f32.mrb[0].mxu0
        %v1942 = vpop.f32.mrb[0].mxu0
        %v1943 = vadd.f32 0.0, %v1942
        %v1944 = vpop.f32.mrb[0].mxu0
        %1945 = vmatprep.mubr.bf16.mxu0 0
        %1946 = vmatmul.mubr.bf16.gmra.mrb[0].mxu0 %v1853
        %v1947 = vpop.f32.mrb[0].mxu0
        %v1948 = vadd.f32 0.0, %v1947
        %v1949 = vpop.f32.mrb[0].mxu0
        %v1950 = vpop.f32.mrb[0].mxu0
        %v1951 = vadd.f32 0.0, %v1950
        %v1952 = vpop.f32.mrb[0].mxu0
        %1953 = vmatprep.mubr.bf16.mxu0 0
        %1954 = vmatmul.mubr.bf16.gmra.mrb[0].mxu0 %v1856
        %v1955 = vpop.f32.mrb[0].mxu0
        %v1956 = vadd.f32 0.0, %v1955
        %v1957 = vpop.f32.mrb[0].mxu0
        %v1958 = vpop.f32.mrb[0].mxu0
        %v1959 = vadd.f32 0.0, %v1958
        %v1960 = vpop.f32.mrb[0].mxu0
        %1961 = vmatprep.mubr.bf16.mxu0 0
        %1962 = vmatmul.mubr.bf16.gmra.mrb[0].mxu0 %v1859
        %v1963 = vpop.f32.mrb[0].mxu0
        %v1964 = vadd.f32 0.0, %v1963
        %v1965 = vpop.f32.mrb[0].mxu0
        %v1966 = vpop.f32.mrb[0].mxu0
        %v1967 = vadd.f32 0.0, %v1966
        %v1968 = vpop.f32.mrb[0].mxu0
        %1969 = vmatprep.mubr.bf16.mxu0 0
        %1970 = vmatmul.mubr.bf16.gmra.mrb[0].mxu0 %v1862
        %v1971 = vpop.f32.mrb[0].mxu0
        %v1972 = vadd.f32 0.0, %v1971
        %v1973 = vpop.f32.mrb[0].mxu0
        %v1974 = vpop.f32.mrb[0].mxu0
        %v1975 = vadd.f32 0.0, %v1974
        %v1976 = vpop.f32.mrb[0].mxu0
        %1977 = vmatprep.mubr.bf16.mxu0 0
        %1978 = vmatmul.mubr.bf16.gmra.mrb[0].mxu0 %v1865
        %v1979 = vpop.f32.mrb[0].mxu0
        %v1980 = vadd.f32 0.0, %v1979
        %v1981 = vpop.f32.mrb[0].mxu0
        %v1982 = vpop.f32.mrb[0].mxu0
        %v1983 = vadd.f32 0.0, %v1982
        %v1984 = vpop.f32.mrb[0].mxu0
        %1985 = vmatprep.mubr.bf16.mxu0 0
        %1986 = vmatmul.mubr.bf16.gmra.mrb[0].mxu0 %v1868
        %v1987 = vpop.f32.mrb[0].mxu0
        %v1988 = vadd.f32 0.0, %v1987
        %v1989 = vpop.f32.mrb[0].mxu0
        %v1990 = vpop.f32.mrb[0].mxu0
        %v1991 = vadd.f32 0.0, %v1990
        %v1992 = vpop.f32.mrb[0].mxu0
        %1993 = vmatprep.mubr.bf16.mxu0 0
        %1994 = vmatmul.mubr.bf16.gmra.mrb[0].mxu0 %v1871
        %v1995 = vpop.f32.mrb[0].mxu0
        %v1996 = vadd.f32 0.0, %v1995
        %v1997 = vpop.f32.mrb[0].mxu0
        %v1998 = vpop.f32.mrb[0].mxu0
        %v1999 = vadd.f32 0.0, %v1998
        %v2000 = vpop.f32.mrb[0].mxu0
        %2001 = vmatprep.mubr.bf16.mxu0 0
        %2002 = vmatmul.mubr.bf16.gmra.mrb[0].mxu0 %v1874
        %v2003 = vpop.f32.mrb[0].mxu0
        %v2004 = vadd.f32 0.0, %v2003
        %v2005 = vpop.f32.mrb[0].mxu0
        %v2006 = vpop.f32.mrb[0].mxu0
        %v2007 = vadd.f32 0.0, %v2006
        %v2008 = vpop.f32.mrb[0].mxu0
        %2009 = vmatprep.mubr.bf16.mxu0 0
        %2010 = vmatmul.mubr.bf16.gmra.mrb[0].mxu0 %v1877
        %v2011 = vpop.f32.mrb[0].mxu0
        %v2012 = vadd.f32 0.0, %v2011
        %v2013 = vpop.f32.mrb[0].mxu0
        %v2014 = vpop.f32.mrb[0].mxu0
        %v2015 = vadd.f32 0.0, %v2014
        %v2016 = vpop.f32.mrb[0].mxu0
        %2017 = vmatprep.mubr.bf16.mxu0 0
        %2018 = vmatmul.mubr.bf16.gmra.mrb[0].mxu0 %v1880
        %v2019 = vpop.f32.mrb[0].mxu0
        %v2020 = vadd.f32 0.0, %v2019
        %v2021 = vpop.f32.mrb[0].mxu0
        %v2022 = vpop.f32.mrb[0].mxu0
        %v2023 = vadd.f32 0.0, %v2022
        %v2024 = vpop.f32.mrb[0].mxu0
        %2025 = vmatprep.mubr.bf16.mxu0 0
        %2026 = vmatmul.mubr.bf16.gmra.mrb[0].mxu0 %v1883
        %v2027 = vpop.f32.mrb[0].mxu0
        %v2028 = vadd.f32 0.0, %v2027
        %v2029 = vpop.f32.mrb[0].mxu0
        %v2030 = vpop.f32.mrb[0].mxu0
        %v2031 = vadd.f32 0.0, %v2030
        %v2032 = vpop.f32.mrb[0].mxu0
        %2033 = vmatprep.mubr.bf16.mxu0 0
        %2034 = vmatmul.mubr.bf16.gmra.mrb[0].mxu0 %v1886
        %v2035 = vpop.f32.mrb[0].mxu0
        %v2036 = vadd.f32 0.0, %v2035
        %v2037 = vpop.f32.mrb[0].mxu0
        %v2038 = vpop.f32.mrb[0].mxu0
        %v2039 = vadd.f32 0.0, %v2038
        %v2040 = vpop.f32.mrb[0].mxu0
        %2041 = vmatprep.mubr.bf16.mxu0 0
        %2042 = vmatmul.mubr.bf16.gmra.mrb[0].mxu0 %v1889
        %v2043 = vpop.f32.mrb[0].mxu0
        %v2044 = vadd.f32 0.0, %v2043
        %v2045 = vpop.f32.mrb[0].mxu0
        %v2046 = vpop.f32.mrb[0].mxu0
        %v2047 = vadd.f32 0.0, %v2046
        %v2048 = vpop.f32.mrb[0].mxu0
        %2049 = vmatprep.mubr.bf16.mxu0 0
        %2050 = vmatmul.mubr.bf16.gmra.mrb[0].mxu0 %v1892
        %v2051 = vpop.f32.mrb[0].mxu0
        %v2052 = vadd.f32 0.0, %v2051
        %v2053 = vpop.f32.mrb[0].mxu0
        %v2054 = vpop.f32.mrb[0].mxu0
        %v2055 = vadd.f32 0.0, %v2054
        %v2056 = vpop.f32.mrb[0].mxu0
        %2057 = vdwg.mxu0
        %v2058 = vadd.f32 %v1573, %v1932
        %v2059 = vadd.f32 %v1576, %v1935
        %v2060 = vadd.f32 %v1581, %v1940
        %v2061 = vadd.f32 %v1584, %v1943
        %v2062 = vadd.f32 %v1589, %v1948
        %v2063 = vadd.f32 %v1592, %v1951
        %v2064 = vadd.f32 %v1597, %v1956
        %v2065 = vadd.f32 %v1600, %v1959
        %v2066 = vadd.f32 %v1605, %v1964
        %v2067 = vadd.f32 %v1608, %v1967
        %v2068 = vadd.f32 %v1613, %v1972
        %v2069 = vadd.f32 %v1616, %v1975
        %v2070 = vadd.f32 %v1621, %v1980
        %v2071 = vadd.f32 %v1624, %v1983
        %v2072 = vadd.f32 %v1629, %v1988
        %v2073 = vadd.f32 %v1632, %v1991
        %v2074 = vadd.f32 %v1637, %v1996
        %v2075 = vadd.f32 %v1640, %v1999
        %v2076 = vadd.f32 %v1645, %v2004
        %v2077 = vadd.f32 %v1648, %v2007
        %v2078 = vadd.f32 %v1653, %v2012
        %v2079 = vadd.f32 %v1656, %v2015
        %v2080 = vadd.f32 %v1661, %v2020
        %v2081 = vadd.f32 %v1664, %v2023
        %v2082 = vadd.f32 %v1669, %v2028
        %v2083 = vadd.f32 %v1672, %v2031
        %v2084 = vadd.f32 %v1677, %v2036
        %v2085 = vadd.f32 %v1680, %v2039
        %v2086 = vadd.f32 %v1685, %v2044
        %v2087 = vadd.f32 %v1688, %v2047
        %v2088 = vadd.f32 %v1693, %v2052
        %v2089 = vadd.f32 %v1696, %v2055
        %v2090 = vld [vmem:[#allocation2 + $0x17] sm:$0xff]
        %v2091 = vld [vmem:[#allocation2 + $0x1f] sm:$0xff]
        %v2092 = vld [vmem:[#allocation2 + $0x27] sm:$0xff]
        %v2093 = vld [vmem:[#allocation2 + $0x2f] sm:$0xff]
        %v2094 = vld [vmem:[#allocation2 + $0x37] sm:$0xff]
        %v2095 = vld [vmem:[#allocation2 + $0x3f] sm:$0xff]
        %v2096 = vld [vmem:[#allocation2 + $0x47] sm:$0xff]
        %v2097 = vld [vmem:[#allocation2 + $0x4f] sm:$0xff]
        %v2098 = vld [vmem:[#allocation2 + $0x57] sm:$0xff]
        %v2099 = vld [vmem:[#allocation2 + $0x5f] sm:$0xff]
        %v2100 = vld [vmem:[#allocation2 + $0x67] sm:$0xff]
        %v2101 = vld [vmem:[#allocation2 + $0x6f] sm:$0xff]
        %v2102 = vld [vmem:[#allocation2 + $0x77] sm:$0xff]
        %v2103 = vld [vmem:[#allocation2 + $0x7f] sm:$0xff]
        %v2104 = vld [vmem:[#allocation2 + $0x87] sm:$0xff]
        %v2105 = vld [vmem:[#allocation2 + $0x8f] sm:$0xff]
        %v2106 = vld [vmem:[#allocation2 + $0x97] sm:$0xff]
        %v2107 = vld [vmem:[#allocation2 + $0x9f] sm:$0xff]
        %v2108 = vld [vmem:[#allocation2 + $0xa7] sm:$0xff]
        %v2109 = vld [vmem:[#allocation2 + $0xaf] sm:$0xff]
        %v2110 = vld [vmem:[#allocation2 + $0xb7] sm:$0xff]
        %v2111 = vld [vmem:[#allocation2 + $0xbf] sm:$0xff]
        %v2112 = vld [vmem:[#allocation2 + $0xc7] sm:$0xff]
        %v2113 = vld [vmem:[#allocation2 + $0xcf] sm:$0xff]
        %v2114 = vld [vmem:[#allocation2 + $0xd7] sm:$0xff]
        %v2115 = vld [vmem:[#allocation2 + $0xdf] sm:$0xff]
        %v2116 = vld [vmem:[#allocation2 + $0xe7] sm:$0xff]
        %v2117 = vld [vmem:[#allocation2 + $0xef] sm:$0xff]
        %v2118 = vld [vmem:[#allocation2 + $0xf7] sm:$0xff]
        %v2119 = vld [vmem:[#allocation2 + $0xff] sm:$0xff]
        %v2120 = vld [vmem:[#allocation2 + $0x107] sm:$0xff]
        %v2121 = vld [vmem:[#allocation2 + $0x10f] sm:$0xff]
        %v2122 = vsel %vm1141, %v2090, 0.0
        %v2123 = vsel %vm1142, %v2091, 0.0
        %v2124 = vsel %vm1143, %v2092, 0.0
        %v2125 = vsel %vm1144, %v2093, 0.0
        %v2126 = vsel %vm1145, %v2094, 0.0
        %v2127 = vsel %vm1146, %v2095, 0.0
        %v2128 = vsel %vm1147, %v2096, 0.0
        %v2129 = vsel %vm1148, %v2097, 0.0
        %v2130 = vsel %vm1149, %v2098, 0.0
        %v2131 = vsel %vm1150, %v2099, 0.0
        %v2132 = vsel %vm1151, %v2100, 0.0
        %v2133 = vsel %vm1152, %v2101, 0.0
        %v2134 = vsel %vm1153, %v2102, 0.0
        %v2135 = vsel %vm1154, %v2103, 0.0
        %v2136 = vsel %vm1155, %v2104, 0.0
        %v2137 = vsel %vm1156, %v2105, 0.0
        %v2138 = vsel %vm1157, %v2106, 0.0
        %v2139 = vsel %vm1158, %v2107, 0.0
        %v2140 = vsel %vm1159, %v2108, 0.0
        %v2141 = vsel %vm1160, %v2109, 0.0
        %v2142 = vsel %vm1161, %v2110, 0.0
        %v2143 = vsel %vm1162, %v2111, 0.0
        %v2144 = vsel %vm1163, %v2112, 0.0
        %v2145 = vsel %vm1164, %v2113, 0.0
        %v2146 = vsel %vm1165, %v2114, 0.0
        %v2147 = vsel %vm1166, %v2115, 0.0
        %v2148 = vsel %vm1167, %v2116, 0.0
        %v2149 = vsel %vm1168, %v2117, 0.0
        %v2150 = vsel %vm1169, %v2118, 0.0
        %v2151 = vsel %vm1170, %v2119, 0.0
        %v2152 = vsel %vm1171, %v2120, 0.0
        %v2153 = vsel %vm1172, %v2121, 0.0
        %v2154 = vpack.c.bf16 %v2123, %v2122
        %v2155 = vpack.c.bf16 %v2125, %v2124
        %v2156 = vpack.c.bf16 %v2127, %v2126
        %v2157 = vpack.c.bf16 %v2129, %v2128
        %v2158 = vpack.c.bf16 %v2131, %v2130
        %v2159 = vpack.c.bf16 %v2133, %v2132
        %v2160 = vpack.c.bf16 %v2135, %v2134
        %v2161 = vpack.c.bf16 %v2137, %v2136
        %v2162 = vpack.c.bf16 %v2139, %v2138
        %v2163 = vpack.c.bf16 %v2141, %v2140
        %v2164 = vpack.c.bf16 %v2143, %v2142
        %v2165 = vpack.c.bf16 %v2145, %v2144
        %v2166 = vpack.c.bf16 %v2147, %v2146
        %v2167 = vpack.c.bf16 %v2149, %v2148
        %v2168 = vpack.c.bf16 %v2151, %v2150
        %v2169 = vpack.c.bf16 %v2153, %v2152
        %s2170 = scalar_lea.vmem %s1, 24
        %v2171 = vld [vmem:[%s2170] sm:$0xff]
        %v2172 = vpack.c.bf16 %v2171, %v2171
        %v2174 = vsel %vm1006, %v2154, 0
        %v2177 = vsel %vm1006, %v2155, 0
        %v2180 = vsel %vm1006, %v2156, 0
        %v2183 = vsel %vm1006, %v2157, 0
        %v2186 = vsel %vm1006, %v2158, 0
        %v2189 = vsel %vm1006, %v2159, 0
        %v2192 = vsel %vm1006, %v2160, 0
        %v2195 = vsel %vm1006, %v2161, 0
        %v2198 = vsel %vm1006, %v2162, 0
        %v2201 = vsel %vm1006, %v2163, 0
        %v2204 = vsel %vm1006, %v2164, 0
        %v2207 = vsel %vm1006, %v2165, 0
        %v2210 = vsel %vm1006, %v2166, 0
        %v2213 = vsel %vm1006, %v2167, 0
        %v2216 = vsel %vm1006, %v2168, 0
        %v2219 = vsel %vm1006, %v2169, 0
        %v2222 = vsel %vm1322, %v2172, 0
        %2224 = vmatprep.subr.bf16.mxu0 0
        %2225 = vmatpush1.bf16.msra.mxu0 %v2222
        %2226 = vmatprep.subr.bf16.mxu0 0
        %2227 = vmatpush1.bf16.msra.mxu0 0
        %2228 = vmatprep.subr.bf16.mxu0 0
        %2229 = vmatpush1.bf16.msra.mxu0 0
        %2230 = vmatprep.subr.bf16.mxu0 0
        %2231 = vmatpush1.bf16.msra.mxu0 0
        %2232 = vmatprep.subr.bf16.mxu0 0
        %2233 = vmatpush1.bf16.msra.mxu0 0
        %2234 = vmatprep.subr.bf16.mxu0 0
        %2235 = vmatpush1.bf16.msra.mxu0 0
        %2236 = vmatprep.subr.bf16.mxu0 0
        %2237 = vmatpush1.bf16.msra.mxu0 0
        %2238 = vmatprep.subr.bf16.mxu0 0
        %2239 = vmatpush1.bf16.msra.mxu0 0
        %2240 = vmatprep.subr.bf16.mxu0 0
        %2241 = vmatpush1.bf16.msra.mxu0 0
        %2242 = vmatprep.subr.bf16.mxu0 0
        %2243 = vmatpush1.bf16.msra.mxu0 0
        %2244 = vmatprep.subr.bf16.mxu0 0
        %2245 = vmatpush1.bf16.msra.mxu0 0
        %2246 = vmatprep.subr.bf16.mxu0 0
        %2247 = vmatpush1.bf16.msra.mxu0 0
        %2248 = vmatprep.subr.bf16.mxu0 0
        %2249 = vmatpush1.bf16.msra.mxu0 0
        %2250 = vmatprep.subr.bf16.mxu0 0
        %2251 = vmatpush1.bf16.msra.mxu0 0
        %2252 = vmatprep.subr.bf16.mxu0 0
        %2253 = vmatpush1.bf16.msra.mxu0 0
        %2254 = vmatprep.subr.bf16.mxu0 0
        %2255 = vmatpush1.bf16.msra.mxu0 0
        %2256 = vmatprep.mubr.bf16.mxu0 0
        %2257 = vmatmul.mubr.bf16.gmra.mrb[0].mxu0 %v2174
        %v2258 = vpop.f32.mrb[0].mxu0
        %v2259 = vadd.f32 0.0, %v2258
        %v2260 = vpop.f32.mrb[0].mxu0
        %v2261 = vpop.f32.mrb[0].mxu0
        %v2262 = vadd.f32 0.0, %v2261
        %v2263 = vpop.f32.mrb[0].mxu0
        %2264 = vmatprep.mubr.bf16.mxu0 0
        %2265 = vmatmul.mubr.bf16.gmra.mrb[0].mxu0 %v2177
        %v2266 = vpop.f32.mrb[0].mxu0
        %v2267 = vadd.f32 0.0, %v2266
        %v2268 = vpop.f32.mrb[0].mxu0
        %v2269 = vpop.f32.mrb[0].mxu0
        %v2270 = vadd.f32 0.0, %v2269
        %v2271 = vpop.f32.mrb[0].mxu0
        %2272 = vmatprep.mubr.bf16.mxu0 0
        %2273 = vmatmul.mubr.bf16.gmra.mrb[0].mxu0 %v2180
        %v2274 = vpop.f32.mrb[0].mxu0
        %v2275 = vadd.f32 0.0, %v2274
        %v2276 = vpop.f32.mrb[0].mxu0
        %v2277 = vpop.f32.mrb[0].mxu0
        %v2278 = vadd.f32 0.0, %v2277
        %v2279 = vpop.f32.mrb[0].mxu0
        %2280 = vmatprep.mubr.bf16.mxu0 0
        %2281 = vmatmul.mubr.bf16.gmra.mrb[0].mxu0 %v2183
        %v2282 = vpop.f32.mrb[0].mxu0
        %v2283 = vadd.f32 0.0, %v2282
        %v2284 = vpop.f32.mrb[0].mxu0
        %v2285 = vpop.f32.mrb[0].mxu0
        %v2286 = vadd.f32 0.0, %v2285
        %v2287 = vpop.f32.mrb[0].mxu0
        %2288 = vmatprep.mubr.bf16.mxu0 0
        %2289 = vmatmul.mubr.bf16.gmra.mrb[0].mxu0 %v2186
        %v2290 = vpop.f32.mrb[0].mxu0
        %v2291 = vadd.f32 0.0, %v2290
        %v2292 = vpop.f32.mrb[0].mxu0
        %v2293 = vpop.f32.mrb[0].mxu0
        %v2294 = vadd.f32 0.0, %v2293
        %v2295 = vpop.f32.mrb[0].mxu0
        %2296 = vmatprep.mubr.bf16.mxu0 0
        %2297 = vmatmul.mubr.bf16.gmra.mrb[0].mxu0 %v2189
        %v2298 = vpop.f32.mrb[0].mxu0
        %v2299 = vadd.f32 0.0, %v2298
        %v2300 = vpop.f32.mrb[0].mxu0
        %v2301 = vpop.f32.mrb[0].mxu0
        %v2302 = vadd.f32 0.0, %v2301
        %v2303 = vpop.f32.mrb[0].mxu0
        %2304 = vmatprep.mubr.bf16.mxu0 0
        %2305 = vmatmul.mubr.bf16.gmra.mrb[0].mxu0 %v2192
        %v2306 = vpop.f32.mrb[0].mxu0
        %v2307 = vadd.f32 0.0, %v2306
        %v2308 = vpop.f32.mrb[0].mxu0
        %v2309 = vpop.f32.mrb[0].mxu0
        %v2310 = vadd.f32 0.0, %v2309
        %v2311 = vpop.f32.mrb[0].mxu0
        %2312 = vmatprep.mubr.bf16.mxu0 0
        %2313 = vmatmul.mubr.bf16.gmra.mrb[0].mxu0 %v2195
        %v2314 = vpop.f32.mrb[0].mxu0
        %v2315 = vadd.f32 0.0, %v2314
        %v2316 = vpop.f32.mrb[0].mxu0
        %v2317 = vpop.f32.mrb[0].mxu0
        %v2318 = vadd.f32 0.0, %v2317
        %v2319 = vpop.f32.mrb[0].mxu0
        %2320 = vmatprep.mubr.bf16.mxu0 0
        %2321 = vmatmul.mubr.bf16.gmra.mrb[0].mxu0 %v2198
        %v2322 = vpop.f32.mrb[0].mxu0
        %v2323 = vadd.f32 0.0, %v2322
        %v2324 = vpop.f32.mrb[0].mxu0
        %v2325 = vpop.f32.mrb[0].mxu0
        %v2326 = vadd.f32 0.0, %v2325
        %v2327 = vpop.f32.mrb[0].mxu0
        %2328 = vmatprep.mubr.bf16.mxu0 0
        %2329 = vmatmul.mubr.bf16.gmra.mrb[0].mxu0 %v2201
        %v2330 = vpop.f32.mrb[0].mxu0
        %v2331 = vadd.f32 0.0, %v2330
        %v2332 = vpop.f32.mrb[0].mxu0
        %v2333 = vpop.f32.mrb[0].mxu0
        %v2334 = vadd.f32 0.0, %v2333
        %v2335 = vpop.f32.mrb[0].mxu0
        %2336 = vmatprep.mubr.bf16.mxu0 0
        %2337 = vmatmul.mubr.bf16.gmra.mrb[0].mxu0 %v2204
        %v2338 = vpop.f32.mrb[0].mxu0
        %v2339 = vadd.f32 0.0, %v2338
        %v2340 = vpop.f32.mrb[0].mxu0
        %v2341 = vpop.f32.mrb[0].mxu0
        %v2342 = vadd.f32 0.0, %v2341
        %v2343 = vpop.f32.mrb[0].mxu0
        %2344 = vmatprep.mubr.bf16.mxu0 0
        %2345 = vmatmul.mubr.bf16.gmra.mrb[0].mxu0 %v2207
        %v2346 = vpop.f32.mrb[0].mxu0
        %v2347 = vadd.f32 0.0, %v2346
        %v2348 = vpop.f32.mrb[0].mxu0
        %v2349 = vpop.f32.mrb[0].mxu0
        %v2350 = vadd.f32 0.0, %v2349
        %v2351 = vpop.f32.mrb[0].mxu0
        %2352 = vmatprep.mubr.bf16.mxu0 0
        %2353 = vmatmul.mubr.bf16.gmra.mrb[0].mxu0 %v2210
        %v2354 = vpop.f32.mrb[0].mxu0
        %v2355 = vadd.f32 0.0, %v2354
        %v2356 = vpop.f32.mrb[0].mxu0
        %v2357 = vpop.f32.mrb[0].mxu0
        %v2358 = vadd.f32 0.0, %v2357
        %v2359 = vpop.f32.mrb[0].mxu0
        %2360 = vmatprep.mubr.bf16.mxu0 0
        %2361 = vmatmul.mubr.bf16.gmra.mrb[0].mxu0 %v2213
        %v2362 = vpop.f32.mrb[0].mxu0
        %v2363 = vadd.f32 0.0, %v2362
        %v2364 = vpop.f32.mrb[0].mxu0
        %v2365 = vpop.f32.mrb[0].mxu0
        %v2366 = vadd.f32 0.0, %v2365
        %v2367 = vpop.f32.mrb[0].mxu0
        %2368 = vmatprep.mubr.bf16.mxu0 0
        %2369 = vmatmul.mubr.bf16.gmra.mrb[0].mxu0 %v2216
        %v2370 = vpop.f32.mrb[0].mxu0
        %v2371 = vadd.f32 0.0, %v2370
        %v2372 = vpop.f32.mrb[0].mxu0
        %v2373 = vpop.f32.mrb[0].mxu0
        %v2374 = vadd.f32 0.0, %v2373
        %v2375 = vpop.f32.mrb[0].mxu0
        %2376 = vmatprep.mubr.bf16.mxu0 0
        %2377 = vmatmul.mubr.bf16.gmra.mrb[0].mxu0 %v2219
        %v2378 = vpop.f32.mrb[0].mxu0
        %v2379 = vadd.f32 0.0, %v2378
        %v2380 = vpop.f32.mrb[0].mxu0
        %v2381 = vpop.f32.mrb[0].mxu0
        %v2382 = vadd.f32 0.0, %v2381
        %v2383 = vpop.f32.mrb[0].mxu0
        %2384 = vdwg.mxu0
        %v2385 = vadd.f32 %v2058, %v2259
        %v2386 = vadd.f32 %v2059, %v2262
        %v2387 = vadd.f32 %v2060, %v2267
        %v2388 = vadd.f32 %v2061, %v2270
        %v2389 = vadd.f32 %v2062, %v2275
        %v2390 = vadd.f32 %v2063, %v2278
        %v2391 = vadd.f32 %v2064, %v2283
        %v2392 = vadd.f32 %v2065, %v2286
        %v2393 = vadd.f32 %v2066, %v2291
        %v2394 = vadd.f32 %v2067, %v2294
        %v2395 = vadd.f32 %v2068, %v2299
        %v2396 = vadd.f32 %v2069, %v2302
        %v2397 = vadd.f32 %v2070, %v2307
        %v2398 = vadd.f32 %v2071, %v2310
        %v2399 = vadd.f32 %v2072, %v2315
        %v2400 = vadd.f32 %v2073, %v2318
        %v2401 = vadd.f32 %v2074, %v2323
        %v2402 = vadd.f32 %v2075, %v2326
        %v2403 = vadd.f32 %v2076, %v2331
        %v2404 = vadd.f32 %v2077, %v2334
        %v2405 = vadd.f32 %v2078, %v2339
        %v2406 = vadd.f32 %v2079, %v2342
        %v2407 = vadd.f32 %v2080, %v2347
        %v2408 = vadd.f32 %v2081, %v2350
        %v2409 = vadd.f32 %v2082, %v2355
        %v2410 = vadd.f32 %v2083, %v2358
        %v2411 = vadd.f32 %v2084, %v2363
        %v2412 = vadd.f32 %v2085, %v2366
        %v2413 = vadd.f32 %v2086, %v2371
        %v2414 = vadd.f32 %v2087, %v2374
        %v2415 = vadd.f32 %v2088, %v2379
        %v2416 = vadd.f32 %v2089, %v2382
        %v2417 = vld [vmem:[#allocation2 + $0x18] sm:$0xff]
        %v2418 = vld [vmem:[#allocation2 + $0x20] sm:$0xff]
        %v2419 = vld [vmem:[#allocation2 + $0x28] sm:$0xff]
        %v2420 = vld [vmem:[#allocation2 + $0x30] sm:$0xff]
        %v2421 = vld [vmem:[#allocation2 + $0x38] sm:$0xff]
        %v2422 = vld [vmem:[#allocation2 + $0x40] sm:$0xff]
        %v2423 = vld [vmem:[#allocation2 + $0x48] sm:$0xff]
        %v2424 = vld [vmem:[#allocation2 + $0x50] sm:$0xff]
        %v2425 = vld [vmem:[#allocation2 + $0x58] sm:$0xff]
        %v2426 = vld [vmem:[#allocation2 + $0x60] sm:$0xff]
        %v2427 = vld [vmem:[#allocation2 + $0x68] sm:$0xff]
        %v2428 = vld [vmem:[#allocation2 + $0x70] sm:$0xff]
        %v2429 = vld [vmem:[#allocation2 + $0x78] sm:$0xff]
        %v2430 = vld [vmem:[#allocation2 + $0x80] sm:$0xff]
        %v2431 = vld [vmem:[#allocation2 + $0x88] sm:$0xff]
        %v2432 = vld [vmem:[#allocation2 + $0x90] sm:$0xff]
        %v2433 = vld [vmem:[#allocation2 + $0x98] sm:$0xff]
        %v2434 = vld [vmem:[#allocation2 + $0xa0] sm:$0xff]
        %v2435 = vld [vmem:[#allocation2 + $0xa8] sm:$0xff]
        %v2436 = vld [vmem:[#allocation2 + $0xb0] sm:$0xff]
        %v2437 = vld [vmem:[#allocation2 + $0xb8] sm:$0xff]
        %v2438 = vld [vmem:[#allocation2 + $0xc0] sm:$0xff]
        %v2439 = vld [vmem:[#allocation2 + $0xc8] sm:$0xff]
        %v2440 = vld [vmem:[#allocation2 + $0xd0] sm:$0xff]
        %v2441 = vld [vmem:[#allocation2 + $0xd8] sm:$0xff]
        %v2442 = vld [vmem:[#allocation2 + $0xe0] sm:$0xff]
        %v2443 = vld [vmem:[#allocation2 + $0xe8] sm:$0xff]
        %v2444 = vld [vmem:[#allocation2 + $0xf0] sm:$0xff]
        %v2445 = vld [vmem:[#allocation2 + $0xf8] sm:$0xff]
        %v2446 = vld [vmem:[#allocation2 + $0x100] sm:$0xff]
        %v2447 = vld [vmem:[#allocation2 + $0x108] sm:$0xff]
        %v2448 = vld [vmem:[#allocation2 + $0x110] sm:$0xff]
        %v2449 = vpack.c.bf16 %v2418, %v2417
        %v2450 = vpack.c.bf16 %v2420, %v2419
        %v2451 = vpack.c.bf16 %v2422, %v2421
        %v2452 = vpack.c.bf16 %v2424, %v2423
        %v2453 = vpack.c.bf16 %v2426, %v2425
        %v2454 = vpack.c.bf16 %v2428, %v2427
        %v2455 = vpack.c.bf16 %v2430, %v2429
        %v2456 = vpack.c.bf16 %v2432, %v2431
        %v2457 = vpack.c.bf16 %v2434, %v2433
        %v2458 = vpack.c.bf16 %v2436, %v2435
        %v2459 = vpack.c.bf16 %v2438, %v2437
        %v2460 = vpack.c.bf16 %v2440, %v2439
        %v2461 = vpack.c.bf16 %v2442, %v2441
        %v2462 = vpack.c.bf16 %v2444, %v2443
        %v2463 = vpack.c.bf16 %v2446, %v2445
        %v2464 = vpack.c.bf16 %v2448, %v2447
        %s2465 = scalar_lea.vmem %s1, 32
        %v2466 = vld [vmem:[%s2465] sm:$0xff]
        %v2467 = vpack.c.bf16 %v2466, %v2466
        %v2469 = vsel %vm1006, %v2449, 0
        %v2472 = vsel %vm1006, %v2450, 0
        %v2475 = vsel %vm1006, %v2451, 0
        %v2478 = vsel %vm1006, %v2452, 0
        %v2481 = vsel %vm1006, %v2453, 0
        %v2484 = vsel %vm1006, %v2454, 0
        %v2487 = vsel %vm1006, %v2455, 0
        %v2490 = vsel %vm1006, %v2456, 0
        %v2493 = vsel %vm1006, %v2457, 0
        %v2496 = vsel %vm1006, %v2458, 0
        %v2499 = vsel %vm1006, %v2459, 0
        %v2502 = vsel %vm1006, %v2460, 0
        %v2505 = vsel %vm1006, %v2461, 0
        %v2508 = vsel %vm1006, %v2462, 0
        %v2511 = vsel %vm1006, %v2463, 0
        %v2514 = vsel %vm1006, %v2464, 0
        %v2517 = vsel %vm1322, %v2467, 0
        %2519 = vmatprep.subr.bf16.mxu0 0
        %2520 = vmatpush1.bf16.msra.mxu0 %v2517
        %2521 = vmatprep.subr.bf16.mxu0 0
        %2522 = vmatpush1.bf16.msra.mxu0 0
        %2523 = vmatprep.subr.bf16.mxu0 0
        %2524 = vmatpush1.bf16.msra.mxu0 0
        %2525 = vmatprep.subr.bf16.mxu0 0
        %2526 = vmatpush1.bf16.msra.mxu0 0
        %2527 = vmatprep.subr.bf16.mxu0 0
        %2528 = vmatpush1.bf16.msra.mxu0 0
        %2529 = vmatprep.subr.bf16.mxu0 0
        %2530 = vmatpush1.bf16.msra.mxu0 0
        %2531 = vmatprep.subr.bf16.mxu0 0
        %2532 = vmatpush1.bf16.msra.mxu0 0
        %2533 = vmatprep.subr.bf16.mxu0 0
        %2534 = vmatpush1.bf16.msra.mxu0 0
        %2535 = vmatprep.subr.bf16.mxu0 0
        %2536 = vmatpush1.bf16.msra.mxu0 0
        %2537 = vmatprep.subr.bf16.mxu0 0
        %2538 = vmatpush1.bf16.msra.mxu0 0
        %2539 = vmatprep.subr.bf16.mxu0 0
        %2540 = vmatpush1.bf16.msra.mxu0 0
        %2541 = vmatprep.subr.bf16.mxu0 0
        %2542 = vmatpush1.bf16.msra.mxu0 0
        %2543 = vmatprep.subr.bf16.mxu0 0
        %2544 = vmatpush1.bf16.msra.mxu0 0
        %2545 = vmatprep.subr.bf16.mxu0 0
        %2546 = vmatpush1.bf16.msra.mxu0 0
        %2547 = vmatprep.subr.bf16.mxu0 0
        %2548 = vmatpush1.bf16.msra.mxu0 0
        %2549 = vmatprep.subr.bf16.mxu0 0
        %2550 = vmatpush1.bf16.msra.mxu0 0
        %2551 = vmatprep.mubr.bf16.mxu0 0
        %2552 = vmatmul.mubr.bf16.gmra.mrb[0].mxu0 %v2469
        %v2553 = vpop.f32.mrb[0].mxu0
        %v2554 = vadd.f32 0.0, %v2553
        %v2555 = vpop.f32.mrb[0].mxu0
        %v2556 = vpop.f32.mrb[0].mxu0
        %v2557 = vadd.f32 0.0, %v2556
        %v2558 = vpop.f32.mrb[0].mxu0
        %2559 = vmatprep.mubr.bf16.mxu0 0
        %2560 = vmatmul.mubr.bf16.gmra.mrb[0].mxu0 %v2472
        %v2561 = vpop.f32.mrb[0].mxu0
        %v2562 = vadd.f32 0.0, %v2561
        %v2563 = vpop.f32.mrb[0].mxu0
        %v2564 = vpop.f32.mrb[0].mxu0
        %v2565 = vadd.f32 0.0, %v2564
        %v2566 = vpop.f32.mrb[0].mxu0
        %2567 = vmatprep.mubr.bf16.mxu0 0
        %2568 = vmatmul.mubr.bf16.gmra.mrb[0].mxu0 %v2475
        %v2569 = vpop.f32.mrb[0].mxu0
        %v2570 = vadd.f32 0.0, %v2569
        %v2571 = vpop.f32.mrb[0].mxu0
        %v2572 = vpop.f32.mrb[0].mxu0
        %v2573 = vadd.f32 0.0, %v2572
        %v2574 = vpop.f32.mrb[0].mxu0
        %2575 = vmatprep.mubr.bf16.mxu0 0
        %2576 = vmatmul.mubr.bf16.gmra.mrb[0].mxu0 %v2478
        %v2577 = vpop.f32.mrb[0].mxu0
        %v2578 = vadd.f32 0.0, %v2577
        %v2579 = vpop.f32.mrb[0].mxu0
        %v2580 = vpop.f32.mrb[0].mxu0
        %v2581 = vadd.f32 0.0, %v2580
        %v2582 = vpop.f32.mrb[0].mxu0
        %2583 = vmatprep.mubr.bf16.mxu0 0
        %2584 = vmatmul.mubr.bf16.gmra.mrb[0].mxu0 %v2481
        %v2585 = vpop.f32.mrb[0].mxu0
        %v2586 = vadd.f32 0.0, %v2585
        %v2587 = vpop.f32.mrb[0].mxu0
        %v2588 = vpop.f32.mrb[0].mxu0
        %v2589 = vadd.f32 0.0, %v2588
        %v2590 = vpop.f32.mrb[0].mxu0
        %2591 = vmatprep.mubr.bf16.mxu0 0
        %2592 = vmatmul.mubr.bf16.gmra.mrb[0].mxu0 %v2484
        %v2593 = vpop.f32.mrb[0].mxu0
        %v2594 = vadd.f32 0.0, %v2593
        %v2595 = vpop.f32.mrb[0].mxu0
        %v2596 = vpop.f32.mrb[0].mxu0
        %v2597 = vadd.f32 0.0, %v2596
        %v2598 = vpop.f32.mrb[0].mxu0
        %2599 = vmatprep.mubr.bf16.mxu0 0
        %2600 = vmatmul.mubr.bf16.gmra.mrb[0].mxu0 %v2487
        %v2601 = vpop.f32.mrb[0].mxu0
        %v2602 = vadd.f32 0.0, %v2601
        %v2603 = vpop.f32.mrb[0].mxu0
        %v2604 = vpop.f32.mrb[0].mxu0
        %v2605 = vadd.f32 0.0, %v2604
        %v2606 = vpop.f32.mrb[0].mxu0
        %2607 = vmatprep.mubr.bf16.mxu0 0
        %2608 = vmatmul.mubr.bf16.gmra.mrb[0].mxu0 %v2490
        %v2609 = vpop.f32.mrb[0].mxu0
        %v2610 = vadd.f32 0.0, %v2609
        %v2611 = vpop.f32.mrb[0].mxu0
        %v2612 = vpop.f32.mrb[0].mxu0
        %v2613 = vadd.f32 0.0, %v2612
        %v2614 = vpop.f32.mrb[0].mxu0
        %2615 = vmatprep.mubr.bf16.mxu0 0
        %2616 = vmatmul.mubr.bf16.gmra.mrb[0].mxu0 %v2493
        %v2617 = vpop.f32.mrb[0].mxu0
        %v2618 = vadd.f32 0.0, %v2617
        %v2619 = vpop.f32.mrb[0].mxu0
        %v2620 = vpop.f32.mrb[0].mxu0
        %v2621 = vadd.f32 0.0, %v2620
        %v2622 = vpop.f32.mrb[0].mxu0
        %2623 = vmatprep.mubr.bf16.mxu0 0
        %2624 = vmatmul.mubr.bf16.gmra.mrb[0].mxu0 %v2496
        %v2625 = vpop.f32.mrb[0].mxu0
        %v2626 = vadd.f32 0.0, %v2625
        %v2627 = vpop.f32.mrb[0].mxu0
        %v2628 = vpop.f32.mrb[0].mxu0
        %v2629 = vadd.f32 0.0, %v2628
        %v2630 = vpop.f32.mrb[0].mxu0
        %2631 = vmatprep.mubr.bf16.mxu0 0
        %2632 = vmatmul.mubr.bf16.gmra.mrb[0].mxu0 %v2499
        %v2633 = vpop.f32.mrb[0].mxu0
        %v2634 = vadd.f32 0.0, %v2633
        %v2635 = vpop.f32.mrb[0].mxu0
        %v2636 = vpop.f32.mrb[0].mxu0
        %v2637 = vadd.f32 0.0, %v2636
        %v2638 = vpop.f32.mrb[0].mxu0
        %2639 = vmatprep.mubr.bf16.mxu0 0
        %2640 = vmatmul.mubr.bf16.gmra.mrb[0].mxu0 %v2502
        %v2641 = vpop.f32.mrb[0].mxu0
        %v2642 = vadd.f32 0.0, %v2641
        %v2643 = vpop.f32.mrb[0].mxu0
        %v2644 = vpop.f32.mrb[0].mxu0
        %v2645 = vadd.f32 0.0, %v2644
        %v2646 = vpop.f32.mrb[0].mxu0
        %2647 = vmatprep.mubr.bf16.mxu0 0
        %2648 = vmatmul.mubr.bf16.gmra.mrb[0].mxu0 %v2505
        %v2649 = vpop.f32.mrb[0].mxu0
        %v2650 = vadd.f32 0.0, %v2649
        %v2651 = vpop.f32.mrb[0].mxu0
        %v2652 = vpop.f32.mrb[0].mxu0
        %v2653 = vadd.f32 0.0, %v2652
        %v2654 = vpop.f32.mrb[0].mxu0
        %2655 = vmatprep.mubr.bf16.mxu0 0
        %2656 = vmatmul.mubr.bf16.gmra.mrb[0].mxu0 %v2508
        %v2657 = vpop.f32.mrb[0].mxu0
        %v2658 = vadd.f32 0.0, %v2657
        %v2659 = vpop.f32.mrb[0].mxu0
        %v2660 = vpop.f32.mrb[0].mxu0
        %v2661 = vadd.f32 0.0, %v2660
        %v2662 = vpop.f32.mrb[0].mxu0
        %2663 = vmatprep.mubr.bf16.mxu0 0
        %2664 = vmatmul.mubr.bf16.gmra.mrb[0].mxu0 %v2511
        %v2665 = vpop.f32.mrb[0].mxu0
        %v2666 = vadd.f32 0.0, %v2665
        %v2667 = vpop.f32.mrb[0].mxu0
        %v2668 = vpop.f32.mrb[0].mxu0
        %v2669 = vadd.f32 0.0, %v2668
        %v2670 = vpop.f32.mrb[0].mxu0
        %2671 = vmatprep.mubr.bf16.mxu0 0
        %2672 = vmatmul.mubr.bf16.gmra.mrb[0].mxu0 %v2514
        %v2673 = vpop.f32.mrb[0].mxu0
        %v2674 = vadd.f32 0.0, %v2673
        %v2675 = vpop.f32.mrb[0].mxu0
        %v2676 = vpop.f32.mrb[0].mxu0
        %v2677 = vadd.f32 0.0, %v2676
        %v2678 = vpop.f32.mrb[0].mxu0
        %2679 = vdwg.mxu0
        %v2680 = vadd.f32 %v2385, %v2554
        %v2681 = vadd.f32 %v2386, %v2557
        %v2682 = vadd.f32 %v2387, %v2562
        %v2683 = vadd.f32 %v2388, %v2565
        %v2684 = vadd.f32 %v2389, %v2570
        %v2685 = vadd.f32 %v2390, %v2573
        %v2686 = vadd.f32 %v2391, %v2578
        %v2687 = vadd.f32 %v2392, %v2581
        %v2688 = vadd.f32 %v2393, %v2586
        %v2689 = vadd.f32 %v2394, %v2589
        %v2690 = vadd.f32 %v2395, %v2594
        %v2691 = vadd.f32 %v2396, %v2597
        %v2692 = vadd.f32 %v2397, %v2602
        %v2693 = vadd.f32 %v2398, %v2605
        %v2694 = vadd.f32 %v2399, %v2610
        %v2695 = vadd.f32 %v2400, %v2613
        %v2696 = vadd.f32 %v2401, %v2618
        %v2697 = vadd.f32 %v2402, %v2621
        %v2698 = vadd.f32 %v2403, %v2626
        %v2699 = vadd.f32 %v2404, %v2629
        %v2700 = vadd.f32 %v2405, %v2634
        %v2701 = vadd.f32 %v2406, %v2637
        %v2702 = vadd.f32 %v2407, %v2642
        %v2703 = vadd.f32 %v2408, %v2645
        %v2704 = vadd.f32 %v2409, %v2650
        %v2705 = vadd.f32 %v2410, %v2653
        %v2706 = vadd.f32 %v2411, %v2658
        %v2707 = vadd.f32 %v2412, %v2661
        %v2708 = vadd.f32 %v2413, %v2666
        %v2709 = vadd.f32 %v2414, %v2669
        %v2710 = vadd.f32 %v2415, %v2674
        %v2711 = vadd.f32 %v2416, %v2677
        %v2712 = vld [vmem:[#allocation2 + $0x19] sm:$0xff]
        %v2713 = vld [vmem:[#allocation2 + $0x21] sm:$0xff]
        %v2714 = vld [vmem:[#allocation2 + $0x29] sm:$0xff]
        %v2715 = vld [vmem:[#allocation2 + $0x31] sm:$0xff]
        %v2716 = vld [vmem:[#allocation2 + $0x39] sm:$0xff]
        %v2717 = vld [vmem:[#allocation2 + $0x41] sm:$0xff]
        %v2718 = vld [vmem:[#allocation2 + $0x49] sm:$0xff]
        %v2719 = vld [vmem:[#allocation2 + $0x51] sm:$0xff]
        %v2720 = vld [vmem:[#allocation2 + $0x59] sm:$0xff]
        %v2721 = vld [vmem:[#allocation2 + $0x61] sm:$0xff]
        %v2722 = vld [vmem:[#allocation2 + $0x69] sm:$0xff]
        %v2723 = vld [vmem:[#allocation2 + $0x71] sm:$0xff]
        %v2724 = vld [vmem:[#allocation2 + $0x79] sm:$0xff]
        %v2725 = vld [vmem:[#allocation2 + $0x81] sm:$0xff]
        %v2726 = vld [vmem:[#allocation2 + $0x89] sm:$0xff]
        %v2727 = vld [vmem:[#allocation2 + $0x91] sm:$0xff]
        %v2728 = vld [vmem:[#allocation2 + $0x99] sm:$0xff]
        %v2729 = vld [vmem:[#allocation2 + $0xa1] sm:$0xff]
        %v2730 = vld [vmem:[#allocation2 + $0xa9] sm:$0xff]
        %v2731 = vld [vmem:[#allocation2 + $0xb1] sm:$0xff]
        %v2732 = vld [vmem:[#allocation2 + $0xb9] sm:$0xff]
        %v2733 = vld [vmem:[#allocation2 + $0xc1] sm:$0xff]
        %v2734 = vld [vmem:[#allocation2 + $0xc9] sm:$0xff]
        %v2735 = vld [vmem:[#allocation2 + $0xd1] sm:$0xff]
        %v2736 = vld [vmem:[#allocation2 + $0xd9] sm:$0xff]
        %v2737 = vld [vmem:[#allocation2 + $0xe1] sm:$0xff]
        %v2738 = vld [vmem:[#allocation2 + $0xe9] sm:$0xff]
        %v2739 = vld [vmem:[#allocation2 + $0xf1] sm:$0xff]
        %v2740 = vld [vmem:[#allocation2 + $0xf9] sm:$0xff]
        %v2741 = vld [vmem:[#allocation2 + $0x101] sm:$0xff]
        %v2742 = vld [vmem:[#allocation2 + $0x109] sm:$0xff]
        %v2743 = vld [vmem:[#allocation2 + $0x111] sm:$0xff]
        %v2744 = vsel %vm1763, %v2712, 0.0
        %v2745 = vsel %vm1764, %v2713, 0.0
        %v2746 = vsel %vm1765, %v2714, 0.0
        %v2747 = vsel %vm1766, %v2715, 0.0
        %v2748 = vsel %vm1767, %v2716, 0.0
        %v2749 = vsel %vm1768, %v2717, 0.0
        %v2750 = vsel %vm1769, %v2718, 0.0
        %v2751 = vsel %vm1770, %v2719, 0.0
        %v2752 = vsel %vm1771, %v2720, 0.0
        %v2753 = vsel %vm1772, %v2721, 0.0
        %v2754 = vsel %vm1773, %v2722, 0.0
        %v2755 = vsel %vm1774, %v2723, 0.0
        %v2756 = vsel %vm1775, %v2724, 0.0
        %v2757 = vsel %vm1776, %v2725, 0.0
        %v2758 = vsel %vm1777, %v2726, 0.0
        %v2759 = vsel %vm1778, %v2727, 0.0
        %v2760 = vsel %vm1779, %v2728, 0.0
        %v2761 = vsel %vm1780, %v2729, 0.0
        %v2762 = vsel %vm1781, %v2730, 0.0
        %v2763 = vsel %vm1782, %v2731, 0.0
        %v2764 = vsel %vm1783, %v2732, 0.0
        %v2765 = vsel %vm1784, %v2733, 0.0
        %v2766 = vsel %vm1785, %v2734, 0.0
        %v2767 = vsel %vm1786, %v2735, 0.0
        %v2768 = vsel %vm1787, %v2736, 0.0
        %v2769 = vsel %vm1788, %v2737, 0.0
        %v2770 = vsel %vm1789, %v2738, 0.0
        %v2771 = vsel %vm1790, %v2739, 0.0
        %v2772 = vsel %vm1791, %v2740, 0.0
        %v2773 = vsel %vm1792, %v2741, 0.0
        %v2774 = vsel %vm1793, %v2742, 0.0
        %v2775 = vsel %vm1794, %v2743, 0.0
        %v2776 = vpack.c.bf16 %v2745, %v2744
        %v2777 = vpack.c.bf16 %v2747, %v2746
        %v2778 = vpack.c.bf16 %v2749, %v2748
        %v2779 = vpack.c.bf16 %v2751, %v2750
        %v2780 = vpack.c.bf16 %v2753, %v2752
        %v2781 = vpack.c.bf16 %v2755, %v2754
        %v2782 = vpack.c.bf16 %v2757, %v2756
        %v2783 = vpack.c.bf16 %v2759, %v2758
        %v2784 = vpack.c.bf16 %v2761, %v2760
        %v2785 = vpack.c.bf16 %v2763, %v2762
        %v2786 = vpack.c.bf16 %v2765, %v2764
        %v2787 = vpack.c.bf16 %v2767, %v2766
        %v2788 = vpack.c.bf16 %v2769, %v2768
        %v2789 = vpack.c.bf16 %v2771, %v2770
        %v2790 = vpack.c.bf16 %v2773, %v2772
        %v2791 = vpack.c.bf16 %v2775, %v2774
        %s2792 = scalar_lea.vmem %s1, 40
        %v2793 = vld [vmem:[%s2792] sm:$0xff]
        %v2794 = vpack.c.bf16 %v2793, %v2793
        %v2796 = vsel %vm1006, %v2776, 0
        %v2799 = vsel %vm1006, %v2777, 0
        %v2802 = vsel %vm1006, %v2778, 0
        %v2805 = vsel %vm1006, %v2779, 0
        %v2808 = vsel %vm1006, %v2780, 0
        %v2811 = vsel %vm1006, %v2781, 0
        %v2814 = vsel %vm1006, %v2782, 0
        %v2817 = vsel %vm1006, %v2783, 0
        %v2820 = vsel %vm1006, %v2784, 0
        %v2823 = vsel %vm1006, %v2785, 0
        %v2826 = vsel %vm1006, %v2786, 0
        %v2829 = vsel %vm1006, %v2787, 0
        %v2832 = vsel %vm1006, %v2788, 0
        %v2835 = vsel %vm1006, %v2789, 0
        %v2838 = vsel %vm1006, %v2790, 0
        %v2841 = vsel %vm1006, %v2791, 0
        %v2844 = vsel %vm1322, %v2794, 0
        %2846 = vmatprep.subr.bf16.mxu0 0
        %2847 = vmatpush1.bf16.msra.mxu0 %v2844
        %2848 = vmatprep.subr.bf16.mxu0 0
        %2849 = vmatpush1.bf16.msra.mxu0 0
        %2850 = vmatprep.subr.bf16.mxu0 0
        %2851 = vmatpush1.bf16.msra.mxu0 0
        %2852 = vmatprep.subr.bf16.mxu0 0
        %2853 = vmatpush1.bf16.msra.mxu0 0
        %2854 = vmatprep.subr.bf16.mxu0 0
        %2855 = vmatpush1.bf16.msra.mxu0 0
        %2856 = vmatprep.subr.bf16.mxu0 0
        %2857 = vmatpush1.bf16.msra.mxu0 0
        %2858 = vmatprep.subr.bf16.mxu0 0
        %2859 = vmatpush1.bf16.msra.mxu0 0
        %2860 = vmatprep.subr.bf16.mxu0 0
        %2861 = vmatpush1.bf16.msra.mxu0 0
        %2862 = vmatprep.subr.bf16.mxu0 0
        %2863 = vmatpush1.bf16.msra.mxu0 0
        %2864 = vmatprep.subr.bf16.mxu0 0
        %2865 = vmatpush1.bf16.msra.mxu0 0
        %2866 = vmatprep.subr.bf16.mxu0 0
        %2867 = vmatpush1.bf16.msra.mxu0 0
        %2868 = vmatprep.subr.bf16.mxu0 0
        %2869 = vmatpush1.bf16.msra.mxu0 0
        %2870 = vmatprep.subr.bf16.mxu0 0
        %2871 = vmatpush1.bf16.msra.mxu0 0
        %2872 = vmatprep.subr.bf16.mxu0 0
        %2873 = vmatpush1.bf16.msra.mxu0 0
        %2874 = vmatprep.subr.bf16.mxu0 0
        %2875 = vmatpush1.bf16.msra.mxu0 0
        %2876 = vmatprep.subr.bf16.mxu0 0
        %2877 = vmatpush1.bf16.msra.mxu0 0
        %2878 = vmatprep.mubr.bf16.mxu0 0
        %2879 = vmatmul.mubr.bf16.gmra.mrb[0].mxu0 %v2796
        %v2880 = vpop.f32.mrb[0].mxu0
        %v2881 = vadd.f32 0.0, %v2880
        %v2882 = vpop.f32.mrb[0].mxu0
        %v2883 = vpop.f32.mrb[0].mxu0
        %v2884 = vadd.f32 0.0, %v2883
        %v2885 = vpop.f32.mrb[0].mxu0
        %2886 = vmatprep.mubr.bf16.mxu0 0
        %2887 = vmatmul.mubr.bf16.gmra.mrb[0].mxu0 %v2799
        %v2888 = vpop.f32.mrb[0].mxu0
        %v2889 = vadd.f32 0.0, %v2888
        %v2890 = vpop.f32.mrb[0].mxu0
        %v2891 = vpop.f32.mrb[0].mxu0
        %v2892 = vadd.f32 0.0, %v2891
        %v2893 = vpop.f32.mrb[0].mxu0
        %2894 = vmatprep.mubr.bf16.mxu0 0
        %2895 = vmatmul.mubr.bf16.gmra.mrb[0].mxu0 %v2802
        %v2896 = vpop.f32.mrb[0].mxu0
        %v2897 = vadd.f32 0.0, %v2896
        %v2898 = vpop.f32.mrb[0].mxu0
        %v2899 = vpop.f32.mrb[0].mxu0
        %v2900 = vadd.f32 0.0, %v2899
        %v2901 = vpop.f32.mrb[0].mxu0
        %2902 = vmatprep.mubr.bf16.mxu0 0
        %2903 = vmatmul.mubr.bf16.gmra.mrb[0].mxu0 %v2805
        %v2904 = vpop.f32.mrb[0].mxu0
        %v2905 = vadd.f32 0.0, %v2904
        %v2906 = vpop.f32.mrb[0].mxu0
        %v2907 = vpop.f32.mrb[0].mxu0
        %v2908 = vadd.f32 0.0, %v2907
        %v2909 = vpop.f32.mrb[0].mxu0
        %2910 = vmatprep.mubr.bf16.mxu0 0
        %2911 = vmatmul.mubr.bf16.gmra.mrb[0].mxu0 %v2808
        %v2912 = vpop.f32.mrb[0].mxu0
        %v2913 = vadd.f32 0.0, %v2912
        %v2914 = vpop.f32.mrb[0].mxu0
        %v2915 = vpop.f32.mrb[0].mxu0
        %v2916 = vadd.f32 0.0, %v2915
        %v2917 = vpop.f32.mrb[0].mxu0
        %2918 = vmatprep.mubr.bf16.mxu0 0
        %2919 = vmatmul.mubr.bf16.gmra.mrb[0].mxu0 %v2811
        %v2920 = vpop.f32.mrb[0].mxu0
        %v2921 = vadd.f32 0.0, %v2920
        %v2922 = vpop.f32.mrb[0].mxu0
        %v2923 = vpop.f32.mrb[0].mxu0
        %v2924 = vadd.f32 0.0, %v2923
        %v2925 = vpop.f32.mrb[0].mxu0
        %2926 = vmatprep.mubr.bf16.mxu0 0
        %2927 = vmatmul.mubr.bf16.gmra.mrb[0].mxu0 %v2814
        %v2928 = vpop.f32.mrb[0].mxu0
        %v2929 = vadd.f32 0.0, %v2928
        %v2930 = vpop.f32.mrb[0].mxu0
        %v2931 = vpop.f32.mrb[0].mxu0
        %v2932 = vadd.f32 0.0, %v2931
        %v2933 = vpop.f32.mrb[0].mxu0
        %2934 = vmatprep.mubr.bf16.mxu0 0
        %2935 = vmatmul.mubr.bf16.gmra.mrb[0].mxu0 %v2817
        %v2936 = vpop.f32.mrb[0].mxu0
        %v2937 = vadd.f32 0.0, %v2936
        %v2938 = vpop.f32.mrb[0].mxu0
        %v2939 = vpop.f32.mrb[0].mxu0
        %v2940 = vadd.f32 0.0, %v2939
        %v2941 = vpop.f32.mrb[0].mxu0
        %2942 = vmatprep.mubr.bf16.mxu0 0
        %2943 = vmatmul.mubr.bf16.gmra.mrb[0].mxu0 %v2820
        %v2944 = vpop.f32.mrb[0].mxu0
        %v2945 = vadd.f32 0.0, %v2944
        %v2946 = vpop.f32.mrb[0].mxu0
        %v2947 = vpop.f32.mrb[0].mxu0
        %v2948 = vadd.f32 0.0, %v2947
        %v2949 = vpop.f32.mrb[0].mxu0
        %2950 = vmatprep.mubr.bf16.mxu0 0
        %2951 = vmatmul.mubr.bf16.gmra.mrb[0].mxu0 %v2823
        %v2952 = vpop.f32.mrb[0].mxu0
        %v2953 = vadd.f32 0.0, %v2952
        %v2954 = vpop.f32.mrb[0].mxu0
        %v2955 = vpop.f32.mrb[0].mxu0
        %v2956 = vadd.f32 0.0, %v2955
        %v2957 = vpop.f32.mrb[0].mxu0
        %2958 = vmatprep.mubr.bf16.mxu0 0
        %2959 = vmatmul.mubr.bf16.gmra.mrb[0].mxu0 %v2826
        %v2960 = vpop.f32.mrb[0].mxu0
        %v2961 = vadd.f32 0.0, %v2960
        %v2962 = vpop.f32.mrb[0].mxu0
        %v2963 = vpop.f32.mrb[0].mxu0
        %v2964 = vadd.f32 0.0, %v2963
        %v2965 = vpop.f32.mrb[0].mxu0
        %2966 = vmatprep.mubr.bf16.mxu0 0
        %2967 = vmatmul.mubr.bf16.gmra.mrb[0].mxu0 %v2829
        %v2968 = vpop.f32.mrb[0].mxu0
        %v2969 = vadd.f32 0.0, %v2968
        %v2970 = vpop.f32.mrb[0].mxu0
        %v2971 = vpop.f32.mrb[0].mxu0
        %v2972 = vadd.f32 0.0, %v2971
        %v2973 = vpop.f32.mrb[0].mxu0
        %2974 = vmatprep.mubr.bf16.mxu0 0
        %2975 = vmatmul.mubr.bf16.gmra.mrb[0].mxu0 %v2832
        %v2976 = vpop.f32.mrb[0].mxu0
        %v2977 = vadd.f32 0.0, %v2976
        %v2978 = vpop.f32.mrb[0].mxu0
        %v2979 = vpop.f32.mrb[0].mxu0
        %v2980 = vadd.f32 0.0, %v2979
        %v2981 = vpop.f32.mrb[0].mxu0
        %2982 = vmatprep.mubr.bf16.mxu0 0
        %2983 = vmatmul.mubr.bf16.gmra.mrb[0].mxu0 %v2835
        %v2984 = vpop.f32.mrb[0].mxu0
        %v2985 = vadd.f32 0.0, %v2984
        %v2986 = vpop.f32.mrb[0].mxu0
        %v2987 = vpop.f32.mrb[0].mxu0
        %v2988 = vadd.f32 0.0, %v2987
        %v2989 = vpop.f32.mrb[0].mxu0
        %2990 = vmatprep.mubr.bf16.mxu0 0
        %2991 = vmatmul.mubr.bf16.gmra.mrb[0].mxu0 %v2838
        %v2992 = vpop.f32.mrb[0].mxu0
        %v2993 = vadd.f32 0.0, %v2992
        %v2994 = vpop.f32.mrb[0].mxu0
        %v2995 = vpop.f32.mrb[0].mxu0
        %v2996 = vadd.f32 0.0, %v2995
        %v2997 = vpop.f32.mrb[0].mxu0
        %2998 = vmatprep.mubr.bf16.mxu0 0
        %2999 = vmatmul.mubr.bf16.gmra.mrb[0].mxu0 %v2841
        %v3000 = vpop.f32.mrb[0].mxu0
        %v3001 = vadd.f32 0.0, %v3000
        %v3002 = vpop.f32.mrb[0].mxu0
        %v3003 = vpop.f32.mrb[0].mxu0
        %v3004 = vadd.f32 0.0, %v3003
        %v3005 = vpop.f32.mrb[0].mxu0
        %3006 = vdwg.mxu0
        %v3007 = vadd.f32 %v2680, %v2881
        %v3008 = vadd.f32 %v2681, %v2884
        %v3009 = vadd.f32 %v2682, %v2889
        %v3010 = vadd.f32 %v2683, %v2892
        %v3011 = vadd.f32 %v2684, %v2897
        %v3012 = vadd.f32 %v2685, %v2900
        %v3013 = vadd.f32 %v2686, %v2905
        %v3014 = vadd.f32 %v2687, %v2908
        %v3015 = vadd.f32 %v2688, %v2913
        %v3016 = vadd.f32 %v2689, %v2916
        %v3017 = vadd.f32 %v2690, %v2921
        %v3018 = vadd.f32 %v2691, %v2924
        %v3019 = vadd.f32 %v2692, %v2929
        %v3020 = vadd.f32 %v2693, %v2932
        %v3021 = vadd.f32 %v2694, %v2937
        %v3022 = vadd.f32 %v2695, %v2940
        %v3023 = vadd.f32 %v2696, %v2945
        %v3024 = vadd.f32 %v2697, %v2948
        %v3025 = vadd.f32 %v2698, %v2953
        %v3026 = vadd.f32 %v2699, %v2956
        %v3027 = vadd.f32 %v2700, %v2961
        %v3028 = vadd.f32 %v2701, %v2964
        %v3029 = vadd.f32 %v2702, %v2969
        %v3030 = vadd.f32 %v2703, %v2972
        %v3031 = vadd.f32 %v2704, %v2977
        %v3032 = vadd.f32 %v2705, %v2980
        %v3033 = vadd.f32 %v2706, %v2985
        %v3034 = vadd.f32 %v2707, %v2988
        %v3035 = vadd.f32 %v2708, %v2993
        %v3036 = vadd.f32 %v2709, %v2996
        %v3037 = vadd.f32 %v2710, %v3001
        %v3038 = vadd.f32 %v2711, %v3004
        %v3039 = vld [vmem:[#allocation2 + $0x27] sm:$0xff]
        %v3040 = vld [vmem:[#allocation2 + $0x2f] sm:$0xff]
        %v3041 = vld [vmem:[#allocation2 + $0x37] sm:$0xff]
        %v3042 = vld [vmem:[#allocation2 + $0x3f] sm:$0xff]
        %v3043 = vld [vmem:[#allocation2 + $0x47] sm:$0xff]
        %v3044 = vld [vmem:[#allocation2 + $0x4f] sm:$0xff]
        %v3045 = vld [vmem:[#allocation2 + $0x57] sm:$0xff]
        %v3046 = vld [vmem:[#allocation2 + $0x5f] sm:$0xff]
        %v3047 = vld [vmem:[#allocation2 + $0x67] sm:$0xff]
        %v3048 = vld [vmem:[#allocation2 + $0x6f] sm:$0xff]
        %v3049 = vld [vmem:[#allocation2 + $0x77] sm:$0xff]
        %v3050 = vld [vmem:[#allocation2 + $0x7f] sm:$0xff]
        %v3051 = vld [vmem:[#allocation2 + $0x87] sm:$0xff]
        %v3052 = vld [vmem:[#allocation2 + $0x8f] sm:$0xff]
        %v3053 = vld [vmem:[#allocation2 + $0x97] sm:$0xff]
        %v3054 = vld [vmem:[#allocation2 + $0x9f] sm:$0xff]
        %v3055 = vld [vmem:[#allocation2 + $0xa7] sm:$0xff]
        %v3056 = vld [vmem:[#allocation2 + $0xaf] sm:$0xff]
        %v3057 = vld [vmem:[#allocation2 + $0xb7] sm:$0xff]
        %v3058 = vld [vmem:[#allocation2 + $0xbf] sm:$0xff]
        %v3059 = vld [vmem:[#allocation2 + $0xc7] sm:$0xff]
        %v3060 = vld [vmem:[#allocation2 + $0xcf] sm:$0xff]
        %v3061 = vld [vmem:[#allocation2 + $0xd7] sm:$0xff]
        %v3062 = vld [vmem:[#allocation2 + $0xdf] sm:$0xff]
        %v3063 = vld [vmem:[#allocation2 + $0xe7] sm:$0xff]
        %v3064 = vld [vmem:[#allocation2 + $0xef] sm:$0xff]
        %v3065 = vld [vmem:[#allocation2 + $0xf7] sm:$0xff]
        %v3066 = vld [vmem:[#allocation2 + $0xff] sm:$0xff]
        %v3067 = vld [vmem:[#allocation2 + $0x107] sm:$0xff]
        %v3068 = vld [vmem:[#allocation2 + $0x10f] sm:$0xff]
        %v3069 = vld [vmem:[#allocation2 + $0x117] sm:$0xff]
        %v3070 = vld [vmem:[#allocation2 + $0x11f] sm:$0xff]
        %v3071 = vsel %vm1141, %v3039, 0.0
        %v3072 = vsel %vm1142, %v3040, 0.0
        %v3073 = vsel %vm1143, %v3041, 0.0
        %v3074 = vsel %vm1144, %v3042, 0.0
        %v3075 = vsel %vm1145, %v3043, 0.0
        %v3076 = vsel %vm1146, %v3044, 0.0
        %v3077 = vsel %vm1147, %v3045, 0.0
        %v3078 = vsel %vm1148, %v3046, 0.0
        %v3079 = vsel %vm1149, %v3047, 0.0
        %v3080 = vsel %vm1150, %v3048, 0.0
        %v3081 = vsel %vm1151, %v3049, 0.0
        %v3082 = vsel %vm1152, %v3050, 0.0
        %v3083 = vsel %vm1153, %v3051, 0.0
        %v3084 = vsel %vm1154, %v3052, 0.0
        %v3085 = vsel %vm1155, %v3053, 0.0
        %v3086 = vsel %vm1156, %v3054, 0.0
        %v3087 = vsel %vm1157, %v3055, 0.0
        %v3088 = vsel %vm1158, %v3056, 0.0
        %v3089 = vsel %vm1159, %v3057, 0.0
        %v3090 = vsel %vm1160, %v3058, 0.0
        %v3091 = vsel %vm1161, %v3059, 0.0
        %v3092 = vsel %vm1162, %v3060, 0.0
        %v3093 = vsel %vm1163, %v3061, 0.0
        %v3094 = vsel %vm1164, %v3062, 0.0
        %v3095 = vsel %vm1165, %v3063, 0.0
        %v3096 = vsel %vm1166, %v3064, 0.0
        %v3097 = vsel %vm1167, %v3065, 0.0
        %v3098 = vsel %vm1168, %v3066, 0.0
        %v3099 = vsel %vm1169, %v3067, 0.0
        %v3100 = vsel %vm1170, %v3068, 0.0
        %v3101 = vsel %vm1171, %v3069, 0.0
        %v3102 = vsel %vm1172, %v3070, 0.0
        %v3103 = vpack.c.bf16 %v3072, %v3071
        %v3104 = vpack.c.bf16 %v3074, %v3073
        %v3105 = vpack.c.bf16 %v3076, %v3075
        %v3106 = vpack.c.bf16 %v3078, %v3077
        %v3107 = vpack.c.bf16 %v3080, %v3079
        %v3108 = vpack.c.bf16 %v3082, %v3081
        %v3109 = vpack.c.bf16 %v3084, %v3083
        %v3110 = vpack.c.bf16 %v3086, %v3085
        %v3111 = vpack.c.bf16 %v3088, %v3087
        %v3112 = vpack.c.bf16 %v3090, %v3089
        %v3113 = vpack.c.bf16 %v3092, %v3091
        %v3114 = vpack.c.bf16 %v3094, %v3093
        %v3115 = vpack.c.bf16 %v3096, %v3095
        %v3116 = vpack.c.bf16 %v3098, %v3097
        %v3117 = vpack.c.bf16 %v3100, %v3099
        %v3118 = vpack.c.bf16 %v3102, %v3101
        %s3119 = scalar_lea.vmem %s1, 48
        %v3120 = vld [vmem:[%s3119] sm:$0xff]
        %v3121 = vpack.c.bf16 %v3120, %v3120
        %v3123 = vsel %vm1006, %v3103, 0
        %v3126 = vsel %vm1006, %v3104, 0
        %v3129 = vsel %vm1006, %v3105, 0
        %v3132 = vsel %vm1006, %v3106, 0
        %v3135 = vsel %vm1006, %v3107, 0
        %v3138 = vsel %vm1006, %v3108, 0
        %v3141 = vsel %vm1006, %v3109, 0
        %v3144 = vsel %vm1006, %v3110, 0
        %v3147 = vsel %vm1006, %v3111, 0
        %v3150 = vsel %vm1006, %v3112, 0
        %v3153 = vsel %vm1006, %v3113, 0
        %v3156 = vsel %vm1006, %v3114, 0
        %v3159 = vsel %vm1006, %v3115, 0
        %v3162 = vsel %vm1006, %v3116, 0
        %v3165 = vsel %vm1006, %v3117, 0
        %v3168 = vsel %vm1006, %v3118, 0
        %v3171 = vsel %vm1322, %v3121, 0
        %3173 = vmatprep.subr.bf16.mxu0 0
        %3174 = vmatpush1.bf16.msra.mxu0 %v3171
        %3175 = vmatprep.subr.bf16.mxu0 0
        %3176 = vmatpush1.bf16.msra.mxu0 0
        %3177 = vmatprep.subr.bf16.mxu0 0
        %3178 = vmatpush1.bf16.msra.mxu0 0
        %3179 = vmatprep.subr.bf16.mxu0 0
        %3180 = vmatpush1.bf16.msra.mxu0 0
        %3181 = vmatprep.subr.bf16.mxu0 0
        %3182 = vmatpush1.bf16.msra.mxu0 0
        %3183 = vmatprep.subr.bf16.mxu0 0
        %3184 = vmatpush1.bf16.msra.mxu0 0
        %3185 = vmatprep.subr.bf16.mxu0 0
        %3186 = vmatpush1.bf16.msra.mxu0 0
        %3187 = vmatprep.subr.bf16.mxu0 0
        %3188 = vmatpush1.bf16.msra.mxu0 0
        %3189 = vmatprep.subr.bf16.mxu0 0
        %3190 = vmatpush1.bf16.msra.mxu0 0
        %3191 = vmatprep.subr.bf16.mxu0 0
        %3192 = vmatpush1.bf16.msra.mxu0 0
        %3193 = vmatprep.subr.bf16.mxu0 0
        %3194 = vmatpush1.bf16.msra.mxu0 0
        %3195 = vmatprep.subr.bf16.mxu0 0
        %3196 = vmatpush1.bf16.msra.mxu0 0
        %3197 = vmatprep.subr.bf16.mxu0 0
        %3198 = vmatpush1.bf16.msra.mxu0 0
        %3199 = vmatprep.subr.bf16.mxu0 0
        %3200 = vmatpush1.bf16.msra.mxu0 0
        %3201 = vmatprep.subr.bf16.mxu0 0
        %3202 = vmatpush1.bf16.msra.mxu0 0
        %3203 = vmatprep.subr.bf16.mxu0 0
        %3204 = vmatpush1.bf16.msra.mxu0 0
        %3205 = vmatprep.mubr.bf16.mxu0 0
        %3206 = vmatmul.mubr.bf16.gmra.mrb[0].mxu0 %v3123
        %v3207 = vpop.f32.mrb[0].mxu0
        %v3208 = vadd.f32 0.0, %v3207
        %v3209 = vpop.f32.mrb[0].mxu0
        %v3210 = vpop.f32.mrb[0].mxu0
        %v3211 = vadd.f32 0.0, %v3210
        %v3212 = vpop.f32.mrb[0].mxu0
        %3213 = vmatprep.mubr.bf16.mxu0 0
        %3214 = vmatmul.mubr.bf16.gmra.mrb[0].mxu0 %v3126
        %v3215 = vpop.f32.mrb[0].mxu0
        %v3216 = vadd.f32 0.0, %v3215
        %v3217 = vpop.f32.mrb[0].mxu0
        %v3218 = vpop.f32.mrb[0].mxu0
        %v3219 = vadd.f32 0.0, %v3218
        %v3220 = vpop.f32.mrb[0].mxu0
        %3221 = vmatprep.mubr.bf16.mxu0 0
        %3222 = vmatmul.mubr.bf16.gmra.mrb[0].mxu0 %v3129
        %v3223 = vpop.f32.mrb[0].mxu0
        %v3224 = vadd.f32 0.0, %v3223
        %v3225 = vpop.f32.mrb[0].mxu0
        %v3226 = vpop.f32.mrb[0].mxu0
        %v3227 = vadd.f32 0.0, %v3226
        %v3228 = vpop.f32.mrb[0].mxu0
        %3229 = vmatprep.mubr.bf16.mxu0 0
        %3230 = vmatmul.mubr.bf16.gmra.mrb[0].mxu0 %v3132
        %v3231 = vpop.f32.mrb[0].mxu0
        %v3232 = vadd.f32 0.0, %v3231
        %v3233 = vpop.f32.mrb[0].mxu0
        %v3234 = vpop.f32.mrb[0].mxu0
        %v3235 = vadd.f32 0.0, %v3234
        %v3236 = vpop.f32.mrb[0].mxu0
        %3237 = vmatprep.mubr.bf16.mxu0 0
        %3238 = vmatmul.mubr.bf16.gmra.mrb[0].mxu0 %v3135
        %v3239 = vpop.f32.mrb[0].mxu0
        %v3240 = vadd.f32 0.0, %v3239
        %v3241 = vpop.f32.mrb[0].mxu0
        %v3242 = vpop.f32.mrb[0].mxu0
        %v3243 = vadd.f32 0.0, %v3242
        %v3244 = vpop.f32.mrb[0].mxu0
        %3245 = vmatprep.mubr.bf16.mxu0 0
        %3246 = vmatmul.mubr.bf16.gmra.mrb[0].mxu0 %v3138
        %v3247 = vpop.f32.mrb[0].mxu0
        %v3248 = vadd.f32 0.0, %v3247
        %v3249 = vpop.f32.mrb[0].mxu0
        %v3250 = vpop.f32.mrb[0].mxu0
        %v3251 = vadd.f32 0.0, %v3250
        %v3252 = vpop.f32.mrb[0].mxu0
        %3253 = vmatprep.mubr.bf16.mxu0 0
        %3254 = vmatmul.mubr.bf16.gmra.mrb[0].mxu0 %v3141
        %v3255 = vpop.f32.mrb[0].mxu0
        %v3256 = vadd.f32 0.0, %v3255
        %v3257 = vpop.f32.mrb[0].mxu0
        %v3258 = vpop.f32.mrb[0].mxu0
        %v3259 = vadd.f32 0.0, %v3258
        %v3260 = vpop.f32.mrb[0].mxu0
        %3261 = vmatprep.mubr.bf16.mxu0 0
        %3262 = vmatmul.mubr.bf16.gmra.mrb[0].mxu0 %v3144
        %v3263 = vpop.f32.mrb[0].mxu0
        %v3264 = vadd.f32 0.0, %v3263
        %v3265 = vpop.f32.mrb[0].mxu0
        %v3266 = vpop.f32.mrb[0].mxu0
        %v3267 = vadd.f32 0.0, %v3266
        %v3268 = vpop.f32.mrb[0].mxu0
        %3269 = vmatprep.mubr.bf16.mxu0 0
        %3270 = vmatmul.mubr.bf16.gmra.mrb[0].mxu0 %v3147
        %v3271 = vpop.f32.mrb[0].mxu0
        %v3272 = vadd.f32 0.0, %v3271
        %v3273 = vpop.f32.mrb[0].mxu0
        %v3274 = vpop.f32.mrb[0].mxu0
        %v3275 = vadd.f32 0.0, %v3274
        %v3276 = vpop.f32.mrb[0].mxu0
        %3277 = vmatprep.mubr.bf16.mxu0 0
        %3278 = vmatmul.mubr.bf16.gmra.mrb[0].mxu0 %v3150
        %v3279 = vpop.f32.mrb[0].mxu0
        %v3280 = vadd.f32 0.0, %v3279
        %v3281 = vpop.f32.mrb[0].mxu0
        %v3282 = vpop.f32.mrb[0].mxu0
        %v3283 = vadd.f32 0.0, %v3282
        %v3284 = vpop.f32.mrb[0].mxu0
        %3285 = vmatprep.mubr.bf16.mxu0 0
        %3286 = vmatmul.mubr.bf16.gmra.mrb[0].mxu0 %v3153
        %v3287 = vpop.f32.mrb[0].mxu0
        %v3288 = vadd.f32 0.0, %v3287
        %v3289 = vpop.f32.mrb[0].mxu0
        %v3290 = vpop.f32.mrb[0].mxu0
        %v3291 = vadd.f32 0.0, %v3290
        %v3292 = vpop.f32.mrb[0].mxu0
        %3293 = vmatprep.mubr.bf16.mxu0 0
        %3294 = vmatmul.mubr.bf16.gmra.mrb[0].mxu0 %v3156
        %v3295 = vpop.f32.mrb[0].mxu0
        %v3296 = vadd.f32 0.0, %v3295
        %v3297 = vpop.f32.mrb[0].mxu0
        %v3298 = vpop.f32.mrb[0].mxu0
        %v3299 = vadd.f32 0.0, %v3298
        %v3300 = vpop.f32.mrb[0].mxu0
        %3301 = vmatprep.mubr.bf16.mxu0 0
        %3302 = vmatmul.mubr.bf16.gmra.mrb[0].mxu0 %v3159
        %v3303 = vpop.f32.mrb[0].mxu0
        %v3304 = vadd.f32 0.0, %v3303
        %v3305 = vpop.f32.mrb[0].mxu0
        %v3306 = vpop.f32.mrb[0].mxu0
        %v3307 = vadd.f32 0.0, %v3306
        %v3308 = vpop.f32.mrb[0].mxu0
        %3309 = vmatprep.mubr.bf16.mxu0 0
        %3310 = vmatmul.mubr.bf16.gmra.mrb[0].mxu0 %v3162
        %v3311 = vpop.f32.mrb[0].mxu0
        %v3312 = vadd.f32 0.0, %v3311
        %v3313 = vpop.f32.mrb[0].mxu0
        %v3314 = vpop.f32.mrb[0].mxu0
        %v3315 = vadd.f32 0.0, %v3314
        %v3316 = vpop.f32.mrb[0].mxu0
        %3317 = vmatprep.mubr.bf16.mxu0 0
        %3318 = vmatmul.mubr.bf16.gmra.mrb[0].mxu0 %v3165
        %v3319 = vpop.f32.mrb[0].mxu0
        %v3320 = vadd.f32 0.0, %v3319
        %v3321 = vpop.f32.mrb[0].mxu0
        %v3322 = vpop.f32.mrb[0].mxu0
        %v3323 = vadd.f32 0.0, %v3322
        %v3324 = vpop.f32.mrb[0].mxu0
        %3325 = vmatprep.mubr.bf16.mxu0 0
        %3326 = vmatmul.mubr.bf16.gmra.mrb[0].mxu0 %v3168
        %v3327 = vpop.f32.mrb[0].mxu0
        %v3328 = vadd.f32 0.0, %v3327
        %v3329 = vpop.f32.mrb[0].mxu0
        %v3330 = vpop.f32.mrb[0].mxu0
        %v3331 = vadd.f32 0.0, %v3330
        %v3332 = vpop.f32.mrb[0].mxu0
        %3333 = vdwg.mxu0
        %v3334 = vadd.f32 %v3007, %v3208
        %v3335 = vadd.f32 %v3008, %v3211
        %v3336 = vadd.f32 %v3009, %v3216
        %v3337 = vadd.f32 %v3010, %v3219
        %v3338 = vadd.f32 %v3011, %v3224
        %v3339 = vadd.f32 %v3012, %v3227
        %v3340 = vadd.f32 %v3013, %v3232
        %v3341 = vadd.f32 %v3014, %v3235
        %v3342 = vadd.f32 %v3015, %v3240
        %v3343 = vadd.f32 %v3016, %v3243
        %v3344 = vadd.f32 %v3017, %v3248
        %v3345 = vadd.f32 %v3018, %v3251
        %v3346 = vadd.f32 %v3019, %v3256
        %v3347 = vadd.f32 %v3020, %v3259
        %v3348 = vadd.f32 %v3021, %v3264
        %v3349 = vadd.f32 %v3022, %v3267
        %v3350 = vadd.f32 %v3023, %v3272
        %v3351 = vadd.f32 %v3024, %v3275
        %v3352 = vadd.f32 %v3025, %v3280
        %v3353 = vadd.f32 %v3026, %v3283
        %v3354 = vadd.f32 %v3027, %v3288
        %v3355 = vadd.f32 %v3028, %v3291
        %v3356 = vadd.f32 %v3029, %v3296
        %v3357 = vadd.f32 %v3030, %v3299
        %v3358 = vadd.f32 %v3031, %v3304
        %v3359 = vadd.f32 %v3032, %v3307
        %v3360 = vadd.f32 %v3033, %v3312
        %v3361 = vadd.f32 %v3034, %v3315
        %v3362 = vadd.f32 %v3035, %v3320
        %v3363 = vadd.f32 %v3036, %v3323
        %v3364 = vadd.f32 %v3037, %v3328
        %v3365 = vadd.f32 %v3038, %v3331
        %v3366 = vld [vmem:[#allocation2 + $0x28] sm:$0xff]
        %v3367 = vld [vmem:[#allocation2 + $0x30] sm:$0xff]
        %v3368 = vld [vmem:[#allocation2 + $0x38] sm:$0xff]
        %v3369 = vld [vmem:[#allocation2 + $0x40] sm:$0xff]
        %v3370 = vld [vmem:[#allocation2 + $0x48] sm:$0xff]
        %v3371 = vld [vmem:[#allocation2 + $0x50] sm:$0xff]
        %v3372 = vld [vmem:[#allocation2 + $0x58] sm:$0xff]
        %v3373 = vld [vmem:[#allocation2 + $0x60] sm:$0xff]
        %v3374 = vld [vmem:[#allocation2 + $0x68] sm:$0xff]
        %v3375 = vld [vmem:[#allocation2 + $0x70] sm:$0xff]
        %v3376 = vld [vmem:[#allocation2 + $0x78] sm:$0xff]
        %v3377 = vld [vmem:[#allocation2 + $0x80] sm:$0xff]
        %v3378 = vld [vmem:[#allocation2 + $0x88] sm:$0xff]
        %v3379 = vld [vmem:[#allocation2 + $0x90] sm:$0xff]
        %v3380 = vld [vmem:[#allocation2 + $0x98] sm:$0xff]
        %v3381 = vld [vmem:[#allocation2 + $0xa0] sm:$0xff]
        %v3382 = vld [vmem:[#allocation2 + $0xa8] sm:$0xff]
        %v3383 = vld [vmem:[#allocation2 + $0xb0] sm:$0xff]
        %v3384 = vld [vmem:[#allocation2 + $0xb8] sm:$0xff]
        %v3385 = vld [vmem:[#allocation2 + $0xc0] sm:$0xff]
        %v3386 = vld [vmem:[#allocation2 + $0xc8] sm:$0xff]
        %v3387 = vld [vmem:[#allocation2 + $0xd0] sm:$0xff]
        %v3388 = vld [vmem:[#allocation2 + $0xd8] sm:$0xff]
        %v3389 = vld [vmem:[#allocation2 + $0xe0] sm:$0xff]
        %v3390 = vld [vmem:[#allocation2 + $0xe8] sm:$0xff]
        %v3391 = vld [vmem:[#allocation2 + $0xf0] sm:$0xff]
        %v3392 = vld [vmem:[#allocation2 + $0xf8] sm:$0xff]
        %v3393 = vld [vmem:[#allocation2 + $0x100] sm:$0xff]
        %v3394 = vld [vmem:[#allocation2 + $0x108] sm:$0xff]
        %v3395 = vld [vmem:[#allocation2 + $0x110] sm:$0xff]
        %v3396 = vld [vmem:[#allocation2 + $0x118] sm:$0xff]
        %v3397 = vld [vmem:[#allocation2 + $0x120] sm:$0xff]
        %v3398 = vpack.c.bf16 %v3367, %v3366
        %v3399 = vpack.c.bf16 %v3369, %v3368
        %v3400 = vpack.c.bf16 %v3371, %v3370
        %v3401 = vpack.c.bf16 %v3373, %v3372
        %v3402 = vpack.c.bf16 %v3375, %v3374
        %v3403 = vpack.c.bf16 %v3377, %v3376
        %v3404 = vpack.c.bf16 %v3379, %v3378
        %v3405 = vpack.c.bf16 %v3381, %v3380
        %v3406 = vpack.c.bf16 %v3383, %v3382
        %v3407 = vpack.c.bf16 %v3385, %v3384
        %v3408 = vpack.c.bf16 %v3387, %v3386
        %v3409 = vpack.c.bf16 %v3389, %v3388
        %v3410 = vpack.c.bf16 %v3391, %v3390
        %v3411 = vpack.c.bf16 %v3393, %v3392
        %v3412 = vpack.c.bf16 %v3395, %v3394
        %v3413 = vpack.c.bf16 %v3397, %v3396
        %s3414 = scalar_lea.vmem %s1, 56
        %v3415 = vld [vmem:[%s3414] sm:$0xff]
        %v3416 = vpack.c.bf16 %v3415, %v3415
        %v3418 = vsel %vm1006, %v3398, 0
        %v3421 = vsel %vm1006, %v3399, 0
        %v3424 = vsel %vm1006, %v3400, 0
        %v3427 = vsel %vm1006, %v3401, 0
        %v3430 = vsel %vm1006, %v3402, 0
        %v3433 = vsel %vm1006, %v3403, 0
        %v3436 = vsel %vm1006, %v3404, 0
        %v3439 = vsel %vm1006, %v3405, 0
        %v3442 = vsel %vm1006, %v3406, 0
        %v3445 = vsel %vm1006, %v3407, 0
        %v3448 = vsel %vm1006, %v3408, 0
        %v3451 = vsel %vm1006, %v3409, 0
        %v3454 = vsel %vm1006, %v3410, 0
        %v3457 = vsel %vm1006, %v3411, 0
        %v3460 = vsel %vm1006, %v3412, 0
        %v3463 = vsel %vm1006, %v3413, 0
        %v3466 = vsel %vm1322, %v3416, 0
        %3468 = vmatprep.subr.bf16.mxu0 0
        %3469 = vmatpush1.bf16.msra.mxu0 %v3466
        %3470 = vmatprep.subr.bf16.mxu0 0
        %3471 = vmatpush1.bf16.msra.mxu0 0
        %3472 = vmatprep.subr.bf16.mxu0 0
        %3473 = vmatpush1.bf16.msra.mxu0 0
        %3474 = vmatprep.subr.bf16.mxu0 0
        %3475 = vmatpush1.bf16.msra.mxu0 0
        %3476 = vmatprep.subr.bf16.mxu0 0
        %3477 = vmatpush1.bf16.msra.mxu0 0
        %3478 = vmatprep.subr.bf16.mxu0 0
        %3479 = vmatpush1.bf16.msra.mxu0 0
        %3480 = vmatprep.subr.bf16.mxu0 0
        %3481 = vmatpush1.bf16.msra.mxu0 0
        %3482 = vmatprep.subr.bf16.mxu0 0
        %3483 = vmatpush1.bf16.msra.mxu0 0
        %3484 = vmatprep.subr.bf16.mxu0 0
        %3485 = vmatpush1.bf16.msra.mxu0 0
        %3486 = vmatprep.subr.bf16.mxu0 0
        %3487 = vmatpush1.bf16.msra.mxu0 0
        %3488 = vmatprep.subr.bf16.mxu0 0
        %3489 = vmatpush1.bf16.msra.mxu0 0
        %3490 = vmatprep.subr.bf16.mxu0 0
        %3491 = vmatpush1.bf16.msra.mxu0 0
        %3492 = vmatprep.subr.bf16.mxu0 0
        %3493 = vmatpush1.bf16.msra.mxu0 0
        %3494 = vmatprep.subr.bf16.mxu0 0
        %3495 = vmatpush1.bf16.msra.mxu0 0
        %3496 = vmatprep.subr.bf16.mxu0 0
        %3497 = vmatpush1.bf16.msra.mxu0 0
        %3498 = vmatprep.subr.bf16.mxu0 0
        %3499 = vmatpush1.bf16.msra.mxu0 0
        %3500 = vmatprep.mubr.bf16.mxu0 0
        %3501 = vmatmul.mubr.bf16.gmra.mrb[0].mxu0 %v3418
        %v3502 = vpop.f32.mrb[0].mxu0
        %v3503 = vadd.f32 0.0, %v3502
        %v3504 = vpop.f32.mrb[0].mxu0
        %v3505 = vpop.f32.mrb[0].mxu0
        %v3506 = vadd.f32 0.0, %v3505
        %v3507 = vpop.f32.mrb[0].mxu0
        %3508 = vmatprep.mubr.bf16.mxu0 0
        %3509 = vmatmul.mubr.bf16.gmra.mrb[0].mxu0 %v3421
        %v3510 = vpop.f32.mrb[0].mxu0
        %v3511 = vadd.f32 0.0, %v3510
        %v3512 = vpop.f32.mrb[0].mxu0
        %v3513 = vpop.f32.mrb[0].mxu0
        %v3514 = vadd.f32 0.0, %v3513
        %v3515 = vpop.f32.mrb[0].mxu0
        %3516 = vmatprep.mubr.bf16.mxu0 0
        %3517 = vmatmul.mubr.bf16.gmra.mrb[0].mxu0 %v3424
        %v3518 = vpop.f32.mrb[0].mxu0
        %v3519 = vadd.f32 0.0, %v3518
        %v3520 = vpop.f32.mrb[0].mxu0
        %v3521 = vpop.f32.mrb[0].mxu0
        %v3522 = vadd.f32 0.0, %v3521
        %v3523 = vpop.f32.mrb[0].mxu0
        %3524 = vmatprep.mubr.bf16.mxu0 0
        %3525 = vmatmul.mubr.bf16.gmra.mrb[0].mxu0 %v3427
        %v3526 = vpop.f32.mrb[0].mxu0
        %v3527 = vadd.f32 0.0, %v3526
        %v3528 = vpop.f32.mrb[0].mxu0
        %v3529 = vpop.f32.mrb[0].mxu0
        %v3530 = vadd.f32 0.0, %v3529
        %v3531 = vpop.f32.mrb[0].mxu0
        %3532 = vmatprep.mubr.bf16.mxu0 0
        %3533 = vmatmul.mubr.bf16.gmra.mrb[0].mxu0 %v3430
        %v3534 = vpop.f32.mrb[0].mxu0
        %v3535 = vadd.f32 0.0, %v3534
        %v3536 = vpop.f32.mrb[0].mxu0
        %v3537 = vpop.f32.mrb[0].mxu0
        %v3538 = vadd.f32 0.0, %v3537
        %v3539 = vpop.f32.mrb[0].mxu0
        %3540 = vmatprep.mubr.bf16.mxu0 0
        %3541 = vmatmul.mubr.bf16.gmra.mrb[0].mxu0 %v3433
        %v3542 = vpop.f32.mrb[0].mxu0
        %v3543 = vadd.f32 0.0, %v3542
        %v3544 = vpop.f32.mrb[0].mxu0
        %v3545 = vpop.f32.mrb[0].mxu0
        %v3546 = vadd.f32 0.0, %v3545
        %v3547 = vpop.f32.mrb[0].mxu0
        %3548 = vmatprep.mubr.bf16.mxu0 0
        %3549 = vmatmul.mubr.bf16.gmra.mrb[0].mxu0 %v3436
        %v3550 = vpop.f32.mrb[0].mxu0
        %v3551 = vadd.f32 0.0, %v3550
        %v3552 = vpop.f32.mrb[0].mxu0
        %v3553 = vpop.f32.mrb[0].mxu0
        %v3554 = vadd.f32 0.0, %v3553
        %v3555 = vpop.f32.mrb[0].mxu0
        %3556 = vmatprep.mubr.bf16.mxu0 0
        %3557 = vmatmul.mubr.bf16.gmra.mrb[0].mxu0 %v3439
        %v3558 = vpop.f32.mrb[0].mxu0
        %v3559 = vadd.f32 0.0, %v3558
        %v3560 = vpop.f32.mrb[0].mxu0
        %v3561 = vpop.f32.mrb[0].mxu0
        %v3562 = vadd.f32 0.0, %v3561
        %v3563 = vpop.f32.mrb[0].mxu0
        %3564 = vmatprep.mubr.bf16.mxu0 0
        %3565 = vmatmul.mubr.bf16.gmra.mrb[0].mxu0 %v3442
        %v3566 = vpop.f32.mrb[0].mxu0
        %v3567 = vadd.f32 0.0, %v3566
        %v3568 = vpop.f32.mrb[0].mxu0
        %v3569 = vpop.f32.mrb[0].mxu0
        %v3570 = vadd.f32 0.0, %v3569
        %v3571 = vpop.f32.mrb[0].mxu0
        %3572 = vmatprep.mubr.bf16.mxu0 0
        %3573 = vmatmul.mubr.bf16.gmra.mrb[0].mxu0 %v3445
        %v3574 = vpop.f32.mrb[0].mxu0
        %v3575 = vadd.f32 0.0, %v3574
        %v3576 = vpop.f32.mrb[0].mxu0
        %v3577 = vpop.f32.mrb[0].mxu0
        %v3578 = vadd.f32 0.0, %v3577
        %v3579 = vpop.f32.mrb[0].mxu0
        %3580 = vmatprep.mubr.bf16.mxu0 0
        %3581 = vmatmul.mubr.bf16.gmra.mrb[0].mxu0 %v3448
        %v3582 = vpop.f32.mrb[0].mxu0
        %v3583 = vadd.f32 0.0, %v3582
        %v3584 = vpop.f32.mrb[0].mxu0
        %v3585 = vpop.f32.mrb[0].mxu0
        %v3586 = vadd.f32 0.0, %v3585
        %v3587 = vpop.f32.mrb[0].mxu0
        %3588 = vmatprep.mubr.bf16.mxu0 0
        %3589 = vmatmul.mubr.bf16.gmra.mrb[0].mxu0 %v3451
        %v3590 = vpop.f32.mrb[0].mxu0
        %v3591 = vadd.f32 0.0, %v3590
        %v3592 = vpop.f32.mrb[0].mxu0
        %v3593 = vpop.f32.mrb[0].mxu0
        %v3594 = vadd.f32 0.0, %v3593
        %v3595 = vpop.f32.mrb[0].mxu0
        %3596 = vmatprep.mubr.bf16.mxu0 0
        %3597 = vmatmul.mubr.bf16.gmra.mrb[0].mxu0 %v3454
        %v3598 = vpop.f32.mrb[0].mxu0
        %v3599 = vadd.f32 0.0, %v3598
        %v3600 = vpop.f32.mrb[0].mxu0
        %v3601 = vpop.f32.mrb[0].mxu0
        %v3602 = vadd.f32 0.0, %v3601
        %v3603 = vpop.f32.mrb[0].mxu0
        %3604 = vmatprep.mubr.bf16.mxu0 0
        %3605 = vmatmul.mubr.bf16.gmra.mrb[0].mxu0 %v3457
        %v3606 = vpop.f32.mrb[0].mxu0
        %v3607 = vadd.f32 0.0, %v3606
        %v3608 = vpop.f32.mrb[0].mxu0
        %v3609 = vpop.f32.mrb[0].mxu0
        %v3610 = vadd.f32 0.0, %v3609
        %v3611 = vpop.f32.mrb[0].mxu0
        %3612 = vmatprep.mubr.bf16.mxu0 0
        %3613 = vmatmul.mubr.bf16.gmra.mrb[0].mxu0 %v3460
        %v3614 = vpop.f32.mrb[0].mxu0
        %v3615 = vadd.f32 0.0, %v3614
        %v3616 = vpop.f32.mrb[0].mxu0
        %v3617 = vpop.f32.mrb[0].mxu0
        %v3618 = vadd.f32 0.0, %v3617
        %v3619 = vpop.f32.mrb[0].mxu0
        %3620 = vmatprep.mubr.bf16.mxu0 0
        %3621 = vmatmul.mubr.bf16.gmra.mrb[0].mxu0 %v3463
        %v3622 = vpop.f32.mrb[0].mxu0
        %v3623 = vadd.f32 0.0, %v3622
        %v3624 = vpop.f32.mrb[0].mxu0
        %v3625 = vpop.f32.mrb[0].mxu0
        %v3626 = vadd.f32 0.0, %v3625
        %v3627 = vpop.f32.mrb[0].mxu0
        %3628 = vdwg.mxu0
        %v3629 = vadd.f32 %v3334, %v3503
        %v3630 = vadd.f32 %v3335, %v3506
        %v3631 = vadd.f32 %v3336, %v3511
        %v3632 = vadd.f32 %v3337, %v3514
        %v3633 = vadd.f32 %v3338, %v3519
        %v3634 = vadd.f32 %v3339, %v3522
        %v3635 = vadd.f32 %v3340, %v3527
        %v3636 = vadd.f32 %v3341, %v3530
        %v3637 = vadd.f32 %v3342, %v3535
        %v3638 = vadd.f32 %v3343, %v3538
        %v3639 = vadd.f32 %v3344, %v3543
        %v3640 = vadd.f32 %v3345, %v3546
        %v3641 = vadd.f32 %v3346, %v3551
        %v3642 = vadd.f32 %v3347, %v3554
        %v3643 = vadd.f32 %v3348, %v3559
        %v3644 = vadd.f32 %v3349, %v3562
        %v3645 = vadd.f32 %v3350, %v3567
        %v3646 = vadd.f32 %v3351, %v3570
        %v3647 = vadd.f32 %v3352, %v3575
        %v3648 = vadd.f32 %v3353, %v3578
        %v3649 = vadd.f32 %v3354, %v3583
        %v3650 = vadd.f32 %v3355, %v3586
        %v3651 = vadd.f32 %v3356, %v3591
        %v3652 = vadd.f32 %v3357, %v3594
        %v3653 = vadd.f32 %v3358, %v3599
        %v3654 = vadd.f32 %v3359, %v3602
        %v3655 = vadd.f32 %v3360, %v3607
        %v3656 = vadd.f32 %v3361, %v3610
        %v3657 = vadd.f32 %v3362, %v3615
        %v3658 = vadd.f32 %v3363, %v3618
        %v3659 = vadd.f32 %v3364, %v3623
        %v3660 = vadd.f32 %v3365, %v3626
        %v3661 = vld [vmem:[#allocation2 + $0x29] sm:$0xff]
        %v3662 = vld [vmem:[#allocation2 + $0x31] sm:$0xff]
        %v3663 = vld [vmem:[#allocation2 + $0x39] sm:$0xff]
        %v3664 = vld [vmem:[#allocation2 + $0x41] sm:$0xff]
        %v3665 = vld [vmem:[#allocation2 + $0x49] sm:$0xff]
        %v3666 = vld [vmem:[#allocation2 + $0x51] sm:$0xff]
        %v3667 = vld [vmem:[#allocation2 + $0x59] sm:$0xff]
        %v3668 = vld [vmem:[#allocation2 + $0x61] sm:$0xff]
        %v3669 = vld [vmem:[#allocation2 + $0x69] sm:$0xff]
        %v3670 = vld [vmem:[#allocation2 + $0x71] sm:$0xff]
        %v3671 = vld [vmem:[#allocation2 + $0x79] sm:$0xff]
        %v3672 = vld [vmem:[#allocation2 + $0x81] sm:$0xff]
        %v3673 = vld [vmem:[#allocation2 + $0x89] sm:$0xff]
        %v3674 = vld [vmem:[#allocation2 + $0x91] sm:$0xff]
        %v3675 = vld [vmem:[#allocation2 + $0x99] sm:$0xff]
        %v3676 = vld [vmem:[#allocation2 + $0xa1] sm:$0xff]
        %v3677 = vld [vmem:[#allocation2 + $0xa9] sm:$0xff]
        %v3678 = vld [vmem:[#allocation2 + $0xb1] sm:$0xff]
        %v3679 = vld [vmem:[#allocation2 + $0xb9] sm:$0xff]
        %v3680 = vld [vmem:[#allocation2 + $0xc1] sm:$0xff]
        %v3681 = vld [vmem:[#allocation2 + $0xc9] sm:$0xff]
        %v3682 = vld [vmem:[#allocation2 + $0xd1] sm:$0xff]
        %v3683 = vld [vmem:[#allocation2 + $0xd9] sm:$0xff]
        %v3684 = vld [vmem:[#allocation2 + $0xe1] sm:$0xff]
        %v3685 = vld [vmem:[#allocation2 + $0xe9] sm:$0xff]
        %v3686 = vld [vmem:[#allocation2 + $0xf1] sm:$0xff]
        %v3687 = vld [vmem:[#allocation2 + $0xf9] sm:$0xff]
        %v3688 = vld [vmem:[#allocation2 + $0x101] sm:$0xff]
        %v3689 = vld [vmem:[#allocation2 + $0x109] sm:$0xff]
        %v3690 = vld [vmem:[#allocation2 + $0x111] sm:$0xff]
        %v3691 = vld [vmem:[#allocation2 + $0x119] sm:$0xff]
        %v3692 = vld [vmem:[#allocation2 + $0x121] sm:$0xff]
        %v3693 = vsel %vm1763, %v3661, 0.0
        %v3694 = vsel %vm1764, %v3662, 0.0
        %v3695 = vsel %vm1765, %v3663, 0.0
        %v3696 = vsel %vm1766, %v3664, 0.0
        %v3697 = vsel %vm1767, %v3665, 0.0
        %v3698 = vsel %vm1768, %v3666, 0.0
        %v3699 = vsel %vm1769, %v3667, 0.0
        %v3700 = vsel %vm1770, %v3668, 0.0
        %v3701 = vsel %vm1771, %v3669, 0.0
        %v3702 = vsel %vm1772, %v3670, 0.0
        %v3703 = vsel %vm1773, %v3671, 0.0
        %v3704 = vsel %vm1774, %v3672, 0.0
        %v3705 = vsel %vm1775, %v3673, 0.0
        %v3706 = vsel %vm1776, %v3674, 0.0
        %v3707 = vsel %vm1777, %v3675, 0.0
        %v3708 = vsel %vm1778, %v3676, 0.0
        %v3709 = vsel %vm1779, %v3677, 0.0
        %v3710 = vsel %vm1780, %v3678, 0.0
        %v3711 = vsel %vm1781, %v3679, 0.0
        %v3712 = vsel %vm1782, %v3680, 0.0
        %v3713 = vsel %vm1783, %v3681, 0.0
        %v3714 = vsel %vm1784, %v3682, 0.0
        %v3715 = vsel %vm1785, %v3683, 0.0
        %v3716 = vsel %vm1786, %v3684, 0.0
        %v3717 = vsel %vm1787, %v3685, 0.0
        %v3718 = vsel %vm1788, %v3686, 0.0
        %v3719 = vsel %vm1789, %v3687, 0.0
        %v3720 = vsel %vm1790, %v3688, 0.0
        %v3721 = vsel %vm1791, %v3689, 0.0
        %v3722 = vsel %vm1792, %v3690, 0.0
        %v3723 = vsel %vm1793, %v3691, 0.0
        %v3724 = vsel %vm1794, %v3692, 0.0
        %v3725 = vpack.c.bf16 %v3694, %v3693
        %v3726 = vpack.c.bf16 %v3696, %v3695
        %v3727 = vpack.c.bf16 %v3698, %v3697
        %v3728 = vpack.c.bf16 %v3700, %v3699
        %v3729 = vpack.c.bf16 %v3702, %v3701
        %v3730 = vpack.c.bf16 %v3704, %v3703
        %v3731 = vpack.c.bf16 %v3706, %v3705
        %v3732 = vpack.c.bf16 %v3708, %v3707
        %v3733 = vpack.c.bf16 %v3710, %v3709
        %v3734 = vpack.c.bf16 %v3712, %v3711
        %v3735 = vpack.c.bf16 %v3714, %v3713
        %v3736 = vpack.c.bf16 %v3716, %v3715
        %v3737 = vpack.c.bf16 %v3718, %v3717
        %v3738 = vpack.c.bf16 %v3720, %v3719
        %v3739 = vpack.c.bf16 %v3722, %v3721
        %v3740 = vpack.c.bf16 %v3724, %v3723
        %s3741 = scalar_lea.vmem %s1, 64
        %v3742 = vld [vmem:[%s3741] sm:$0xff]
        %v3743 = vpack.c.bf16 %v3742, %v3742
        %v3745 = vsel %vm1006, %v3725, 0
        %v3748 = vsel %vm1006, %v3726, 0
        %v3751 = vsel %vm1006, %v3727, 0
        %v3754 = vsel %vm1006, %v3728, 0
        %v3757 = vsel %vm1006, %v3729, 0
        %v3760 = vsel %vm1006, %v3730, 0
        %v3763 = vsel %vm1006, %v3731, 0
        %v3766 = vsel %vm1006, %v3732, 0
        %v3769 = vsel %vm1006, %v3733, 0
        %v3772 = vsel %vm1006, %v3734, 0
        %v3775 = vsel %vm1006, %v3735, 0
        %v3778 = vsel %vm1006, %v3736, 0
        %v3781 = vsel %vm1006, %v3737, 0
        %v3784 = vsel %vm1006, %v3738, 0
        %v3787 = vsel %vm1006, %v3739, 0
        %v3790 = vsel %vm1006, %v3740, 0
        %v3793 = vsel %vm1322, %v3743, 0
        %3795 = vmatprep.subr.bf16.mxu0 0
        %3796 = vmatpush1.bf16.msra.mxu0 %v3793
        %3797 = vmatprep.subr.bf16.mxu0 0
        %3798 = vmatpush1.bf16.msra.mxu0 0
        %3799 = vmatprep.subr.bf16.mxu0 0
        %3800 = vmatpush1.bf16.msra.mxu0 0
        %3801 = vmatprep.subr.bf16.mxu0 0
        %3802 = vmatpush1.bf16.msra.mxu0 0
        %3803 = vmatprep.subr.bf16.mxu0 0
        %3804 = vmatpush1.bf16.msra.mxu0 0
        %3805 = vmatprep.subr.bf16.mxu0 0
        %3806 = vmatpush1.bf16.msra.mxu0 0
        %3807 = vmatprep.subr.bf16.mxu0 0
        %3808 = vmatpush1.bf16.msra.mxu0 0
        %3809 = vmatprep.subr.bf16.mxu0 0
        %3810 = vmatpush1.bf16.msra.mxu0 0
        %3811 = vmatprep.subr.bf16.mxu0 0
        %3812 = vmatpush1.bf16.msra.mxu0 0
        %3813 = vmatprep.subr.bf16.mxu0 0
        %3814 = vmatpush1.bf16.msra.mxu0 0
        %3815 = vmatprep.subr.bf16.mxu0 0
        %3816 = vmatpush1.bf16.msra.mxu0 0
        %3817 = vmatprep.subr.bf16.mxu0 0
        %3818 = vmatpush1.bf16.msra.mxu0 0
        %3819 = vmatprep.subr.bf16.mxu0 0
        %3820 = vmatpush1.bf16.msra.mxu0 0
        %3821 = vmatprep.subr.bf16.mxu0 0
        %3822 = vmatpush1.bf16.msra.mxu0 0
        %3823 = vmatprep.subr.bf16.mxu0 0
        %3824 = vmatpush1.bf16.msra.mxu0 0
        %3825 = vmatprep.subr.bf16.mxu0 0
        %3826 = vmatpush1.bf16.msra.mxu0 0
        %3827 = vmatprep.mubr.bf16.mxu0 0
        %3828 = vmatmul.mubr.bf16.gmra.mrb[0].mxu0 %v3745
        %v3829 = vpop.f32.mrb[0].mxu0
        %v3830 = vadd.f32 0.0, %v3829
        %v3831 = vpop.f32.mrb[0].mxu0
        %v3832 = vpop.f32.mrb[0].mxu0
        %v3833 = vadd.f32 0.0, %v3832
        %v3834 = vpop.f32.mrb[0].mxu0
        %3835 = vmatprep.mubr.bf16.mxu0 0
        %3836 = vmatmul.mubr.bf16.gmra.mrb[0].mxu0 %v3748
        %v3837 = vpop.f32.mrb[0].mxu0
        %v3838 = vadd.f32 0.0, %v3837
        %v3839 = vpop.f32.mrb[0].mxu0
        %v3840 = vpop.f32.mrb[0].mxu0
        %v3841 = vadd.f32 0.0, %v3840
        %v3842 = vpop.f32.mrb[0].mxu0
        %3843 = vmatprep.mubr.bf16.mxu0 0
        %3844 = vmatmul.mubr.bf16.gmra.mrb[0].mxu0 %v3751
        %v3845 = vpop.f32.mrb[0].mxu0
        %v3846 = vadd.f32 0.0, %v3845
        %v3847 = vpop.f32.mrb[0].mxu0
        %v3848 = vpop.f32.mrb[0].mxu0
        %v3849 = vadd.f32 0.0, %v3848
        %v3850 = vpop.f32.mrb[0].mxu0
        %3851 = vmatprep.mubr.bf16.mxu0 0
        %3852 = vmatmul.mubr.bf16.gmra.mrb[0].mxu0 %v3754
        %v3853 = vpop.f32.mrb[0].mxu0
        %v3854 = vadd.f32 0.0, %v3853
        %v3855 = vpop.f32.mrb[0].mxu0
        %v3856 = vpop.f32.mrb[0].mxu0
        %v3857 = vadd.f32 0.0, %v3856
        %v3858 = vpop.f32.mrb[0].mxu0
        %3859 = vmatprep.mubr.bf16.mxu0 0
        %3860 = vmatmul.mubr.bf16.gmra.mrb[0].mxu0 %v3757
        %v3861 = vpop.f32.mrb[0].mxu0
        %v3862 = vadd.f32 0.0, %v3861
        %v3863 = vpop.f32.mrb[0].mxu0
        %v3864 = vpop.f32.mrb[0].mxu0
        %v3865 = vadd.f32 0.0, %v3864
        %v3866 = vpop.f32.mrb[0].mxu0
        %3867 = vmatprep.mubr.bf16.mxu0 0
        %3868 = vmatmul.mubr.bf16.gmra.mrb[0].mxu0 %v3760
        %v3869 = vpop.f32.mrb[0].mxu0
        %v3870 = vadd.f32 0.0, %v3869
        %v3871 = vpop.f32.mrb[0].mxu0
        %v3872 = vpop.f32.mrb[0].mxu0
        %v3873 = vadd.f32 0.0, %v3872
        %v3874 = vpop.f32.mrb[0].mxu0
        %3875 = vmatprep.mubr.bf16.mxu0 0
        %3876 = vmatmul.mubr.bf16.gmra.mrb[0].mxu0 %v3763
        %v3877 = vpop.f32.mrb[0].mxu0
        %v3878 = vadd.f32 0.0, %v3877
        %v3879 = vpop.f32.mrb[0].mxu0
        %v3880 = vpop.f32.mrb[0].mxu0
        %v3881 = vadd.f32 0.0, %v3880
        %v3882 = vpop.f32.mrb[0].mxu0
        %3883 = vmatprep.mubr.bf16.mxu0 0
        %3884 = vmatmul.mubr.bf16.gmra.mrb[0].mxu0 %v3766
        %v3885 = vpop.f32.mrb[0].mxu0
        %v3886 = vadd.f32 0.0, %v3885
        %v3887 = vpop.f32.mrb[0].mxu0
        %v3888 = vpop.f32.mrb[0].mxu0
        %v3889 = vadd.f32 0.0, %v3888
        %v3890 = vpop.f32.mrb[0].mxu0
        %3891 = vmatprep.mubr.bf16.mxu0 0
        %3892 = vmatmul.mubr.bf16.gmra.mrb[0].mxu0 %v3769
        %v3893 = vpop.f32.mrb[0].mxu0
        %v3894 = vadd.f32 0.0, %v3893
        %v3895 = vpop.f32.mrb[0].mxu0
        %v3896 = vpop.f32.mrb[0].mxu0
        %v3897 = vadd.f32 0.0, %v3896
        %v3898 = vpop.f32.mrb[0].mxu0
        %3899 = vmatprep.mubr.bf16.mxu0 0
        %3900 = vmatmul.mubr.bf16.gmra.mrb[0].mxu0 %v3772
        %v3901 = vpop.f32.mrb[0].mxu0
        %v3902 = vadd.f32 0.0, %v3901
        %v3903 = vpop.f32.mrb[0].mxu0
        %v3904 = vpop.f32.mrb[0].mxu0
        %v3905 = vadd.f32 0.0, %v3904
        %v3906 = vpop.f32.mrb[0].mxu0
        %3907 = vmatprep.mubr.bf16.mxu0 0
        %3908 = vmatmul.mubr.bf16.gmra.mrb[0].mxu0 %v3775
        %v3909 = vpop.f32.mrb[0].mxu0
        %v3910 = vadd.f32 0.0, %v3909
        %v3911 = vpop.f32.mrb[0].mxu0
        %v3912 = vpop.f32.mrb[0].mxu0
        %v3913 = vadd.f32 0.0, %v3912
        %v3914 = vpop.f32.mrb[0].mxu0
        %3915 = vmatprep.mubr.bf16.mxu0 0
        %3916 = vmatmul.mubr.bf16.gmra.mrb[0].mxu0 %v3778
        %v3917 = vpop.f32.mrb[0].mxu0
        %v3918 = vadd.f32 0.0, %v3917
        %v3919 = vpop.f32.mrb[0].mxu0
        %v3920 = vpop.f32.mrb[0].mxu0
        %v3921 = vadd.f32 0.0, %v3920
        %v3922 = vpop.f32.mrb[0].mxu0
        %3923 = vmatprep.mubr.bf16.mxu0 0
        %3924 = vmatmul.mubr.bf16.gmra.mrb[0].mxu0 %v3781
        %v3925 = vpop.f32.mrb[0].mxu0
        %v3926 = vadd.f32 0.0, %v3925
        %v3927 = vpop.f32.mrb[0].mxu0
        %v3928 = vpop.f32.mrb[0].mxu0
        %v3929 = vadd.f32 0.0, %v3928
        %v3930 = vpop.f32.mrb[0].mxu0
        %3931 = vmatprep.mubr.bf16.mxu0 0
        %3932 = vmatmul.mubr.bf16.gmra.mrb[0].mxu0 %v3784
        %v3933 = vpop.f32.mrb[0].mxu0
        %v3934 = vadd.f32 0.0, %v3933
        %v3935 = vpop.f32.mrb[0].mxu0
        %v3936 = vpop.f32.mrb[0].mxu0
        %v3937 = vadd.f32 0.0, %v3936
        %v3938 = vpop.f32.mrb[0].mxu0
        %3939 = vmatprep.mubr.bf16.mxu0 0
        %3940 = vmatmul.mubr.bf16.gmra.mrb[0].mxu0 %v3787
        %v3941 = vpop.f32.mrb[0].mxu0
        %v3942 = vadd.f32 0.0, %v3941
        %v3943 = vpop.f32.mrb[0].mxu0
        %v3944 = vpop.f32.mrb[0].mxu0
        %v3945 = vadd.f32 0.0, %v3944
        %v3946 = vpop.f32.mrb[0].mxu0
        %3947 = vmatprep.mubr.bf16.mxu0 0
        %3948 = vmatmul.mubr.bf16.gmra.mrb[0].mxu0 %v3790
        %v3949 = vpop.f32.mrb[0].mxu0
        %v3950 = vadd.f32 0.0, %v3949
        %v3951 = vpop.f32.mrb[0].mxu0
        %v3952 = vpop.f32.mrb[0].mxu0
        %v3953 = vadd.f32 0.0, %v3952
        %v3954 = vpop.f32.mrb[0].mxu0
        %3955 = vdwg.mxu0
        %v3956 = vadd.f32 %v3629, %v3830
        %v3957 = vadd.f32 %v3630, %v3833
        %v3958 = vadd.f32 %v3631, %v3838
        %v3959 = vadd.f32 %v3632, %v3841
        %v3960 = vadd.f32 %v3633, %v3846
        %v3961 = vadd.f32 %v3634, %v3849
        %v3962 = vadd.f32 %v3635, %v3854
        %v3963 = vadd.f32 %v3636, %v3857
        %v3964 = vadd.f32 %v3637, %v3862
        %v3965 = vadd.f32 %v3638, %v3865
        %v3966 = vadd.f32 %v3639, %v3870
        %v3967 = vadd.f32 %v3640, %v3873
        %v3968 = vadd.f32 %v3641, %v3878
        %v3969 = vadd.f32 %v3642, %v3881
        %v3970 = vadd.f32 %v3643, %v3886
        %v3971 = vadd.f32 %v3644, %v3889
        %v3972 = vadd.f32 %v3645, %v3894
        %v3973 = vadd.f32 %v3646, %v3897
        %v3974 = vadd.f32 %v3647, %v3902
        %v3975 = vadd.f32 %v3648, %v3905
        %v3976 = vadd.f32 %v3649, %v3910
        %v3977 = vadd.f32 %v3650, %v3913
        %v3978 = vadd.f32 %v3651, %v3918
        %v3979 = vadd.f32 %v3652, %v3921
        %v3980 = vadd.f32 %v3653, %v3926
        %v3981 = vadd.f32 %v3654, %v3929
        %v3982 = vadd.f32 %v3655, %v3934
        %v3983 = vadd.f32 %v3656, %v3937
        %v3984 = vadd.f32 %v3657, %v3942
        %v3985 = vadd.f32 %v3658, %v3945
        %v3986 = vadd.f32 %v3659, %v3950
        %v3987 = vadd.f32 %v3660, %v3953
        %v3988 = vld [vmem:[%s2] sm:$0x1]
        %v3990 = vlaneseq
        %v3991 = vshrl.u32 %v3990, 7
        %v3992 = vsub.s32 0, %v3991
        %v3993 = vrot.slane %v3988, %v3992
        %v3995 = vmul.f32 %v3956, %v3993
        %v3996 = vmul.f32 %v3957, %v3993
        %v3997 = vmul.f32 %v3958, %v3993
        %v3998 = vmul.f32 %v3959, %v3993
        %v3999 = vmul.f32 %v3960, %v3993
        %v4000 = vmul.f32 %v3961, %v3993
        %v4001 = vmul.f32 %v3962, %v3993
        %v4002 = vmul.f32 %v3963, %v3993
        %v4003 = vmul.f32 %v3964, %v3993
        %v4004 = vmul.f32 %v3965, %v3993
        %v4005 = vmul.f32 %v3966, %v3993
        %v4006 = vmul.f32 %v3967, %v3993
        %v4007 = vmul.f32 %v3968, %v3993
        %v4008 = vmul.f32 %v3969, %v3993
        %v4009 = vmul.f32 %v3970, %v3993
        %v4010 = vmul.f32 %v3971, %v3993
        %v4011 = vmul.f32 %v3972, %v3993
        %v4012 = vmul.f32 %v3973, %v3993
        %v4013 = vmul.f32 %v3974, %v3993
        %v4014 = vmul.f32 %v3975, %v3993
        %v4015 = vmul.f32 %v3976, %v3993
        %v4016 = vmul.f32 %v3977, %v3993
        %v4017 = vmul.f32 %v3978, %v3993
        %v4018 = vmul.f32 %v3979, %v3993
        %v4019 = vmul.f32 %v3980, %v3993
        %v4020 = vmul.f32 %v3981, %v3993
        %v4021 = vmul.f32 %v3982, %v3993
        %v4022 = vmul.f32 %v3983, %v3993
        %v4023 = vmul.f32 %v3984, %v3993
        %v4024 = vmul.f32 %v3985, %v3993
        %v4025 = vmul.f32 %v3986, %v3993
        %v4026 = vmul.f32 %v3987, %v3993
        %v4027 = vld [vmem:[%s3] sm:$0x1]
        %v4029 = vlaneseq
        %v4030 = vshrl.u32 %v4029, 7
        %v4031 = vsub.s32 0, %v4030
        %v4032 = vrot.slane %v4027, %v4031
        %v4034 = vadd.f32 %v3995, %v4032
        %v4035 = vadd.f32 %v3996, %v4032
        %v4036 = vadd.f32 %v3997, %v4032
        %v4037 = vadd.f32 %v3998, %v4032
        %v4038 = vadd.f32 %v3999, %v4032
        %v4039 = vadd.f32 %v4000, %v4032
        %v4040 = vadd.f32 %v4001, %v4032
        %v4041 = vadd.f32 %v4002, %v4032
        %v4042 = vadd.f32 %v4003, %v4032
        %v4043 = vadd.f32 %v4004, %v4032
        %v4044 = vadd.f32 %v4005, %v4032
        %v4045 = vadd.f32 %v4006, %v4032
        %v4046 = vadd.f32 %v4007, %v4032
        %v4047 = vadd.f32 %v4008, %v4032
        %v4048 = vadd.f32 %v4009, %v4032
        %v4049 = vadd.f32 %v4010, %v4032
        %v4050 = vadd.f32 %v4011, %v4032
        %v4051 = vadd.f32 %v4012, %v4032
        %v4052 = vadd.f32 %v4013, %v4032
        %v4053 = vadd.f32 %v4014, %v4032
        %v4054 = vadd.f32 %v4015, %v4032
        %v4055 = vadd.f32 %v4016, %v4032
        %v4056 = vadd.f32 %v4017, %v4032
        %v4057 = vadd.f32 %v4018, %v4032
        %v4058 = vadd.f32 %v4019, %v4032
        %v4059 = vadd.f32 %v4020, %v4032
        %v4060 = vadd.f32 %v4021, %v4032
        %v4061 = vadd.f32 %v4022, %v4032
        %v4062 = vadd.f32 %v4023, %v4032
        %v4063 = vadd.f32 %v4024, %v4032
        %v4064 = vadd.f32 %v4025, %v4032
        %v4065 = vadd.f32 %v4026, %v4032
        %v4066 = vmax.f32 %v4034, 0.0
        %v4067 = vmax.f32 %v4035, 0.0
        %v4068 = vmax.f32 %v4036, 0.0
        %v4069 = vmax.f32 %v4037, 0.0
        %v4070 = vmax.f32 %v4038, 0.0
        %v4071 = vmax.f32 %v4039, 0.0
        %v4072 = vmax.f32 %v4040, 0.0
        %v4073 = vmax.f32 %v4041, 0.0
        %v4074 = vmax.f32 %v4042, 0.0
        %v4075 = vmax.f32 %v4043, 0.0
        %v4076 = vmax.f32 %v4044, 0.0
        %v4077 = vmax.f32 %v4045, 0.0
        %v4078 = vmax.f32 %v4046, 0.0
        %v4079 = vmax.f32 %v4047, 0.0
        %v4080 = vmax.f32 %v4048, 0.0
        %v4081 = vmax.f32 %v4049, 0.0
        %v4082 = vmax.f32 %v4050, 0.0
        %v4083 = vmax.f32 %v4051, 0.0
        %v4084 = vmax.f32 %v4052, 0.0
        %v4085 = vmax.f32 %v4053, 0.0
        %v4086 = vmax.f32 %v4054, 0.0
        %v4087 = vmax.f32 %v4055, 0.0
        %v4088 = vmax.f32 %v4056, 0.0
        %v4089 = vmax.f32 %v4057, 0.0
        %v4090 = vmax.f32 %v4058, 0.0
        %v4091 = vmax.f32 %v4059, 0.0
        %v4092 = vmax.f32 %v4060, 0.0
        %v4093 = vmax.f32 %v4061, 0.0
        %v4094 = vmax.f32 %v4062, 0.0
        %v4095 = vmax.f32 %v4063, 0.0
        %v4096 = vmax.f32 %v4064, 0.0
        %v4097 = vmax.f32 %v4065, 0.0
        %v4098 = vpack.c.bf16 %v4067, %v4066
        %v4099 = vpack.c.bf16 %v4069, %v4068
        %v4100 = vpack.c.bf16 %v4071, %v4070
        %v4101 = vpack.c.bf16 %v4073, %v4072
        %v4102 = vpack.c.bf16 %v4075, %v4074
        %v4103 = vpack.c.bf16 %v4077, %v4076
        %v4104 = vpack.c.bf16 %v4079, %v4078
        %v4105 = vpack.c.bf16 %v4081, %v4080
        %v4106 = vpack.c.bf16 %v4083, %v4082
        %v4107 = vpack.c.bf16 %v4085, %v4084
        %v4108 = vpack.c.bf16 %v4087, %v4086
        %v4109 = vpack.c.bf16 %v4089, %v4088
        %v4110 = vpack.c.bf16 %v4091, %v4090
        %v4111 = vpack.c.bf16 %v4093, %v4092
        %v4112 = vpack.c.bf16 %v4095, %v4094
        %v4113 = vpack.c.bf16 %v4097, %v4096
        %v4114 = vld [vmem:[%s4] sm:$0xff]
        %v4115 = vld [vmem:[%s4 + $0x8] sm:$0xff]
        %v4116 = vld [vmem:[%s4 + $0x10] sm:$0xff]
        %v4117 = vld [vmem:[%s4 + $0x18] sm:$0xff]
        %v4118 = vpack.c.bf16 %v4115, %v4114
        %v4119 = vpack.c.bf16 %v4117, %v4116
        %vm4120 = vcmask 261120
        %v4122 = vsel %vm4120, %v4098, 0
        %v4125 = vsel %vm4120, %v4099, 0
        %v4128 = vsel %vm4120, %v4100, 0
        %v4131 = vsel %vm4120, %v4101, 0
        %v4134 = vsel %vm4120, %v4102, 0
        %v4137 = vsel %vm4120, %v4103, 0
        %v4140 = vsel %vm4120, %v4104, 0
        %v4143 = vsel %vm4120, %v4105, 0
        %v4146 = vsel %vm4120, %v4106, 0
        %v4149 = vsel %vm4120, %v4107, 0
        %v4152 = vsel %vm4120, %v4108, 0
        %v4155 = vsel %vm4120, %v4109, 0
        %v4158 = vsel %vm4120, %v4110, 0
        %v4161 = vsel %vm4120, %v4111, 0
        %v4164 = vsel %vm4120, %v4112, 0
        %v4167 = vsel %vm4120, %v4113, 0
        %4169 = vmatprep.subr.bf16.mxu0 0
        %4170 = vmatpush1.bf16.msra.mxu0 %v4118
        %4171 = vmatprep.subr.bf16.mxu0 0
        %4172 = vmatpush1.bf16.msra.mxu0 %v4119
        %4173 = vmatprep.subr.bf16.mxu0 0
        %4174 = vmatpush1.bf16.msra.mxu0 0
        %4175 = vmatprep.subr.bf16.mxu0 0
        %4176 = vmatpush1.bf16.msra.mxu0 0
        %4177 = vmatprep.subr.bf16.mxu0 0
        %4178 = vmatpush1.bf16.msra.mxu0 0
        %4179 = vmatprep.subr.bf16.mxu0 0
        %4180 = vmatpush1.bf16.msra.mxu0 0
        %4181 = vmatprep.subr.bf16.mxu0 0
        %4182 = vmatpush1.bf16.msra.mxu0 0
        %4183 = vmatprep.subr.bf16.mxu0 0
        %4184 = vmatpush1.bf16.msra.mxu0 0
        %4185 = vmatprep.subr.bf16.mxu0 0
        %4186 = vmatpush1.bf16.msra.mxu0 0
        %4187 = vmatprep.subr.bf16.mxu0 0
        %4188 = vmatpush1.bf16.msra.mxu0 0
        %4189 = vmatprep.subr.bf16.mxu0 0
        %4190 = vmatpush1.bf16.msra.mxu0 0
        %4191 = vmatprep.subr.bf16.mxu0 0
        %4192 = vmatpush1.bf16.msra.mxu0 0
        %4193 = vmatprep.subr.bf16.mxu0 0
        %4194 = vmatpush1.bf16.msra.mxu0 0
        %4195 = vmatprep.subr.bf16.mxu0 0
        %4196 = vmatpush1.bf16.msra.mxu0 0
        %4197 = vmatprep.subr.bf16.mxu0 0
        %4198 = vmatpush1.bf16.msra.mxu0 0
        %4199 = vmatprep.subr.bf16.mxu0 0
        %4200 = vmatpush1.bf16.msra.mxu0 0
        %4201 = vmatprep.mubr.bf16.mxu0 0
        %4202 = vmatmul.mubr.bf16.gmra.mrb[0].mxu0 %v4122
        %v4203 = vpop.f32.mrb[0].mxu0
        %v4204 = vadd.f32 0.0, %v4203
        %v4205 = vpop.f32.mrb[0].mxu0
        %v4206 = vpop.f32.mrb[0].mxu0
        %v4207 = vadd.f32 0.0, %v4206
        %v4208 = vpop.f32.mrb[0].mxu0
        %4209 = vmatprep.mubr.bf16.mxu0 0
        %4210 = vmatmul.mubr.bf16.gmra.mrb[0].mxu0 %v4125
        %v4211 = vpop.f32.mrb[0].mxu0
        %v4212 = vadd.f32 0.0, %v4211
        %v4213 = vpop.f32.mrb[0].mxu0
        %v4214 = vpop.f32.mrb[0].mxu0
        %v4215 = vadd.f32 0.0, %v4214
        %v4216 = vpop.f32.mrb[0].mxu0
        %4217 = vmatprep.mubr.bf16.mxu0 0
        %4218 = vmatmul.mubr.bf16.gmra.mrb[0].mxu0 %v4128
        %v4219 = vpop.f32.mrb[0].mxu0
        %v4220 = vadd.f32 0.0, %v4219
        %v4221 = vpop.f32.mrb[0].mxu0
        %v4222 = vpop.f32.mrb[0].mxu0
        %v4223 = vadd.f32 0.0, %v4222
        %v4224 = vpop.f32.mrb[0].mxu0
        %4225 = vmatprep.mubr.bf16.mxu0 0
        %4226 = vmatmul.mubr.bf16.gmra.mrb[0].mxu0 %v4131
        %v4227 = vpop.f32.mrb[0].mxu0
        %v4228 = vadd.f32 0.0, %v4227
        %v4229 = vpop.f32.mrb[0].mxu0
        %v4230 = vpop.f32.mrb[0].mxu0
        %v4231 = vadd.f32 0.0, %v4230
        %v4232 = vpop.f32.mrb[0].mxu0
        %4233 = vmatprep.mubr.bf16.mxu0 0
        %4234 = vmatmul.mubr.bf16.gmra.mrb[0].mxu0 %v4134
        %v4235 = vpop.f32.mrb[0].mxu0
        %v4236 = vadd.f32 0.0, %v4235
        %v4237 = vpop.f32.mrb[0].mxu0
        %v4238 = vpop.f32.mrb[0].mxu0
        %v4239 = vadd.f32 0.0, %v4238
        %v4240 = vpop.f32.mrb[0].mxu0
        %4241 = vmatprep.mubr.bf16.mxu0 0
        %4242 = vmatmul.mubr.bf16.gmra.mrb[0].mxu0 %v4137
        %v4243 = vpop.f32.mrb[0].mxu0
        %v4244 = vadd.f32 0.0, %v4243
        %v4245 = vpop.f32.mrb[0].mxu0
        %v4246 = vpop.f32.mrb[0].mxu0
        %v4247 = vadd.f32 0.0, %v4246
        %v4248 = vpop.f32.mrb[0].mxu0
        %4249 = vmatprep.mubr.bf16.mxu0 0
        %4250 = vmatmul.mubr.bf16.gmra.mrb[0].mxu0 %v4140
        %v4251 = vpop.f32.mrb[0].mxu0
        %v4252 = vadd.f32 0.0, %v4251
        %v4253 = vpop.f32.mrb[0].mxu0
        %v4254 = vpop.f32.mrb[0].mxu0
        %v4255 = vadd.f32 0.0, %v4254
        %v4256 = vpop.f32.mrb[0].mxu0
        %4257 = vmatprep.mubr.bf16.mxu0 0
        %4258 = vmatmul.mubr.bf16.gmra.mrb[0].mxu0 %v4143
        %v4259 = vpop.f32.mrb[0].mxu0
        %v4260 = vadd.f32 0.0, %v4259
        %v4261 = vpop.f32.mrb[0].mxu0
        %v4262 = vpop.f32.mrb[0].mxu0
        %v4263 = vadd.f32 0.0, %v4262
        %v4264 = vpop.f32.mrb[0].mxu0
        %4265 = vmatprep.mubr.bf16.mxu0 0
        %4266 = vmatmul.mubr.bf16.gmra.mrb[0].mxu0 %v4146
        %v4267 = vpop.f32.mrb[0].mxu0
        %v4268 = vadd.f32 0.0, %v4267
        %v4269 = vpop.f32.mrb[0].mxu0
        %v4270 = vpop.f32.mrb[0].mxu0
        %v4271 = vadd.f32 0.0, %v4270
        %v4272 = vpop.f32.mrb[0].mxu0
        %4273 = vmatprep.mubr.bf16.mxu0 0
        %4274 = vmatmul.mubr.bf16.gmra.mrb[0].mxu0 %v4149
        %v4275 = vpop.f32.mrb[0].mxu0
        %v4276 = vadd.f32 0.0, %v4275
        %v4277 = vpop.f32.mrb[0].mxu0
        %v4278 = vpop.f32.mrb[0].mxu0
        %v4279 = vadd.f32 0.0, %v4278
        %v4280 = vpop.f32.mrb[0].mxu0
        %4281 = vmatprep.mubr.bf16.mxu0 0
        %4282 = vmatmul.mubr.bf16.gmra.mrb[0].mxu0 %v4152
        %v4283 = vpop.f32.mrb[0].mxu0
        %v4284 = vadd.f32 0.0, %v4283
        %v4285 = vpop.f32.mrb[0].mxu0
        %v4286 = vpop.f32.mrb[0].mxu0
        %v4287 = vadd.f32 0.0, %v4286
        %v4288 = vpop.f32.mrb[0].mxu0
        %4289 = vmatprep.mubr.bf16.mxu0 0
        %4290 = vmatmul.mubr.bf16.gmra.mrb[0].mxu0 %v4155
        %v4291 = vpop.f32.mrb[0].mxu0
        %v4292 = vadd.f32 0.0, %v4291
        %v4293 = vpop.f32.mrb[0].mxu0
        %v4294 = vpop.f32.mrb[0].mxu0
        %v4295 = vadd.f32 0.0, %v4294
        %v4296 = vpop.f32.mrb[0].mxu0
        %4297 = vmatprep.mubr.bf16.mxu0 0
        %4298 = vmatmul.mubr.bf16.gmra.mrb[0].mxu0 %v4158
        %v4299 = vpop.f32.mrb[0].mxu0
        %v4300 = vadd.f32 0.0, %v4299
        %v4301 = vpop.f32.mrb[0].mxu0
        %v4302 = vpop.f32.mrb[0].mxu0
        %v4303 = vadd.f32 0.0, %v4302
        %v4304 = vpop.f32.mrb[0].mxu0
        %4305 = vmatprep.mubr.bf16.mxu0 0
        %4306 = vmatmul.mubr.bf16.gmra.mrb[0].mxu0 %v4161
        %v4307 = vpop.f32.mrb[0].mxu0
        %v4308 = vadd.f32 0.0, %v4307
        %v4309 = vpop.f32.mrb[0].mxu0
        %v4310 = vpop.f32.mrb[0].mxu0
        %v4311 = vadd.f32 0.0, %v4310
        %v4312 = vpop.f32.mrb[0].mxu0
        %4313 = vmatprep.mubr.bf16.mxu0 0
        %4314 = vmatmul.mubr.bf16.gmra.mrb[0].mxu0 %v4164
        %v4315 = vpop.f32.mrb[0].mxu0
        %v4316 = vadd.f32 0.0, %v4315
        %v4317 = vpop.f32.mrb[0].mxu0
        %v4318 = vpop.f32.mrb[0].mxu0
        %v4319 = vadd.f32 0.0, %v4318
        %v4320 = vpop.f32.mrb[0].mxu0
        %4321 = vmatprep.mubr.bf16.mxu0 0
        %4322 = vmatmul.mubr.bf16.gmra.mrb[0].mxu0 %v4167
        %v4323 = vpop.f32.mrb[0].mxu0
        %v4324 = vadd.f32 0.0, %v4323
        %v4325 = vpop.f32.mrb[0].mxu0
        %v4326 = vpop.f32.mrb[0].mxu0
        %v4327 = vadd.f32 0.0, %v4326
        %v4328 = vpop.f32.mrb[0].mxu0
        %4329 = vdwg.mxu0
        %v4330 = vld [vmem:[%s5] sm:$0x1]
        %v4332 = vlaneseq
        %v4333 = vshrl.u32 %v4332, 7
        %v4334 = vsub.s32 0, %v4333
        %v4335 = vrot.slane %v4330, %v4334
        %v4337 = vmul.f32 %v4204, %v4335
        %v4338 = vmul.f32 %v4207, %v4335
        %v4339 = vmul.f32 %v4212, %v4335
        %v4340 = vmul.f32 %v4215, %v4335
        %v4341 = vmul.f32 %v4220, %v4335
        %v4342 = vmul.f32 %v4223, %v4335
        %v4343 = vmul.f32 %v4228, %v4335
        %v4344 = vmul.f32 %v4231, %v4335
        %v4345 = vmul.f32 %v4236, %v4335
        %v4346 = vmul.f32 %v4239, %v4335
        %v4347 = vmul.f32 %v4244, %v4335
        %v4348 = vmul.f32 %v4247, %v4335
        %v4349 = vmul.f32 %v4252, %v4335
        %v4350 = vmul.f32 %v4255, %v4335
        %v4351 = vmul.f32 %v4260, %v4335
        %v4352 = vmul.f32 %v4263, %v4335
        %v4353 = vmul.f32 %v4268, %v4335
        %v4354 = vmul.f32 %v4271, %v4335
        %v4355 = vmul.f32 %v4276, %v4335
        %v4356 = vmul.f32 %v4279, %v4335
        %v4357 = vmul.f32 %v4284, %v4335
        %v4358 = vmul.f32 %v4287, %v4335
        %v4359 = vmul.f32 %v4292, %v4335
        %v4360 = vmul.f32 %v4295, %v4335
        %v4361 = vmul.f32 %v4300, %v4335
        %v4362 = vmul.f32 %v4303, %v4335
        %v4363 = vmul.f32 %v4308, %v4335
        %v4364 = vmul.f32 %v4311, %v4335
        %v4365 = vmul.f32 %v4316, %v4335
        %v4366 = vmul.f32 %v4319, %v4335
        %v4367 = vmul.f32 %v4324, %v4335
        %v4368 = vmul.f32 %v4327, %v4335
        %v4369 = vld [vmem:[%s6] sm:$0x1]
        %v4371 = vlaneseq
        %v4372 = vshrl.u32 %v4371, 7
        %v4373 = vsub.s32 0, %v4372
        %v4374 = vrot.slane %v4369, %v4373
        %v4376 = vadd.f32 %v4337, %v4374
        %v4377 = vadd.f32 %v4338, %v4374
        %v4378 = vadd.f32 %v4339, %v4374
        %v4379 = vadd.f32 %v4340, %v4374
        %v4380 = vadd.f32 %v4341, %v4374
        %v4381 = vadd.f32 %v4342, %v4374
        %v4382 = vadd.f32 %v4343, %v4374
        %v4383 = vadd.f32 %v4344, %v4374
        %v4384 = vadd.f32 %v4345, %v4374
        %v4385 = vadd.f32 %v4346, %v4374
        %v4386 = vadd.f32 %v4347, %v4374
        %v4387 = vadd.f32 %v4348, %v4374
        %v4388 = vadd.f32 %v4349, %v4374
        %v4389 = vadd.f32 %v4350, %v4374
        %v4390 = vadd.f32 %v4351, %v4374
        %v4391 = vadd.f32 %v4352, %v4374
        %v4392 = vadd.f32 %v4353, %v4374
        %v4393 = vadd.f32 %v4354, %v4374
        %v4394 = vadd.f32 %v4355, %v4374
        %v4395 = vadd.f32 %v4356, %v4374
        %v4396 = vadd.f32 %v4357, %v4374
        %v4397 = vadd.f32 %v4358, %v4374
        %v4398 = vadd.f32 %v4359, %v4374
        %v4399 = vadd.f32 %v4360, %v4374
        %v4400 = vadd.f32 %v4361, %v4374
        %v4401 = vadd.f32 %v4362, %v4374
        %v4402 = vadd.f32 %v4363, %v4374
        %v4403 = vadd.f32 %v4364, %v4374
        %v4404 = vadd.f32 %v4365, %v4374
        %v4405 = vadd.f32 %v4366, %v4374
        %v4406 = vadd.f32 %v4367, %v4374
        %v4407 = vadd.f32 %v4368, %v4374
        %v4408 = vmax.f32 %v4376, 0.0
        %v4409 = vmax.f32 %v4377, 0.0
        %v4410 = vmax.f32 %v4378, 0.0
        %v4411 = vmax.f32 %v4379, 0.0
        %v4412 = vmax.f32 %v4380, 0.0
        %v4413 = vmax.f32 %v4381, 0.0
        %v4414 = vmax.f32 %v4382, 0.0
        %v4415 = vmax.f32 %v4383, 0.0
        %v4416 = vmax.f32 %v4384, 0.0
        %v4417 = vmax.f32 %v4385, 0.0
        %v4418 = vmax.f32 %v4386, 0.0
        %v4419 = vmax.f32 %v4387, 0.0
        %v4420 = vmax.f32 %v4388, 0.0
        %v4421 = vmax.f32 %v4389, 0.0
        %v4422 = vmax.f32 %v4390, 0.0
        %v4423 = vmax.f32 %v4391, 0.0
        %v4424 = vmax.f32 %v4392, 0.0
        %v4425 = vmax.f32 %v4393, 0.0
        %v4426 = vmax.f32 %v4394, 0.0
        %v4427 = vmax.f32 %v4395, 0.0
        %v4428 = vmax.f32 %v4396, 0.0
        %v4429 = vmax.f32 %v4397, 0.0
        %v4430 = vmax.f32 %v4398, 0.0
        %v4431 = vmax.f32 %v4399, 0.0
        %v4432 = vmax.f32 %v4400, 0.0
        %v4433 = vmax.f32 %v4401, 0.0
        %v4434 = vmax.f32 %v4402, 0.0
        %v4435 = vmax.f32 %v4403, 0.0
        %v4436 = vmax.f32 %v4404, 0.0
        %v4437 = vmax.f32 %v4405, 0.0
        %v4438 = vmax.f32 %v4406, 0.0
        %v4439 = vmax.f32 %v4407, 0.0
        %vm4440 = vcmask 130048
        %4441 = vst.msk [vmem:[#allocation3] sm:$0xff] %vm4440, 0.0
        %4442 = vst.msk [vmem:[#allocation3 + $0x8] sm:$0xff] %vm4440, 0.0
        %4443 = vst.msk [vmem:[#allocation3 + $0x10] sm:$0xff] %vm4440, 0.0
        %4444 = vst.msk [vmem:[#allocation3 + $0x18] sm:$0xff] %vm4440, 0.0
        %4445 = vst.msk [vmem:[#allocation3 + $0x20] sm:$0xff] %vm4440, 0.0
        %4446 = vst.msk [vmem:[#allocation3 + $0x28] sm:$0xff] %vm4440, 0.0
        %4447 = vst.msk [vmem:[#allocation3 + $0x30] sm:$0xff] %vm4440, 0.0
        %4448 = vst.msk [vmem:[#allocation3 + $0x38] sm:$0xff] %vm4440, 0.0
        %4449 = vst.msk [vmem:[#allocation3 + $0x40] sm:$0xff] %vm4440, 0.0
        %4450 = vst.msk [vmem:[#allocation3 + $0x48] sm:$0xff] %vm4440, 0.0
        %4451 = vst.msk [vmem:[#allocation3 + $0x50] sm:$0xff] %vm4440, 0.0
        %4452 = vst.msk [vmem:[#allocation3 + $0x58] sm:$0xff] %vm4440, 0.0
        %4453 = vst.msk [vmem:[#allocation3 + $0x60] sm:$0xff] %vm4440, 0.0
        %4454 = vst.msk [vmem:[#allocation3 + $0x68] sm:$0xff] %vm4440, 0.0
        %4455 = vst.msk [vmem:[#allocation3 + $0x70] sm:$0xff] %vm4440, 0.0
        %4456 = vst.msk [vmem:[#allocation3 + $0x78] sm:$0xff] %vm4440, 0.0
        %4457 = vst.msk [vmem:[#allocation3 + $0x80] sm:$0xff] %vm4440, 0.0
        %4458 = vst.msk [vmem:[#allocation3 + $0x88] sm:$0xff] %vm4440, 0.0
        %4459 = vst.msk [vmem:[#allocation3 + $0x90] sm:$0xff] %vm4440, 0.0
        %4460 = vst.msk [vmem:[#allocation3 + $0x98] sm:$0xff] %vm4440, 0.0
        %4461 = vst.msk [vmem:[#allocation3 + $0xa0] sm:$0xff] %vm4440, 0.0
        %4462 = vst.msk [vmem:[#allocation3 + $0xa8] sm:$0xff] %vm4440, 0.0
        %4463 = vst.msk [vmem:[#allocation3 + $0xb0] sm:$0xff] %vm4440, 0.0
        %4464 = vst.msk [vmem:[#allocation3 + $0xb8] sm:$0xff] %vm4440, 0.0
        %4465 = vst.msk [vmem:[#allocation3 + $0xc0] sm:$0xff] %vm4440, 0.0
        %4466 = vst.msk [vmem:[#allocation3 + $0xc8] sm:$0xff] %vm4440, 0.0
        %4467 = vst.msk [vmem:[#allocation3 + $0xd0] sm:$0xff] %vm4440, 0.0
        %4468 = vst.msk [vmem:[#allocation3 + $0xd8] sm:$0xff] %vm4440, 0.0
        %4469 = vst.msk [vmem:[#allocation3 + $0xe0] sm:$0xff] %vm4440, 0.0
        %4470 = vst.msk [vmem:[#allocation3 + $0xe8] sm:$0xff] %vm4440, 0.0
        %4471 = vst.msk [vmem:[#allocation3 + $0xf0] sm:$0xff] %vm4440, 0.0
        %4472 = vst.msk [vmem:[#allocation3 + $0xf8] sm:$0xff] %vm4440, 0.0
        %4473 = vst.msk [vmem:[#allocation3 + $0x100] sm:$0xff] %vm4440, 0.0
        %4474 = vst.msk [vmem:[#allocation3 + $0x108] sm:$0xff] %vm4440, 0.0
        %4475 = vst.msk [vmem:[#allocation3 + $0x110] sm:$0xff] %vm4440, 0.0
        %4476 = vst.msk [vmem:[#allocation3 + $0x118] sm:$0xff] %vm4440, 0.0
        %4477 = vst.msk [vmem:[#allocation3 + $0x120] sm:$0xff] %vm4440, 0.0
        %4478 = vst.msk [vmem:[#allocation3 + $0x128] sm:$0xff] %vm4440, 0.0
        %4479 = vst.msk [vmem:[#allocation3 + $0x18] sm:$0xff] %vm4440, %v4408
        %4480 = vst.msk [vmem:[#allocation3 + $0x20] sm:$0xff] %vm4440, %v4409
        %4481 = vst.msk [vmem:[#allocation3 + $0x28] sm:$0xff] %vm4440, %v4410
        %4482 = vst.msk [vmem:[#allocation3 + $0x30] sm:$0xff] %vm4440, %v4411
        %4483 = vst.msk [vmem:[#allocation3 + $0x38] sm:$0xff] %vm4440, %v4412
        %4484 = vst.msk [vmem:[#allocation3 + $0x40] sm:$0xff] %vm4440, %v4413
        %4485 = vst.msk [vmem:[#allocation3 + $0x48] sm:$0xff] %vm4440, %v4414
        %4486 = vst.msk [vmem:[#allocation3 + $0x50] sm:$0xff] %vm4440, %v4415
        %4487 = vst.msk [vmem:[#allocation3 + $0x58] sm:$0xff] %vm4440, %v4416
        %4488 = vst.msk [vmem:[#allocation3 + $0x60] sm:$0xff] %vm4440, %v4417
        %4489 = vst.msk [vmem:[#allocation3 + $0x68] sm:$0xff] %vm4440, %v4418
        %4490 = vst.msk [vmem:[#allocation3 + $0x70] sm:$0xff] %vm4440, %v4419
        %4491 = vst.msk [vmem:[#allocation3 + $0x78] sm:$0xff] %vm4440, %v4420
        %4492 = vst.msk [vmem:[#allocation3 + $0x80] sm:$0xff] %vm4440, %v4421
        %4493 = vst.msk [vmem:[#allocation3 + $0x88] sm:$0xff] %vm4440, %v4422
        %4494 = vst.msk [vmem:[#allocation3 + $0x90] sm:$0xff] %vm4440, %v4423
        %4495 = vst.msk [vmem:[#allocation3 + $0x98] sm:$0xff] %vm4440, %v4424
        %4496 = vst.msk [vmem:[#allocation3 + $0xa0] sm:$0xff] %vm4440, %v4425
        %4497 = vst.msk [vmem:[#allocation3 + $0xa8] sm:$0xff] %vm4440, %v4426
        %4498 = vst.msk [vmem:[#allocation3 + $0xb0] sm:$0xff] %vm4440, %v4427
        %4499 = vst.msk [vmem:[#allocation3 + $0xb8] sm:$0xff] %vm4440, %v4428
        %4500 = vst.msk [vmem:[#allocation3 + $0xc0] sm:$0xff] %vm4440, %v4429
        %4501 = vst.msk [vmem:[#allocation3 + $0xc8] sm:$0xff] %vm4440, %v4430
        %4502 = vst.msk [vmem:[#allocation3 + $0xd0] sm:$0xff] %vm4440, %v4431
        %4503 = vst.msk [vmem:[#allocation3 + $0xd8] sm:$0xff] %vm4440, %v4432
        %4504 = vst.msk [vmem:[#allocation3 + $0xe0] sm:$0xff] %vm4440, %v4433
        %4505 = vst.msk [vmem:[#allocation3 + $0xe8] sm:$0xff] %vm4440, %v4434
        %4506 = vst.msk [vmem:[#allocation3 + $0xf0] sm:$0xff] %vm4440, %v4435
        %4507 = vst.msk [vmem:[#allocation3 + $0xf8] sm:$0xff] %vm4440, %v4436
        %4508 = vst.msk [vmem:[#allocation3 + $0x100] sm:$0xff] %vm4440, %v4437
        %4509 = vst.msk [vmem:[#allocation3 + $0x108] sm:$0xff] %vm4440, %v4438
        %4510 = vst.msk [vmem:[#allocation3 + $0x110] sm:$0xff] %vm4440, %v4439
        %v4511 = vld [vmem:[#allocation3 + $0x7] sm:$0xff]
        %v4512 = vld [vmem:[#allocation3 + $0xf] sm:$0xff]
        %v4513 = vld [vmem:[#allocation3 + $0x17] sm:$0xff]
        %v4514 = vld [vmem:[#allocation3 + $0x1f] sm:$0xff]
        %v4515 = vld [vmem:[#allocation3 + $0x27] sm:$0xff]
        %v4516 = vld [vmem:[#allocation3 + $0x2f] sm:$0xff]
        %v4517 = vld [vmem:[#allocation3 + $0x37] sm:$0xff]
        %v4518 = vld [vmem:[#allocation3 + $0x3f] sm:$0xff]
        %v4519 = vld [vmem:[#allocation3 + $0x47] sm:$0xff]
        %v4520 = vld [vmem:[#allocation3 + $0x4f] sm:$0xff]
        %v4521 = vld [vmem:[#allocation3 + $0x57] sm:$0xff]
        %v4522 = vld [vmem:[#allocation3 + $0x5f] sm:$0xff]
        %v4523 = vld [vmem:[#allocation3 + $0x67] sm:$0xff]
        %v4524 = vld [vmem:[#allocation3 + $0x6f] sm:$0xff]
        %v4525 = vld [vmem:[#allocation3 + $0x77] sm:$0xff]
        %v4526 = vld [vmem:[#allocation3 + $0x7f] sm:$0xff]
        %v4527 = vld [vmem:[#allocation3 + $0x87] sm:$0xff]
        %v4528 = vld [vmem:[#allocation3 + $0x8f] sm:$0xff]
        %v4529 = vld [vmem:[#allocation3 + $0x97] sm:$0xff]
        %v4530 = vld [vmem:[#allocation3 + $0x9f] sm:$0xff]
        %v4531 = vld [vmem:[#allocation3 + $0xa7] sm:$0xff]
        %v4532 = vld [vmem:[#allocation3 + $0xaf] sm:$0xff]
        %v4533 = vld [vmem:[#allocation3 + $0xb7] sm:$0xff]
        %v4534 = vld [vmem:[#allocation3 + $0xbf] sm:$0xff]
        %v4535 = vld [vmem:[#allocation3 + $0xc7] sm:$0xff]
        %v4536 = vld [vmem:[#allocation3 + $0xcf] sm:$0xff]
        %v4537 = vld [vmem:[#allocation3 + $0xd7] sm:$0xff]
        %v4538 = vld [vmem:[#allocation3 + $0xdf] sm:$0xff]
        %v4539 = vld [vmem:[#allocation3 + $0xe7] sm:$0xff]
        %v4540 = vld [vmem:[#allocation3 + $0xef] sm:$0xff]
        %v4541 = vld [vmem:[#allocation3 + $0xf7] sm:$0xff]
        %v4542 = vld [vmem:[#allocation3 + $0xff] sm:$0xff]
        %v4543 = vsel %vm1141, %v4511, 0.0
        %v4544 = vsel %vm1142, %v4512, 0.0
        %v4545 = vsel %vm1143, %v4513, 0.0
        %v4546 = vsel %vm1144, %v4514, 0.0
        %v4547 = vsel %vm1145, %v4515, 0.0
        %v4548 = vsel %vm1146, %v4516, 0.0
        %v4549 = vsel %vm1147, %v4517, 0.0
        %v4550 = vsel %vm1148, %v4518, 0.0
        %v4551 = vsel %vm1149, %v4519, 0.0
        %v4552 = vsel %vm1150, %v4520, 0.0
        %v4553 = vsel %vm1151, %v4521, 0.0
        %v4554 = vsel %vm1152, %v4522, 0.0
        %v4555 = vsel %vm1153, %v4523, 0.0
        %v4556 = vsel %vm1154, %v4524, 0.0
        %v4557 = vsel %vm1155, %v4525, 0.0
        %v4558 = vsel %vm1156, %v4526, 0.0
        %v4559 = vsel %vm1157, %v4527, 0.0
        %v4560 = vsel %vm1158, %v4528, 0.0
        %v4561 = vsel %vm1159, %v4529, 0.0
        %v4562 = vsel %vm1160, %v4530, 0.0
        %v4563 = vsel %vm1161, %v4531, 0.0
        %v4564 = vsel %vm1162, %v4532, 0.0
        %v4565 = vsel %vm1163, %v4533, 0.0
        %v4566 = vsel %vm1164, %v4534, 0.0
        %v4567 = vsel %vm1165, %v4535, 0.0
        %v4568 = vsel %vm1166, %v4536, 0.0
        %v4569 = vsel %vm1167, %v4537, 0.0
        %v4570 = vsel %vm1168, %v4538, 0.0
        %v4571 = vsel %vm1169, %v4539, 0.0
        %v4572 = vsel %vm1170, %v4540, 0.0
        %v4573 = vsel %vm1171, %v4541, 0.0
        %v4574 = vsel %vm1172, %v4542, 0.0
        %v4575 = vpack.c.bf16 %v4544, %v4543
        %v4576 = vpack.c.bf16 %v4546, %v4545
        %v4577 = vpack.c.bf16 %v4548, %v4547
        %v4578 = vpack.c.bf16 %v4550, %v4549
        %v4579 = vpack.c.bf16 %v4552, %v4551
        %v4580 = vpack.c.bf16 %v4554, %v4553
        %v4581 = vpack.c.bf16 %v4556, %v4555
        %v4582 = vpack.c.bf16 %v4558, %v4557
        %v4583 = vpack.c.bf16 %v4560, %v4559
        %v4584 = vpack.c.bf16 %v4562, %v4561
        %v4585 = vpack.c.bf16 %v4564, %v4563
        %v4586 = vpack.c.bf16 %v4566, %v4565
        %v4587 = vpack.c.bf16 %v4568, %v4567
        %v4588 = vpack.c.bf16 %v4570, %v4569
        %v4589 = vpack.c.bf16 %v4572, %v4571
        %v4590 = vpack.c.bf16 %v4574, %v4573
        %v4591 = vld [vmem:[%s7] sm:$0xff]
        %v4592 = vld [vmem:[%s7 + $0x8] sm:$0xff]
        %v4593 = vpack.c.bf16 %v4592, %v4591
        %v4594 = vld [vmem:[#allocation3 + $0x8] sm:$0xff]
        %v4595 = vld [vmem:[#allocation3 + $0x10] sm:$0xff]
        %v4596 = vld [vmem:[#allocation3 + $0x18] sm:$0xff]
        %v4597 = vld [vmem:[#allocation3 + $0x20] sm:$0xff]
        %v4598 = vld [vmem:[#allocation3 + $0x28] sm:$0xff]
        %v4599 = vld [vmem:[#allocation3 + $0x30] sm:$0xff]
        %v4600 = vld [vmem:[#allocation3 + $0x38] sm:$0xff]
        %v4601 = vld [vmem:[#allocation3 + $0x40] sm:$0xff]
        %v4602 = vld [vmem:[#allocation3 + $0x48] sm:$0xff]
        %v4603 = vld [vmem:[#allocation3 + $0x50] sm:$0xff]
        %v4604 = vld [vmem:[#allocation3 + $0x58] sm:$0xff]
        %v4605 = vld [vmem:[#allocation3 + $0x60] sm:$0xff]
        %v4606 = vld [vmem:[#allocation3 + $0x68] sm:$0xff]
        %v4607 = vld [vmem:[#allocation3 + $0x70] sm:$0xff]
        %v4608 = vld [vmem:[#allocation3 + $0x78] sm:$0xff]
        %v4609 = vld [vmem:[#allocation3 + $0x80] sm:$0xff]
        %v4610 = vld [vmem:[#allocation3 + $0x88] sm:$0xff]
        %v4611 = vld [vmem:[#allocation3 + $0x90] sm:$0xff]
        %v4612 = vld [vmem:[#allocation3 + $0x98] sm:$0xff]
        %v4613 = vld [vmem:[#allocation3 + $0xa0] sm:$0xff]
        %v4614 = vld [vmem:[#allocation3 + $0xa8] sm:$0xff]
        %v4615 = vld [vmem:[#allocation3 + $0xb0] sm:$0xff]
        %v4616 = vld [vmem:[#allocation3 + $0xb8] sm:$0xff]
        %v4617 = vld [vmem:[#allocation3 + $0xc0] sm:$0xff]
        %v4618 = vld [vmem:[#allocation3 + $0xc8] sm:$0xff]
        %v4619 = vld [vmem:[#allocation3 + $0xd0] sm:$0xff]
        %v4620 = vld [vmem:[#allocation3 + $0xd8] sm:$0xff]
        %v4621 = vld [vmem:[#allocation3 + $0xe0] sm:$0xff]
        %v4622 = vld [vmem:[#allocation3 + $0xe8] sm:$0xff]
        %v4623 = vld [vmem:[#allocation3 + $0xf0] sm:$0xff]
        %v4624 = vld [vmem:[#allocation3 + $0xf8] sm:$0xff]
        %v4625 = vld [vmem:[#allocation3 + $0x100] sm:$0xff]
        %v4626 = vpack.c.bf16 %v4595, %v4594
        %v4627 = vpack.c.bf16 %v4597, %v4596
        %v4628 = vpack.c.bf16 %v4599, %v4598
        %v4629 = vpack.c.bf16 %v4601, %v4600
        %v4630 = vpack.c.bf16 %v4603, %v4602
        %v4631 = vpack.c.bf16 %v4605, %v4604
        %v4632 = vpack.c.bf16 %v4607, %v4606
        %v4633 = vpack.c.bf16 %v4609, %v4608
        %v4634 = vpack.c.bf16 %v4611, %v4610
        %v4635 = vpack.c.bf16 %v4613, %v4612
        %v4636 = vpack.c.bf16 %v4615, %v4614
        %v4637 = vpack.c.bf16 %v4617, %v4616
        %v4638 = vpack.c.bf16 %v4619, %v4618
        %v4639 = vpack.c.bf16 %v4621, %v4620
        %v4640 = vpack.c.bf16 %v4623, %v4622
        %v4641 = vpack.c.bf16 %v4625, %v4624
        %s4642 = scalar_lea.vmem %s7, 16
        %v4643 = vld [vmem:[%s4642] sm:$0xff]
        %v4644 = vld [vmem:[%s4642 + $0x8] sm:$0xff]
        %v4645 = vpack.c.bf16 %v4644, %v4643
        %v4647 = vsel %vm4440, %v4626, 0
        %v4650 = vsel %vm4440, %v4627, 0
        %v4653 = vsel %vm4440, %v4628, 0
        %v4656 = vsel %vm4440, %v4629, 0
        %v4659 = vsel %vm4440, %v4630, 0
        %v4662 = vsel %vm4440, %v4631, 0
        %v4665 = vsel %vm4440, %v4632, 0
        %v4668 = vsel %vm4440, %v4633, 0
        %v4671 = vsel %vm4440, %v4634, 0
        %v4674 = vsel %vm4440, %v4635, 0
        %v4677 = vsel %vm4440, %v4636, 0
        %v4680 = vsel %vm4440, %v4637, 0
        %v4683 = vsel %vm4440, %v4638, 0
        %v4686 = vsel %vm4440, %v4639, 0
        %v4689 = vsel %vm4440, %v4640, 0
        %v4692 = vsel %vm4440, %v4641, 0
        %4694 = vmatprep.subr.bf16.mxu0 0
        %4695 = vmatpush1.bf16.msra.mxu0 %v4645
        %4696 = vmatprep.subr.bf16.mxu0 0
        %4697 = vmatpush1.bf16.msra.mxu0 0
        %4698 = vmatprep.subr.bf16.mxu0 0
        %4699 = vmatpush1.bf16.msra.mxu0 0
        %4700 = vmatprep.subr.bf16.mxu0 0
        %4701 = vmatpush1.bf16.msra.mxu0 0
        %4702 = vmatprep.subr.bf16.mxu0 0
        %4703 = vmatpush1.bf16.msra.mxu0 0
        %4704 = vmatprep.subr.bf16.mxu0 0
        %4705 = vmatpush1.bf16.msra.mxu0 0
        %4706 = vmatprep.subr.bf16.mxu0 0
        %4707 = vmatpush1.bf16.msra.mxu0 0
        %4708 = vmatprep.subr.bf16.mxu0 0
        %4709 = vmatpush1.bf16.msra.mxu0 0
        %4710 = vmatprep.subr.bf16.mxu0 0
        %4711 = vmatpush1.bf16.msra.mxu0 0
        %4712 = vmatprep.subr.bf16.mxu0 0
        %4713 = vmatpush1.bf16.msra.mxu0 0
        %4714 = vmatprep.subr.bf16.mxu0 0
        %4715 = vmatpush1.bf16.msra.mxu0 0
        %4716 = vmatprep.subr.bf16.mxu0 0
        %4717 = vmatpush1.bf16.msra.mxu0 0
        %4718 = vmatprep.subr.bf16.mxu0 0
        %4719 = vmatpush1.bf16.msra.mxu0 0
        %4720 = vmatprep.subr.bf16.mxu0 0
        %4721 = vmatpush1.bf16.msra.mxu0 0
        %4722 = vmatprep.subr.bf16.mxu0 0
        %4723 = vmatpush1.bf16.msra.mxu0 0
        %4724 = vmatprep.subr.bf16.mxu0 0
        %4725 = vmatpush1.bf16.msra.mxu0 0
        %4726 = vmatprep.mubr.bf16.mxu0 0
        %4727 = vmatmul.mubr.bf16.gmra.mrb[0].mxu0 %v4647
        %v4728 = vpop.f32.mrb[0].mxu0
        %v4729 = vadd.f32 0.0, %v4728
        %v4730 = vpop.f32.mrb[0].mxu0
        %v4731 = vpop.f32.mrb[0].mxu0
        %v4732 = vadd.f32 0.0, %v4731
        %v4733 = vpop.f32.mrb[0].mxu0
        %4734 = vmatprep.mubr.bf16.mxu0 0
        %4735 = vmatmul.mubr.bf16.gmra.mrb[0].mxu0 %v4650
        %v4736 = vpop.f32.mrb[0].mxu0
        %v4737 = vadd.f32 0.0, %v4736
        %v4738 = vpop.f32.mrb[0].mxu0
        %v4739 = vpop.f32.mrb[0].mxu0
        %v4740 = vadd.f32 0.0, %v4739
        %v4741 = vpop.f32.mrb[0].mxu0
        %4742 = vmatprep.mubr.bf16.mxu0 0
        %4743 = vmatmul.mubr.bf16.gmra.mrb[0].mxu0 %v4653
        %v4744 = vpop.f32.mrb[0].mxu0
        %v4745 = vadd.f32 0.0, %v4744
        %v4746 = vpop.f32.mrb[0].mxu0
        %v4747 = vpop.f32.mrb[0].mxu0
        %v4748 = vadd.f32 0.0, %v4747
        %v4749 = vpop.f32.mrb[0].mxu0
        %4750 = vmatprep.mubr.bf16.mxu0 0
        %4751 = vmatmul.mubr.bf16.gmra.mrb[0].mxu0 %v4656
        %v4752 = vpop.f32.mrb[0].mxu0
        %v4753 = vadd.f32 0.0, %v4752
        %v4754 = vpop.f32.mrb[0].mxu0
        %v4755 = vpop.f32.mrb[0].mxu0
        %v4756 = vadd.f32 0.0, %v4755
        %v4757 = vpop.f32.mrb[0].mxu0
        %4758 = vmatprep.mubr.bf16.mxu0 0
        %4759 = vmatmul.mubr.bf16.gmra.mrb[0].mxu0 %v4659
        %v4760 = vpop.f32.mrb[0].mxu0
        %v4761 = vadd.f32 0.0, %v4760
        %v4762 = vpop.f32.mrb[0].mxu0
        %v4763 = vpop.f32.mrb[0].mxu0
        %v4764 = vadd.f32 0.0, %v4763
        %v4765 = vpop.f32.mrb[0].mxu0
        %4766 = vmatprep.mubr.bf16.mxu0 0
        %4767 = vmatmul.mubr.bf16.gmra.mrb[0].mxu0 %v4662
        %v4768 = vpop.f32.mrb[0].mxu0
        %v4769 = vadd.f32 0.0, %v4768
        %v4770 = vpop.f32.mrb[0].mxu0
        %v4771 = vpop.f32.mrb[0].mxu0
        %v4772 = vadd.f32 0.0, %v4771
        %v4773 = vpop.f32.mrb[0].mxu0
        %4774 = vmatprep.mubr.bf16.mxu0 0
        %4775 = vmatmul.mubr.bf16.gmra.mrb[0].mxu0 %v4665
        %v4776 = vpop.f32.mrb[0].mxu0
        %v4777 = vadd.f32 0.0, %v4776
        %v4778 = vpop.f32.mrb[0].mxu0
        %v4779 = vpop.f32.mrb[0].mxu0
        %v4780 = vadd.f32 0.0, %v4779
        %v4781 = vpop.f32.mrb[0].mxu0
        %4782 = vmatprep.mubr.bf16.mxu0 0
        %4783 = vmatmul.mubr.bf16.gmra.mrb[0].mxu0 %v4668
        %v4784 = vpop.f32.mrb[0].mxu0
        %v4785 = vadd.f32 0.0, %v4784
        %v4786 = vpop.f32.mrb[0].mxu0
        %v4787 = vpop.f32.mrb[0].mxu0
        %v4788 = vadd.f32 0.0, %v4787
        %v4789 = vpop.f32.mrb[0].mxu0
        %4790 = vmatprep.mubr.bf16.mxu0 0
        %4791 = vmatmul.mubr.bf16.gmra.mrb[0].mxu0 %v4671
        %v4792 = vpop.f32.mrb[0].mxu0
        %v4793 = vadd.f32 0.0, %v4792
        %v4794 = vpop.f32.mrb[0].mxu0
        %v4795 = vpop.f32.mrb[0].mxu0
        %v4796 = vadd.f32 0.0, %v4795
        %v4797 = vpop.f32.mrb[0].mxu0
        %4798 = vmatprep.mubr.bf16.mxu0 0
        %4799 = vmatmul.mubr.bf16.gmra.mrb[0].mxu0 %v4674
        %v4800 = vpop.f32.mrb[0].mxu0
        %v4801 = vadd.f32 0.0, %v4800
        %v4802 = vpop.f32.mrb[0].mxu0
        %v4803 = vpop.f32.mrb[0].mxu0
        %v4804 = vadd.f32 0.0, %v4803
        %v4805 = vpop.f32.mrb[0].mxu0
        %4806 = vmatprep.mubr.bf16.mxu0 0
        %4807 = vmatmul.mubr.bf16.gmra.mrb[0].mxu0 %v4677
        %v4808 = vpop.f32.mrb[0].mxu0
        %v4809 = vadd.f32 0.0, %v4808
        %v4810 = vpop.f32.mrb[0].mxu0
        %v4811 = vpop.f32.mrb[0].mxu0
        %v4812 = vadd.f32 0.0, %v4811
        %v4813 = vpop.f32.mrb[0].mxu0
        %4814 = vmatprep.mubr.bf16.mxu0 0
        %4815 = vmatmul.mubr.bf16.gmra.mrb[0].mxu0 %v4680
        %v4816 = vpop.f32.mrb[0].mxu0
        %v4817 = vadd.f32 0.0, %v4816
        %v4818 = vpop.f32.mrb[0].mxu0
        %v4819 = vpop.f32.mrb[0].mxu0
        %v4820 = vadd.f32 0.0, %v4819
        %v4821 = vpop.f32.mrb[0].mxu0
        %4822 = vmatprep.mubr.bf16.mxu0 0
        %4823 = vmatmul.mubr.bf16.gmra.mrb[0].mxu0 %v4683
        %v4824 = vpop.f32.mrb[0].mxu0
        %v4825 = vadd.f32 0.0, %v4824
        %v4826 = vpop.f32.mrb[0].mxu0
        %v4827 = vpop.f32.mrb[0].mxu0
        %v4828 = vadd.f32 0.0, %v4827
        %v4829 = vpop.f32.mrb[0].mxu0
        %4830 = vmatprep.mubr.bf16.mxu0 0
        %4831 = vmatmul.mubr.bf16.gmra.mrb[0].mxu0 %v4686
        %v4832 = vpop.f32.mrb[0].mxu0
        %v4833 = vadd.f32 0.0, %v4832
        %v4834 = vpop.f32.mrb[0].mxu0
        %v4835 = vpop.f32.mrb[0].mxu0
        %v4836 = vadd.f32 0.0, %v4835
        %v4837 = vpop.f32.mrb[0].mxu0
        %4838 = vmatprep.mubr.bf16.mxu0 0
        %4839 = vmatmul.mubr.bf16.gmra.mrb[0].mxu0 %v4689
        %v4840 = vpop.f32.mrb[0].mxu0
        %v4841 = vadd.f32 0.0, %v4840
        %v4842 = vpop.f32.mrb[0].mxu0
        %v4843 = vpop.f32.mrb[0].mxu0
        %v4844 = vadd.f32 0.0, %v4843
        %v4845 = vpop.f32.mrb[0].mxu0
        %4846 = vmatprep.mubr.bf16.mxu0 0
        %4847 = vmatmul.mubr.bf16.gmra.mrb[0].mxu0 %v4692
        %v4848 = vpop.f32.mrb[0].mxu0
        %v4849 = vadd.f32 0.0, %v4848
        %v4850 = vpop.f32.mrb[0].mxu0
        %v4851 = vpop.f32.mrb[0].mxu0
        %v4852 = vadd.f32 0.0, %v4851
        %v4853 = vpop.f32.mrb[0].mxu0
        %4854 = vdwg.mxu0
        %v4856 = vsel %vm4440, %v4575, 0
        %v4859 = vsel %vm4440, %v4576, 0
        %v4862 = vsel %vm4440, %v4577, 0
        %v4865 = vsel %vm4440, %v4578, 0
        %v4868 = vsel %vm4440, %v4579, 0
        %v4871 = vsel %vm4440, %v4580, 0
        %v4874 = vsel %vm4440, %v4581, 0
        %v4877 = vsel %vm4440, %v4582, 0
        %v4880 = vsel %vm4440, %v4583, 0
        %v4883 = vsel %vm4440, %v4584, 0
        %v4886 = vsel %vm4440, %v4585, 0
        %v4889 = vsel %vm4440, %v4586, 0
        %v4892 = vsel %vm4440, %v4587, 0
        %v4895 = vsel %vm4440, %v4588, 0
        %v4898 = vsel %vm4440, %v4589, 0
        %v4901 = vsel %vm4440, %v4590, 0
        %4903 = vmatprep.subr.bf16.mxu0 0
        %4904 = vmatpush1.bf16.msra.mxu0 %v4593
        %4905 = vmatprep.subr.bf16.mxu0 0
        %4906 = vmatpush1.bf16.msra.mxu0 0
        %4907 = vmatprep.subr.bf16.mxu0 0
        %4908 = vmatpush1.bf16.msra.mxu0 0
        %4909 = vmatprep.subr.bf16.mxu0 0
        %4910 = vmatpush1.bf16.msra.mxu0 0
        %4911 = vmatprep.subr.bf16.mxu0 0
        %4912 = vmatpush1.bf16.msra.mxu0 0
        %4913 = vmatprep.subr.bf16.mxu0 0
        %4914 = vmatpush1.bf16.msra.mxu0 0
        %4915 = vmatprep.subr.bf16.mxu0 0
        %4916 = vmatpush1.bf16.msra.mxu0 0
        %4917 = vmatprep.subr.bf16.mxu0 0
        %4918 = vmatpush1.bf16.msra.mxu0 0
        %4919 = vmatprep.subr.bf16.mxu0 0
        %4920 = vmatpush1.bf16.msra.mxu0 0
        %4921 = vmatprep.subr.bf16.mxu0 0
        %4922 = vmatpush1.bf16.msra.mxu0 0
        %4923 = vmatprep.subr.bf16.mxu0 0
        %4924 = vmatpush1.bf16.msra.mxu0 0
        %4925 = vmatprep.subr.bf16.mxu0 0
        %4926 = vmatpush1.bf16.msra.mxu0 0
        %4927 = vmatprep.subr.bf16.mxu0 0
        %4928 = vmatpush1.bf16.msra.mxu0 0
        %4929 = vmatprep.subr.bf16.mxu0 0
        %4930 = vmatpush1.bf16.msra.mxu0 0
        %4931 = vmatprep.subr.bf16.mxu0 0
        %4932 = vmatpush1.bf16.msra.mxu0 0
        %4933 = vmatprep.subr.bf16.mxu0 0
        %4934 = vmatpush1.bf16.msra.mxu0 0
        %4935 = vmatprep.mubr.bf16.mxu0 0
        %4936 = vmatmul.mubr.bf16.gmra.mrb[0].mxu0 %v4856
        %v4937 = vpop.f32.mrb[0].mxu0
        %v4938 = vadd.f32 %v4729, %v4937
        %v4939 = vpop.f32.mrb[0].mxu0
        %v4940 = vpop.f32.mrb[0].mxu0
        %v4941 = vadd.f32 %v4732, %v4940
        %v4942 = vpop.f32.mrb[0].mxu0
        %4943 = vmatprep.mubr.bf16.mxu0 0
        %4944 = vmatmul.mubr.bf16.gmra.mrb[0].mxu0 %v4859
        %v4945 = vpop.f32.mrb[0].mxu0
        %v4946 = vadd.f32 %v4737, %v4945
        %v4947 = vpop.f32.mrb[0].mxu0
        %v4948 = vpop.f32.mrb[0].mxu0
        %v4949 = vadd.f32 %v4740, %v4948
        %v4950 = vpop.f32.mrb[0].mxu0
        %4951 = vmatprep.mubr.bf16.mxu0 0
        %4952 = vmatmul.mubr.bf16.gmra.mrb[0].mxu0 %v4862
        %v4953 = vpop.f32.mrb[0].mxu0
        %v4954 = vadd.f32 %v4745, %v4953
        %v4955 = vpop.f32.mrb[0].mxu0
        %v4956 = vpop.f32.mrb[0].mxu0
        %v4957 = vadd.f32 %v4748, %v4956
        %v4958 = vpop.f32.mrb[0].mxu0
        %4959 = vmatprep.mubr.bf16.mxu0 0
        %4960 = vmatmul.mubr.bf16.gmra.mrb[0].mxu0 %v4865
        %v4961 = vpop.f32.mrb[0].mxu0
        %v4962 = vadd.f32 %v4753, %v4961
        %v4963 = vpop.f32.mrb[0].mxu0
        %v4964 = vpop.f32.mrb[0].mxu0
        %v4965 = vadd.f32 %v4756, %v4964
        %v4966 = vpop.f32.mrb[0].mxu0
        %4967 = vmatprep.mubr.bf16.mxu0 0
        %4968 = vmatmul.mubr.bf16.gmra.mrb[0].mxu0 %v4868
        %v4969 = vpop.f32.mrb[0].mxu0
        %v4970 = vadd.f32 %v4761, %v4969
        %v4971 = vpop.f32.mrb[0].mxu0
        %v4972 = vpop.f32.mrb[0].mxu0
        %v4973 = vadd.f32 %v4764, %v4972
        %v4974 = vpop.f32.mrb[0].mxu0
        %4975 = vmatprep.mubr.bf16.mxu0 0
        %4976 = vmatmul.mubr.bf16.gmra.mrb[0].mxu0 %v4871
        %v4977 = vpop.f32.mrb[0].mxu0
        %v4978 = vadd.f32 %v4769, %v4977
        %v4979 = vpop.f32.mrb[0].mxu0
        %v4980 = vpop.f32.mrb[0].mxu0
        %v4981 = vadd.f32 %v4772, %v4980
        %v4982 = vpop.f32.mrb[0].mxu0
        %4983 = vmatprep.mubr.bf16.mxu0 0
        %4984 = vmatmul.mubr.bf16.gmra.mrb[0].mxu0 %v4874
        %v4985 = vpop.f32.mrb[0].mxu0
        %v4986 = vadd.f32 %v4777, %v4985
        %v4987 = vpop.f32.mrb[0].mxu0
        %v4988 = vpop.f32.mrb[0].mxu0
        %v4989 = vadd.f32 %v4780, %v4988
        %v4990 = vpop.f32.mrb[0].mxu0
        %4991 = vmatprep.mubr.bf16.mxu0 0
        %4992 = vmatmul.mubr.bf16.gmra.mrb[0].mxu0 %v4877
        %v4993 = vpop.f32.mrb[0].mxu0
        %v4994 = vadd.f32 %v4785, %v4993
        %v4995 = vpop.f32.mrb[0].mxu0
        %v4996 = vpop.f32.mrb[0].mxu0
        %v4997 = vadd.f32 %v4788, %v4996
        %v4998 = vpop.f32.mrb[0].mxu0
        %4999 = vmatprep.mubr.bf16.mxu0 0
        %5000 = vmatmul.mubr.bf16.gmra.mrb[0].mxu0 %v4880
        %v5001 = vpop.f32.mrb[0].mxu0
        %v5002 = vadd.f32 %v4793, %v5001
        %v5003 = vpop.f32.mrb[0].mxu0
        %v5004 = vpop.f32.mrb[0].mxu0
        %v5005 = vadd.f32 %v4796, %v5004
        %v5006 = vpop.f32.mrb[0].mxu0
        %5007 = vmatprep.mubr.bf16.mxu0 0
        %5008 = vmatmul.mubr.bf16.gmra.mrb[0].mxu0 %v4883
        %v5009 = vpop.f32.mrb[0].mxu0
        %v5010 = vadd.f32 %v4801, %v5009
        %v5011 = vpop.f32.mrb[0].mxu0
        %v5012 = vpop.f32.mrb[0].mxu0
        %v5013 = vadd.f32 %v4804, %v5012
        %v5014 = vpop.f32.mrb[0].mxu0
        %5015 = vmatprep.mubr.bf16.mxu0 0
        %5016 = vmatmul.mubr.bf16.gmra.mrb[0].mxu0 %v4886
        %v5017 = vpop.f32.mrb[0].mxu0
        %v5018 = vadd.f32 %v4809, %v5017
        %v5019 = vpop.f32.mrb[0].mxu0
        %v5020 = vpop.f32.mrb[0].mxu0
        %v5021 = vadd.f32 %v4812, %v5020
        %v5022 = vpop.f32.mrb[0].mxu0
        %5023 = vmatprep.mubr.bf16.mxu0 0
        %5024 = vmatmul.mubr.bf16.gmra.mrb[0].mxu0 %v4889
        %v5025 = vpop.f32.mrb[0].mxu0
        %v5026 = vadd.f32 %v4817, %v5025
        %v5027 = vpop.f32.mrb[0].mxu0
        %v5028 = vpop.f32.mrb[0].mxu0
        %v5029 = vadd.f32 %v4820, %v5028
        %v5030 = vpop.f32.mrb[0].mxu0
        %5031 = vmatprep.mubr.bf16.mxu0 0
        %5032 = vmatmul.mubr.bf16.gmra.mrb[0].mxu0 %v4892
        %v5033 = vpop.f32.mrb[0].mxu0
        %v5034 = vadd.f32 %v4825, %v5033
        %v5035 = vpop.f32.mrb[0].mxu0
        %v5036 = vpop.f32.mrb[0].mxu0
        %v5037 = vadd.f32 %v4828, %v5036
        %v5038 = vpop.f32.mrb[0].mxu0
        %5039 = vmatprep.mubr.bf16.mxu0 0
        %5040 = vmatmul.mubr.bf16.gmra.mrb[0].mxu0 %v4895
        %v5041 = vpop.f32.mrb[0].mxu0
        %v5042 = vadd.f32 %v4833, %v5041
        %v5043 = vpop.f32.mrb[0].mxu0
        %v5044 = vpop.f32.mrb[0].mxu0
        %v5045 = vadd.f32 %v4836, %v5044
        %v5046 = vpop.f32.mrb[0].mxu0
        %5047 = vmatprep.mubr.bf16.mxu0 0
        %5048 = vmatmul.mubr.bf16.gmra.mrb[0].mxu0 %v4898
        %v5049 = vpop.f32.mrb[0].mxu0
        %v5050 = vadd.f32 %v4841, %v5049
        %v5051 = vpop.f32.mrb[0].mxu0
        %v5052 = vpop.f32.mrb[0].mxu0
        %v5053 = vadd.f32 %v4844, %v5052
        %v5054 = vpop.f32.mrb[0].mxu0
        %5055 = vmatprep.mubr.bf16.mxu0 0
        %5056 = vmatmul.mubr.bf16.gmra.mrb[0].mxu0 %v4901
        %v5057 = vpop.f32.mrb[0].mxu0
        %v5058 = vadd.f32 %v4849, %v5057
        %v5059 = vpop.f32.mrb[0].mxu0
        %v5060 = vpop.f32.mrb[0].mxu0
        %v5061 = vadd.f32 %v4852, %v5060
        %v5062 = vpop.f32.mrb[0].mxu0
        %5063 = vdwg.mxu0
        %v5064 = vld [vmem:[#allocation3 + $0x9] sm:$0xff]
        %v5065 = vld [vmem:[#allocation3 + $0x11] sm:$0xff]
        %v5066 = vld [vmem:[#allocation3 + $0x19] sm:$0xff]
        %v5067 = vld [vmem:[#allocation3 + $0x21] sm:$0xff]
        %v5068 = vld [vmem:[#allocation3 + $0x29] sm:$0xff]
        %v5069 = vld [vmem:[#allocation3 + $0x31] sm:$0xff]
        %v5070 = vld [vmem:[#allocation3 + $0x39] sm:$0xff]
        %v5071 = vld [vmem:[#allocation3 + $0x41] sm:$0xff]
        %v5072 = vld [vmem:[#allocation3 + $0x49] sm:$0xff]
        %v5073 = vld [vmem:[#allocation3 + $0x51] sm:$0xff]
        %v5074 = vld [vmem:[#allocation3 + $0x59] sm:$0xff]
        %v5075 = vld [vmem:[#allocation3 + $0x61] sm:$0xff]
        %v5076 = vld [vmem:[#allocation3 + $0x69] sm:$0xff]
        %v5077 = vld [vmem:[#allocation3 + $0x71] sm:$0xff]
        %v5078 = vld [vmem:[#allocation3 + $0x79] sm:$0xff]
        %v5079 = vld [vmem:[#allocation3 + $0x81] sm:$0xff]
        %v5080 = vld [vmem:[#allocation3 + $0x89] sm:$0xff]
        %v5081 = vld [vmem:[#allocation3 + $0x91] sm:$0xff]
        %v5082 = vld [vmem:[#allocation3 + $0x99] sm:$0xff]
        %v5083 = vld [vmem:[#allocation3 + $0xa1] sm:$0xff]
        %v5084 = vld [vmem:[#allocation3 + $0xa9] sm:$0xff]
        %v5085 = vld [vmem:[#allocation3 + $0xb1] sm:$0xff]
        %v5086 = vld [vmem:[#allocation3 + $0xb9] sm:$0xff]
        %v5087 = vld [vmem:[#allocation3 + $0xc1] sm:$0xff]
        %v5088 = vld [vmem:[#allocation3 + $0xc9] sm:$0xff]
        %v5089 = vld [vmem:[#allocation3 + $0xd1] sm:$0xff]
        %v5090 = vld [vmem:[#allocation3 + $0xd9] sm:$0xff]
        %v5091 = vld [vmem:[#allocation3 + $0xe1] sm:$0xff]
        %v5092 = vld [vmem:[#allocation3 + $0xe9] sm:$0xff]
        %v5093 = vld [vmem:[#allocation3 + $0xf1] sm:$0xff]
        %v5094 = vld [vmem:[#allocation3 + $0xf9] sm:$0xff]
        %v5095 = vld [vmem:[#allocation3 + $0x101] sm:$0xff]
        %v5096 = vsel %vm1763, %v5064, 0.0
        %v5097 = vsel %vm1764, %v5065, 0.0
        %v5098 = vsel %vm1765, %v5066, 0.0
        %v5099 = vsel %vm1766, %v5067, 0.0
        %v5100 = vsel %vm1767, %v5068, 0.0
        %v5101 = vsel %vm1768, %v5069, 0.0
        %v5102 = vsel %vm1769, %v5070, 0.0
        %v5103 = vsel %vm1770, %v5071, 0.0
        %v5104 = vsel %vm1771, %v5072, 0.0
        %v5105 = vsel %vm1772, %v5073, 0.0
        %v5106 = vsel %vm1773, %v5074, 0.0
        %v5107 = vsel %vm1774, %v5075, 0.0
        %v5108 = vsel %vm1775, %v5076, 0.0
        %v5109 = vsel %vm1776, %v5077, 0.0
        %v5110 = vsel %vm1777, %v5078, 0.0
        %v5111 = vsel %vm1778, %v5079, 0.0
        %v5112 = vsel %vm1779, %v5080, 0.0
        %v5113 = vsel %vm1780, %v5081, 0.0
        %v5114 = vsel %vm1781, %v5082, 0.0
        %v5115 = vsel %vm1782, %v5083, 0.0
        %v5116 = vsel %vm1783, %v5084, 0.0
        %v5117 = vsel %vm1784, %v5085, 0.0
        %v5118 = vsel %vm1785, %v5086, 0.0
        %v5119 = vsel %vm1786, %v5087, 0.0
        %v5120 = vsel %vm1787, %v5088, 0.0
        %v5121 = vsel %vm1788, %v5089, 0.0
        %v5122 = vsel %vm1789, %v5090, 0.0
        %v5123 = vsel %vm1790, %v5091, 0.0
        %v5124 = vsel %vm1791, %v5092, 0.0
        %v5125 = vsel %vm1792, %v5093, 0.0
        %v5126 = vsel %vm1793, %v5094, 0.0
        %v5127 = vsel %vm1794, %v5095, 0.0
        %v5128 = vpack.c.bf16 %v5097, %v5096
        %v5129 = vpack.c.bf16 %v5099, %v5098
        %v5130 = vpack.c.bf16 %v5101, %v5100
        %v5131 = vpack.c.bf16 %v5103, %v5102
        %v5132 = vpack.c.bf16 %v5105, %v5104
        %v5133 = vpack.c.bf16 %v5107, %v5106
        %v5134 = vpack.c.bf16 %v5109, %v5108
        %v5135 = vpack.c.bf16 %v5111, %v5110
        %v5136 = vpack.c.bf16 %v5113, %v5112
        %v5137 = vpack.c.bf16 %v5115, %v5114
        %v5138 = vpack.c.bf16 %v5117, %v5116
        %v5139 = vpack.c.bf16 %v5119, %v5118
        %v5140 = vpack.c.bf16 %v5121, %v5120
        %v5141 = vpack.c.bf16 %v5123, %v5122
        %v5142 = vpack.c.bf16 %v5125, %v5124
        %v5143 = vpack.c.bf16 %v5127, %v5126
        %s5144 = scalar_lea.vmem %s7, 32
        %v5145 = vld [vmem:[%s5144] sm:$0xff]
        %v5146 = vld [vmem:[%s5144 + $0x8] sm:$0xff]
        %v5147 = vpack.c.bf16 %v5146, %v5145
        %v5149 = vsel %vm4440, %v5128, 0
        %v5152 = vsel %vm4440, %v5129, 0
        %v5155 = vsel %vm4440, %v5130, 0
        %v5158 = vsel %vm4440, %v5131, 0
        %v5161 = vsel %vm4440, %v5132, 0
        %v5164 = vsel %vm4440, %v5133, 0
        %v5167 = vsel %vm4440, %v5134, 0
        %v5170 = vsel %vm4440, %v5135, 0
        %v5173 = vsel %vm4440, %v5136, 0
        %v5176 = vsel %vm4440, %v5137, 0
        %v5179 = vsel %vm4440, %v5138, 0
        %v5182 = vsel %vm4440, %v5139, 0
        %v5185 = vsel %vm4440, %v5140, 0
        %v5188 = vsel %vm4440, %v5141, 0
        %v5191 = vsel %vm4440, %v5142, 0
        %v5194 = vsel %vm4440, %v5143, 0
        %5196 = vmatprep.subr.bf16.mxu0 0
        %5197 = vmatpush1.bf16.msra.mxu0 %v5147
        %5198 = vmatprep.subr.bf16.mxu0 0
        %5199 = vmatpush1.bf16.msra.mxu0 0
        %5200 = vmatprep.subr.bf16.mxu0 0
        %5201 = vmatpush1.bf16.msra.mxu0 0
        %5202 = vmatprep.subr.bf16.mxu0 0
        %5203 = vmatpush1.bf16.msra.mxu0 0
        %5204 = vmatprep.subr.bf16.mxu0 0
        %5205 = vmatpush1.bf16.msra.mxu0 0
        %5206 = vmatprep.subr.bf16.mxu0 0
        %5207 = vmatpush1.bf16.msra.mxu0 0
        %5208 = vmatprep.subr.bf16.mxu0 0
        %5209 = vmatpush1.bf16.msra.mxu0 0
        %5210 = vmatprep.subr.bf16.mxu0 0
        %5211 = vmatpush1.bf16.msra.mxu0 0
        %5212 = vmatprep.subr.bf16.mxu0 0
        %5213 = vmatpush1.bf16.msra.mxu0 0
        %5214 = vmatprep.subr.bf16.mxu0 0
        %5215 = vmatpush1.bf16.msra.mxu0 0
        %5216 = vmatprep.subr.bf16.mxu0 0
        %5217 = vmatpush1.bf16.msra.mxu0 0
        %5218 = vmatprep.subr.bf16.mxu0 0
        %5219 = vmatpush1.bf16.msra.mxu0 0
        %5220 = vmatprep.subr.bf16.mxu0 0
        %5221 = vmatpush1.bf16.msra.mxu0 0
        %5222 = vmatprep.subr.bf16.mxu0 0
        %5223 = vmatpush1.bf16.msra.mxu0 0
        %5224 = vmatprep.subr.bf16.mxu0 0
        %5225 = vmatpush1.bf16.msra.mxu0 0
        %5226 = vmatprep.subr.bf16.mxu0 0
        %5227 = vmatpush1.bf16.msra.mxu0 0
        %5228 = vmatprep.mubr.bf16.mxu0 0
        %5229 = vmatmul.mubr.bf16.gmra.mrb[0].mxu0 %v5149
        %v5230 = vpop.f32.mrb[0].mxu0
        %v5231 = vadd.f32 0.0, %v5230
        %v5232 = vpop.f32.mrb[0].mxu0
        %v5233 = vpop.f32.mrb[0].mxu0
        %v5234 = vadd.f32 0.0, %v5233
        %v5235 = vpop.f32.mrb[0].mxu0
        %5236 = vmatprep.mubr.bf16.mxu0 0
        %5237 = vmatmul.mubr.bf16.gmra.mrb[0].mxu0 %v5152
        %v5238 = vpop.f32.mrb[0].mxu0
        %v5239 = vadd.f32 0.0, %v5238
        %v5240 = vpop.f32.mrb[0].mxu0
        %v5241 = vpop.f32.mrb[0].mxu0
        %v5242 = vadd.f32 0.0, %v5241
        %v5243 = vpop.f32.mrb[0].mxu0
        %5244 = vmatprep.mubr.bf16.mxu0 0
        %5245 = vmatmul.mubr.bf16.gmra.mrb[0].mxu0 %v5155
        %v5246 = vpop.f32.mrb[0].mxu0
        %v5247 = vadd.f32 0.0, %v5246
        %v5248 = vpop.f32.mrb[0].mxu0
        %v5249 = vpop.f32.mrb[0].mxu0
        %v5250 = vadd.f32 0.0, %v5249
        %v5251 = vpop.f32.mrb[0].mxu0
        %5252 = vmatprep.mubr.bf16.mxu0 0
        %5253 = vmatmul.mubr.bf16.gmra.mrb[0].mxu0 %v5158
        %v5254 = vpop.f32.mrb[0].mxu0
        %v5255 = vadd.f32 0.0, %v5254
        %v5256 = vpop.f32.mrb[0].mxu0
        %v5257 = vpop.f32.mrb[0].mxu0
        %v5258 = vadd.f32 0.0, %v5257
        %v5259 = vpop.f32.mrb[0].mxu0
        %5260 = vmatprep.mubr.bf16.mxu0 0
        %5261 = vmatmul.mubr.bf16.gmra.mrb[0].mxu0 %v5161
        %v5262 = vpop.f32.mrb[0].mxu0
        %v5263 = vadd.f32 0.0, %v5262
        %v5264 = vpop.f32.mrb[0].mxu0
        %v5265 = vpop.f32.mrb[0].mxu0
        %v5266 = vadd.f32 0.0, %v5265
        %v5267 = vpop.f32.mrb[0].mxu0
        %5268 = vmatprep.mubr.bf16.mxu0 0
        %5269 = vmatmul.mubr.bf16.gmra.mrb[0].mxu0 %v5164
        %v5270 = vpop.f32.mrb[0].mxu0
        %v5271 = vadd.f32 0.0, %v5270
        %v5272 = vpop.f32.mrb[0].mxu0
        %v5273 = vpop.f32.mrb[0].mxu0
        %v5274 = vadd.f32 0.0, %v5273
        %v5275 = vpop.f32.mrb[0].mxu0
        %5276 = vmatprep.mubr.bf16.mxu0 0
        %5277 = vmatmul.mubr.bf16.gmra.mrb[0].mxu0 %v5167
        %v5278 = vpop.f32.mrb[0].mxu0
        %v5279 = vadd.f32 0.0, %v5278
        %v5280 = vpop.f32.mrb[0].mxu0
        %v5281 = vpop.f32.mrb[0].mxu0
        %v5282 = vadd.f32 0.0, %v5281
        %v5283 = vpop.f32.mrb[0].mxu0
        %5284 = vmatprep.mubr.bf16.mxu0 0
        %5285 = vmatmul.mubr.bf16.gmra.mrb[0].mxu0 %v5170
        %v5286 = vpop.f32.mrb[0].mxu0
        %v5287 = vadd.f32 0.0, %v5286
        %v5288 = vpop.f32.mrb[0].mxu0
        %v5289 = vpop.f32.mrb[0].mxu0
        %v5290 = vadd.f32 0.0, %v5289
        %v5291 = vpop.f32.mrb[0].mxu0
        %5292 = vmatprep.mubr.bf16.mxu0 0
        %5293 = vmatmul.mubr.bf16.gmra.mrb[0].mxu0 %v5173
        %v5294 = vpop.f32.mrb[0].mxu0
        %v5295 = vadd.f32 0.0, %v5294
        %v5296 = vpop.f32.mrb[0].mxu0
        %v5297 = vpop.f32.mrb[0].mxu0
        %v5298 = vadd.f32 0.0, %v5297
        %v5299 = vpop.f32.mrb[0].mxu0
        %5300 = vmatprep.mubr.bf16.mxu0 0
        %5301 = vmatmul.mubr.bf16.gmra.mrb[0].mxu0 %v5176
        %v5302 = vpop.f32.mrb[0].mxu0
        %v5303 = vadd.f32 0.0, %v5302
        %v5304 = vpop.f32.mrb[0].mxu0
        %v5305 = vpop.f32.mrb[0].mxu0
        %v5306 = vadd.f32 0.0, %v5305
        %v5307 = vpop.f32.mrb[0].mxu0
        %5308 = vmatprep.mubr.bf16.mxu0 0
        %5309 = vmatmul.mubr.bf16.gmra.mrb[0].mxu0 %v5179
        %v5310 = vpop.f32.mrb[0].mxu0
        %v5311 = vadd.f32 0.0, %v5310
        %v5312 = vpop.f32.mrb[0].mxu0
        %v5313 = vpop.f32.mrb[0].mxu0
        %v5314 = vadd.f32 0.0, %v5313
        %v5315 = vpop.f32.mrb[0].mxu0
        %5316 = vmatprep.mubr.bf16.mxu0 0
        %5317 = vmatmul.mubr.bf16.gmra.mrb[0].mxu0 %v5182
        %v5318 = vpop.f32.mrb[0].mxu0
        %v5319 = vadd.f32 0.0, %v5318
        %v5320 = vpop.f32.mrb[0].mxu0
        %v5321 = vpop.f32.mrb[0].mxu0
        %v5322 = vadd.f32 0.0, %v5321
        %v5323 = vpop.f32.mrb[0].mxu0
        %5324 = vmatprep.mubr.bf16.mxu0 0
        %5325 = vmatmul.mubr.bf16.gmra.mrb[0].mxu0 %v5185
        %v5326 = vpop.f32.mrb[0].mxu0
        %v5327 = vadd.f32 0.0, %v5326
        %v5328 = vpop.f32.mrb[0].mxu0
        %v5329 = vpop.f32.mrb[0].mxu0
        %v5330 = vadd.f32 0.0, %v5329
        %v5331 = vpop.f32.mrb[0].mxu0
        %5332 = vmatprep.mubr.bf16.mxu0 0
        %5333 = vmatmul.mubr.bf16.gmra.mrb[0].mxu0 %v5188
        %v5334 = vpop.f32.mrb[0].mxu0
        %v5335 = vadd.f32 0.0, %v5334
        %v5336 = vpop.f32.mrb[0].mxu0
        %v5337 = vpop.f32.mrb[0].mxu0
        %v5338 = vadd.f32 0.0, %v5337
        %v5339 = vpop.f32.mrb[0].mxu0
        %5340 = vmatprep.mubr.bf16.mxu0 0
        %5341 = vmatmul.mubr.bf16.gmra.mrb[0].mxu0 %v5191
        %v5342 = vpop.f32.mrb[0].mxu0
        %v5343 = vadd.f32 0.0, %v5342
        %v5344 = vpop.f32.mrb[0].mxu0
        %v5345 = vpop.f32.mrb[0].mxu0
        %v5346 = vadd.f32 0.0, %v5345
        %v5347 = vpop.f32.mrb[0].mxu0
        %5348 = vmatprep.mubr.bf16.mxu0 0
        %5349 = vmatmul.mubr.bf16.gmra.mrb[0].mxu0 %v5194
        %v5350 = vpop.f32.mrb[0].mxu0
        %v5351 = vadd.f32 0.0, %v5350
        %v5352 = vpop.f32.mrb[0].mxu0
        %v5353 = vpop.f32.mrb[0].mxu0
        %v5354 = vadd.f32 0.0, %v5353
        %v5355 = vpop.f32.mrb[0].mxu0
        %5356 = vdwg.mxu0
        %v5357 = vadd.f32 %v4938, %v5231
        %v5358 = vadd.f32 %v4941, %v5234
        %v5359 = vadd.f32 %v4946, %v5239
        %v5360 = vadd.f32 %v4949, %v5242
        %v5361 = vadd.f32 %v4954, %v5247
        %v5362 = vadd.f32 %v4957, %v5250
        %v5363 = vadd.f32 %v4962, %v5255
        %v5364 = vadd.f32 %v4965, %v5258
        %v5365 = vadd.f32 %v4970, %v5263
        %v5366 = vadd.f32 %v4973, %v5266
        %v5367 = vadd.f32 %v4978, %v5271
        %v5368 = vadd.f32 %v4981, %v5274
        %v5369 = vadd.f32 %v4986, %v5279
        %v5370 = vadd.f32 %v4989, %v5282
        %v5371 = vadd.f32 %v4994, %v5287
        %v5372 = vadd.f32 %v4997, %v5290
        %v5373 = vadd.f32 %v5002, %v5295
        %v5374 = vadd.f32 %v5005, %v5298
        %v5375 = vadd.f32 %v5010, %v5303
        %v5376 = vadd.f32 %v5013, %v5306
        %v5377 = vadd.f32 %v5018, %v5311
        %v5378 = vadd.f32 %v5021, %v5314
        %v5379 = vadd.f32 %v5026, %v5319
        %v5380 = vadd.f32 %v5029, %v5322
        %v5381 = vadd.f32 %v5034, %v5327
        %v5382 = vadd.f32 %v5037, %v5330
        %v5383 = vadd.f32 %v5042, %v5335
        %v5384 = vadd.f32 %v5045, %v5338
        %v5385 = vadd.f32 %v5050, %v5343
        %v5386 = vadd.f32 %v5053, %v5346
        %v5387 = vadd.f32 %v5058, %v5351
        %v5388 = vadd.f32 %v5061, %v5354
        %v5389 = vld [vmem:[#allocation3 + $0x17] sm:$0xff]
        %v5390 = vld [vmem:[#allocation3 + $0x1f] sm:$0xff]
        %v5391 = vld [vmem:[#allocation3 + $0x27] sm:$0xff]
        %v5392 = vld [vmem:[#allocation3 + $0x2f] sm:$0xff]
        %v5393 = vld [vmem:[#allocation3 + $0x37] sm:$0xff]
        %v5394 = vld [vmem:[#allocation3 + $0x3f] sm:$0xff]
        %v5395 = vld [vmem:[#allocation3 + $0x47] sm:$0xff]
        %v5396 = vld [vmem:[#allocation3 + $0x4f] sm:$0xff]
        %v5397 = vld [vmem:[#allocation3 + $0x57] sm:$0xff]
        %v5398 = vld [vmem:[#allocation3 + $0x5f] sm:$0xff]
        %v5399 = vld [vmem:[#allocation3 + $0x67] sm:$0xff]
        %v5400 = vld [vmem:[#allocation3 + $0x6f] sm:$0xff]
        %v5401 = vld [vmem:[#allocation3 + $0x77] sm:$0xff]
        %v5402 = vld [vmem:[#allocation3 + $0x7f] sm:$0xff]
        %v5403 = vld [vmem:[#allocation3 + $0x87] sm:$0xff]
        %v5404 = vld [vmem:[#allocation3 + $0x8f] sm:$0xff]
        %v5405 = vld [vmem:[#allocation3 + $0x97] sm:$0xff]
        %v5406 = vld [vmem:[#allocation3 + $0x9f] sm:$0xff]
        %v5407 = vld [vmem:[#allocation3 + $0xa7] sm:$0xff]
        %v5408 = vld [vmem:[#allocation3 + $0xaf] sm:$0xff]
        %v5409 = vld [vmem:[#allocation3 + $0xb7] sm:$0xff]
        %v5410 = vld [vmem:[#allocation3 + $0xbf] sm:$0xff]
        %v5411 = vld [vmem:[#allocation3 + $0xc7] sm:$0xff]
        %v5412 = vld [vmem:[#allocation3 + $0xcf] sm:$0xff]
        %v5413 = vld [vmem:[#allocation3 + $0xd7] sm:$0xff]
        %v5414 = vld [vmem:[#allocation3 + $0xdf] sm:$0xff]
        %v5415 = vld [vmem:[#allocation3 + $0xe7] sm:$0xff]
        %v5416 = vld [vmem:[#allocation3 + $0xef] sm:$0xff]
        %v5417 = vld [vmem:[#allocation3 + $0xf7] sm:$0xff]
        %v5418 = vld [vmem:[#allocation3 + $0xff] sm:$0xff]
        %v5419 = vld [vmem:[#allocation3 + $0x107] sm:$0xff]
        %v5420 = vld [vmem:[#allocation3 + $0x10f] sm:$0xff]
        %v5421 = vsel %vm1141, %v5389, 0.0
        %v5422 = vsel %vm1142, %v5390, 0.0
        %v5423 = vsel %vm1143, %v5391, 0.0
        %v5424 = vsel %vm1144, %v5392, 0.0
        %v5425 = vsel %vm1145, %v5393, 0.0
        %v5426 = vsel %vm1146, %v5394, 0.0
        %v5427 = vsel %vm1147, %v5395, 0.0
        %v5428 = vsel %vm1148, %v5396, 0.0
        %v5429 = vsel %vm1149, %v5397, 0.0
        %v5430 = vsel %vm1150, %v5398, 0.0
        %v5431 = vsel %vm1151, %v5399, 0.0
        %v5432 = vsel %vm1152, %v5400, 0.0
        %v5433 = vsel %vm1153, %v5401, 0.0
        %v5434 = vsel %vm1154, %v5402, 0.0
        %v5435 = vsel %vm1155, %v5403, 0.0
        %v5436 = vsel %vm1156, %v5404, 0.0
        %v5437 = vsel %vm1157, %v5405, 0.0
        %v5438 = vsel %vm1158, %v5406, 0.0
        %v5439 = vsel %vm1159, %v5407, 0.0
        %v5440 = vsel %vm1160, %v5408, 0.0
        %v5441 = vsel %vm1161, %v5409, 0.0
        %v5442 = vsel %vm1162, %v5410, 0.0
        %v5443 = vsel %vm1163, %v5411, 0.0
        %v5444 = vsel %vm1164, %v5412, 0.0
        %v5445 = vsel %vm1165, %v5413, 0.0
        %v5446 = vsel %vm1166, %v5414, 0.0
        %v5447 = vsel %vm1167, %v5415, 0.0
        %v5448 = vsel %vm1168, %v5416, 0.0
        %v5449 = vsel %vm1169, %v5417, 0.0
        %v5450 = vsel %vm1170, %v5418, 0.0
        %v5451 = vsel %vm1171, %v5419, 0.0
        %v5452 = vsel %vm1172, %v5420, 0.0
        %v5453 = vpack.c.bf16 %v5422, %v5421
        %v5454 = vpack.c.bf16 %v5424, %v5423
        %v5455 = vpack.c.bf16 %v5426, %v5425
        %v5456 = vpack.c.bf16 %v5428, %v5427
        %v5457 = vpack.c.bf16 %v5430, %v5429
        %v5458 = vpack.c.bf16 %v5432, %v5431
        %v5459 = vpack.c.bf16 %v5434, %v5433
        %v5460 = vpack.c.bf16 %v5436, %v5435
        %v5461 = vpack.c.bf16 %v5438, %v5437
        %v5462 = vpack.c.bf16 %v5440, %v5439
        %v5463 = vpack.c.bf16 %v5442, %v5441
        %v5464 = vpack.c.bf16 %v5444, %v5443
        %v5465 = vpack.c.bf16 %v5446, %v5445
        %v5466 = vpack.c.bf16 %v5448, %v5447
        %v5467 = vpack.c.bf16 %v5450, %v5449
        %v5468 = vpack.c.bf16 %v5452, %v5451
        %s5469 = scalar_lea.vmem %s7, 48
        %v5470 = vld [vmem:[%s5469] sm:$0xff]
        %v5471 = vld [vmem:[%s5469 + $0x8] sm:$0xff]
        %v5472 = vpack.c.bf16 %v5471, %v5470
        %v5474 = vsel %vm4440, %v5453, 0
        %v5477 = vsel %vm4440, %v5454, 0
        %v5480 = vsel %vm4440, %v5455, 0
        %v5483 = vsel %vm4440, %v5456, 0
        %v5486 = vsel %vm4440, %v5457, 0
        %v5489 = vsel %vm4440, %v5458, 0
        %v5492 = vsel %vm4440, %v5459, 0
        %v5495 = vsel %vm4440, %v5460, 0
        %v5498 = vsel %vm4440, %v5461, 0
        %v5501 = vsel %vm4440, %v5462, 0
        %v5504 = vsel %vm4440, %v5463, 0
        %v5507 = vsel %vm4440, %v5464, 0
        %v5510 = vsel %vm4440, %v5465, 0
        %v5513 = vsel %vm4440, %v5466, 0
        %v5516 = vsel %vm4440, %v5467, 0
        %v5519 = vsel %vm4440, %v5468, 0
        %5521 = vmatprep.subr.bf16.mxu0 0
        %5522 = vmatpush1.bf16.msra.mxu0 %v5472
        %5523 = vmatprep.subr.bf16.mxu0 0
        %5524 = vmatpush1.bf16.msra.mxu0 0
        %5525 = vmatprep.subr.bf16.mxu0 0
        %5526 = vmatpush1.bf16.msra.mxu0 0
        %5527 = vmatprep.subr.bf16.mxu0 0
        %5528 = vmatpush1.bf16.msra.mxu0 0
        %5529 = vmatprep.subr.bf16.mxu0 0
        %5530 = vmatpush1.bf16.msra.mxu0 0
        %5531 = vmatprep.subr.bf16.mxu0 0
        %5532 = vmatpush1.bf16.msra.mxu0 0
        %5533 = vmatprep.subr.bf16.mxu0 0
        %5534 = vmatpush1.bf16.msra.mxu0 0
        %5535 = vmatprep.subr.bf16.mxu0 0
        %5536 = vmatpush1.bf16.msra.mxu0 0
        %5537 = vmatprep.subr.bf16.mxu0 0
        %5538 = vmatpush1.bf16.msra.mxu0 0
        %5539 = vmatprep.subr.bf16.mxu0 0
        %5540 = vmatpush1.bf16.msra.mxu0 0
        %5541 = vmatprep.subr.bf16.mxu0 0
        %5542 = vmatpush1.bf16.msra.mxu0 0
        %5543 = vmatprep.subr.bf16.mxu0 0
        %5544 = vmatpush1.bf16.msra.mxu0 0
        %5545 = vmatprep.subr.bf16.mxu0 0
        %5546 = vmatpush1.bf16.msra.mxu0 0
        %5547 = vmatprep.subr.bf16.mxu0 0
        %5548 = vmatpush1.bf16.msra.mxu0 0
        %5549 = vmatprep.subr.bf16.mxu0 0
        %5550 = vmatpush1.bf16.msra.mxu0 0
        %5551 = vmatprep.subr.bf16.mxu0 0
        %5552 = vmatpush1.bf16.msra.mxu0 0
        %5553 = vmatprep.mubr.bf16.mxu0 0
        %5554 = vmatmul.mubr.bf16.gmra.mrb[0].mxu0 %v5474
        %v5555 = vpop.f32.mrb[0].mxu0
        %v5556 = vadd.f32 0.0, %v5555
        %v5557 = vpop.f32.mrb[0].mxu0
        %v5558 = vpop.f32.mrb[0].mxu0
        %v5559 = vadd.f32 0.0, %v5558
        %v5560 = vpop.f32.mrb[0].mxu0
        %5561 = vmatprep.mubr.bf16.mxu0 0
        %5562 = vmatmul.mubr.bf16.gmra.mrb[0].mxu0 %v5477
        %v5563 = vpop.f32.mrb[0].mxu0
        %v5564 = vadd.f32 0.0, %v5563
        %v5565 = vpop.f32.mrb[0].mxu0
        %v5566 = vpop.f32.mrb[0].mxu0
        %v5567 = vadd.f32 0.0, %v5566
        %v5568 = vpop.f32.mrb[0].mxu0
        %5569 = vmatprep.mubr.bf16.mxu0 0
        %5570 = vmatmul.mubr.bf16.gmra.mrb[0].mxu0 %v5480
        %v5571 = vpop.f32.mrb[0].mxu0
        %v5572 = vadd.f32 0.0, %v5571
        %v5573 = vpop.f32.mrb[0].mxu0
        %v5574 = vpop.f32.mrb[0].mxu0
        %v5575 = vadd.f32 0.0, %v5574
        %v5576 = vpop.f32.mrb[0].mxu0
        %5577 = vmatprep.mubr.bf16.mxu0 0
        %5578 = vmatmul.mubr.bf16.gmra.mrb[0].mxu0 %v5483
        %v5579 = vpop.f32.mrb[0].mxu0
        %v5580 = vadd.f32 0.0, %v5579
        %v5581 = vpop.f32.mrb[0].mxu0
        %v5582 = vpop.f32.mrb[0].mxu0
        %v5583 = vadd.f32 0.0, %v5582
        %v5584 = vpop.f32.mrb[0].mxu0
        %5585 = vmatprep.mubr.bf16.mxu0 0
        %5586 = vmatmul.mubr.bf16.gmra.mrb[0].mxu0 %v5486
        %v5587 = vpop.f32.mrb[0].mxu0
        %v5588 = vadd.f32 0.0, %v5587
        %v5589 = vpop.f32.mrb[0].mxu0
        %v5590 = vpop.f32.mrb[0].mxu0
        %v5591 = vadd.f32 0.0, %v5590
        %v5592 = vpop.f32.mrb[0].mxu0
        %5593 = vmatprep.mubr.bf16.mxu0 0
        %5594 = vmatmul.mubr.bf16.gmra.mrb[0].mxu0 %v5489
        %v5595 = vpop.f32.mrb[0].mxu0
        %v5596 = vadd.f32 0.0, %v5595
        %v5597 = vpop.f32.mrb[0].mxu0
        %v5598 = vpop.f32.mrb[0].mxu0
        %v5599 = vadd.f32 0.0, %v5598
        %v5600 = vpop.f32.mrb[0].mxu0
        %5601 = vmatprep.mubr.bf16.mxu0 0
        %5602 = vmatmul.mubr.bf16.gmra.mrb[0].mxu0 %v5492
        %v5603 = vpop.f32.mrb[0].mxu0
        %v5604 = vadd.f32 0.0, %v5603
        %v5605 = vpop.f32.mrb[0].mxu0
        %v5606 = vpop.f32.mrb[0].mxu0
        %v5607 = vadd.f32 0.0, %v5606
        %v5608 = vpop.f32.mrb[0].mxu0
        %5609 = vmatprep.mubr.bf16.mxu0 0
        %5610 = vmatmul.mubr.bf16.gmra.mrb[0].mxu0 %v5495
        %v5611 = vpop.f32.mrb[0].mxu0
        %v5612 = vadd.f32 0.0, %v5611
        %v5613 = vpop.f32.mrb[0].mxu0
        %v5614 = vpop.f32.mrb[0].mxu0
        %v5615 = vadd.f32 0.0, %v5614
        %v5616 = vpop.f32.mrb[0].mxu0
        %5617 = vmatprep.mubr.bf16.mxu0 0
        %5618 = vmatmul.mubr.bf16.gmra.mrb[0].mxu0 %v5498
        %v5619 = vpop.f32.mrb[0].mxu0
        %v5620 = vadd.f32 0.0, %v5619
        %v5621 = vpop.f32.mrb[0].mxu0
        %v5622 = vpop.f32.mrb[0].mxu0
        %v5623 = vadd.f32 0.0, %v5622
        %v5624 = vpop.f32.mrb[0].mxu0
        %5625 = vmatprep.mubr.bf16.mxu0 0
        %5626 = vmatmul.mubr.bf16.gmra.mrb[0].mxu0 %v5501
        %v5627 = vpop.f32.mrb[0].mxu0
        %v5628 = vadd.f32 0.0, %v5627
        %v5629 = vpop.f32.mrb[0].mxu0
        %v5630 = vpop.f32.mrb[0].mxu0
        %v5631 = vadd.f32 0.0, %v5630
        %v5632 = vpop.f32.mrb[0].mxu0
        %5633 = vmatprep.mubr.bf16.mxu0 0
        %5634 = vmatmul.mubr.bf16.gmra.mrb[0].mxu0 %v5504
        %v5635 = vpop.f32.mrb[0].mxu0
        %v5636 = vadd.f32 0.0, %v5635
        %v5637 = vpop.f32.mrb[0].mxu0
        %v5638 = vpop.f32.mrb[0].mxu0
        %v5639 = vadd.f32 0.0, %v5638
        %v5640 = vpop.f32.mrb[0].mxu0
        %5641 = vmatprep.mubr.bf16.mxu0 0
        %5642 = vmatmul.mubr.bf16.gmra.mrb[0].mxu0 %v5507
        %v5643 = vpop.f32.mrb[0].mxu0
        %v5644 = vadd.f32 0.0, %v5643
        %v5645 = vpop.f32.mrb[0].mxu0
        %v5646 = vpop.f32.mrb[0].mxu0
        %v5647 = vadd.f32 0.0, %v5646
        %v5648 = vpop.f32.mrb[0].mxu0
        %5649 = vmatprep.mubr.bf16.mxu0 0
        %5650 = vmatmul.mubr.bf16.gmra.mrb[0].mxu0 %v5510
        %v5651 = vpop.f32.mrb[0].mxu0
        %v5652 = vadd.f32 0.0, %v5651
        %v5653 = vpop.f32.mrb[0].mxu0
        %v5654 = vpop.f32.mrb[0].mxu0
        %v5655 = vadd.f32 0.0, %v5654
        %v5656 = vpop.f32.mrb[0].mxu0
        %5657 = vmatprep.mubr.bf16.mxu0 0
        %5658 = vmatmul.mubr.bf16.gmra.mrb[0].mxu0 %v5513
        %v5659 = vpop.f32.mrb[0].mxu0
        %v5660 = vadd.f32 0.0, %v5659
        %v5661 = vpop.f32.mrb[0].mxu0
        %v5662 = vpop.f32.mrb[0].mxu0
        %v5663 = vadd.f32 0.0, %v5662
        %v5664 = vpop.f32.mrb[0].mxu0
        %5665 = vmatprep.mubr.bf16.mxu0 0
        %5666 = vmatmul.mubr.bf16.gmra.mrb[0].mxu0 %v5516
        %v5667 = vpop.f32.mrb[0].mxu0
        %v5668 = vadd.f32 0.0, %v5667
        %v5669 = vpop.f32.mrb[0].mxu0
        %v5670 = vpop.f32.mrb[0].mxu0
        %v5671 = vadd.f32 0.0, %v5670
        %v5672 = vpop.f32.mrb[0].mxu0
        %5673 = vmatprep.mubr.bf16.mxu0 0
        %5674 = vmatmul.mubr.bf16.gmra.mrb[0].mxu0 %v5519
        %v5675 = vpop.f32.mrb[0].mxu0
        %v5676 = vadd.f32 0.0, %v5675
        %v5677 = vpop.f32.mrb[0].mxu0
        %v5678 = vpop.f32.mrb[0].mxu0
        %v5679 = vadd.f32 0.0, %v5678
        %v5680 = vpop.f32.mrb[0].mxu0
        %5681 = vdwg.mxu0
        %v5682 = vadd.f32 %v5357, %v5556
        %v5683 = vadd.f32 %v5358, %v5559
        %v5684 = vadd.f32 %v5359, %v5564
        %v5685 = vadd.f32 %v5360, %v5567
        %v5686 = vadd.f32 %v5361, %v5572
        %v5687 = vadd.f32 %v5362, %v5575
        %v5688 = vadd.f32 %v5363, %v5580
        %v5689 = vadd.f32 %v5364, %v5583
        %v5690 = vadd.f32 %v5365, %v5588
        %v5691 = vadd.f32 %v5366, %v5591
        %v5692 = vadd.f32 %v5367, %v5596
        %v5693 = vadd.f32 %v5368, %v5599
        %v5694 = vadd.f32 %v5369, %v5604
        %v5695 = vadd.f32 %v5370, %v5607
        %v5696 = vadd.f32 %v5371, %v5612
        %v5697 = vadd.f32 %v5372, %v5615
        %v5698 = vadd.f32 %v5373, %v5620
        %v5699 = vadd.f32 %v5374, %v5623
        %v5700 = vadd.f32 %v5375, %v5628
        %v5701 = vadd.f32 %v5376, %v5631
        %v5702 = vadd.f32 %v5377, %v5636
        %v5703 = vadd.f32 %v5378, %v5639
        %v5704 = vadd.f32 %v5379, %v5644
        %v5705 = vadd.f32 %v5380, %v5647
        %v5706 = vadd.f32 %v5381, %v5652
        %v5707 = vadd.f32 %v5382, %v5655
        %v5708 = vadd.f32 %v5383, %v5660
        %v5709 = vadd.f32 %v5384, %v5663
        %v5710 = vadd.f32 %v5385, %v5668
        %v5711 = vadd.f32 %v5386, %v5671
        %v5712 = vadd.f32 %v5387, %v5676
        %v5713 = vadd.f32 %v5388, %v5679
        %v5714 = vld [vmem:[#allocation3 + $0x18] sm:$0xff]
        %v5715 = vld [vmem:[#allocation3 + $0x20] sm:$0xff]
        %v5716 = vld [vmem:[#allocation3 + $0x28] sm:$0xff]
        %v5717 = vld [vmem:[#allocation3 + $0x30] sm:$0xff]
        %v5718 = vld [vmem:[#allocation3 + $0x38] sm:$0xff]
        %v5719 = vld [vmem:[#allocation3 + $0x40] sm:$0xff]
        %v5720 = vld [vmem:[#allocation3 + $0x48] sm:$0xff]
        %v5721 = vld [vmem:[#allocation3 + $0x50] sm:$0xff]
        %v5722 = vld [vmem:[#allocation3 + $0x58] sm:$0xff]
        %v5723 = vld [vmem:[#allocation3 + $0x60] sm:$0xff]
        %v5724 = vld [vmem:[#allocation3 + $0x68] sm:$0xff]
        %v5725 = vld [vmem:[#allocation3 + $0x70] sm:$0xff]
        %v5726 = vld [vmem:[#allocation3 + $0x78] sm:$0xff]
        %v5727 = vld [vmem:[#allocation3 + $0x80] sm:$0xff]
        %v5728 = vld [vmem:[#allocation3 + $0x88] sm:$0xff]
        %v5729 = vld [vmem:[#allocation3 + $0x90] sm:$0xff]
        %v5730 = vld [vmem:[#allocation3 + $0x98] sm:$0xff]
        %v5731 = vld [vmem:[#allocation3 + $0xa0] sm:$0xff]
        %v5732 = vld [vmem:[#allocation3 + $0xa8] sm:$0xff]
        %v5733 = vld [vmem:[#allocation3 + $0xb0] sm:$0xff]
        %v5734 = vld [vmem:[#allocation3 + $0xb8] sm:$0xff]
        %v5735 = vld [vmem:[#allocation3 + $0xc0] sm:$0xff]
        %v5736 = vld [vmem:[#allocation3 + $0xc8] sm:$0xff]
        %v5737 = vld [vmem:[#allocation3 + $0xd0] sm:$0xff]
        %v5738 = vld [vmem:[#allocation3 + $0xd8] sm:$0xff]
        %v5739 = vld [vmem:[#allocation3 + $0xe0] sm:$0xff]
        %v5740 = vld [vmem:[#allocation3 + $0xe8] sm:$0xff]
        %v5741 = vld [vmem:[#allocation3 + $0xf0] sm:$0xff]
        %v5742 = vld [vmem:[#allocation3 + $0xf8] sm:$0xff]
        %v5743 = vld [vmem:[#allocation3 + $0x100] sm:$0xff]
        %v5744 = vld [vmem:[#allocation3 + $0x108] sm:$0xff]
        %v5745 = vld [vmem:[#allocation3 + $0x110] sm:$0xff]
        %v5746 = vpack.c.bf16 %v5715, %v5714
        %v5747 = vpack.c.bf16 %v5717, %v5716
        %v5748 = vpack.c.bf16 %v5719, %v5718
        %v5749 = vpack.c.bf16 %v5721, %v5720
        %v5750 = vpack.c.bf16 %v5723, %v5722
        %v5751 = vpack.c.bf16 %v5725, %v5724
        %v5752 = vpack.c.bf16 %v5727, %v5726
        %v5753 = vpack.c.bf16 %v5729, %v5728
        %v5754 = vpack.c.bf16 %v5731, %v5730
        %v5755 = vpack.c.bf16 %v5733, %v5732
        %v5756 = vpack.c.bf16 %v5735, %v5734
        %v5757 = vpack.c.bf16 %v5737, %v5736
        %v5758 = vpack.c.bf16 %v5739, %v5738
        %v5759 = vpack.c.bf16 %v5741, %v5740
        %v5760 = vpack.c.bf16 %v5743, %v5742
        %v5761 = vpack.c.bf16 %v5745, %v5744
        %s5762 = scalar_lea.vmem %s7, 64
        %v5763 = vld [vmem:[%s5762] sm:$0xff]
        %v5764 = vld [vmem:[%s5762 + $0x8] sm:$0xff]
        %v5765 = vpack.c.bf16 %v5764, %v5763
        %v5767 = vsel %vm4440, %v5746, 0
        %v5770 = vsel %vm4440, %v5747, 0
        %v5773 = vsel %vm4440, %v5748, 0
        %v5776 = vsel %vm4440, %v5749, 0
        %v5779 = vsel %vm4440, %v5750, 0
        %v5782 = vsel %vm4440, %v5751, 0
        %v5785 = vsel %vm4440, %v5752, 0
        %v5788 = vsel %vm4440, %v5753, 0
        %v5791 = vsel %vm4440, %v5754, 0
        %v5794 = vsel %vm4440, %v5755, 0
        %v5797 = vsel %vm4440, %v5756, 0
        %v5800 = vsel %vm4440, %v5757, 0
        %v5803 = vsel %vm4440, %v5758, 0
        %v5806 = vsel %vm4440, %v5759, 0
        %v5809 = vsel %vm4440, %v5760, 0
        %v5812 = vsel %vm4440, %v5761, 0
        %5814 = vmatprep.subr.bf16.mxu0 0
        %5815 = vmatpush1.bf16.msra.mxu0 %v5765
        %5816 = vmatprep.subr.bf16.mxu0 0
        %5817 = vmatpush1.bf16.msra.mxu0 0
        %5818 = vmatprep.subr.bf16.mxu0 0
        %5819 = vmatpush1.bf16.msra.mxu0 0
        %5820 = vmatprep.subr.bf16.mxu0 0
        %5821 = vmatpush1.bf16.msra.mxu0 0
        %5822 = vmatprep.subr.bf16.mxu0 0
        %5823 = vmatpush1.bf16.msra.mxu0 0
        %5824 = vmatprep.subr.bf16.mxu0 0
        %5825 = vmatpush1.bf16.msra.mxu0 0
        %5826 = vmatprep.subr.bf16.mxu0 0
        %5827 = vmatpush1.bf16.msra.mxu0 0
        %5828 = vmatprep.subr.bf16.mxu0 0
        %5829 = vmatpush1.bf16.msra.mxu0 0
        %5830 = vmatprep.subr.bf16.mxu0 0
        %5831 = vmatpush1.bf16.msra.mxu0 0
        %5832 = vmatprep.subr.bf16.mxu0 0
        %5833 = vmatpush1.bf16.msra.mxu0 0
        %5834 = vmatprep.subr.bf16.mxu0 0
        %5835 = vmatpush1.bf16.msra.mxu0 0
        %5836 = vmatprep.subr.bf16.mxu0 0
        %5837 = vmatpush1.bf16.msra.mxu0 0
        %5838 = vmatprep.subr.bf16.mxu0 0
        %5839 = vmatpush1.bf16.msra.mxu0 0
        %5840 = vmatprep.subr.bf16.mxu0 0
        %5841 = vmatpush1.bf16.msra.mxu0 0
        %5842 = vmatprep.subr.bf16.mxu0 0
        %5843 = vmatpush1.bf16.msra.mxu0 0
        %5844 = vmatprep.subr.bf16.mxu0 0
        %5845 = vmatpush1.bf16.msra.mxu0 0
        %5846 = vmatprep.mubr.bf16.mxu0 0
        %5847 = vmatmul.mubr.bf16.gmra.mrb[0].mxu0 %v5767
        %v5848 = vpop.f32.mrb[0].mxu0
        %v5849 = vadd.f32 0.0, %v5848
        %v5850 = vpop.f32.mrb[0].mxu0
        %v5851 = vpop.f32.mrb[0].mxu0
        %v5852 = vadd.f32 0.0, %v5851
        %v5853 = vpop.f32.mrb[0].mxu0
        %5854 = vmatprep.mubr.bf16.mxu0 0
        %5855 = vmatmul.mubr.bf16.gmra.mrb[0].mxu0 %v5770
        %v5856 = vpop.f32.mrb[0].mxu0
        %v5857 = vadd.f32 0.0, %v5856
        %v5858 = vpop.f32.mrb[0].mxu0
        %v5859 = vpop.f32.mrb[0].mxu0
        %v5860 = vadd.f32 0.0, %v5859
        %v5861 = vpop.f32.mrb[0].mxu0
        %5862 = vmatprep.mubr.bf16.mxu0 0
        %5863 = vmatmul.mubr.bf16.gmra.mrb[0].mxu0 %v5773
        %v5864 = vpop.f32.mrb[0].mxu0
        %v5865 = vadd.f32 0.0, %v5864
        %v5866 = vpop.f32.mrb[0].mxu0
        %v5867 = vpop.f32.mrb[0].mxu0
        %v5868 = vadd.f32 0.0, %v5867
        %v5869 = vpop.f32.mrb[0].mxu0
        %5870 = vmatprep.mubr.bf16.mxu0 0
        %5871 = vmatmul.mubr.bf16.gmra.mrb[0].mxu0 %v5776
        %v5872 = vpop.f32.mrb[0].mxu0
        %v5873 = vadd.f32 0.0, %v5872
        %v5874 = vpop.f32.mrb[0].mxu0
        %v5875 = vpop.f32.mrb[0].mxu0
        %v5876 = vadd.f32 0.0, %v5875
        %v5877 = vpop.f32.mrb[0].mxu0
        %5878 = vmatprep.mubr.bf16.mxu0 0
        %5879 = vmatmul.mubr.bf16.gmra.mrb[0].mxu0 %v5779
        %v5880 = vpop.f32.mrb[0].mxu0
        %v5881 = vadd.f32 0.0, %v5880
        %v5882 = vpop.f32.mrb[0].mxu0
        %v5883 = vpop.f32.mrb[0].mxu0
        %v5884 = vadd.f32 0.0, %v5883
        %v5885 = vpop.f32.mrb[0].mxu0
        %5886 = vmatprep.mubr.bf16.mxu0 0
        %5887 = vmatmul.mubr.bf16.gmra.mrb[0].mxu0 %v5782
        %v5888 = vpop.f32.mrb[0].mxu0
        %v5889 = vadd.f32 0.0, %v5888
        %v5890 = vpop.f32.mrb[0].mxu0
        %v5891 = vpop.f32.mrb[0].mxu0
        %v5892 = vadd.f32 0.0, %v5891
        %v5893 = vpop.f32.mrb[0].mxu0
        %5894 = vmatprep.mubr.bf16.mxu0 0
        %5895 = vmatmul.mubr.bf16.gmra.mrb[0].mxu0 %v5785
        %v5896 = vpop.f32.mrb[0].mxu0
        %v5897 = vadd.f32 0.0, %v5896
        %v5898 = vpop.f32.mrb[0].mxu0
        %v5899 = vpop.f32.mrb[0].mxu0
        %v5900 = vadd.f32 0.0, %v5899
        %v5901 = vpop.f32.mrb[0].mxu0
        %5902 = vmatprep.mubr.bf16.mxu0 0
        %5903 = vmatmul.mubr.bf16.gmra.mrb[0].mxu0 %v5788
        %v5904 = vpop.f32.mrb[0].mxu0
        %v5905 = vadd.f32 0.0, %v5904
        %v5906 = vpop.f32.mrb[0].mxu0
        %v5907 = vpop.f32.mrb[0].mxu0
        %v5908 = vadd.f32 0.0, %v5907
        %v5909 = vpop.f32.mrb[0].mxu0
        %5910 = vmatprep.mubr.bf16.mxu0 0
        %5911 = vmatmul.mubr.bf16.gmra.mrb[0].mxu0 %v5791
        %v5912 = vpop.f32.mrb[0].mxu0
        %v5913 = vadd.f32 0.0, %v5912
        %v5914 = vpop.f32.mrb[0].mxu0
        %v5915 = vpop.f32.mrb[0].mxu0
        %v5916 = vadd.f32 0.0, %v5915
        %v5917 = vpop.f32.mrb[0].mxu0
        %5918 = vmatprep.mubr.bf16.mxu0 0
        %5919 = vmatmul.mubr.bf16.gmra.mrb[0].mxu0 %v5794
        %v5920 = vpop.f32.mrb[0].mxu0
        %v5921 = vadd.f32 0.0, %v5920
        %v5922 = vpop.f32.mrb[0].mxu0
        %v5923 = vpop.f32.mrb[0].mxu0
        %v5924 = vadd.f32 0.0, %v5923
        %v5925 = vpop.f32.mrb[0].mxu0
        %5926 = vmatprep.mubr.bf16.mxu0 0
        %5927 = vmatmul.mubr.bf16.gmra.mrb[0].mxu0 %v5797
        %v5928 = vpop.f32.mrb[0].mxu0
        %v5929 = vadd.f32 0.0, %v5928
        %v5930 = vpop.f32.mrb[0].mxu0
        %v5931 = vpop.f32.mrb[0].mxu0
        %v5932 = vadd.f32 0.0, %v5931
        %v5933 = vpop.f32.mrb[0].mxu0
        %5934 = vmatprep.mubr.bf16.mxu0 0
        %5935 = vmatmul.mubr.bf16.gmra.mrb[0].mxu0 %v5800
        %v5936 = vpop.f32.mrb[0].mxu0
        %v5937 = vadd.f32 0.0, %v5936
        %v5938 = vpop.f32.mrb[0].mxu0
        %v5939 = vpop.f32.mrb[0].mxu0
        %v5940 = vadd.f32 0.0, %v5939
        %v5941 = vpop.f32.mrb[0].mxu0
        %5942 = vmatprep.mubr.bf16.mxu0 0
        %5943 = vmatmul.mubr.bf16.gmra.mrb[0].mxu0 %v5803
        %v5944 = vpop.f32.mrb[0].mxu0
        %v5945 = vadd.f32 0.0, %v5944
        %v5946 = vpop.f32.mrb[0].mxu0
        %v5947 = vpop.f32.mrb[0].mxu0
        %v5948 = vadd.f32 0.0, %v5947
        %v5949 = vpop.f32.mrb[0].mxu0
        %5950 = vmatprep.mubr.bf16.mxu0 0
        %5951 = vmatmul.mubr.bf16.gmra.mrb[0].mxu0 %v5806
        %v5952 = vpop.f32.mrb[0].mxu0
        %v5953 = vadd.f32 0.0, %v5952
        %v5954 = vpop.f32.mrb[0].mxu0
        %v5955 = vpop.f32.mrb[0].mxu0
        %v5956 = vadd.f32 0.0, %v5955
        %v5957 = vpop.f32.mrb[0].mxu0
        %5958 = vmatprep.mubr.bf16.mxu0 0
        %5959 = vmatmul.mubr.bf16.gmra.mrb[0].mxu0 %v5809
        %v5960 = vpop.f32.mrb[0].mxu0
        %v5961 = vadd.f32 0.0, %v5960
        %v5962 = vpop.f32.mrb[0].mxu0
        %v5963 = vpop.f32.mrb[0].mxu0
        %v5964 = vadd.f32 0.0, %v5963
        %v5965 = vpop.f32.mrb[0].mxu0
        %5966 = vmatprep.mubr.bf16.mxu0 0
        %5967 = vmatmul.mubr.bf16.gmra.mrb[0].mxu0 %v5812
        %v5968 = vpop.f32.mrb[0].mxu0
        %v5969 = vadd.f32 0.0, %v5968
        %v5970 = vpop.f32.mrb[0].mxu0
        %v5971 = vpop.f32.mrb[0].mxu0
        %v5972 = vadd.f32 0.0, %v5971
        %v5973 = vpop.f32.mrb[0].mxu0
        %5974 = vdwg.mxu0
        %v5975 = vadd.f32 %v5682, %v5849
        %v5976 = vadd.f32 %v5683, %v5852
        %v5977 = vadd.f32 %v5684, %v5857
        %v5978 = vadd.f32 %v5685, %v5860
        %v5979 = vadd.f32 %v5686, %v5865
        %v5980 = vadd.f32 %v5687, %v5868
        %v5981 = vadd.f32 %v5688, %v5873
        %v5982 = vadd.f32 %v5689, %v5876
        %v5983 = vadd.f32 %v5690, %v5881
        %v5984 = vadd.f32 %v5691, %v5884
        %v5985 = vadd.f32 %v5692, %v5889
        %v5986 = vadd.f32 %v5693, %v5892
        %v5987 = vadd.f32 %v5694, %v5897
        %v5988 = vadd.f32 %v5695, %v5900
        %v5989 = vadd.f32 %v5696, %v5905
        %v5990 = vadd.f32 %v5697, %v5908
        %v5991 = vadd.f32 %v5698, %v5913
        %v5992 = vadd.f32 %v5699, %v5916
        %v5993 = vadd.f32 %v5700, %v5921
        %v5994 = vadd.f32 %v5701, %v5924
        %v5995 = vadd.f32 %v5702, %v5929
        %v5996 = vadd.f32 %v5703, %v5932
        %v5997 = vadd.f32 %v5704, %v5937
        %v5998 = vadd.f32 %v5705, %v5940
        %v5999 = vadd.f32 %v5706, %v5945
        %v6000 = vadd.f32 %v5707, %v5948
        %v6001 = vadd.f32 %v5708, %v5953
        %v6002 = vadd.f32 %v5709, %v5956
        %v6003 = vadd.f32 %v5710, %v5961
        %v6004 = vadd.f32 %v5711, %v5964
        %v6005 = vadd.f32 %v5712, %v5969
        %v6006 = vadd.f32 %v5713, %v5972
        %v6007 = vld [vmem:[#allocation3 + $0x19] sm:$0xff]
        %v6008 = vld [vmem:[#allocation3 + $0x21] sm:$0xff]
        %v6009 = vld [vmem:[#allocation3 + $0x29] sm:$0xff]
        %v6010 = vld [vmem:[#allocation3 + $0x31] sm:$0xff]
        %v6011 = vld [vmem:[#allocation3 + $0x39] sm:$0xff]
        %v6012 = vld [vmem:[#allocation3 + $0x41] sm:$0xff]
        %v6013 = vld [vmem:[#allocation3 + $0x49] sm:$0xff]
        %v6014 = vld [vmem:[#allocation3 + $0x51] sm:$0xff]
        %v6015 = vld [vmem:[#allocation3 + $0x59] sm:$0xff]
        %v6016 = vld [vmem:[#allocation3 + $0x61] sm:$0xff]
        %v6017 = vld [vmem:[#allocation3 + $0x69] sm:$0xff]
        %v6018 = vld [vmem:[#allocation3 + $0x71] sm:$0xff]
        %v6019 = vld [vmem:[#allocation3 + $0x79] sm:$0xff]
        %v6020 = vld [vmem:[#allocation3 + $0x81] sm:$0xff]
        %v6021 = vld [vmem:[#allocation3 + $0x89] sm:$0xff]
        %v6022 = vld [vmem:[#allocation3 + $0x91] sm:$0xff]
        %v6023 = vld [vmem:[#allocation3 + $0x99] sm:$0xff]
        %v6024 = vld [vmem:[#allocation3 + $0xa1] sm:$0xff]
        %v6025 = vld [vmem:[#allocation3 + $0xa9] sm:$0xff]
        %v6026 = vld [vmem:[#allocation3 + $0xb1] sm:$0xff]
        %v6027 = vld [vmem:[#allocation3 + $0xb9] sm:$0xff]
        %v6028 = vld [vmem:[#allocation3 + $0xc1] sm:$0xff]
        %v6029 = vld [vmem:[#allocation3 + $0xc9] sm:$0xff]
        %v6030 = vld [vmem:[#allocation3 + $0xd1] sm:$0xff]
        %v6031 = vld [vmem:[#allocation3 + $0xd9] sm:$0xff]
        %v6032 = vld [vmem:[#allocation3 + $0xe1] sm:$0xff]
        %v6033 = vld [vmem:[#allocation3 + $0xe9] sm:$0xff]
        %v6034 = vld [vmem:[#allocation3 + $0xf1] sm:$0xff]
        %v6035 = vld [vmem:[#allocation3 + $0xf9] sm:$0xff]
        %v6036 = vld [vmem:[#allocation3 + $0x101] sm:$0xff]
        %v6037 = vld [vmem:[#allocation3 + $0x109] sm:$0xff]
        %v6038 = vld [vmem:[#allocation3 + $0x111] sm:$0xff]
        %v6039 = vsel %vm1763, %v6007, 0.0
        %v6040 = vsel %vm1764, %v6008, 0.0
        %v6041 = vsel %vm1765, %v6009, 0.0
        %v6042 = vsel %vm1766, %v6010, 0.0
        %v6043 = vsel %vm1767, %v6011, 0.0
        %v6044 = vsel %vm1768, %v6012, 0.0
        %v6045 = vsel %vm1769, %v6013, 0.0
        %v6046 = vsel %vm1770, %v6014, 0.0
        %v6047 = vsel %vm1771, %v6015, 0.0
        %v6048 = vsel %vm1772, %v6016, 0.0
        %v6049 = vsel %vm1773, %v6017, 0.0
        %v6050 = vsel %vm1774, %v6018, 0.0
        %v6051 = vsel %vm1775, %v6019, 0.0
        %v6052 = vsel %vm1776, %v6020, 0.0
        %v6053 = vsel %vm1777, %v6021, 0.0
        %v6054 = vsel %vm1778, %v6022, 0.0
        %v6055 = vsel %vm1779, %v6023, 0.0
        %v6056 = vsel %vm1780, %v6024, 0.0
        %v6057 = vsel %vm1781, %v6025, 0.0
        %v6058 = vsel %vm1782, %v6026, 0.0
        %v6059 = vsel %vm1783, %v6027, 0.0
        %v6060 = vsel %vm1784, %v6028, 0.0
        %v6061 = vsel %vm1785, %v6029, 0.0
        %v6062 = vsel %vm1786, %v6030, 0.0
        %v6063 = vsel %vm1787, %v6031, 0.0
        %v6064 = vsel %vm1788, %v6032, 0.0
        %v6065 = vsel %vm1789, %v6033, 0.0
        %v6066 = vsel %vm1790, %v6034, 0.0
        %v6067 = vsel %vm1791, %v6035, 0.0
        %v6068 = vsel %vm1792, %v6036, 0.0
        %v6069 = vsel %vm1793, %v6037, 0.0
        %v6070 = vsel %vm1794, %v6038, 0.0
        %v6071 = vpack.c.bf16 %v6040, %v6039
        %v6072 = vpack.c.bf16 %v6042, %v6041
        %v6073 = vpack.c.bf16 %v6044, %v6043
        %v6074 = vpack.c.bf16 %v6046, %v6045
        %v6075 = vpack.c.bf16 %v6048, %v6047
        %v6076 = vpack.c.bf16 %v6050, %v6049
        %v6077 = vpack.c.bf16 %v6052, %v6051
        %v6078 = vpack.c.bf16 %v6054, %v6053
        %v6079 = vpack.c.bf16 %v6056, %v6055
        %v6080 = vpack.c.bf16 %v6058, %v6057
        %v6081 = vpack.c.bf16 %v6060, %v6059
        %v6082 = vpack.c.bf16 %v6062, %v6061
        %v6083 = vpack.c.bf16 %v6064, %v6063
        %v6084 = vpack.c.bf16 %v6066, %v6065
        %v6085 = vpack.c.bf16 %v6068, %v6067
        %v6086 = vpack.c.bf16 %v6070, %v6069
        %s6087 = scalar_lea.vmem %s7, 80
        %v6088 = vld [vmem:[%s6087] sm:$0xff]
        %v6089 = vld [vmem:[%s6087 + $0x8] sm:$0xff]
        %v6090 = vpack.c.bf16 %v6089, %v6088
        %v6092 = vsel %vm4440, %v6071, 0
        %v6095 = vsel %vm4440, %v6072, 0
        %v6098 = vsel %vm4440, %v6073, 0
        %v6101 = vsel %vm4440, %v6074, 0
        %v6104 = vsel %vm4440, %v6075, 0
        %v6107 = vsel %vm4440, %v6076, 0
        %v6110 = vsel %vm4440, %v6077, 0
        %v6113 = vsel %vm4440, %v6078, 0
        %v6116 = vsel %vm4440, %v6079, 0
        %v6119 = vsel %vm4440, %v6080, 0
        %v6122 = vsel %vm4440, %v6081, 0
        %v6125 = vsel %vm4440, %v6082, 0
        %v6128 = vsel %vm4440, %v6083, 0
        %v6131 = vsel %vm4440, %v6084, 0
        %v6134 = vsel %vm4440, %v6085, 0
        %v6137 = vsel %vm4440, %v6086, 0
        %6139 = vmatprep.subr.bf16.mxu0 0
        %6140 = vmatpush1.bf16.msra.mxu0 %v6090
        %6141 = vmatprep.subr.bf16.mxu0 0
        %6142 = vmatpush1.bf16.msra.mxu0 0
        %6143 = vmatprep.subr.bf16.mxu0 0
        %6144 = vmatpush1.bf16.msra.mxu0 0
        %6145 = vmatprep.subr.bf16.mxu0 0
        %6146 = vmatpush1.bf16.msra.mxu0 0
        %6147 = vmatprep.subr.bf16.mxu0 0
        %6148 = vmatpush1.bf16.msra.mxu0 0
        %6149 = vmatprep.subr.bf16.mxu0 0
        %6150 = vmatpush1.bf16.msra.mxu0 0
        %6151 = vmatprep.subr.bf16.mxu0 0
        %6152 = vmatpush1.bf16.msra.mxu0 0
        %6153 = vmatprep.subr.bf16.mxu0 0
        %6154 = vmatpush1.bf16.msra.mxu0 0
        %6155 = vmatprep.subr.bf16.mxu0 0
        %6156 = vmatpush1.bf16.msra.mxu0 0
        %6157 = vmatprep.subr.bf16.mxu0 0
        %6158 = vmatpush1.bf16.msra.mxu0 0
        %6159 = vmatprep.subr.bf16.mxu0 0
        %6160 = vmatpush1.bf16.msra.mxu0 0
        %6161 = vmatprep.subr.bf16.mxu0 0
        %6162 = vmatpush1.bf16.msra.mxu0 0
        %6163 = vmatprep.subr.bf16.mxu0 0
        %6164 = vmatpush1.bf16.msra.mxu0 0
        %6165 = vmatprep.subr.bf16.mxu0 0
        %6166 = vmatpush1.bf16.msra.mxu0 0
        %6167 = vmatprep.subr.bf16.mxu0 0
        %6168 = vmatpush1.bf16.msra.mxu0 0
        %6169 = vmatprep.subr.bf16.mxu0 0
        %6170 = vmatpush1.bf16.msra.mxu0 0
        %6171 = vmatprep.mubr.bf16.mxu0 0
        %6172 = vmatmul.mubr.bf16.gmra.mrb[0].mxu0 %v6092
        %v6173 = vpop.f32.mrb[0].mxu0
        %v6174 = vadd.f32 0.0, %v6173
        %v6175 = vpop.f32.mrb[0].mxu0
        %v6176 = vpop.f32.mrb[0].mxu0
        %v6177 = vadd.f32 0.0, %v6176
        %v6178 = vpop.f32.mrb[0].mxu0
        %6179 = vmatprep.mubr.bf16.mxu0 0
        %6180 = vmatmul.mubr.bf16.gmra.mrb[0].mxu0 %v6095
        %v6181 = vpop.f32.mrb[0].mxu0
        %v6182 = vadd.f32 0.0, %v6181
        %v6183 = vpop.f32.mrb[0].mxu0
        %v6184 = vpop.f32.mrb[0].mxu0
        %v6185 = vadd.f32 0.0, %v6184
        %v6186 = vpop.f32.mrb[0].mxu0
        %6187 = vmatprep.mubr.bf16.mxu0 0
        %6188 = vmatmul.mubr.bf16.gmra.mrb[0].mxu0 %v6098
        %v6189 = vpop.f32.mrb[0].mxu0
        %v6190 = vadd.f32 0.0, %v6189
        %v6191 = vpop.f32.mrb[0].mxu0
        %v6192 = vpop.f32.mrb[0].mxu0
        %v6193 = vadd.f32 0.0, %v6192
        %v6194 = vpop.f32.mrb[0].mxu0
        %6195 = vmatprep.mubr.bf16.mxu0 0
        %6196 = vmatmul.mubr.bf16.gmra.mrb[0].mxu0 %v6101
        %v6197 = vpop.f32.mrb[0].mxu0
        %v6198 = vadd.f32 0.0, %v6197
        %v6199 = vpop.f32.mrb[0].mxu0
        %v6200 = vpop.f32.mrb[0].mxu0
        %v6201 = vadd.f32 0.0, %v6200
        %v6202 = vpop.f32.mrb[0].mxu0
        %6203 = vmatprep.mubr.bf16.mxu0 0
        %6204 = vmatmul.mubr.bf16.gmra.mrb[0].mxu0 %v6104
        %v6205 = vpop.f32.mrb[0].mxu0
        %v6206 = vadd.f32 0.0, %v6205
        %v6207 = vpop.f32.mrb[0].mxu0
        %v6208 = vpop.f32.mrb[0].mxu0
        %v6209 = vadd.f32 0.0, %v6208
        %v6210 = vpop.f32.mrb[0].mxu0
        %6211 = vmatprep.mubr.bf16.mxu0 0
        %6212 = vmatmul.mubr.bf16.gmra.mrb[0].mxu0 %v6107
        %v6213 = vpop.f32.mrb[0].mxu0
        %v6214 = vadd.f32 0.0, %v6213
        %v6215 = vpop.f32.mrb[0].mxu0
        %v6216 = vpop.f32.mrb[0].mxu0
        %v6217 = vadd.f32 0.0, %v6216
        %v6218 = vpop.f32.mrb[0].mxu0
        %6219 = vmatprep.mubr.bf16.mxu0 0
        %6220 = vmatmul.mubr.bf16.gmra.mrb[0].mxu0 %v6110
        %v6221 = vpop.f32.mrb[0].mxu0
        %v6222 = vadd.f32 0.0, %v6221
        %v6223 = vpop.f32.mrb[0].mxu0
        %v6224 = vpop.f32.mrb[0].mxu0
        %v6225 = vadd.f32 0.0, %v6224
        %v6226 = vpop.f32.mrb[0].mxu0
        %6227 = vmatprep.mubr.bf16.mxu0 0
        %6228 = vmatmul.mubr.bf16.gmra.mrb[0].mxu0 %v6113
        %v6229 = vpop.f32.mrb[0].mxu0
        %v6230 = vadd.f32 0.0, %v6229
        %v6231 = vpop.f32.mrb[0].mxu0
        %v6232 = vpop.f32.mrb[0].mxu0
        %v6233 = vadd.f32 0.0, %v6232
        %v6234 = vpop.f32.mrb[0].mxu0
        %6235 = vmatprep.mubr.bf16.mxu0 0
        %6236 = vmatmul.mubr.bf16.gmra.mrb[0].mxu0 %v6116
        %v6237 = vpop.f32.mrb[0].mxu0
        %v6238 = vadd.f32 0.0, %v6237
        %v6239 = vpop.f32.mrb[0].mxu0
        %v6240 = vpop.f32.mrb[0].mxu0
        %v6241 = vadd.f32 0.0, %v6240
        %v6242 = vpop.f32.mrb[0].mxu0
        %6243 = vmatprep.mubr.bf16.mxu0 0
        %6244 = vmatmul.mubr.bf16.gmra.mrb[0].mxu0 %v6119
        %v6245 = vpop.f32.mrb[0].mxu0
        %v6246 = vadd.f32 0.0, %v6245
        %v6247 = vpop.f32.mrb[0].mxu0
        %v6248 = vpop.f32.mrb[0].mxu0
        %v6249 = vadd.f32 0.0, %v6248
        %v6250 = vpop.f32.mrb[0].mxu0
        %6251 = vmatprep.mubr.bf16.mxu0 0
        %6252 = vmatmul.mubr.bf16.gmra.mrb[0].mxu0 %v6122
        %v6253 = vpop.f32.mrb[0].mxu0
        %v6254 = vadd.f32 0.0, %v6253
        %v6255 = vpop.f32.mrb[0].mxu0
        %v6256 = vpop.f32.mrb[0].mxu0
        %v6257 = vadd.f32 0.0, %v6256
        %v6258 = vpop.f32.mrb[0].mxu0
        %6259 = vmatprep.mubr.bf16.mxu0 0
        %6260 = vmatmul.mubr.bf16.gmra.mrb[0].mxu0 %v6125
        %v6261 = vpop.f32.mrb[0].mxu0
        %v6262 = vadd.f32 0.0, %v6261
        %v6263 = vpop.f32.mrb[0].mxu0
        %v6264 = vpop.f32.mrb[0].mxu0
        %v6265 = vadd.f32 0.0, %v6264
        %v6266 = vpop.f32.mrb[0].mxu0
        %6267 = vmatprep.mubr.bf16.mxu0 0
        %6268 = vmatmul.mubr.bf16.gmra.mrb[0].mxu0 %v6128
        %v6269 = vpop.f32.mrb[0].mxu0
        %v6270 = vadd.f32 0.0, %v6269
        %v6271 = vpop.f32.mrb[0].mxu0
        %v6272 = vpop.f32.mrb[0].mxu0
        %v6273 = vadd.f32 0.0, %v6272
        %v6274 = vpop.f32.mrb[0].mxu0
        %6275 = vmatprep.mubr.bf16.mxu0 0
        %6276 = vmatmul.mubr.bf16.gmra.mrb[0].mxu0 %v6131
        %v6277 = vpop.f32.mrb[0].mxu0
        %v6278 = vadd.f32 0.0, %v6277
        %v6279 = vpop.f32.mrb[0].mxu0
        %v6280 = vpop.f32.mrb[0].mxu0
        %v6281 = vadd.f32 0.0, %v6280
        %v6282 = vpop.f32.mrb[0].mxu0
        %6283 = vmatprep.mubr.bf16.mxu0 0
        %6284 = vmatmul.mubr.bf16.gmra.mrb[0].mxu0 %v6134
        %v6285 = vpop.f32.mrb[0].mxu0
        %v6286 = vadd.f32 0.0, %v6285
        %v6287 = vpop.f32.mrb[0].mxu0
        %v6288 = vpop.f32.mrb[0].mxu0
        %v6289 = vadd.f32 0.0, %v6288
        %v6290 = vpop.f32.mrb[0].mxu0
        %6291 = vmatprep.mubr.bf16.mxu0 0
        %6292 = vmatmul.mubr.bf16.gmra.mrb[0].mxu0 %v6137
        %v6293 = vpop.f32.mrb[0].mxu0
        %v6294 = vadd.f32 0.0, %v6293
        %v6295 = vpop.f32.mrb[0].mxu0
        %v6296 = vpop.f32.mrb[0].mxu0
        %v6297 = vadd.f32 0.0, %v6296
        %v6298 = vpop.f32.mrb[0].mxu0
        %6299 = vdwg.mxu0
        %v6300 = vadd.f32 %v5975, %v6174
        %v6301 = vadd.f32 %v5976, %v6177
        %v6302 = vadd.f32 %v5977, %v6182
        %v6303 = vadd.f32 %v5978, %v6185
        %v6304 = vadd.f32 %v5979, %v6190
        %v6305 = vadd.f32 %v5980, %v6193
        %v6306 = vadd.f32 %v5981, %v6198
        %v6307 = vadd.f32 %v5982, %v6201
        %v6308 = vadd.f32 %v5983, %v6206
        %v6309 = vadd.f32 %v5984, %v6209
        %v6310 = vadd.f32 %v5985, %v6214
        %v6311 = vadd.f32 %v5986, %v6217
        %v6312 = vadd.f32 %v5987, %v6222
        %v6313 = vadd.f32 %v5988, %v6225
        %v6314 = vadd.f32 %v5989, %v6230
        %v6315 = vadd.f32 %v5990, %v6233
        %v6316 = vadd.f32 %v5991, %v6238
        %v6317 = vadd.f32 %v5992, %v6241
        %v6318 = vadd.f32 %v5993, %v6246
        %v6319 = vadd.f32 %v5994, %v6249
        %v6320 = vadd.f32 %v5995, %v6254
        %v6321 = vadd.f32 %v5996, %v6257
        %v6322 = vadd.f32 %v5997, %v6262
        %v6323 = vadd.f32 %v5998, %v6265
        %v6324 = vadd.f32 %v5999, %v6270
        %v6325 = vadd.f32 %v6000, %v6273
        %v6326 = vadd.f32 %v6001, %v6278
        %v6327 = vadd.f32 %v6002, %v6281
        %v6328 = vadd.f32 %v6003, %v6286
        %v6329 = vadd.f32 %v6004, %v6289
        %v6330 = vadd.f32 %v6005, %v6294
        %v6331 = vadd.f32 %v6006, %v6297
        %v6332 = vld [vmem:[#allocation3 + $0x27] sm:$0xff]
        %v6333 = vld [vmem:[#allocation3 + $0x2f] sm:$0xff]
        %v6334 = vld [vmem:[#allocation3 + $0x37] sm:$0xff]
        %v6335 = vld [vmem:[#allocation3 + $0x3f] sm:$0xff]
        %v6336 = vld [vmem:[#allocation3 + $0x47] sm:$0xff]
        %v6337 = vld [vmem:[#allocation3 + $0x4f] sm:$0xff]
        %v6338 = vld [vmem:[#allocation3 + $0x57] sm:$0xff]
        %v6339 = vld [vmem:[#allocation3 + $0x5f] sm:$0xff]
        %v6340 = vld [vmem:[#allocation3 + $0x67] sm:$0xff]
        %v6341 = vld [vmem:[#allocation3 + $0x6f] sm:$0xff]
        %v6342 = vld [vmem:[#allocation3 + $0x77] sm:$0xff]
        %v6343 = vld [vmem:[#allocation3 + $0x7f] sm:$0xff]
        %v6344 = vld [vmem:[#allocation3 + $0x87] sm:$0xff]
        %v6345 = vld [vmem:[#allocation3 + $0x8f] sm:$0xff]
        %v6346 = vld [vmem:[#allocation3 + $0x97] sm:$0xff]
        %v6347 = vld [vmem:[#allocation3 + $0x9f] sm:$0xff]
        %v6348 = vld [vmem:[#allocation3 + $0xa7] sm:$0xff]
        %v6349 = vld [vmem:[#allocation3 + $0xaf] sm:$0xff]
        %v6350 = vld [vmem:[#allocation3 + $0xb7] sm:$0xff]
        %v6351 = vld [vmem:[#allocation3 + $0xbf] sm:$0xff]
        %v6352 = vld [vmem:[#allocation3 + $0xc7] sm:$0xff]
        %v6353 = vld [vmem:[#allocation3 + $0xcf] sm:$0xff]
        %v6354 = vld [vmem:[#allocation3 + $0xd7] sm:$0xff]
        %v6355 = vld [vmem:[#allocation3 + $0xdf] sm:$0xff]
        %v6356 = vld [vmem:[#allocation3 + $0xe7] sm:$0xff]
        %v6357 = vld [vmem:[#allocation3 + $0xef] sm:$0xff]
        %v6358 = vld [vmem:[#allocation3 + $0xf7] sm:$0xff]
        %v6359 = vld [vmem:[#allocation3 + $0xff] sm:$0xff]
        %v6360 = vld [vmem:[#allocation3 + $0x107] sm:$0xff]
        %v6361 = vld [vmem:[#allocation3 + $0x10f] sm:$0xff]
        %v6362 = vld [vmem:[#allocation3 + $0x117] sm:$0xff]
        %v6363 = vld [vmem:[#allocation3 + $0x11f] sm:$0xff]
        %v6364 = vsel %vm1141, %v6332, 0.0
        %v6365 = vsel %vm1142, %v6333, 0.0
        %v6366 = vsel %vm1143, %v6334, 0.0
        %v6367 = vsel %vm1144, %v6335, 0.0
        %v6368 = vsel %vm1145, %v6336, 0.0
        %v6369 = vsel %vm1146, %v6337, 0.0
        %v6370 = vsel %vm1147, %v6338, 0.0
        %v6371 = vsel %vm1148, %v6339, 0.0
        %v6372 = vsel %vm1149, %v6340, 0.0
        %v6373 = vsel %vm1150, %v6341, 0.0
        %v6374 = vsel %vm1151, %v6342, 0.0
        %v6375 = vsel %vm1152, %v6343, 0.0
        %v6376 = vsel %vm1153, %v6344, 0.0
        %v6377 = vsel %vm1154, %v6345, 0.0
        %v6378 = vsel %vm1155, %v6346, 0.0
        %v6379 = vsel %vm1156, %v6347, 0.0
        %v6380 = vsel %vm1157, %v6348, 0.0
        %v6381 = vsel %vm1158, %v6349, 0.0
        %v6382 = vsel %vm1159, %v6350, 0.0
        %v6383 = vsel %vm1160, %v6351, 0.0
        %v6384 = vsel %vm1161, %v6352, 0.0
        %v6385 = vsel %vm1162, %v6353, 0.0
        %v6386 = vsel %vm1163, %v6354, 0.0
        %v6387 = vsel %vm1164, %v6355, 0.0
        %v6388 = vsel %vm1165, %v6356, 0.0
        %v6389 = vsel %vm1166, %v6357, 0.0
        %v6390 = vsel %vm1167, %v6358, 0.0
        %v6391 = vsel %vm1168, %v6359, 0.0
        %v6392 = vsel %vm1169, %v6360, 0.0
        %v6393 = vsel %vm1170, %v6361, 0.0
        %v6394 = vsel %vm1171, %v6362, 0.0
        %v6395 = vsel %vm1172, %v6363, 0.0
        %v6396 = vpack.c.bf16 %v6365, %v6364
        %v6397 = vpack.c.bf16 %v6367, %v6366
        %v6398 = vpack.c.bf16 %v6369, %v6368
        %v6399 = vpack.c.bf16 %v6371, %v6370
        %v6400 = vpack.c.bf16 %v6373, %v6372
        %v6401 = vpack.c.bf16 %v6375, %v6374
        %v6402 = vpack.c.bf16 %v6377, %v6376
        %v6403 = vpack.c.bf16 %v6379, %v6378
        %v6404 = vpack.c.bf16 %v6381, %v6380
        %v6405 = vpack.c.bf16 %v6383, %v6382
        %v6406 = vpack.c.bf16 %v6385, %v6384
        %v6407 = vpack.c.bf16 %v6387, %v6386
        %v6408 = vpack.c.bf16 %v6389, %v6388
        %v6409 = vpack.c.bf16 %v6391, %v6390
        %v6410 = vpack.c.bf16 %v6393, %v6392
        %v6411 = vpack.c.bf16 %v6395, %v6394
        %s6412 = scalar_lea.vmem %s7, 96
        %v6413 = vld [vmem:[%s6412] sm:$0xff]
        %v6414 = vld [vmem:[%s6412 + $0x8] sm:$0xff]
        %v6415 = vpack.c.bf16 %v6414, %v6413
        %v6417 = vsel %vm4440, %v6396, 0
        %v6420 = vsel %vm4440, %v6397, 0
        %v6423 = vsel %vm4440, %v6398, 0
        %v6426 = vsel %vm4440, %v6399, 0
        %v6429 = vsel %vm4440, %v6400, 0
        %v6432 = vsel %vm4440, %v6401, 0
        %v6435 = vsel %vm4440, %v6402, 0
        %v6438 = vsel %vm4440, %v6403, 0
        %v6441 = vsel %vm4440, %v6404, 0
        %v6444 = vsel %vm4440, %v6405, 0
        %v6447 = vsel %vm4440, %v6406, 0
        %v6450 = vsel %vm4440, %v6407, 0
        %v6453 = vsel %vm4440, %v6408, 0
        %v6456 = vsel %vm4440, %v6409, 0
        %v6459 = vsel %vm4440, %v6410, 0
        %v6462 = vsel %vm4440, %v6411, 0
        %6464 = vmatprep.subr.bf16.mxu0 0
        %6465 = vmatpush1.bf16.msra.mxu0 %v6415
        %6466 = vmatprep.subr.bf16.mxu0 0
        %6467 = vmatpush1.bf16.msra.mxu0 0
        %6468 = vmatprep.subr.bf16.mxu0 0
        %6469 = vmatpush1.bf16.msra.mxu0 0
        %6470 = vmatprep.subr.bf16.mxu0 0
        %6471 = vmatpush1.bf16.msra.mxu0 0
        %6472 = vmatprep.subr.bf16.mxu0 0
        %6473 = vmatpush1.bf16.msra.mxu0 0
        %6474 = vmatprep.subr.bf16.mxu0 0
        %6475 = vmatpush1.bf16.msra.mxu0 0
        %6476 = vmatprep.subr.bf16.mxu0 0
        %6477 = vmatpush1.bf16.msra.mxu0 0
        %6478 = vmatprep.subr.bf16.mxu0 0
        %6479 = vmatpush1.bf16.msra.mxu0 0
        %6480 = vmatprep.subr.bf16.mxu0 0
        %6481 = vmatpush1.bf16.msra.mxu0 0
        %6482 = vmatprep.subr.bf16.mxu0 0
        %6483 = vmatpush1.bf16.msra.mxu0 0
        %6484 = vmatprep.subr.bf16.mxu0 0
        %6485 = vmatpush1.bf16.msra.mxu0 0
        %6486 = vmatprep.subr.bf16.mxu0 0
        %6487 = vmatpush1.bf16.msra.mxu0 0
        %6488 = vmatprep.subr.bf16.mxu0 0
        %6489 = vmatpush1.bf16.msra.mxu0 0
        %6490 = vmatprep.subr.bf16.mxu0 0
        %6491 = vmatpush1.bf16.msra.mxu0 0
        %6492 = vmatprep.subr.bf16.mxu0 0
        %6493 = vmatpush1.bf16.msra.mxu0 0
        %6494 = vmatprep.subr.bf16.mxu0 0
        %6495 = vmatpush1.bf16.msra.mxu0 0
        %6496 = vmatprep.mubr.bf16.mxu0 0
        %6497 = vmatmul.mubr.bf16.gmra.mrb[0].mxu0 %v6417
        %v6498 = vpop.f32.mrb[0].mxu0
        %v6499 = vadd.f32 0.0, %v6498
        %v6500 = vpop.f32.mrb[0].mxu0
        %v6501 = vpop.f32.mrb[0].mxu0
        %v6502 = vadd.f32 0.0, %v6501
        %v6503 = vpop.f32.mrb[0].mxu0
        %6504 = vmatprep.mubr.bf16.mxu0 0
        %6505 = vmatmul.mubr.bf16.gmra.mrb[0].mxu0 %v6420
        %v6506 = vpop.f32.mrb[0].mxu0
        %v6507 = vadd.f32 0.0, %v6506
        %v6508 = vpop.f32.mrb[0].mxu0
        %v6509 = vpop.f32.mrb[0].mxu0
        %v6510 = vadd.f32 0.0, %v6509
        %v6511 = vpop.f32.mrb[0].mxu0
        %6512 = vmatprep.mubr.bf16.mxu0 0
        %6513 = vmatmul.mubr.bf16.gmra.mrb[0].mxu0 %v6423
        %v6514 = vpop.f32.mrb[0].mxu0
        %v6515 = vadd.f32 0.0, %v6514
        %v6516 = vpop.f32.mrb[0].mxu0
        %v6517 = vpop.f32.mrb[0].mxu0
        %v6518 = vadd.f32 0.0, %v6517
        %v6519 = vpop.f32.mrb[0].mxu0
        %6520 = vmatprep.mubr.bf16.mxu0 0
        %6521 = vmatmul.mubr.bf16.gmra.mrb[0].mxu0 %v6426
        %v6522 = vpop.f32.mrb[0].mxu0
        %v6523 = vadd.f32 0.0, %v6522
        %v6524 = vpop.f32.mrb[0].mxu0
        %v6525 = vpop.f32.mrb[0].mxu0
        %v6526 = vadd.f32 0.0, %v6525
        %v6527 = vpop.f32.mrb[0].mxu0
        %6528 = vmatprep.mubr.bf16.mxu0 0
        %6529 = vmatmul.mubr.bf16.gmra.mrb[0].mxu0 %v6429
        %v6530 = vpop.f32.mrb[0].mxu0
        %v6531 = vadd.f32 0.0, %v6530
        %v6532 = vpop.f32.mrb[0].mxu0
        %v6533 = vpop.f32.mrb[0].mxu0
        %v6534 = vadd.f32 0.0, %v6533
        %v6535 = vpop.f32.mrb[0].mxu0
        %6536 = vmatprep.mubr.bf16.mxu0 0
        %6537 = vmatmul.mubr.bf16.gmra.mrb[0].mxu0 %v6432
        %v6538 = vpop.f32.mrb[0].mxu0
        %v6539 = vadd.f32 0.0, %v6538
        %v6540 = vpop.f32.mrb[0].mxu0
        %v6541 = vpop.f32.mrb[0].mxu0
        %v6542 = vadd.f32 0.0, %v6541
        %v6543 = vpop.f32.mrb[0].mxu0
        %6544 = vmatprep.mubr.bf16.mxu0 0
        %6545 = vmatmul.mubr.bf16.gmra.mrb[0].mxu0 %v6435
        %v6546 = vpop.f32.mrb[0].mxu0
        %v6547 = vadd.f32 0.0, %v6546
        %v6548 = vpop.f32.mrb[0].mxu0
        %v6549 = vpop.f32.mrb[0].mxu0
        %v6550 = vadd.f32 0.0, %v6549
        %v6551 = vpop.f32.mrb[0].mxu0
        %6552 = vmatprep.mubr.bf16.mxu0 0
        %6553 = vmatmul.mubr.bf16.gmra.mrb[0].mxu0 %v6438
        %v6554 = vpop.f32.mrb[0].mxu0
        %v6555 = vadd.f32 0.0, %v6554
        %v6556 = vpop.f32.mrb[0].mxu0
        %v6557 = vpop.f32.mrb[0].mxu0
        %v6558 = vadd.f32 0.0, %v6557
        %v6559 = vpop.f32.mrb[0].mxu0
        %6560 = vmatprep.mubr.bf16.mxu0 0
        %6561 = vmatmul.mubr.bf16.gmra.mrb[0].mxu0 %v6441
        %v6562 = vpop.f32.mrb[0].mxu0
        %v6563 = vadd.f32 0.0, %v6562
        %v6564 = vpop.f32.mrb[0].mxu0
        %v6565 = vpop.f32.mrb[0].mxu0
        %v6566 = vadd.f32 0.0, %v6565
        %v6567 = vpop.f32.mrb[0].mxu0
        %6568 = vmatprep.mubr.bf16.mxu0 0
        %6569 = vmatmul.mubr.bf16.gmra.mrb[0].mxu0 %v6444
        %v6570 = vpop.f32.mrb[0].mxu0
        %v6571 = vadd.f32 0.0, %v6570
        %v6572 = vpop.f32.mrb[0].mxu0
        %v6573 = vpop.f32.mrb[0].mxu0
        %v6574 = vadd.f32 0.0, %v6573
        %v6575 = vpop.f32.mrb[0].mxu0
        %6576 = vmatprep.mubr.bf16.mxu0 0
        %6577 = vmatmul.mubr.bf16.gmra.mrb[0].mxu0 %v6447
        %v6578 = vpop.f32.mrb[0].mxu0
        %v6579 = vadd.f32 0.0, %v6578
        %v6580 = vpop.f32.mrb[0].mxu0
        %v6581 = vpop.f32.mrb[0].mxu0
        %v6582 = vadd.f32 0.0, %v6581
        %v6583 = vpop.f32.mrb[0].mxu0
        %6584 = vmatprep.mubr.bf16.mxu0 0
        %6585 = vmatmul.mubr.bf16.gmra.mrb[0].mxu0 %v6450
        %v6586 = vpop.f32.mrb[0].mxu0
        %v6587 = vadd.f32 0.0, %v6586
        %v6588 = vpop.f32.mrb[0].mxu0
        %v6589 = vpop.f32.mrb[0].mxu0
        %v6590 = vadd.f32 0.0, %v6589
        %v6591 = vpop.f32.mrb[0].mxu0
        %6592 = vmatprep.mubr.bf16.mxu0 0
        %6593 = vmatmul.mubr.bf16.gmra.mrb[0].mxu0 %v6453
        %v6594 = vpop.f32.mrb[0].mxu0
        %v6595 = vadd.f32 0.0, %v6594
        %v6596 = vpop.f32.mrb[0].mxu0
        %v6597 = vpop.f32.mrb[0].mxu0
        %v6598 = vadd.f32 0.0, %v6597
        %v6599 = vpop.f32.mrb[0].mxu0
        %6600 = vmatprep.mubr.bf16.mxu0 0
        %6601 = vmatmul.mubr.bf16.gmra.mrb[0].mxu0 %v6456
        %v6602 = vpop.f32.mrb[0].mxu0
        %v6603 = vadd.f32 0.0, %v6602
        %v6604 = vpop.f32.mrb[0].mxu0
        %v6605 = vpop.f32.mrb[0].mxu0
        %v6606 = vadd.f32 0.0, %v6605
        %v6607 = vpop.f32.mrb[0].mxu0
        %6608 = vmatprep.mubr.bf16.mxu0 0
        %6609 = vmatmul.mubr.bf16.gmra.mrb[0].mxu0 %v6459
        %v6610 = vpop.f32.mrb[0].mxu0
        %v6611 = vadd.f32 0.0, %v6610
        %v6612 = vpop.f32.mrb[0].mxu0
        %v6613 = vpop.f32.mrb[0].mxu0
        %v6614 = vadd.f32 0.0, %v6613
        %v6615 = vpop.f32.mrb[0].mxu0
        %6616 = vmatprep.mubr.bf16.mxu0 0
        %6617 = vmatmul.mubr.bf16.gmra.mrb[0].mxu0 %v6462
        %v6618 = vpop.f32.mrb[0].mxu0
        %v6619 = vadd.f32 0.0, %v6618
        %v6620 = vpop.f32.mrb[0].mxu0
        %v6621 = vpop.f32.mrb[0].mxu0
        %v6622 = vadd.f32 0.0, %v6621
        %v6623 = vpop.f32.mrb[0].mxu0
        %6624 = vdwg.mxu0
        %v6625 = vadd.f32 %v6300, %v6499
        %v6626 = vadd.f32 %v6301, %v6502
        %v6627 = vadd.f32 %v6302, %v6507
        %v6628 = vadd.f32 %v6303, %v6510
        %v6629 = vadd.f32 %v6304, %v6515
        %v6630 = vadd.f32 %v6305, %v6518
        %v6631 = vadd.f32 %v6306, %v6523
        %v6632 = vadd.f32 %v6307, %v6526
        %v6633 = vadd.f32 %v6308, %v6531
        %v6634 = vadd.f32 %v6309, %v6534
        %v6635 = vadd.f32 %v6310, %v6539
        %v6636 = vadd.f32 %v6311, %v6542
        %v6637 = vadd.f32 %v6312, %v6547
        %v6638 = vadd.f32 %v6313, %v6550
        %v6639 = vadd.f32 %v6314, %v6555
        %v6640 = vadd.f32 %v6315, %v6558
        %v6641 = vadd.f32 %v6316, %v6563
        %v6642 = vadd.f32 %v6317, %v6566
        %v6643 = vadd.f32 %v6318, %v6571
        %v6644 = vadd.f32 %v6319, %v6574
        %v6645 = vadd.f32 %v6320, %v6579
        %v6646 = vadd.f32 %v6321, %v6582
        %v6647 = vadd.f32 %v6322, %v6587
        %v6648 = vadd.f32 %v6323, %v6590
        %v6649 = vadd.f32 %v6324, %v6595
        %v6650 = vadd.f32 %v6325, %v6598
        %v6651 = vadd.f32 %v6326, %v6603
        %v6652 = vadd.f32 %v6327, %v6606
        %v6653 = vadd.f32 %v6328, %v6611
        %v6654 = vadd.f32 %v6329, %v6614
        %v6655 = vadd.f32 %v6330, %v6619
        %v6656 = vadd.f32 %v6331, %v6622
        %v6657 = vld [vmem:[#allocation3 + $0x28] sm:$0xff]
        %v6658 = vld [vmem:[#allocation3 + $0x30] sm:$0xff]
        %v6659 = vld [vmem:[#allocation3 + $0x38] sm:$0xff]
        %v6660 = vld [vmem:[#allocation3 + $0x40] sm:$0xff]
        %v6661 = vld [vmem:[#allocation3 + $0x48] sm:$0xff]
        %v6662 = vld [vmem:[#allocation3 + $0x50] sm:$0xff]
        %v6663 = vld [vmem:[#allocation3 + $0x58] sm:$0xff]
        %v6664 = vld [vmem:[#allocation3 + $0x60] sm:$0xff]
        %v6665 = vld [vmem:[#allocation3 + $0x68] sm:$0xff]
        %v6666 = vld [vmem:[#allocation3 + $0x70] sm:$0xff]
        %v6667 = vld [vmem:[#allocation3 + $0x78] sm:$0xff]
        %v6668 = vld [vmem:[#allocation3 + $0x80] sm:$0xff]
        %v6669 = vld [vmem:[#allocation3 + $0x88] sm:$0xff]
        %v6670 = vld [vmem:[#allocation3 + $0x90] sm:$0xff]
        %v6671 = vld [vmem:[#allocation3 + $0x98] sm:$0xff]
        %v6672 = vld [vmem:[#allocation3 + $0xa0] sm:$0xff]
        %v6673 = vld [vmem:[#allocation3 + $0xa8] sm:$0xff]
        %v6674 = vld [vmem:[#allocation3 + $0xb0] sm:$0xff]
        %v6675 = vld [vmem:[#allocation3 + $0xb8] sm:$0xff]
        %v6676 = vld [vmem:[#allocation3 + $0xc0] sm:$0xff]
        %v6677 = vld [vmem:[#allocation3 + $0xc8] sm:$0xff]
        %v6678 = vld [vmem:[#allocation3 + $0xd0] sm:$0xff]
        %v6679 = vld [vmem:[#allocation3 + $0xd8] sm:$0xff]
        %v6680 = vld [vmem:[#allocation3 + $0xe0] sm:$0xff]
        %v6681 = vld [vmem:[#allocation3 + $0xe8] sm:$0xff]
        %v6682 = vld [vmem:[#allocation3 + $0xf0] sm:$0xff]
        %v6683 = vld [vmem:[#allocation3 + $0xf8] sm:$0xff]
        %v6684 = vld [vmem:[#allocation3 + $0x100] sm:$0xff]
        %v6685 = vld [vmem:[#allocation3 + $0x108] sm:$0xff]
        %v6686 = vld [vmem:[#allocation3 + $0x110] sm:$0xff]
        %v6687 = vld [vmem:[#allocation3 + $0x118] sm:$0xff]
        %v6688 = vld [vmem:[#allocation3 + $0x120] sm:$0xff]
        %v6689 = vpack.c.bf16 %v6658, %v6657
        %v6690 = vpack.c.bf16 %v6660, %v6659
        %v6691 = vpack.c.bf16 %v6662, %v6661
        %v6692 = vpack.c.bf16 %v6664, %v6663
        %v6693 = vpack.c.bf16 %v6666, %v6665
        %v6694 = vpack.c.bf16 %v6668, %v6667
        %v6695 = vpack.c.bf16 %v6670, %v6669
        %v6696 = vpack.c.bf16 %v6672, %v6671
        %v6697 = vpack.c.bf16 %v6674, %v6673
        %v6698 = vpack.c.bf16 %v6676, %v6675
        %v6699 = vpack.c.bf16 %v6678, %v6677
        %v6700 = vpack.c.bf16 %v6680, %v6679
        %v6701 = vpack.c.bf16 %v6682, %v6681
        %v6702 = vpack.c.bf16 %v6684, %v6683
        %v6703 = vpack.c.bf16 %v6686, %v6685
        %v6704 = vpack.c.bf16 %v6688, %v6687
        %s6705 = scalar_lea.vmem %s7, 112
        %v6706 = vld [vmem:[%s6705] sm:$0xff]
        %v6707 = vld [vmem:[%s6705 + $0x8] sm:$0xff]
        %v6708 = vpack.c.bf16 %v6707, %v6706
        %v6710 = vsel %vm4440, %v6689, 0
        %v6713 = vsel %vm4440, %v6690, 0
        %v6716 = vsel %vm4440, %v6691, 0
        %v6719 = vsel %vm4440, %v6692, 0
        %v6722 = vsel %vm4440, %v6693, 0
        %v6725 = vsel %vm4440, %v6694, 0
        %v6728 = vsel %vm4440, %v6695, 0
        %v6731 = vsel %vm4440, %v6696, 0
        %v6734 = vsel %vm4440, %v6697, 0
        %v6737 = vsel %vm4440, %v6698, 0
        %v6740 = vsel %vm4440, %v6699, 0
        %v6743 = vsel %vm4440, %v6700, 0
        %v6746 = vsel %vm4440, %v6701, 0
        %v6749 = vsel %vm4440, %v6702, 0
        %v6752 = vsel %vm4440, %v6703, 0
        %v6755 = vsel %vm4440, %v6704, 0
        %6757 = vmatprep.subr.bf16.mxu0 0
        %6758 = vmatpush1.bf16.msra.mxu0 %v6708
        %6759 = vmatprep.subr.bf16.mxu0 0
        %6760 = vmatpush1.bf16.msra.mxu0 0
        %6761 = vmatprep.subr.bf16.mxu0 0
        %6762 = vmatpush1.bf16.msra.mxu0 0
        %6763 = vmatprep.subr.bf16.mxu0 0
        %6764 = vmatpush1.bf16.msra.mxu0 0
        %6765 = vmatprep.subr.bf16.mxu0 0
        %6766 = vmatpush1.bf16.msra.mxu0 0
        %6767 = vmatprep.subr.bf16.mxu0 0
        %6768 = vmatpush1.bf16.msra.mxu0 0
        %6769 = vmatprep.subr.bf16.mxu0 0
        %6770 = vmatpush1.bf16.msra.mxu0 0
        %6771 = vmatprep.subr.bf16.mxu0 0
        %6772 = vmatpush1.bf16.msra.mxu0 0
        %6773 = vmatprep.subr.bf16.mxu0 0
        %6774 = vmatpush1.bf16.msra.mxu0 0
        %6775 = vmatprep.subr.bf16.mxu0 0
        %6776 = vmatpush1.bf16.msra.mxu0 0
        %6777 = vmatprep.subr.bf16.mxu0 0
        %6778 = vmatpush1.bf16.msra.mxu0 0
        %6779 = vmatprep.subr.bf16.mxu0 0
        %6780 = vmatpush1.bf16.msra.mxu0 0
        %6781 = vmatprep.subr.bf16.mxu0 0
        %6782 = vmatpush1.bf16.msra.mxu0 0
        %6783 = vmatprep.subr.bf16.mxu0 0
        %6784 = vmatpush1.bf16.msra.mxu0 0
        %6785 = vmatprep.subr.bf16.mxu0 0
        %6786 = vmatpush1.bf16.msra.mxu0 0
        %6787 = vmatprep.subr.bf16.mxu0 0
        %6788 = vmatpush1.bf16.msra.mxu0 0
        %6789 = vmatprep.mubr.bf16.mxu0 0
        %6790 = vmatmul.mubr.bf16.gmra.mrb[0].mxu0 %v6710
        %v6791 = vpop.f32.mrb[0].mxu0
        %v6792 = vadd.f32 0.0, %v6791
        %v6793 = vpop.f32.mrb[0].mxu0
        %v6794 = vpop.f32.mrb[0].mxu0
        %v6795 = vadd.f32 0.0, %v6794
        %v6796 = vpop.f32.mrb[0].mxu0
        %6797 = vmatprep.mubr.bf16.mxu0 0
        %6798 = vmatmul.mubr.bf16.gmra.mrb[0].mxu0 %v6713
        %v6799 = vpop.f32.mrb[0].mxu0
        %v6800 = vadd.f32 0.0, %v6799
        %v6801 = vpop.f32.mrb[0].mxu0
        %v6802 = vpop.f32.mrb[0].mxu0
        %v6803 = vadd.f32 0.0, %v6802
        %v6804 = vpop.f32.mrb[0].mxu0
        %6805 = vmatprep.mubr.bf16.mxu0 0
        %6806 = vmatmul.mubr.bf16.gmra.mrb[0].mxu0 %v6716
        %v6807 = vpop.f32.mrb[0].mxu0
        %v6808 = vadd.f32 0.0, %v6807
        %v6809 = vpop.f32.mrb[0].mxu0
        %v6810 = vpop.f32.mrb[0].mxu0
        %v6811 = vadd.f32 0.0, %v6810
        %v6812 = vpop.f32.mrb[0].mxu0
        %6813 = vmatprep.mubr.bf16.mxu0 0
        %6814 = vmatmul.mubr.bf16.gmra.mrb[0].mxu0 %v6719
        %v6815 = vpop.f32.mrb[0].mxu0
        %v6816 = vadd.f32 0.0, %v6815
        %v6817 = vpop.f32.mrb[0].mxu0
        %v6818 = vpop.f32.mrb[0].mxu0
        %v6819 = vadd.f32 0.0, %v6818
        %v6820 = vpop.f32.mrb[0].mxu0
        %6821 = vmatprep.mubr.bf16.mxu0 0
        %6822 = vmatmul.mubr.bf16.gmra.mrb[0].mxu0 %v6722
        %v6823 = vpop.f32.mrb[0].mxu0
        %v6824 = vadd.f32 0.0, %v6823
        %v6825 = vpop.f32.mrb[0].mxu0
        %v6826 = vpop.f32.mrb[0].mxu0
        %v6827 = vadd.f32 0.0, %v6826
        %v6828 = vpop.f32.mrb[0].mxu0
        %6829 = vmatprep.mubr.bf16.mxu0 0
        %6830 = vmatmul.mubr.bf16.gmra.mrb[0].mxu0 %v6725
        %v6831 = vpop.f32.mrb[0].mxu0
        %v6832 = vadd.f32 0.0, %v6831
        %v6833 = vpop.f32.mrb[0].mxu0
        %v6834 = vpop.f32.mrb[0].mxu0
        %v6835 = vadd.f32 0.0, %v6834
        %v6836 = vpop.f32.mrb[0].mxu0
        %6837 = vmatprep.mubr.bf16.mxu0 0
        %6838 = vmatmul.mubr.bf16.gmra.mrb[0].mxu0 %v6728
        %v6839 = vpop.f32.mrb[0].mxu0
        %v6840 = vadd.f32 0.0, %v6839
        %v6841 = vpop.f32.mrb[0].mxu0
        %v6842 = vpop.f32.mrb[0].mxu0
        %v6843 = vadd.f32 0.0, %v6842
        %v6844 = vpop.f32.mrb[0].mxu0
        %6845 = vmatprep.mubr.bf16.mxu0 0
        %6846 = vmatmul.mubr.bf16.gmra.mrb[0].mxu0 %v6731
        %v6847 = vpop.f32.mrb[0].mxu0
        %v6848 = vadd.f32 0.0, %v6847
        %v6849 = vpop.f32.mrb[0].mxu0
        %v6850 = vpop.f32.mrb[0].mxu0
        %v6851 = vadd.f32 0.0, %v6850
        %v6852 = vpop.f32.mrb[0].mxu0
        %6853 = vmatprep.mubr.bf16.mxu0 0
        %6854 = vmatmul.mubr.bf16.gmra.mrb[0].mxu0 %v6734
        %v6855 = vpop.f32.mrb[0].mxu0
        %v6856 = vadd.f32 0.0, %v6855
        %v6857 = vpop.f32.mrb[0].mxu0
        %v6858 = vpop.f32.mrb[0].mxu0
        %v6859 = vadd.f32 0.0, %v6858
        %v6860 = vpop.f32.mrb[0].mxu0
        %6861 = vmatprep.mubr.bf16.mxu0 0
        %6862 = vmatmul.mubr.bf16.gmra.mrb[0].mxu0 %v6737
        %v6863 = vpop.f32.mrb[0].mxu0
        %v6864 = vadd.f32 0.0, %v6863
        %v6865 = vpop.f32.mrb[0].mxu0
        %v6866 = vpop.f32.mrb[0].mxu0
        %v6867 = vadd.f32 0.0, %v6866
        %v6868 = vpop.f32.mrb[0].mxu0
        %6869 = vmatprep.mubr.bf16.mxu0 0
        %6870 = vmatmul.mubr.bf16.gmra.mrb[0].mxu0 %v6740
        %v6871 = vpop.f32.mrb[0].mxu0
        %v6872 = vadd.f32 0.0, %v6871
        %v6873 = vpop.f32.mrb[0].mxu0
        %v6874 = vpop.f32.mrb[0].mxu0
        %v6875 = vadd.f32 0.0, %v6874
        %v6876 = vpop.f32.mrb[0].mxu0
        %6877 = vmatprep.mubr.bf16.mxu0 0
        %6878 = vmatmul.mubr.bf16.gmra.mrb[0].mxu0 %v6743
        %v6879 = vpop.f32.mrb[0].mxu0
        %v6880 = vadd.f32 0.0, %v6879
        %v6881 = vpop.f32.mrb[0].mxu0
        %v6882 = vpop.f32.mrb[0].mxu0
        %v6883 = vadd.f32 0.0, %v6882
        %v6884 = vpop.f32.mrb[0].mxu0
        %6885 = vmatprep.mubr.bf16.mxu0 0
        %6886 = vmatmul.mubr.bf16.gmra.mrb[0].mxu0 %v6746
        %v6887 = vpop.f32.mrb[0].mxu0
        %v6888 = vadd.f32 0.0, %v6887
        %v6889 = vpop.f32.mrb[0].mxu0
        %v6890 = vpop.f32.mrb[0].mxu0
        %v6891 = vadd.f32 0.0, %v6890
        %v6892 = vpop.f32.mrb[0].mxu0
        %6893 = vmatprep.mubr.bf16.mxu0 0
        %6894 = vmatmul.mubr.bf16.gmra.mrb[0].mxu0 %v6749
        %v6895 = vpop.f32.mrb[0].mxu0
        %v6896 = vadd.f32 0.0, %v6895
        %v6897 = vpop.f32.mrb[0].mxu0
        %v6898 = vpop.f32.mrb[0].mxu0
        %v6899 = vadd.f32 0.0, %v6898
        %v6900 = vpop.f32.mrb[0].mxu0
        %6901 = vmatprep.mubr.bf16.mxu0 0
        %6902 = vmatmul.mubr.bf16.gmra.mrb[0].mxu0 %v6752
        %v6903 = vpop.f32.mrb[0].mxu0
        %v6904 = vadd.f32 0.0, %v6903
        %v6905 = vpop.f32.mrb[0].mxu0
        %v6906 = vpop.f32.mrb[0].mxu0
        %v6907 = vadd.f32 0.0, %v6906
        %v6908 = vpop.f32.mrb[0].mxu0
        %6909 = vmatprep.mubr.bf16.mxu0 0
        %6910 = vmatmul.mubr.bf16.gmra.mrb[0].mxu0 %v6755
        %v6911 = vpop.f32.mrb[0].mxu0
        %v6912 = vadd.f32 0.0, %v6911
        %v6913 = vpop.f32.mrb[0].mxu0
        %v6914 = vpop.f32.mrb[0].mxu0
        %v6915 = vadd.f32 0.0, %v6914
        %v6916 = vpop.f32.mrb[0].mxu0
        %6917 = vdwg.mxu0
        %v6918 = vadd.f32 %v6625, %v6792
        %v6919 = vadd.f32 %v6626, %v6795
        %v6920 = vadd.f32 %v6627, %v6800
        %v6921 = vadd.f32 %v6628, %v6803
        %v6922 = vadd.f32 %v6629, %v6808
        %v6923 = vadd.f32 %v6630, %v6811
        %v6924 = vadd.f32 %v6631, %v6816
        %v6925 = vadd.f32 %v6632, %v6819
        %v6926 = vadd.f32 %v6633, %v6824
        %v6927 = vadd.f32 %v6634, %v6827
        %v6928 = vadd.f32 %v6635, %v6832
        %v6929 = vadd.f32 %v6636, %v6835
        %v6930 = vadd.f32 %v6637, %v6840
        %v6931 = vadd.f32 %v6638, %v6843
        %v6932 = vadd.f32 %v6639, %v6848
        %v6933 = vadd.f32 %v6640, %v6851
        %v6934 = vadd.f32 %v6641, %v6856
        %v6935 = vadd.f32 %v6642, %v6859
        %v6936 = vadd.f32 %v6643, %v6864
        %v6937 = vadd.f32 %v6644, %v6867
        %v6938 = vadd.f32 %v6645, %v6872
        %v6939 = vadd.f32 %v6646, %v6875
        %v6940 = vadd.f32 %v6647, %v6880
        %v6941 = vadd.f32 %v6648, %v6883
        %v6942 = vadd.f32 %v6649, %v6888
        %v6943 = vadd.f32 %v6650, %v6891
        %v6944 = vadd.f32 %v6651, %v6896
        %v6945 = vadd.f32 %v6652, %v6899
        %v6946 = vadd.f32 %v6653, %v6904
        %v6947 = vadd.f32 %v6654, %v6907
        %v6948 = vadd.f32 %v6655, %v6912
        %v6949 = vadd.f32 %v6656, %v6915
        %v6950 = vld [vmem:[#allocation3 + $0x29] sm:$0xff]
        %v6951 = vld [vmem:[#allocation3 + $0x31] sm:$0xff]
        %v6952 = vld [vmem:[#allocation3 + $0x39] sm:$0xff]
        %v6953 = vld [vmem:[#allocation3 + $0x41] sm:$0xff]
        %v6954 = vld [vmem:[#allocation3 + $0x49] sm:$0xff]
        %v6955 = vld [vmem:[#allocation3 + $0x51] sm:$0xff]
        %v6956 = vld [vmem:[#allocation3 + $0x59] sm:$0xff]
        %v6957 = vld [vmem:[#allocation3 + $0x61] sm:$0xff]
        %v6958 = vld [vmem:[#allocation3 + $0x69] sm:$0xff]
        %v6959 = vld [vmem:[#allocation3 + $0x71] sm:$0xff]
        %v6960 = vld [vmem:[#allocation3 + $0x79] sm:$0xff]
        %v6961 = vld [vmem:[#allocation3 + $0x81] sm:$0xff]
        %v6962 = vld [vmem:[#allocation3 + $0x89] sm:$0xff]
        %v6963 = vld [vmem:[#allocation3 + $0x91] sm:$0xff]
        %v6964 = vld [vmem:[#allocation3 + $0x99] sm:$0xff]
        %v6965 = vld [vmem:[#allocation3 + $0xa1] sm:$0xff]
        %v6966 = vld [vmem:[#allocation3 + $0xa9] sm:$0xff]
        %v6967 = vld [vmem:[#allocation3 + $0xb1] sm:$0xff]
        %v6968 = vld [vmem:[#allocation3 + $0xb9] sm:$0xff]
        %v6969 = vld [vmem:[#allocation3 + $0xc1] sm:$0xff]
        %v6970 = vld [vmem:[#allocation3 + $0xc9] sm:$0xff]
        %v6971 = vld [vmem:[#allocation3 + $0xd1] sm:$0xff]
        %v6972 = vld [vmem:[#allocation3 + $0xd9] sm:$0xff]
        %v6973 = vld [vmem:[#allocation3 + $0xe1] sm:$0xff]
        %v6974 = vld [vmem:[#allocation3 + $0xe9] sm:$0xff]
        %v6975 = vld [vmem:[#allocation3 + $0xf1] sm:$0xff]
        %v6976 = vld [vmem:[#allocation3 + $0xf9] sm:$0xff]
        %v6977 = vld [vmem:[#allocation3 + $0x101] sm:$0xff]
        %v6978 = vld [vmem:[#allocation3 + $0x109] sm:$0xff]
        %v6979 = vld [vmem:[#allocation3 + $0x111] sm:$0xff]
        %v6980 = vld [vmem:[#allocation3 + $0x119] sm:$0xff]
        %v6981 = vld [vmem:[#allocation3 + $0x121] sm:$0xff]
        %v6982 = vsel %vm1763, %v6950, 0.0
        %v6983 = vsel %vm1764, %v6951, 0.0
        %v6984 = vsel %vm1765, %v6952, 0.0
        %v6985 = vsel %vm1766, %v6953, 0.0
        %v6986 = vsel %vm1767, %v6954, 0.0
        %v6987 = vsel %vm1768, %v6955, 0.0
        %v6988 = vsel %vm1769, %v6956, 0.0
        %v6989 = vsel %vm1770, %v6957, 0.0
        %v6990 = vsel %vm1771, %v6958, 0.0
        %v6991 = vsel %vm1772, %v6959, 0.0
        %v6992 = vsel %vm1773, %v6960, 0.0
        %v6993 = vsel %vm1774, %v6961, 0.0
        %v6994 = vsel %vm1775, %v6962, 0.0
        %v6995 = vsel %vm1776, %v6963, 0.0
        %v6996 = vsel %vm1777, %v6964, 0.0
        %v6997 = vsel %vm1778, %v6965, 0.0
        %v6998 = vsel %vm1779, %v6966, 0.0
        %v6999 = vsel %vm1780, %v6967, 0.0
        %v7000 = vsel %vm1781, %v6968, 0.0
        %v7001 = vsel %vm1782, %v6969, 0.0
        %v7002 = vsel %vm1783, %v6970, 0.0
        %v7003 = vsel %vm1784, %v6971, 0.0
        %v7004 = vsel %vm1785, %v6972, 0.0
        %v7005 = vsel %vm1786, %v6973, 0.0
        %v7006 = vsel %vm1787, %v6974, 0.0
        %v7007 = vsel %vm1788, %v6975, 0.0
        %v7008 = vsel %vm1789, %v6976, 0.0
        %v7009 = vsel %vm1790, %v6977, 0.0
        %v7010 = vsel %vm1791, %v6978, 0.0
        %v7011 = vsel %vm1792, %v6979, 0.0
        %v7012 = vsel %vm1793, %v6980, 0.0
        %v7013 = vsel %vm1794, %v6981, 0.0
        %v7014 = vpack.c.bf16 %v6983, %v6982
        %v7015 = vpack.c.bf16 %v6985, %v6984
        %v7016 = vpack.c.bf16 %v6987, %v6986
        %v7017 = vpack.c.bf16 %v6989, %v6988
        %v7018 = vpack.c.bf16 %v6991, %v6990
        %v7019 = vpack.c.bf16 %v6993, %v6992
        %v7020 = vpack.c.bf16 %v6995, %v6994
        %v7021 = vpack.c.bf16 %v6997, %v6996
        %v7022 = vpack.c.bf16 %v6999, %v6998
        %v7023 = vpack.c.bf16 %v7001, %v7000
        %v7024 = vpack.c.bf16 %v7003, %v7002
        %v7025 = vpack.c.bf16 %v7005, %v7004
        %v7026 = vpack.c.bf16 %v7007, %v7006
        %v7027 = vpack.c.bf16 %v7009, %v7008
        %v7028 = vpack.c.bf16 %v7011, %v7010
        %v7029 = vpack.c.bf16 %v7013, %v7012
        %s7030 = scalar_lea.vmem %s7, 128
        %v7031 = vld [vmem:[%s7030] sm:$0xff]
        %v7032 = vld [vmem:[%s7030 + $0x8] sm:$0xff]
        %v7033 = vpack.c.bf16 %v7032, %v7031
        %v7035 = vsel %vm4440, %v7014, 0
        %v7038 = vsel %vm4440, %v7015, 0
        %v7041 = vsel %vm4440, %v7016, 0
        %v7044 = vsel %vm4440, %v7017, 0
        %v7047 = vsel %vm4440, %v7018, 0
        %v7050 = vsel %vm4440, %v7019, 0
        %v7053 = vsel %vm4440, %v7020, 0
        %v7056 = vsel %vm4440, %v7021, 0
        %v7059 = vsel %vm4440, %v7022, 0
        %v7062 = vsel %vm4440, %v7023, 0
        %v7065 = vsel %vm4440, %v7024, 0
        %v7068 = vsel %vm4440, %v7025, 0
        %v7071 = vsel %vm4440, %v7026, 0
        %v7074 = vsel %vm4440, %v7027, 0
        %v7077 = vsel %vm4440, %v7028, 0
        %v7080 = vsel %vm4440, %v7029, 0
        %7082 = vmatprep.subr.bf16.mxu0 0
        %7083 = vmatpush1.bf16.msra.mxu0 %v7033
        %7084 = vmatprep.subr.bf16.mxu0 0
        %7085 = vmatpush1.bf16.msra.mxu0 0
        %7086 = vmatprep.subr.bf16.mxu0 0
        %7087 = vmatpush1.bf16.msra.mxu0 0
        %7088 = vmatprep.subr.bf16.mxu0 0
        %7089 = vmatpush1.bf16.msra.mxu0 0
        %7090 = vmatprep.subr.bf16.mxu0 0
        %7091 = vmatpush1.bf16.msra.mxu0 0
        %7092 = vmatprep.subr.bf16.mxu0 0
        %7093 = vmatpush1.bf16.msra.mxu0 0
        %7094 = vmatprep.subr.bf16.mxu0 0
        %7095 = vmatpush1.bf16.msra.mxu0 0
        %7096 = vmatprep.subr.bf16.mxu0 0
        %7097 = vmatpush1.bf16.msra.mxu0 0
        %7098 = vmatprep.subr.bf16.mxu0 0
        %7099 = vmatpush1.bf16.msra.mxu0 0
        %7100 = vmatprep.subr.bf16.mxu0 0
        %7101 = vmatpush1.bf16.msra.mxu0 0
        %7102 = vmatprep.subr.bf16.mxu0 0
        %7103 = vmatpush1.bf16.msra.mxu0 0
        %7104 = vmatprep.subr.bf16.mxu0 0
        %7105 = vmatpush1.bf16.msra.mxu0 0
        %7106 = vmatprep.subr.bf16.mxu0 0
        %7107 = vmatpush1.bf16.msra.mxu0 0
        %7108 = vmatprep.subr.bf16.mxu0 0
        %7109 = vmatpush1.bf16.msra.mxu0 0
        %7110 = vmatprep.subr.bf16.mxu0 0
        %7111 = vmatpush1.bf16.msra.mxu0 0
        %7112 = vmatprep.subr.bf16.mxu0 0
        %7113 = vmatpush1.bf16.msra.mxu0 0
        %7114 = vmatprep.mubr.bf16.mxu0 0
        %7115 = vmatmul.mubr.bf16.gmra.mrb[0].mxu0 %v7035
        %v7116 = vpop.f32.mrb[0].mxu0
        %v7117 = vadd.f32 0.0, %v7116
        %v7118 = vpop.f32.mrb[0].mxu0
        %v7119 = vpop.f32.mrb[0].mxu0
        %v7120 = vadd.f32 0.0, %v7119
        %v7121 = vpop.f32.mrb[0].mxu0
        %7122 = vmatprep.mubr.bf16.mxu0 0
        %7123 = vmatmul.mubr.bf16.gmra.mrb[0].mxu0 %v7038
        %v7124 = vpop.f32.mrb[0].mxu0
        %v7125 = vadd.f32 0.0, %v7124
        %v7126 = vpop.f32.mrb[0].mxu0
        %v7127 = vpop.f32.mrb[0].mxu0
        %v7128 = vadd.f32 0.0, %v7127
        %v7129 = vpop.f32.mrb[0].mxu0
        %7130 = vmatprep.mubr.bf16.mxu0 0
        %7131 = vmatmul.mubr.bf16.gmra.mrb[0].mxu0 %v7041
        %v7132 = vpop.f32.mrb[0].mxu0
        %v7133 = vadd.f32 0.0, %v7132
        %v7134 = vpop.f32.mrb[0].mxu0
        %v7135 = vpop.f32.mrb[0].mxu0
        %v7136 = vadd.f32 0.0, %v7135
        %v7137 = vpop.f32.mrb[0].mxu0
        %7138 = vmatprep.mubr.bf16.mxu0 0
        %7139 = vmatmul.mubr.bf16.gmra.mrb[0].mxu0 %v7044
        %v7140 = vpop.f32.mrb[0].mxu0
        %v7141 = vadd.f32 0.0, %v7140
        %v7142 = vpop.f32.mrb[0].mxu0
        %v7143 = vpop.f32.mrb[0].mxu0
        %v7144 = vadd.f32 0.0, %v7143
        %v7145 = vpop.f32.mrb[0].mxu0
        %7146 = vmatprep.mubr.bf16.mxu0 0
        %7147 = vmatmul.mubr.bf16.gmra.mrb[0].mxu0 %v7047
        %v7148 = vpop.f32.mrb[0].mxu0
        %v7149 = vadd.f32 0.0, %v7148
        %v7150 = vpop.f32.mrb[0].mxu0
        %v7151 = vpop.f32.mrb[0].mxu0
        %v7152 = vadd.f32 0.0, %v7151
        %v7153 = vpop.f32.mrb[0].mxu0
        %7154 = vmatprep.mubr.bf16.mxu0 0
        %7155 = vmatmul.mubr.bf16.gmra.mrb[0].mxu0 %v7050
        %v7156 = vpop.f32.mrb[0].mxu0
        %v7157 = vadd.f32 0.0, %v7156
        %v7158 = vpop.f32.mrb[0].mxu0
        %v7159 = vpop.f32.mrb[0].mxu0
        %v7160 = vadd.f32 0.0, %v7159
        %v7161 = vpop.f32.mrb[0].mxu0
        %7162 = vmatprep.mubr.bf16.mxu0 0
        %7163 = vmatmul.mubr.bf16.gmra.mrb[0].mxu0 %v7053
        %v7164 = vpop.f32.mrb[0].mxu0
        %v7165 = vadd.f32 0.0, %v7164
        %v7166 = vpop.f32.mrb[0].mxu0
        %v7167 = vpop.f32.mrb[0].mxu0
        %v7168 = vadd.f32 0.0, %v7167
        %v7169 = vpop.f32.mrb[0].mxu0
        %7170 = vmatprep.mubr.bf16.mxu0 0
        %7171 = vmatmul.mubr.bf16.gmra.mrb[0].mxu0 %v7056
        %v7172 = vpop.f32.mrb[0].mxu0
        %v7173 = vadd.f32 0.0, %v7172
        %v7174 = vpop.f32.mrb[0].mxu0
        %v7175 = vpop.f32.mrb[0].mxu0
        %v7176 = vadd.f32 0.0, %v7175
        %v7177 = vpop.f32.mrb[0].mxu0
        %7178 = vmatprep.mubr.bf16.mxu0 0
        %7179 = vmatmul.mubr.bf16.gmra.mrb[0].mxu0 %v7059
        %v7180 = vpop.f32.mrb[0].mxu0
        %v7181 = vadd.f32 0.0, %v7180
        %v7182 = vpop.f32.mrb[0].mxu0
        %v7183 = vpop.f32.mrb[0].mxu0
        %v7184 = vadd.f32 0.0, %v7183
        %v7185 = vpop.f32.mrb[0].mxu0
        %7186 = vmatprep.mubr.bf16.mxu0 0
        %7187 = vmatmul.mubr.bf16.gmra.mrb[0].mxu0 %v7062
        %v7188 = vpop.f32.mrb[0].mxu0
        %v7189 = vadd.f32 0.0, %v7188
        %v7190 = vpop.f32.mrb[0].mxu0
        %v7191 = vpop.f32.mrb[0].mxu0
        %v7192 = vadd.f32 0.0, %v7191
        %v7193 = vpop.f32.mrb[0].mxu0
        %7194 = vmatprep.mubr.bf16.mxu0 0
        %7195 = vmatmul.mubr.bf16.gmra.mrb[0].mxu0 %v7065
        %v7196 = vpop.f32.mrb[0].mxu0
        %v7197 = vadd.f32 0.0, %v7196
        %v7198 = vpop.f32.mrb[0].mxu0
        %v7199 = vpop.f32.mrb[0].mxu0
        %v7200 = vadd.f32 0.0, %v7199
        %v7201 = vpop.f32.mrb[0].mxu0
        %7202 = vmatprep.mubr.bf16.mxu0 0
        %7203 = vmatmul.mubr.bf16.gmra.mrb[0].mxu0 %v7068
        %v7204 = vpop.f32.mrb[0].mxu0
        %v7205 = vadd.f32 0.0, %v7204
        %v7206 = vpop.f32.mrb[0].mxu0
        %v7207 = vpop.f32.mrb[0].mxu0
        %v7208 = vadd.f32 0.0, %v7207
        %v7209 = vpop.f32.mrb[0].mxu0
        %7210 = vmatprep.mubr.bf16.mxu0 0
        %7211 = vmatmul.mubr.bf16.gmra.mrb[0].mxu0 %v7071
        %v7212 = vpop.f32.mrb[0].mxu0
        %v7213 = vadd.f32 0.0, %v7212
        %v7214 = vpop.f32.mrb[0].mxu0
        %v7215 = vpop.f32.mrb[0].mxu0
        %v7216 = vadd.f32 0.0, %v7215
        %v7217 = vpop.f32.mrb[0].mxu0
        %7218 = vmatprep.mubr.bf16.mxu0 0
        %7219 = vmatmul.mubr.bf16.gmra.mrb[0].mxu0 %v7074
        %v7220 = vpop.f32.mrb[0].mxu0
        %v7221 = vadd.f32 0.0, %v7220
        %v7222 = vpop.f32.mrb[0].mxu0
        %v7223 = vpop.f32.mrb[0].mxu0
        %v7224 = vadd.f32 0.0, %v7223
        %v7225 = vpop.f32.mrb[0].mxu0
        %7226 = vmatprep.mubr.bf16.mxu0 0
        %7227 = vmatmul.mubr.bf16.gmra.mrb[0].mxu0 %v7077
        %v7228 = vpop.f32.mrb[0].mxu0
        %v7229 = vadd.f32 0.0, %v7228
        %v7230 = vpop.f32.mrb[0].mxu0
        %v7231 = vpop.f32.mrb[0].mxu0
        %v7232 = vadd.f32 0.0, %v7231
        %v7233 = vpop.f32.mrb[0].mxu0
        %7234 = vmatprep.mubr.bf16.mxu0 0
        %7235 = vmatmul.mubr.bf16.gmra.mrb[0].mxu0 %v7080
        %v7236 = vpop.f32.mrb[0].mxu0
        %v7237 = vadd.f32 0.0, %v7236
        %v7238 = vpop.f32.mrb[0].mxu0
        %v7239 = vpop.f32.mrb[0].mxu0
        %v7240 = vadd.f32 0.0, %v7239
        %v7241 = vpop.f32.mrb[0].mxu0
        %7242 = vdwg.mxu0
        %v7243 = vadd.f32 %v6918, %v7117
        %v7244 = vadd.f32 %v6919, %v7120
        %v7245 = vadd.f32 %v6920, %v7125
        %v7246 = vadd.f32 %v6921, %v7128
        %v7247 = vadd.f32 %v6922, %v7133
        %v7248 = vadd.f32 %v6923, %v7136
        %v7249 = vadd.f32 %v6924, %v7141
        %v7250 = vadd.f32 %v6925, %v7144
        %v7251 = vadd.f32 %v6926, %v7149
        %v7252 = vadd.f32 %v6927, %v7152
        %v7253 = vadd.f32 %v6928, %v7157
        %v7254 = vadd.f32 %v6929, %v7160
        %v7255 = vadd.f32 %v6930, %v7165
        %v7256 = vadd.f32 %v6931, %v7168
        %v7257 = vadd.f32 %v6932, %v7173
        %v7258 = vadd.f32 %v6933, %v7176
        %v7259 = vadd.f32 %v6934, %v7181
        %v7260 = vadd.f32 %v6935, %v7184
        %v7261 = vadd.f32 %v6936, %v7189
        %v7262 = vadd.f32 %v6937, %v7192
        %v7263 = vadd.f32 %v6938, %v7197
        %v7264 = vadd.f32 %v6939, %v7200
        %v7265 = vadd.f32 %v6940, %v7205
        %v7266 = vadd.f32 %v6941, %v7208
        %v7267 = vadd.f32 %v6942, %v7213
        %v7268 = vadd.f32 %v6943, %v7216
        %v7269 = vadd.f32 %v6944, %v7221
        %v7270 = vadd.f32 %v6945, %v7224
        %v7271 = vadd.f32 %v6946, %v7229
        %v7272 = vadd.f32 %v6947, %v7232
        %v7273 = vadd.f32 %v6948, %v7237
        %v7274 = vadd.f32 %v6949, %v7240
        %v7275 = vld [vmem:[%s8] sm:$0x1]
        %v7277 = vlaneseq
        %v7278 = vshrl.u32 %v7277, 7
        %v7279 = vsub.s32 0, %v7278
        %v7280 = vrot.slane %v7275, %v7279
        %v7282 = vmul.f32 %v7243, %v7280
        %v7283 = vmul.f32 %v7244, %v7280
        %v7284 = vmul.f32 %v7245, %v7280
        %v7285 = vmul.f32 %v7246, %v7280
        %v7286 = vmul.f32 %v7247, %v7280
        %v7287 = vmul.f32 %v7248, %v7280
        %v7288 = vmul.f32 %v7249, %v7280
        %v7289 = vmul.f32 %v7250, %v7280
        %v7290 = vmul.f32 %v7251, %v7280
        %v7291 = vmul.f32 %v7252, %v7280
        %v7292 = vmul.f32 %v7253, %v7280
        %v7293 = vmul.f32 %v7254, %v7280
        %v7294 = vmul.f32 %v7255, %v7280
        %v7295 = vmul.f32 %v7256, %v7280
        %v7296 = vmul.f32 %v7257, %v7280
        %v7297 = vmul.f32 %v7258, %v7280
        %v7298 = vmul.f32 %v7259, %v7280
        %v7299 = vmul.f32 %v7260, %v7280
        %v7300 = vmul.f32 %v7261, %v7280
        %v7301 = vmul.f32 %v7262, %v7280
        %v7302 = vmul.f32 %v7263, %v7280
        %v7303 = vmul.f32 %v7264, %v7280
        %v7304 = vmul.f32 %v7265, %v7280
        %v7305 = vmul.f32 %v7266, %v7280
        %v7306 = vmul.f32 %v7267, %v7280
        %v7307 = vmul.f32 %v7268, %v7280
        %v7308 = vmul.f32 %v7269, %v7280
        %v7309 = vmul.f32 %v7270, %v7280
        %v7310 = vmul.f32 %v7271, %v7280
        %v7311 = vmul.f32 %v7272, %v7280
        %v7312 = vmul.f32 %v7273, %v7280
        %v7313 = vmul.f32 %v7274, %v7280
        %v7314 = vld [vmem:[%s9] sm:$0x1]
        %v7316 = vlaneseq
        %v7317 = vshrl.u32 %v7316, 7
        %v7318 = vsub.s32 0, %v7317
        %v7319 = vrot.slane %v7314, %v7318
        %v7321 = vadd.f32 %v7282, %v7319
        %v7322 = vadd.f32 %v7283, %v7319
        %v7323 = vadd.f32 %v7284, %v7319
        %v7324 = vadd.f32 %v7285, %v7319
        %v7325 = vadd.f32 %v7286, %v7319
        %v7326 = vadd.f32 %v7287, %v7319
        %v7327 = vadd.f32 %v7288, %v7319
        %v7328 = vadd.f32 %v7289, %v7319
        %v7329 = vadd.f32 %v7290, %v7319
        %v7330 = vadd.f32 %v7291, %v7319
        %v7331 = vadd.f32 %v7292, %v7319
        %v7332 = vadd.f32 %v7293, %v7319
        %v7333 = vadd.f32 %v7294, %v7319
        %v7334 = vadd.f32 %v7295, %v7319
        %v7335 = vadd.f32 %v7296, %v7319
        %v7336 = vadd.f32 %v7297, %v7319
        %v7337 = vadd.f32 %v7298, %v7319
        %v7338 = vadd.f32 %v7299, %v7319
        %v7339 = vadd.f32 %v7300, %v7319
        %v7340 = vadd.f32 %v7301, %v7319
        %v7341 = vadd.f32 %v7302, %v7319
        %v7342 = vadd.f32 %v7303, %v7319
        %v7343 = vadd.f32 %v7304, %v7319
        %v7344 = vadd.f32 %v7305, %v7319
        %v7345 = vadd.f32 %v7306, %v7319
        %v7346 = vadd.f32 %v7307, %v7319
        %v7347 = vadd.f32 %v7308, %v7319
        %v7348 = vadd.f32 %v7309, %v7319
        %v7349 = vadd.f32 %v7310, %v7319
        %v7350 = vadd.f32 %v7311, %v7319
        %v7351 = vadd.f32 %v7312, %v7319
        %v7352 = vadd.f32 %v7313, %v7319
        %v7353 = vmax.f32 %v7321, 0.0
        %v7354 = vmax.f32 %v7322, 0.0
        %v7355 = vmax.f32 %v7323, 0.0
        %v7356 = vmax.f32 %v7324, 0.0
        %v7357 = vmax.f32 %v7325, 0.0
        %v7358 = vmax.f32 %v7326, 0.0
        %v7359 = vmax.f32 %v7327, 0.0
        %v7360 = vmax.f32 %v7328, 0.0
        %v7361 = vmax.f32 %v7329, 0.0
        %v7362 = vmax.f32 %v7330, 0.0
        %v7363 = vmax.f32 %v7331, 0.0
        %v7364 = vmax.f32 %v7332, 0.0
        %v7365 = vmax.f32 %v7333, 0.0
        %v7366 = vmax.f32 %v7334, 0.0
        %v7367 = vmax.f32 %v7335, 0.0
        %v7368 = vmax.f32 %v7336, 0.0
        %v7369 = vmax.f32 %v7337, 0.0
        %v7370 = vmax.f32 %v7338, 0.0
        %v7371 = vmax.f32 %v7339, 0.0
        %v7372 = vmax.f32 %v7340, 0.0
        %v7373 = vmax.f32 %v7341, 0.0
        %v7374 = vmax.f32 %v7342, 0.0
        %v7375 = vmax.f32 %v7343, 0.0
        %v7376 = vmax.f32 %v7344, 0.0
        %v7377 = vmax.f32 %v7345, 0.0
        %v7378 = vmax.f32 %v7346, 0.0
        %v7379 = vmax.f32 %v7347, 0.0
        %v7380 = vmax.f32 %v7348, 0.0
        %v7381 = vmax.f32 %v7349, 0.0
        %v7382 = vmax.f32 %v7350, 0.0
        %v7383 = vmax.f32 %v7351, 0.0
        %v7384 = vmax.f32 %v7352, 0.0
        %v7385 = vpack.c.bf16 %v7354, %v7353
        %v7386 = vpack.c.bf16 %v7356, %v7355
        %v7387 = vpack.c.bf16 %v7358, %v7357
        %v7388 = vpack.c.bf16 %v7360, %v7359
        %v7389 = vpack.c.bf16 %v7362, %v7361
        %v7390 = vpack.c.bf16 %v7364, %v7363
        %v7391 = vpack.c.bf16 %v7366, %v7365
        %v7392 = vpack.c.bf16 %v7368, %v7367
        %v7393 = vpack.c.bf16 %v7370, %v7369
        %v7394 = vpack.c.bf16 %v7372, %v7371
        %v7395 = vpack.c.bf16 %v7374, %v7373
        %v7396 = vpack.c.bf16 %v7376, %v7375
        %v7397 = vpack.c.bf16 %v7378, %v7377
        %v7398 = vpack.c.bf16 %v7380, %v7379
        %v7399 = vpack.c.bf16 %v7382, %v7381
        %v7400 = vpack.c.bf16 %v7384, %v7383
        %v7401 = vld [vmem:[%s10] sm:$0xff]
        %v7402 = vld [vmem:[%s10 + $0x8] sm:$0xff]
        %v7403 = vpack.c.bf16 %v7402, %v7401
        %v7405 = vsel %vm4440, %v7385, 0
        %v7408 = vsel %vm4440, %v7386, 0
        %v7411 = vsel %vm4440, %v7387, 0
        %v7414 = vsel %vm4440, %v7388, 0
        %v7417 = vsel %vm4440, %v7389, 0
        %v7420 = vsel %vm4440, %v7390, 0
        %v7423 = vsel %vm4440, %v7391, 0
        %v7426 = vsel %vm4440, %v7392, 0
        %v7429 = vsel %vm4440, %v7393, 0
        %v7432 = vsel %vm4440, %v7394, 0
        %v7435 = vsel %vm4440, %v7395, 0
        %v7438 = vsel %vm4440, %v7396, 0
        %v7441 = vsel %vm4440, %v7397, 0
        %v7444 = vsel %vm4440, %v7398, 0
        %v7447 = vsel %vm4440, %v7399, 0
        %v7450 = vsel %vm4440, %v7400, 0
        %7452 = vmatprep.subr.bf16.mxu0 0
        %7453 = vmatpush1.bf16.msra.mxu0 %v7403
        %7454 = vmatprep.subr.bf16.mxu0 0
        %7455 = vmatpush1.bf16.msra.mxu0 0
        %7456 = vmatprep.subr.bf16.mxu0 0
        %7457 = vmatpush1.bf16.msra.mxu0 0
        %7458 = vmatprep.subr.bf16.mxu0 0
        %7459 = vmatpush1.bf16.msra.mxu0 0
        %7460 = vmatprep.subr.bf16.mxu0 0
        %7461 = vmatpush1.bf16.msra.mxu0 0
        %7462 = vmatprep.subr.bf16.mxu0 0
        %7463 = vmatpush1.bf16.msra.mxu0 0
        %7464 = vmatprep.subr.bf16.mxu0 0
        %7465 = vmatpush1.bf16.msra.mxu0 0
        %7466 = vmatprep.subr.bf16.mxu0 0
        %7467 = vmatpush1.bf16.msra.mxu0 0
        %7468 = vmatprep.subr.bf16.mxu0 0
        %7469 = vmatpush1.bf16.msra.mxu0 0
        %7470 = vmatprep.subr.bf16.mxu0 0
        %7471 = vmatpush1.bf16.msra.mxu0 0
        %7472 = vmatprep.subr.bf16.mxu0 0
        %7473 = vmatpush1.bf16.msra.mxu0 0
        %7474 = vmatprep.subr.bf16.mxu0 0
        %7475 = vmatpush1.bf16.msra.mxu0 0
        %7476 = vmatprep.subr.bf16.mxu0 0
        %7477 = vmatpush1.bf16.msra.mxu0 0
        %7478 = vmatprep.subr.bf16.mxu0 0
        %7479 = vmatpush1.bf16.msra.mxu0 0
        %7480 = vmatprep.subr.bf16.mxu0 0
        %7481 = vmatpush1.bf16.msra.mxu0 0
        %7482 = vmatprep.subr.bf16.mxu0 0
        %7483 = vmatpush1.bf16.msra.mxu0 0
        %7484 = vmatprep.mubr.bf16.mxu0 0
        %7485 = vmatmul.mubr.bf16.gmra.mrb[0].mxu0 %v7405
        %v7486 = vpop.f32.mrb[0].mxu0
        %v7487 = vadd.f32 0.0, %v7486
        %v7488 = vpop.f32.mrb[0].mxu0
        %v7489 = vpop.f32.mrb[0].mxu0
        %v7490 = vadd.f32 0.0, %v7489
        %v7491 = vpop.f32.mrb[0].mxu0
        %7492 = vmatprep.mubr.bf16.mxu0 0
        %7493 = vmatmul.mubr.bf16.gmra.mrb[0].mxu0 %v7408
        %v7494 = vpop.f32.mrb[0].mxu0
        %v7495 = vadd.f32 0.0, %v7494
        %v7496 = vpop.f32.mrb[0].mxu0
        %v7497 = vpop.f32.mrb[0].mxu0
        %v7498 = vadd.f32 0.0, %v7497
        %v7499 = vpop.f32.mrb[0].mxu0
        %7500 = vmatprep.mubr.bf16.mxu0 0
        %7501 = vmatmul.mubr.bf16.gmra.mrb[0].mxu0 %v7411
        %v7502 = vpop.f32.mrb[0].mxu0
        %v7503 = vadd.f32 0.0, %v7502
        %v7504 = vpop.f32.mrb[0].mxu0
        %v7505 = vpop.f32.mrb[0].mxu0
        %v7506 = vadd.f32 0.0, %v7505
        %v7507 = vpop.f32.mrb[0].mxu0
        %7508 = vmatprep.mubr.bf16.mxu0 0
        %7509 = vmatmul.mubr.bf16.gmra.mrb[0].mxu0 %v7414
        %v7510 = vpop.f32.mrb[0].mxu0
        %v7511 = vadd.f32 0.0, %v7510
        %v7512 = vpop.f32.mrb[0].mxu0
        %v7513 = vpop.f32.mrb[0].mxu0
        %v7514 = vadd.f32 0.0, %v7513
        %v7515 = vpop.f32.mrb[0].mxu0
        %7516 = vmatprep.mubr.bf16.mxu0 0
        %7517 = vmatmul.mubr.bf16.gmra.mrb[0].mxu0 %v7417
        %v7518 = vpop.f32.mrb[0].mxu0
        %v7519 = vadd.f32 0.0, %v7518
        %v7520 = vpop.f32.mrb[0].mxu0
        %v7521 = vpop.f32.mrb[0].mxu0
        %v7522 = vadd.f32 0.0, %v7521
        %v7523 = vpop.f32.mrb[0].mxu0
        %7524 = vmatprep.mubr.bf16.mxu0 0
        %7525 = vmatmul.mubr.bf16.gmra.mrb[0].mxu0 %v7420
        %v7526 = vpop.f32.mrb[0].mxu0
        %v7527 = vadd.f32 0.0, %v7526
        %v7528 = vpop.f32.mrb[0].mxu0
        %v7529 = vpop.f32.mrb[0].mxu0
        %v7530 = vadd.f32 0.0, %v7529
        %v7531 = vpop.f32.mrb[0].mxu0
        %7532 = vmatprep.mubr.bf16.mxu0 0
        %7533 = vmatmul.mubr.bf16.gmra.mrb[0].mxu0 %v7423
        %v7534 = vpop.f32.mrb[0].mxu0
        %v7535 = vadd.f32 0.0, %v7534
        %v7536 = vpop.f32.mrb[0].mxu0
        %v7537 = vpop.f32.mrb[0].mxu0
        %v7538 = vadd.f32 0.0, %v7537
        %v7539 = vpop.f32.mrb[0].mxu0
        %7540 = vmatprep.mubr.bf16.mxu0 0
        %7541 = vmatmul.mubr.bf16.gmra.mrb[0].mxu0 %v7426
        %v7542 = vpop.f32.mrb[0].mxu0
        %v7543 = vadd.f32 0.0, %v7542
        %v7544 = vpop.f32.mrb[0].mxu0
        %v7545 = vpop.f32.mrb[0].mxu0
        %v7546 = vadd.f32 0.0, %v7545
        %v7547 = vpop.f32.mrb[0].mxu0
        %7548 = vmatprep.mubr.bf16.mxu0 0
        %7549 = vmatmul.mubr.bf16.gmra.mrb[0].mxu0 %v7429
        %v7550 = vpop.f32.mrb[0].mxu0
        %v7551 = vadd.f32 0.0, %v7550
        %v7552 = vpop.f32.mrb[0].mxu0
        %v7553 = vpop.f32.mrb[0].mxu0
        %v7554 = vadd.f32 0.0, %v7553
        %v7555 = vpop.f32.mrb[0].mxu0
        %7556 = vmatprep.mubr.bf16.mxu0 0
        %7557 = vmatmul.mubr.bf16.gmra.mrb[0].mxu0 %v7432
        %v7558 = vpop.f32.mrb[0].mxu0
        %v7559 = vadd.f32 0.0, %v7558
        %v7560 = vpop.f32.mrb[0].mxu0
        %v7561 = vpop.f32.mrb[0].mxu0
        %v7562 = vadd.f32 0.0, %v7561
        %v7563 = vpop.f32.mrb[0].mxu0
        %7564 = vmatprep.mubr.bf16.mxu0 0
        %7565 = vmatmul.mubr.bf16.gmra.mrb[0].mxu0 %v7435
        %v7566 = vpop.f32.mrb[0].mxu0
        %v7567 = vadd.f32 0.0, %v7566
        %v7568 = vpop.f32.mrb[0].mxu0
        %v7569 = vpop.f32.mrb[0].mxu0
        %v7570 = vadd.f32 0.0, %v7569
        %v7571 = vpop.f32.mrb[0].mxu0
        %7572 = vmatprep.mubr.bf16.mxu0 0
        %7573 = vmatmul.mubr.bf16.gmra.mrb[0].mxu0 %v7438
        %v7574 = vpop.f32.mrb[0].mxu0
        %v7575 = vadd.f32 0.0, %v7574
        %v7576 = vpop.f32.mrb[0].mxu0
        %v7577 = vpop.f32.mrb[0].mxu0
        %v7578 = vadd.f32 0.0, %v7577
        %v7579 = vpop.f32.mrb[0].mxu0
        %7580 = vmatprep.mubr.bf16.mxu0 0
        %7581 = vmatmul.mubr.bf16.gmra.mrb[0].mxu0 %v7441
        %v7582 = vpop.f32.mrb[0].mxu0
        %v7583 = vadd.f32 0.0, %v7582
        %v7584 = vpop.f32.mrb[0].mxu0
        %v7585 = vpop.f32.mrb[0].mxu0
        %v7586 = vadd.f32 0.0, %v7585
        %v7587 = vpop.f32.mrb[0].mxu0
        %7588 = vmatprep.mubr.bf16.mxu0 0
        %7589 = vmatmul.mubr.bf16.gmra.mrb[0].mxu0 %v7444
        %v7590 = vpop.f32.mrb[0].mxu0
        %v7591 = vadd.f32 0.0, %v7590
        %v7592 = vpop.f32.mrb[0].mxu0
        %v7593 = vpop.f32.mrb[0].mxu0
        %v7594 = vadd.f32 0.0, %v7593
        %v7595 = vpop.f32.mrb[0].mxu0
        %7596 = vmatprep.mubr.bf16.mxu0 0
        %7597 = vmatmul.mubr.bf16.gmra.mrb[0].mxu0 %v7447
        %v7598 = vpop.f32.mrb[0].mxu0
        %v7599 = vadd.f32 0.0, %v7598
        %v7600 = vpop.f32.mrb[0].mxu0
        %v7601 = vpop.f32.mrb[0].mxu0
        %v7602 = vadd.f32 0.0, %v7601
        %v7603 = vpop.f32.mrb[0].mxu0
        %7604 = vmatprep.mubr.bf16.mxu0 0
        %7605 = vmatmul.mubr.bf16.gmra.mrb[0].mxu0 %v7450
        %v7606 = vpop.f32.mrb[0].mxu0
        %v7607 = vadd.f32 0.0, %v7606
        %v7608 = vpop.f32.mrb[0].mxu0
        %v7609 = vpop.f32.mrb[0].mxu0
        %v7610 = vadd.f32 0.0, %v7609
        %v7611 = vpop.f32.mrb[0].mxu0
        %7612 = vdwg.mxu0
        %v7613 = vld [vmem:[%s11] sm:$0x1]
        %v7615 = vlaneseq
        %v7616 = vshrl.u32 %v7615, 7
        %v7617 = vsub.s32 0, %v7616
        %v7618 = vrot.slane %v7613, %v7617
        %v7620 = vmul.f32 %v7487, %v7618
        %v7621 = vmul.f32 %v7490, %v7618
        %v7622 = vmul.f32 %v7495, %v7618
        %v7623 = vmul.f32 %v7498, %v7618
        %v7624 = vmul.f32 %v7503, %v7618
        %v7625 = vmul.f32 %v7506, %v7618
        %v7626 = vmul.f32 %v7511, %v7618
        %v7627 = vmul.f32 %v7514, %v7618
        %v7628 = vmul.f32 %v7519, %v7618
        %v7629 = vmul.f32 %v7522, %v7618
        %v7630 = vmul.f32 %v7527, %v7618
        %v7631 = vmul.f32 %v7530, %v7618
        %v7632 = vmul.f32 %v7535, %v7618
        %v7633 = vmul.f32 %v7538, %v7618
        %v7634 = vmul.f32 %v7543, %v7618
        %v7635 = vmul.f32 %v7546, %v7618
        %v7636 = vmul.f32 %v7551, %v7618
        %v7637 = vmul.f32 %v7554, %v7618
        %v7638 = vmul.f32 %v7559, %v7618
        %v7639 = vmul.f32 %v7562, %v7618
        %v7640 = vmul.f32 %v7567, %v7618
        %v7641 = vmul.f32 %v7570, %v7618
        %v7642 = vmul.f32 %v7575, %v7618
        %v7643 = vmul.f32 %v7578, %v7618
        %v7644 = vmul.f32 %v7583, %v7618
        %v7645 = vmul.f32 %v7586, %v7618
        %v7646 = vmul.f32 %v7591, %v7618
        %v7647 = vmul.f32 %v7594, %v7618
        %v7648 = vmul.f32 %v7599, %v7618
        %v7649 = vmul.f32 %v7602, %v7618
        %v7650 = vmul.f32 %v7607, %v7618
        %v7651 = vmul.f32 %v7610, %v7618
        %v7652 = vld [vmem:[%s12] sm:$0x1]
        %v7654 = vlaneseq
        %v7655 = vshrl.u32 %v7654, 7
        %v7656 = vsub.s32 0, %v7655
        %v7657 = vrot.slane %v7652, %v7656
        %v7659 = vadd.f32 %v7620, %v7657
        %v7660 = vadd.f32 %v7621, %v7657
        %v7661 = vadd.f32 %v7622, %v7657
        %v7662 = vadd.f32 %v7623, %v7657
        %v7663 = vadd.f32 %v7624, %v7657
        %v7664 = vadd.f32 %v7625, %v7657
        %v7665 = vadd.f32 %v7626, %v7657
        %v7666 = vadd.f32 %v7627, %v7657
        %v7667 = vadd.f32 %v7628, %v7657
        %v7668 = vadd.f32 %v7629, %v7657
        %v7669 = vadd.f32 %v7630, %v7657
        %v7670 = vadd.f32 %v7631, %v7657
        %v7671 = vadd.f32 %v7632, %v7657
        %v7672 = vadd.f32 %v7633, %v7657
        %v7673 = vadd.f32 %v7634, %v7657
        %v7674 = vadd.f32 %v7635, %v7657
        %v7675 = vadd.f32 %v7636, %v7657
        %v7676 = vadd.f32 %v7637, %v7657
        %v7677 = vadd.f32 %v7638, %v7657
        %v7678 = vadd.f32 %v7639, %v7657
        %v7679 = vadd.f32 %v7640, %v7657
        %v7680 = vadd.f32 %v7641, %v7657
        %v7681 = vadd.f32 %v7642, %v7657
        %v7682 = vadd.f32 %v7643, %v7657
        %v7683 = vadd.f32 %v7644, %v7657
        %v7684 = vadd.f32 %v7645, %v7657
        %v7685 = vadd.f32 %v7646, %v7657
        %v7686 = vadd.f32 %v7647, %v7657
        %v7687 = vadd.f32 %v7648, %v7657
        %v7688 = vadd.f32 %v7649, %v7657
        %v7689 = vadd.f32 %v7650, %v7657
        %v7690 = vadd.f32 %v7651, %v7657
        %v7691 = vadd.f32 %v7659, %v4066
        %v7692 = vadd.f32 %v7660, %v4067
        %v7693 = vadd.f32 %v7661, %v4068
        %v7694 = vadd.f32 %v7662, %v4069
        %v7695 = vadd.f32 %v7663, %v4070
        %v7696 = vadd.f32 %v7664, %v4071
        %v7697 = vadd.f32 %v7665, %v4072
        %v7698 = vadd.f32 %v7666, %v4073
        %v7699 = vadd.f32 %v7667, %v4074
        %v7700 = vadd.f32 %v7668, %v4075
        %v7701 = vadd.f32 %v7669, %v4076
        %v7702 = vadd.f32 %v7670, %v4077
        %v7703 = vadd.f32 %v7671, %v4078
        %v7704 = vadd.f32 %v7672, %v4079
        %v7705 = vadd.f32 %v7673, %v4080
        %v7706 = vadd.f32 %v7674, %v4081
        %v7707 = vadd.f32 %v7675, %v4082
        %v7708 = vadd.f32 %v7676, %v4083
        %v7709 = vadd.f32 %v7677, %v4084
        %v7710 = vadd.f32 %v7678, %v4085
        %v7711 = vadd.f32 %v7679, %v4086
        %v7712 = vadd.f32 %v7680, %v4087
        %v7713 = vadd.f32 %v7681, %v4088
        %v7714 = vadd.f32 %v7682, %v4089
        %v7715 = vadd.f32 %v7683, %v4090
        %v7716 = vadd.f32 %v7684, %v4091
        %v7717 = vadd.f32 %v7685, %v4092
        %v7718 = vadd.f32 %v7686, %v4093
        %v7719 = vadd.f32 %v7687, %v4094
        %v7720 = vadd.f32 %v7688, %v4095
        %v7721 = vadd.f32 %v7689, %v4096
        %v7722 = vadd.f32 %v7690, %v4097
        %v7723 = vmax.f32 %v7691, 0.0
        %v7724 = vmax.f32 %v7692, 0.0
        %v7725 = vmax.f32 %v7693, 0.0
        %v7726 = vmax.f32 %v7694, 0.0
        %v7727 = vmax.f32 %v7695, 0.0
        %v7728 = vmax.f32 %v7696, 0.0
        %v7729 = vmax.f32 %v7697, 0.0
        %v7730 = vmax.f32 %v7698, 0.0
        %v7731 = vmax.f32 %v7699, 0.0
        %v7732 = vmax.f32 %v7700, 0.0
        %v7733 = vmax.f32 %v7701, 0.0
        %v7734 = vmax.f32 %v7702, 0.0
        %v7735 = vmax.f32 %v7703, 0.0
        %v7736 = vmax.f32 %v7704, 0.0
        %v7737 = vmax.f32 %v7705, 0.0
        %v7738 = vmax.f32 %v7706, 0.0
        %v7739 = vmax.f32 %v7707, 0.0
        %v7740 = vmax.f32 %v7708, 0.0
        %v7741 = vmax.f32 %v7709, 0.0
        %v7742 = vmax.f32 %v7710, 0.0
        %v7743 = vmax.f32 %v7711, 0.0
        %v7744 = vmax.f32 %v7712, 0.0
        %v7745 = vmax.f32 %v7713, 0.0
        %v7746 = vmax.f32 %v7714, 0.0
        %v7747 = vmax.f32 %v7715, 0.0
        %v7748 = vmax.f32 %v7716, 0.0
        %v7749 = vmax.f32 %v7717, 0.0
        %v7750 = vmax.f32 %v7718, 0.0
        %v7751 = vmax.f32 %v7719, 0.0
        %v7752 = vmax.f32 %v7720, 0.0
        %v7753 = vmax.f32 %v7721, 0.0
        %v7754 = vmax.f32 %v7722, 0.0
        %v7755 = vld [vmem:[%s13] sm:$0xff]
        %v7756 = vld [vmem:[%s13 + $0x8] sm:$0xff]
        %v7757 = vld [vmem:[%s13 + $0x10] sm:$0xff]
        %v7758 = vld [vmem:[%s13 + $0x18] sm:$0xff]
        %v7760 = vsel %vm4120, %v7723, 0
        %v7763 = vsel %vm4120, %v7724, 0
        %v7766 = vsel %vm4120, %v7725, 0
        %v7769 = vsel %vm4120, %v7726, 0
        %v7772 = vsel %vm4120, %v7727, 0
        %v7775 = vsel %vm4120, %v7728, 0
        %v7778 = vsel %vm4120, %v7729, 0
        %v7781 = vsel %vm4120, %v7730, 0
        %v7784 = vsel %vm4120, %v7731, 0
        %v7787 = vsel %vm4120, %v7732, 0
        %v7790 = vsel %vm4120, %v7733, 0
        %v7793 = vsel %vm4120, %v7734, 0
        %v7796 = vsel %vm4120, %v7735, 0
        %v7799 = vsel %vm4120, %v7736, 0
        %v7802 = vsel %vm4120, %v7737, 0
        %v7805 = vsel %vm4120, %v7738, 0
        %v7808 = vsel %vm4120, %v7739, 0
        %v7811 = vsel %vm4120, %v7740, 0
        %v7814 = vsel %vm4120, %v7741, 0
        %v7817 = vsel %vm4120, %v7742, 0
        %v7820 = vsel %vm4120, %v7743, 0
        %v7823 = vsel %vm4120, %v7744, 0
        %v7826 = vsel %vm4120, %v7745, 0
        %v7829 = vsel %vm4120, %v7746, 0
        %v7832 = vsel %vm4120, %v7747, 0
        %v7835 = vsel %vm4120, %v7748, 0
        %v7838 = vsel %vm4120, %v7749, 0
        %v7841 = vsel %vm4120, %v7750, 0
        %v7844 = vsel %vm4120, %v7751, 0
        %v7847 = vsel %vm4120, %v7752, 0
        %v7850 = vsel %vm4120, %v7753, 0
        %v7853 = vsel %vm4120, %v7754, 0
        %7855 = vmatprep.subr.mxu0 0.0
        %7856 = vmatpush1.msra.mxu0 %v7755
        %7857 = vmatprep.subr.mxu0 0.0
        %7858 = vmatpush1.msra.mxu0 %v7756
        %7859 = vmatprep.subr.mxu0 0.0
        %7860 = vmatpush1.msra.mxu0 %v7757
        %7861 = vmatprep.subr.mxu0 0.0
        %7862 = vmatpush1.msra.mxu0 %v7758
        %7863 = vmatprep.subr.mxu0 0.0
        %7864 = vmatpush1.msra.mxu0 0.0
        %7865 = vmatprep.subr.mxu0 0.0
        %7866 = vmatpush1.msra.mxu0 0.0
        %7867 = vmatprep.subr.mxu0 0.0
        %7868 = vmatpush1.msra.mxu0 0.0
        %7869 = vmatprep.subr.mxu0 0.0
        %7870 = vmatpush1.msra.mxu0 0.0
        %7871 = vmatprep.subr.mxu0 0.0
        %7872 = vmatpush1.msra.mxu0 0.0
        %7873 = vmatprep.subr.mxu0 0.0
        %7874 = vmatpush1.msra.mxu0 0.0
        %7875 = vmatprep.subr.mxu0 0.0
        %7876 = vmatpush1.msra.mxu0 0.0
        %7877 = vmatprep.subr.mxu0 0.0
        %7878 = vmatpush1.msra.mxu0 0.0
        %7879 = vmatprep.subr.mxu0 0.0
        %7880 = vmatpush1.msra.mxu0 0.0
        %7881 = vmatprep.subr.mxu0 0.0
        %7882 = vmatpush1.msra.mxu0 0.0
        %7883 = vmatprep.subr.mxu0 0.0
        %7884 = vmatpush1.msra.mxu0 0.0
        %7885 = vmatprep.subr.mxu0 0.0
        %7886 = vmatpush1.msra.mxu0 0.0
        %7887 = vmatprep.subr.mxu0 0.0
        %7888 = vmatpush1.msra.mxu0 0.0
        %7889 = vmatprep.subr.mxu0 0.0
        %7890 = vmatpush1.msra.mxu0 0.0
        %7891 = vmatprep.subr.mxu0 0.0
        %7892 = vmatpush1.msra.mxu0 0.0
        %7893 = vmatprep.subr.mxu0 0.0
        %7894 = vmatpush1.msra.mxu0 0.0
        %7895 = vmatprep.subr.mxu0 0.0
        %7896 = vmatpush1.msra.mxu0 0.0
        %7897 = vmatprep.subr.mxu0 0.0
        %7898 = vmatpush1.msra.mxu0 0.0
        %7899 = vmatprep.subr.mxu0 0.0
        %7900 = vmatpush1.msra.mxu0 0.0
        %7901 = vmatprep.subr.mxu0 0.0
        %7902 = vmatpush1.msra.mxu0 0.0
        %7903 = vmatprep.subr.mxu0 0.0
        %7904 = vmatpush1.msra.mxu0 0.0
        %7905 = vmatprep.subr.mxu0 0.0
        %7906 = vmatpush1.msra.mxu0 0.0
        %7907 = vmatprep.subr.mxu0 0.0
        %7908 = vmatpush1.msra.mxu0 0.0
        %7909 = vmatprep.subr.mxu0 0.0
        %7910 = vmatpush1.msra.mxu0 0.0
        %7911 = vmatprep.subr.mxu0 0.0
        %7912 = vmatpush1.msra.mxu0 0.0
        %7913 = vmatprep.subr.mxu0 0.0
        %7914 = vmatpush1.msra.mxu0 0.0
        %7915 = vmatprep.subr.mxu0 0.0
        %7916 = vmatpush1.msra.mxu0 0.0
        %7917 = vmatprep.subr.mxu0 0.0
        %7918 = vmatpush1.msra.mxu0 0.0
        %7919 = vmatprep.mubr.f32.mxu0 0.0
        %7920 = vmatmul.mubr.f32.gmra.mrb[0].mxu0 %v7760
        %v7921 = vpop.f32.mrb[0].mxu0
        %v7922 = vadd.f32 0.0, %v7921
        %v7923 = vpop.f32.mrb[0].mxu0
        %7924 = vmatprep.mubr.f32.mxu0 0.0
        %7925 = vmatmul.mubr.f32.gmra.mrb[0].mxu0 %v7763
        %v7926 = vpop.f32.mrb[0].mxu0
        %v7927 = vadd.f32 0.0, %v7926
        %v7928 = vpop.f32.mrb[0].mxu0
        %7929 = vmatprep.mubr.f32.mxu0 0.0
        %7930 = vmatmul.mubr.f32.gmra.mrb[0].mxu0 %v7766
        %v7931 = vpop.f32.mrb[0].mxu0
        %v7932 = vadd.f32 0.0, %v7931
        %v7933 = vpop.f32.mrb[0].mxu0
        %7934 = vmatprep.mubr.f32.mxu0 0.0
        %7935 = vmatmul.mubr.f32.gmra.mrb[0].mxu0 %v7769
        %v7936 = vpop.f32.mrb[0].mxu0
        %v7937 = vadd.f32 0.0, %v7936
        %v7938 = vpop.f32.mrb[0].mxu0
        %7939 = vmatprep.mubr.f32.mxu0 0.0
        %7940 = vmatmul.mubr.f32.gmra.mrb[0].mxu0 %v7772
        %v7941 = vpop.f32.mrb[0].mxu0
        %v7942 = vadd.f32 0.0, %v7941
        %v7943 = vpop.f32.mrb[0].mxu0
        %7944 = vmatprep.mubr.f32.mxu0 0.0
        %7945 = vmatmul.mubr.f32.gmra.mrb[0].mxu0 %v7775
        %v7946 = vpop.f32.mrb[0].mxu0
        %v7947 = vadd.f32 0.0, %v7946
        %v7948 = vpop.f32.mrb[0].mxu0
        %7949 = vmatprep.mubr.f32.mxu0 0.0
        %7950 = vmatmul.mubr.f32.gmra.mrb[0].mxu0 %v7778
        %v7951 = vpop.f32.mrb[0].mxu0
        %v7952 = vadd.f32 0.0, %v7951
        %v7953 = vpop.f32.mrb[0].mxu0
        %7954 = vmatprep.mubr.f32.mxu0 0.0
        %7955 = vmatmul.mubr.f32.gmra.mrb[0].mxu0 %v7781
        %v7956 = vpop.f32.mrb[0].mxu0
        %v7957 = vadd.f32 0.0, %v7956
        %v7958 = vpop.f32.mrb[0].mxu0
        %7959 = vmatprep.mubr.f32.mxu0 0.0
        %7960 = vmatmul.mubr.f32.gmra.mrb[0].mxu0 %v7784
        %v7961 = vpop.f32.mrb[0].mxu0
        %v7962 = vadd.f32 0.0, %v7961
        %v7963 = vpop.f32.mrb[0].mxu0
        %7964 = vmatprep.mubr.f32.mxu0 0.0
        %7965 = vmatmul.mubr.f32.gmra.mrb[0].mxu0 %v7787
        %v7966 = vpop.f32.mrb[0].mxu0
        %v7967 = vadd.f32 0.0, %v7966
        %v7968 = vpop.f32.mrb[0].mxu0
        %7969 = vmatprep.mubr.f32.mxu0 0.0
        %7970 = vmatmul.mubr.f32.gmra.mrb[0].mxu0 %v7790
        %v7971 = vpop.f32.mrb[0].mxu0
        %v7972 = vadd.f32 0.0, %v7971
        %v7973 = vpop.f32.mrb[0].mxu0
        %7974 = vmatprep.mubr.f32.mxu0 0.0
        %7975 = vmatmul.mubr.f32.gmra.mrb[0].mxu0 %v7793
        %v7976 = vpop.f32.mrb[0].mxu0
        %v7977 = vadd.f32 0.0, %v7976
        %v7978 = vpop.f32.mrb[0].mxu0
        %7979 = vmatprep.mubr.f32.mxu0 0.0
        %7980 = vmatmul.mubr.f32.gmra.mrb[0].mxu0 %v7796
        %v7981 = vpop.f32.mrb[0].mxu0
        %v7982 = vadd.f32 0.0, %v7981
        %v7983 = vpop.f32.mrb[0].mxu0
        %7984 = vmatprep.mubr.f32.mxu0 0.0
        %7985 = vmatmul.mubr.f32.gmra.mrb[0].mxu0 %v7799
        %v7986 = vpop.f32.mrb[0].mxu0
        %v7987 = vadd.f32 0.0, %v7986
        %v7988 = vpop.f32.mrb[0].mxu0
        %7989 = vmatprep.mubr.f32.mxu0 0.0
        %7990 = vmatmul.mubr.f32.gmra.mrb[0].mxu0 %v7802
        %v7991 = vpop.f32.mrb[0].mxu0
        %v7992 = vadd.f32 0.0, %v7991
        %v7993 = vpop.f32.mrb[0].mxu0
        %7994 = vmatprep.mubr.f32.mxu0 0.0
        %7995 = vmatmul.mubr.f32.gmra.mrb[0].mxu0 %v7805
        %v7996 = vpop.f32.mrb[0].mxu0
        %v7997 = vadd.f32 0.0, %v7996
        %v7998 = vpop.f32.mrb[0].mxu0
        %7999 = vmatprep.mubr.f32.mxu0 0.0
        %8000 = vmatmul.mubr.f32.gmra.mrb[0].mxu0 %v7808
        %v8001 = vpop.f32.mrb[0].mxu0
        %v8002 = vadd.f32 0.0, %v8001
        %v8003 = vpop.f32.mrb[0].mxu0
        %8004 = vmatprep.mubr.f32.mxu0 0.0
        %8005 = vmatmul.mubr.f32.gmra.mrb[0].mxu0 %v7811
        %v8006 = vpop.f32.mrb[0].mxu0
        %v8007 = vadd.f32 0.0, %v8006
        %v8008 = vpop.f32.mrb[0].mxu0
        %8009 = vmatprep.mubr.f32.mxu0 0.0
        %8010 = vmatmul.mubr.f32.gmra.mrb[0].mxu0 %v7814
        %v8011 = vpop.f32.mrb[0].mxu0
        %v8012 = vadd.f32 0.0, %v8011
        %v8013 = vpop.f32.mrb[0].mxu0
        %8014 = vmatprep.mubr.f32.mxu0 0.0
        %8015 = vmatmul.mubr.f32.gmra.mrb[0].mxu0 %v7817
        %v8016 = vpop.f32.mrb[0].mxu0
        %v8017 = vadd.f32 0.0, %v8016
        %v8018 = vpop.f32.mrb[0].mxu0
        %8019 = vmatprep.mubr.f32.mxu0 0.0
        %8020 = vmatmul.mubr.f32.gmra.mrb[0].mxu0 %v7820
        %v8021 = vpop.f32.mrb[0].mxu0
        %v8022 = vadd.f32 0.0, %v8021
        %v8023 = vpop.f32.mrb[0].mxu0
        %8024 = vmatprep.mubr.f32.mxu0 0.0
        %8025 = vmatmul.mubr.f32.gmra.mrb[0].mxu0 %v7823
        %v8026 = vpop.f32.mrb[0].mxu0
        %v8027 = vadd.f32 0.0, %v8026
        %v8028 = vpop.f32.mrb[0].mxu0
        %8029 = vmatprep.mubr.f32.mxu0 0.0
        %8030 = vmatmul.mubr.f32.gmra.mrb[0].mxu0 %v7826
        %v8031 = vpop.f32.mrb[0].mxu0
        %v8032 = vadd.f32 0.0, %v8031
        %v8033 = vpop.f32.mrb[0].mxu0
        %8034 = vmatprep.mubr.f32.mxu0 0.0
        %8035 = vmatmul.mubr.f32.gmra.mrb[0].mxu0 %v7829
        %v8036 = vpop.f32.mrb[0].mxu0
        %v8037 = vadd.f32 0.0, %v8036
        %v8038 = vpop.f32.mrb[0].mxu0
        %8039 = vmatprep.mubr.f32.mxu0 0.0
        %8040 = vmatmul.mubr.f32.gmra.mrb[0].mxu0 %v7832
        %v8041 = vpop.f32.mrb[0].mxu0
        %v8042 = vadd.f32 0.0, %v8041
        %v8043 = vpop.f32.mrb[0].mxu0
        %8044 = vmatprep.mubr.f32.mxu0 0.0
        %8045 = vmatmul.mubr.f32.gmra.mrb[0].mxu0 %v7835
        %v8046 = vpop.f32.mrb[0].mxu0
        %v8047 = vadd.f32 0.0, %v8046
        %v8048 = vpop.f32.mrb[0].mxu0
        %8049 = vmatprep.mubr.f32.mxu0 0.0
        %8050 = vmatmul.mubr.f32.gmra.mrb[0].mxu0 %v7838
        %v8051 = vpop.f32.mrb[0].mxu0
        %v8052 = vadd.f32 0.0, %v8051
        %v8053 = vpop.f32.mrb[0].mxu0
        %8054 = vmatprep.mubr.f32.mxu0 0.0
        %8055 = vmatmul.mubr.f32.gmra.mrb[0].mxu0 %v7841
        %v8056 = vpop.f32.mrb[0].mxu0
        %v8057 = vadd.f32 0.0, %v8056
        %v8058 = vpop.f32.mrb[0].mxu0
        %8059 = vmatprep.mubr.f32.mxu0 0.0
        %8060 = vmatmul.mubr.f32.gmra.mrb[0].mxu0 %v7844
        %v8061 = vpop.f32.mrb[0].mxu0
        %v8062 = vadd.f32 0.0, %v8061
        %v8063 = vpop.f32.mrb[0].mxu0
        %8064 = vmatprep.mubr.f32.mxu0 0.0
        %8065 = vmatmul.mubr.f32.gmra.mrb[0].mxu0 %v7847
        %v8066 = vpop.f32.mrb[0].mxu0
        %v8067 = vadd.f32 0.0, %v8066
        %v8068 = vpop.f32.mrb[0].mxu0
        %8069 = vmatprep.mubr.f32.mxu0 0.0
        %8070 = vmatmul.mubr.f32.gmra.mrb[0].mxu0 %v7850
        %v8071 = vpop.f32.mrb[0].mxu0
        %v8072 = vadd.f32 0.0, %v8071
        %v8073 = vpop.f32.mrb[0].mxu0
        %8074 = vmatprep.mubr.f32.mxu0 0.0
        %8075 = vmatmul.mubr.f32.gmra.mrb[0].mxu0 %v7853
        %v8076 = vpop.f32.mrb[0].mxu0
        %v8077 = vadd.f32 0.0, %v8076
        %v8078 = vpop.f32.mrb[0].mxu0
        %8079 = vdwg.mxu0
        %vm8080 = vcmask 23552
        %v8081 = vsel %vm8080, %v7922, 0.0
        %v8082 = vsel %vm8080, %v7927, 0.0
        %v8083 = vadd.f32 %v8081, %v8082
        %v8084 = vsel %vm8080, %v7932, 0.0
        %v8085 = vadd.f32 %v8083, %v8084
        %v8086 = vsel %vm8080, %v7937, 0.0
        %v8087 = vadd.f32 %v8085, %v8086
        %v8088 = vsel %vm8080, %v7942, 0.0
        %v8089 = vadd.f32 %v8087, %v8088
        %v8090 = vsel %vm8080, %v7947, 0.0
        %v8091 = vadd.f32 %v8089, %v8090
        %v8092 = vsel %vm8080, %v7952, 0.0
        %v8093 = vadd.f32 %v8091, %v8092
        %v8094 = vsel %vm8080, %v7957, 0.0
        %v8095 = vadd.f32 %v8093, %v8094
        %v8096 = vsel %vm8080, %v7962, 0.0
        %v8097 = vadd.f32 %v8095, %v8096
        %v8098 = vsel %vm8080, %v7967, 0.0
        %v8099 = vadd.f32 %v8097, %v8098
        %v8100 = vsel %vm8080, %v7972, 0.0
        %v8101 = vadd.f32 %v8099, %v8100
        %v8102 = vsel %vm8080, %v7977, 0.0
        %v8103 = vadd.f32 %v8101, %v8102
        %v8104 = vsel %vm8080, %v7982, 0.0
        %v8105 = vadd.f32 %v8103, %v8104
        %v8106 = vsel %vm8080, %v7987, 0.0
        %v8107 = vadd.f32 %v8105, %v8106
        %v8108 = vsel %vm8080, %v7992, 0.0
        %v8109 = vadd.f32 %v8107, %v8108
        %v8110 = vsel %vm8080, %v7997, 0.0
        %v8111 = vadd.f32 %v8109, %v8110
        %v8112 = vsel %vm8080, %v8002, 0.0
        %v8113 = vadd.f32 %v8111, %v8112
        %v8114 = vsel %vm8080, %v8007, 0.0
        %v8115 = vadd.f32 %v8113, %v8114
        %v8116 = vsel %vm8080, %v8012, 0.0
        %v8117 = vadd.f32 %v8115, %v8116
        %v8118 = vsel %vm8080, %v8017, 0.0
        %v8119 = vadd.f32 %v8117, %v8118
        %v8120 = vsel %vm8080, %v8022, 0.0
        %v8121 = vadd.f32 %v8119, %v8120
        %v8122 = vsel %vm8080, %v8027, 0.0
        %v8123 = vadd.f32 %v8121, %v8122
        %v8124 = vsel %vm8080, %v8032, 0.0
        %v8125 = vadd.f32 %v8123, %v8124
        %v8126 = vsel %vm8080, %v8037, 0.0
        %v8127 = vadd.f32 %v8125, %v8126
        %v8128 = vsel %vm8080, %v8042, 0.0
        %v8129 = vadd.f32 %v8127, %v8128
        %v8130 = vsel %vm8080, %v8047, 0.0
        %v8131 = vadd.f32 %v8129, %v8130
        %v8132 = vsel %vm8080, %v8052, 0.0
        %v8133 = vadd.f32 %v8131, %v8132
        %v8134 = vsel %vm8080, %v8057, 0.0
        %v8135 = vadd.f32 %v8133, %v8134
        %v8136 = vsel %vm8080, %v8062, 0.0
        %v8137 = vadd.f32 %v8135, %v8136
        %v8138 = vsel %vm8080, %v8067, 0.0
        %v8139 = vadd.f32 %v8137, %v8138
        %v8140 = vsel %vm8080, %v8072, 0.0
        %v8141 = vadd.f32 %v8139, %v8140
        %v8142 = vsel %vm8080, %v8077, 0.0
        %v8143 = vadd.f32 %v8141, %v8142
        %v8144 = vrot.slane %v8143, 4
        %v8145 = vadd.f32 %v8143, %v8144
        %v8146 = vrot.slane %v8145, 2
        %v8147 = vadd.f32 %v8145, %v8146
        %v8148 = vrot.slane %v8147, 1
        %v8149 = vadd.f32 %v8147, %v8148
        %v8150 = vmul.f32 %v8149, 0.00390625
        %v8151 = vld [vmem:[%s14] sm:$0x1]
        %v8152 = vadd.f32 %v8150, %v8151
        %vm8153 = vcmask 16384
        %8154 = vst.msk [vmem:[%s486] sm:$0x1] %vm8153, %v8152
        %s8155 = sand.u32 %s357, 1
        %s8156 = scalar_lea.sflag [#allocation5], %s8155
        %s8157 = sand.u32 %s357, 1
        %s8158 = scalar_lea.vmem [#allocation4], %s8157
        // Predicated region
        $region81: #{custom_net_forward.1} parent=79 // pred_check
          %p8159 = pneg %p367
        $region82: #{custom_net_forward.1} parent=79 // pred_check_branch
          %8161 = sbr.rel (%p8159) target = $region84
        $region83: #{custom_net_forward.1} parent=79 // pred_region
          %s8163 = ssub.s32 16, 16
          %8164 = vsyncadd %s8156, %s8163
          %s8165 = smul.addr %s29, 16
          %s8166 = scalar_lea.hbm %s15, %s8165
          %s8168 = sshll.u32 %s8158, 4
          %s8169 = int_to_ptr.vmem [resolvable:$true] %s8168
          %8171 = dma.vmem_to_hbm [thread:$0]  %s8169, 16, %s8166, %s8156
        $region84: #{custom_net_forward.1} parent=79 // pred_fallthru
          _
      $region80: #{custom_net_forward.1} parent=5 // pred_fallthru
        _
      %p8172 = scmp.le.s32.totalorder 2, %s24
      // Predicated region
      $region85: #{custom_net_forward.1} parent=5 // pred_check
        %p8173 = pneg %p8172
      $region86: #{custom_net_forward.1} parent=5 // pred_check_branch
        %8175 = sbr.rel (%p8173) target = $region88
      $region87: #{custom_net_forward.1} parent=5 // pred_region
        %s8176 = ssub.s32 %s24, 2
        // Predicated region
        $region89: #{custom_net_forward.1} parent=87 // pred_check
          %p8177 = pneg %p373
        $region90: #{custom_net_forward.1} parent=87 // pred_check_branch
          %8179 = sbr.rel (%p8177) target = $region92
        $region91: #{custom_net_forward.1} parent=87 // pred_region
          %s8180 = sand.u32 %s358, 1
          %s8181 = scalar_lea.sflag [#allocation5], %s8180
          %s8182 = sand.u32 %s358, 1
          %s8183 = scalar_lea.vmem [#allocation4], %s8182
          %8184 = dma.done %s8181, 16
        $region92: #{custom_net_forward.1} parent=87 // pred_fallthru
          _
      $region88: #{custom_net_forward.1} parent=5 // pred_fallthru
        _
    $region6: #{custom_net_forward.1} parent=1 // loop_footer
      %s28 = sadd.s32 1, %s24
    $region7: #{custom_net_forward.1} parent=1 // loop_footer_branch
      %23 = sbr.rel target = $region3
    $region8: #{custom_net_forward.1} parent=1 // loop_exit
      _
    %8185 = vsyncpa [#allocation5], 1
    %s8186 = scalar_lea.sflag [#allocation5], 1
    %8187 = vsyncpa %s8186, 1

</llo_original>
